<compile_context>
chip_gen: v6e
topology: v6e:2x2x1
jax: 0.10.0
libtpu: 0.0.40
codegen_flags: <defaults>
</compile_context>

<pallas_src>
import math

import numpy as np
import jax
import jax.numpy as jnp
from jax import lax
from jax.experimental import pallas as pl
from jax.experimental.pallas import tpu as pltpu

# ----------------------- static model / problem sizes -----------------------
S = 8            # sequence length (source and target)
B = 2            # batch
D = 32           # d_model
H = 4            # num heads
HD = D // H      # head dim
DFF = 64         # feed-forward hidden
L = 2            # num encoder layers == num decoder layers
V_IN = 128       # input vocab size
V_TGT = 128      # target vocab size (lane-dense logits: last dim == 128)
LN_EPS = 1e-5    # PyTorch LayerNorm default eps
QSCALE = 1.0 / math.sqrt(HD)
R = B * S        # rows of flattened activations (seq-major: r = s*B + b)
CA = B * H * S   # attention "columns": one per (key-batch, head, key-pos)


# ------------------------------ kernel helpers -------------------------------
def _layernorm(x, gamma, beta):
    # single-pass variance E[x^2] - mu^2; fine at these magnitudes (residual
    # stream is O(1) after each LayerNorm).
    mu = jnp.mean(x, axis=-1, keepdims=True)
    ms = jnp.mean(x * x, axis=-1, keepdims=True)
    return (x - mu) * lax.rsqrt(ms - mu * mu + LN_EPS) * gamma + beta


def _mha(q, k, v, rep, hmask, segsum, bias, pad):
    """All (batch, head) pairs at once.

    q, k, v : (R, D) seq-major rows, head h in lanes [h*HD, (h+1)*HD).
    rep     : (CA, R)  0/1 row-replication matrix (key row for each column).
    hmask   : (CA, D)  0/1 head mask (column's head vs. feature lane).
    segsum  : (CA, CA) 0/1 block-diagonal ones over 8-column softmax groups.
    bias    : (R, CA)  0 / -1e9 cross-batch additive mask.
    pad     : (R, CA)  1 on cross-batch columns (keeps the denominator != 0).
    Returns the per-head attention outputs already concatenated along lanes.
    """
    kbd = jnp.dot(rep, k, preferred_element_type=jnp.float32) * hmask     # (CA, D)
    vbd = jnp.dot(rep, v, preferred_element_type=jnp.float32) * hmask     # (CA, D)
    s = jnp.einsum('rd,cd->rc', q, kbd,
                   preferred_element_type=jnp.float32) + bias             # (R, CA)
    s = s - jnp.max(s, axis=-1, keepdims=True)        # row max == valid max
    p = jnp.exp(s)                                    # cross-batch cols -> 0
    denom = jnp.dot(p, segsum, preferred_element_type=jnp.float32) + pad
    p = p / denom                                     # exact division (parity)
    return jnp.dot(p, vbd, preferred_element_type=jnp.float32)            # (R, D)


# --------------------------------- the kernel --------------------------------
def transformer_kernel(enc_ids_ref, dec_ids_ref, emb_enc_ref, emb_dec_ref,
                       rep_ref, hmask_ref, segsum_ref, bias_ref, pad_ref,
                       e_wqkv_ref, e_wo_ref, e_w1_ref, e_w2_ref, e_vec_ref,
                       d_sa_wqkv_ref, d_sa_wo_ref, d_ca_wq_ref, d_ca_wkv_ref,
                       d_ca_wo_ref, d_w1_ref, d_w2_ref, d_vec_ref,
                       fin_w_ref, fin_b_ref, out_ref):
    rep, hmask = rep_ref[...], hmask_ref[...]
    segsum, bias, pad = segsum_ref[...], bias_ref[...], pad_ref[...]

    # ---------------- embedding gather as one-hot @ table (MXU) ---------------
    lane = lax.broadcasted_iota(jnp.int32, (R, V_IN), 1)          # V_IN == V_TGT
    enc = jnp.dot((lane == enc_ids_ref[...]).astype(jnp.float32), emb_enc_ref[...],
                  preferred_element_type=jnp.float32)             # (R, D)
    dec = jnp.dot((lane == dec_ids_ref[...]).astype(jnp.float32), emb_dec_ref[...],
                  preferred_element_type=jnp.float32)             # (R, D)

    # ------------------------------ encoder stack -----------------------------
    for l in range(L):
        vec = e_vec_ref[l]                                        # (8, 128)
        qkv = jnp.dot(enc, e_wqkv_ref[l],
                      preferred_element_type=jnp.float32) + vec[0:1, :3 * D]
        ctx = _mha(qkv[:, :D], qkv[:, D:2 * D], qkv[:, 2 * D:3 * D],
                   rep, hmask, segsum, bias, pad)
        attn = jnp.dot(ctx, e_wo_ref[l],
                       preferred_element_type=jnp.float32) + vec[1:2, :D]
        h = _layernorm(enc + attn, vec[2:3, :D], vec[3:4, :D])

        ff = jnp.maximum(jnp.dot(h, e_w1_ref[l],
                                 preferred_element_type=jnp.float32) + vec[4:5, :DFF], 0.0)
        ff = jnp.dot(ff, e_w2_ref[l],
                     preferred_element_type=jnp.float32) + vec[5:6, :D]
        enc = _layernorm(h + ff, vec[6:7, :D], vec[7:8, :D])

    # ------------------------------ decoder stack -----------------------------
    for l in range(L):
        vec = d_vec_ref[l]                                        # (13, 128)

        # self-attention (mask=None path -> not causal, matches the reference)
        qkv = jnp.dot(dec, d_sa_wqkv_ref[l],
                      preferred_element_type=jnp.float32) + vec[0:1, :3 * D]
        ctx = _mha(qkv[:, :D], qkv[:, D:2 * D], qkv[:, 2 * D:3 * D],
                   rep, hmask, segsum, bias, pad)
        sa = jnp.dot(ctx, d_sa_wo_ref[l],
                     preferred_element_type=jnp.float32) + vec[1:2, :D]
        h = _layernorm(dec + sa, vec[2:3, :D], vec[3:4, :D])

        # encoder-decoder cross-attention (K, V from final encoder output)
        q = jnp.dot(h, d_ca_wq_ref[l],
                    preferred_element_type=jnp.float32) + vec[4:5, :D]
        kv = jnp.dot(enc, d_ca_wkv_ref[l],
                     preferred_element_type=jnp.float32) + vec[5:6, :2 * D]
        ctx = _mha(q, kv[:, :D], kv[:, D:2 * D], rep, hmask, segsum, bias, pad)
        ca = jnp.dot(ctx, d_ca_wo_ref[l],
                     preferred_element_type=jnp.float32) + vec[6:7, :D]
        h2 = _layernorm(h + ca, vec[7:8, :D], vec[8:9, :D])

        ff = jnp.maximum(jnp.dot(h2, d_w1_ref[l],
                                 preferred_element_type=jnp.float32) + vec[9:10, :DFF], 0.0)
        ff = jnp.dot(ff, d_w2_ref[l],
                     preferred_element_type=jnp.float32) + vec[10:11, :D]
        dec = _layernorm(h2 + ff, vec[11:12, :D], vec[12:13, :D])

    # ---------------- final linear -> lane-dense (R, 128) logits --------------
    out_ref[...] = jnp.dot(dec, fin_w_ref[...],
                           preferred_element_type=jnp.float32) + fin_b_ref[...]


# ------------------- one-time (startup) parameter packing --------------------
def _rows(vecs):
    """Pack small 1-D vectors as rows of an (n, 128) lane-dense slab."""
    out = np.zeros((len(vecs), 128), np.float32)
    for i, v in enumerate(vecs):
        a = np.asarray(v, np.float32)
        out[i, :a.shape[0]] = a
    return out


def _attn_constants():
    """Constant layout matrices for the fully batched (batch, head) attention."""
    c = np.arange(CA)
    bk, hh, tt = c // (H * S), (c % (H * S)) // S, c % S
    src_row = tt * B + bk                                   # seq-major key row
    rep = (src_row[:, None] == np.arange(R)[None, :]).astype(np.float32)       # (CA, R)
    hmask = (hh[:, None] == (np.arange(D)[None, :] // HD)).astype(np.float32)  # (CA, D)
    segsum = (c[:, None] // S == c[None, :] // S).astype(np.float32)           # (CA, CA)
    valid = ((np.arange(R) % B)[:, None] == bk[None, :]).astype(np.float32)    # (R, CA)
    bias = (-1e9 * (1.0 - valid)).astype(np.float32)
    pad = (1.0 - valid).astype(np.float32)
    return rep, hmask, segsum, bias, pad


def pack_params(params):
    """Runs ONCE at load time (outside the jitted forward)."""
    def npa(x):
        return np.asarray(x, np.float32)

    e_wqkv, e_wo, e_w1, e_w2, e_vec = [], [], [], [], []
    for p in params["enc_layers"]:
        iw, ib = npa(p["in_proj_w"]), npa(p["in_proj_b"])
        e_wqkv.append(np.concatenate([iw[:D].T * QSCALE, iw[D:2 * D].T, iw[2 * D:].T], axis=1))
        e_wo.append(npa(p["out_proj_w"]).T)
        e_w1.append(npa(p["w1"]).T)
        e_w2.append(npa(p["w2"]).T)
        bqkv = np.concatenate([ib[:D] * QSCALE, ib[D:2 * D], ib[2 * D:]])
        e_vec.append(_rows([bqkv, p["out_proj_b"],
                            p["ln1_w"], p["ln1_b"],
                            p["b1"], p["b2"],
                            p["ln2_w"], p["ln2_b"]]))

    d_sa_wqkv, d_sa_wo, d_ca_wq, d_ca_wkv, d_ca_wo, d_w1, d_w2, d_vec = ([] for _ in range(8))
    for p in params["dec_layers"]:
        siw, sib = npa(p["sa_in_proj_w"]), npa(p["sa_in_proj_b"])
        ciw, cib = npa(p["ca_in_proj_w"]), npa(p["ca_in_proj_b"])
        d_sa_wqkv.append(np.concatenate([siw[:D].T * QSCALE, siw[D:2 * D].T, siw[2 * D:].T], axis=1))
        d_sa_wo.append(npa(p["sa_out_proj_w"]).T)
        d_ca_wq.append(ciw[:D].T * QSCALE)
        d_ca_wkv.append(np.concatenate([ciw[D:2 * D].T, ciw[2 * D:].T], axis=1))
        d_ca_wo.append(npa(p["ca_out_proj_w"]).T)
        d_w1.append(npa(p["w1"]).T)
        d_w2.append(npa(p["w2"]).T)
        sa_bqkv = np.concatenate([sib[:D] * QSCALE, sib[D:2 * D], sib[2 * D:]])
        ca_bkv = np.concatenate([cib[D:2 * D], cib[2 * D:]])
        d_vec.append(_rows([sa_bqkv, p["sa_out_proj_b"],
                            p["ln1_w"], p["ln1_b"],
                            cib[:D] * QSCALE, ca_bkv, p["ca_out_proj_b"],
                            p["ln2_w"], p["ln2_b"],
                            p["b1"], p["b2"],
                            p["ln3_w"], p["ln3_b"]]))

    rep, hmask, segsum, bias, pad = _attn_constants()
    packed = dict(
        emb_enc=npa(params["emb_enc"]), emb_dec=npa(params["emb_dec"]),
        rep=rep, hmask=hmask, segsum=segsum, bias=bias, pad=pad,
        e_wqkv=np.stack(e_wqkv), e_wo=np.stack(e_wo),
        e_w1=np.stack(e_w1), e_w2=np.stack(e_w2), e_vec=np.stack(e_vec),
        d_sa_wqkv=np.stack(d_sa_wqkv), d_sa_wo=np.stack(d_sa_wo),
        d_ca_wq=np.stack(d_ca_wq), d_ca_wkv=np.stack(d_ca_wkv),
        d_ca_wo=np.stack(d_ca_wo),
        d_w1=np.stack(d_w1), d_w2=np.stack(d_w2), d_vec=np.stack(d_vec),
        fin_w=npa(params["fin_w"]).T, fin_b=npa(params["fin_b"]).reshape(1, V_TGT),
    )
    return jax.tree_util.tree_map(jnp.asarray, packed)


# ---------------------------------- wrapper -----------------------------------
@jax.jit
def transformer_forward(input_seq, target_seq, packed):
    """input_seq, target_seq: (S, B) int32 token ids (PyTorch seq-first).
    Returns logits of shape (S, B, V_TGT), matching Transformer.forward."""
    # Only free reshapes here: (S,B) ids -> (R,1) and (R,128) logits -> (S,B,128)
    # are row-major-compatible; everything else is inside one pallas_call.
    enc_ids = input_seq.reshape(R, 1)
    dec_ids = target_seq.reshape(R, 1)

    args = (enc_ids, dec_ids,
            packed["emb_enc"], packed["emb_dec"],
            packed["rep"], packed["hmask"], packed["segsum"],
            packed["bias"], packed["pad"],
            packed["e_wqkv"], packed["e_wo"], packed["e_w1"], packed["e_w2"], packed["e_vec"],
            packed["d_sa_wqkv"], packed["d_sa_wo"], packed["d_ca_wq"], packed["d_ca_wkv"],
            packed["d_ca_wo"], packed["d_w1"], packed["d_w2"], packed["d_vec"],
            packed["fin_w"], packed["fin_b"])
    vmem = pl.BlockSpec(memory_space=pltpu.MemorySpace.VMEM)
    out2d = pl.pallas_call(
        transformer_kernel,
        out_shape=jax.ShapeDtypeStruct((R, V_TGT), jnp.float32),
        in_specs=[vmem] * len(args),
        out_specs=vmem,
    )(*args)
    return out2d.reshape(S, B, V_TGT)


# --------------------------- pure-JAX reference (check) ------------------------
def _mha_ref(query, key, value, in_w, in_b, out_w, out_b):
    Sq, Bn, _ = query.shape
    Skv = key.shape[0]
    wq, wk, wv = in_w[:D], in_w[D:2 * D], in_w[2 * D:]
    bq, bk, bv = in_b[:D], in_b[D:2 * D], in_b[2 * D:]
    q = (query @ wq.T + bq) / math.sqrt(HD)
    k = key @ wk.T + bk
    v = value @ wv.T + bv

    def heads(t, Sx):
        return jnp.transpose(t.reshape(Sx, Bn, H, HD), (1, 2, 0, 3)).reshape(Bn * H, Sx, HD)

    q3, k3, v3 = heads(q, Sq), heads(k, Skv), heads(v, Skv)
    attn = jax.nn.softmax(jnp.einsum('bsd,btd->bst', q3, k3), axis=-1)
    ctx = jnp.einsum('bst,btd->bsd', attn, v3)
    ctx = jnp.transpose(ctx.reshape(Bn, H, Sq, HD), (2, 0, 1, 3)).reshape(Sq, Bn, D)
    return ctx @ out_w.T + out_b


def _ln_ref(x, g, b):
    mu = x.mean(-1, keepdims=True)
    var = ((x - mu) ** 2).mean(-1, keepdims=True)
    return (x - mu) / jnp.sqrt(var + LN_EPS) * g + b


def transformer_ref(input_seq, target_seq, params):
    enc = jnp.take(params["emb_enc"], input_seq, axis=0)
    dec = jnp.take(params["emb_dec"], target_seq, axis=0)
    for p in params["enc_layers"]:
        a = _mha_ref(enc, enc, enc, p["in_proj_w"], p["in_proj_b"],
                     p["out_proj_w"], p["out_proj_b"])
        enc = _ln_ref(enc + a, p["ln1_w"], p["ln1_b"])
        ff = jnp.maximum(enc @ p["w1"].T + p["b1"], 0.0) @ p["w2"].T + p["b2"]
        enc = _ln_ref(enc + ff, p["ln2_w"], p["ln2_b"])
    for p in params["dec_layers"]:
        a = _mha_ref(dec, dec, dec, p["sa_in_proj_w"], p["sa_in_proj_b"],
                     p["sa_out_proj_w"], p["sa_out_proj_b"])
        dec = _ln_ref(dec + a, p["ln1_w"], p["ln1_b"])
        a = _mha_ref(dec, enc, enc, p["ca_in_proj_w"], p["ca_in_proj_b"],
                     p["ca_out_proj_w"], p["ca_out_proj_b"])
        dec = _ln_ref(dec + a, p["ln2_w"], p["ln2_b"])
        ff = jnp.maximum(dec @ p["w1"].T + p["b1"], 0.0) @ p["w2"].T + p["b2"]
        dec = _ln_ref(dec + ff, p["ln3_w"], p["ln3_b"])
    return dec @ params["fin_w"].T + params["fin_b"]                   # (S, B, V_TGT)


# ------------------------------------ main -------------------------------------
if __name__ == "__main__":
    keys = iter(jax.random.split(jax.random.PRNGKey(0), 256))

    def nk():
        return next(keys)

    def nrm(shape, scale=0.1):
        return jax.random.normal(nk(), shape, jnp.float32) * scale

    enc_layers = []
    for _ in range(L):
        enc_layers.append(dict(
            in_proj_w=nrm((3 * D, D)), in_proj_b=nrm((3 * D,)),
            out_proj_w=nrm((D, D)), out_proj_b=nrm((D,)),
            w1=nrm((DFF, D)), b1=nrm((DFF,)),
            w2=nrm((D, DFF)), b2=nrm((D,)),
            ln1_w=1.0 + nrm((D,)), ln1_b=nrm((D,)),
            ln2_w=1.0 + nrm((D,)), ln2_b=nrm((D,)),
        ))
    dec_layers = []
    for _ in range(L):
        dec_layers.append(dict(
            sa_in_proj_w=nrm((3 * D, D)), sa_in_proj_b=nrm((3 * D,)),
            sa_out_proj_w=nrm((D, D)), sa_out_proj_b=nrm((D,)),
            ca_in_proj_w=nrm((3 * D, D)), ca_in_proj_b=nrm((3 * D,)),
            ca_out_proj_w=nrm((D, D)), ca_out_proj_b=nrm((D,)),
            w1=nrm((DFF, D)), b1=nrm((DFF,)),
            w2=nrm((D, DFF)), b2=nrm((D,)),
            ln1_w=1.0 + nrm((D,)), ln1_b=nrm((D,)),
            ln2_w=1.0 + nrm((D,)), ln2_b=nrm((D,)),
            ln3_w=1.0 + nrm((D,)), ln3_b=nrm((D,)),
        ))
    params = dict(
        emb_enc=nrm((V_IN, D), 1.0),
        emb_dec=nrm((V_TGT, D), 1.0),
        fin_w=nrm((V_TGT, D)), fin_b=nrm((V_TGT,)),
        enc_layers=enc_layers, dec_layers=dec_layers,
    )

    # one-time packing (NOT inside the per-call jit)
    packed = pack_params(params)

    input_seq = jax.random.randint(nk(), (S, B), 0, V_IN, dtype=jnp.int32)
    target_seq = jax.random.randint(nk(), (S, B), 0, V_TGT, dtype=jnp.int32)

    out = transformer_forward(input_seq, target_seq, packed)
    out = jax.block_until_ready(out)

    ref = transformer_ref(input_seq, target_seq, params)
    assert out.shape == (S, B, V_TGT)
    # tolerance is set by default-precision f32 MXU matmuls (both paths); the
    # softmax itself now uses exact division.
    assert jnp.allclose(out, ref, atol=2e-2, rtol=2e-2), "mismatch vs reference"

    print("KERNEL_OK")
</pallas_src>

<mosaic_0001>
module attributes {stable_mosaic.version = 11 : i64} {
  func.func @transformer_kernel(%arg0: memref<16x1xi32, #tpu.memory_space<vmem>>, %arg1: memref<16x1xi32, #tpu.memory_space<vmem>>, %arg2: memref<128x32xf32, #tpu.memory_space<vmem>>, %arg3: memref<128x32xf32, #tpu.memory_space<vmem>>, %arg4: memref<64x16xf32, #tpu.memory_space<vmem>>, %arg5: memref<64x32xf32, #tpu.memory_space<vmem>>, %arg6: memref<64x64xf32, #tpu.memory_space<vmem>>, %arg7: memref<16x64xf32, #tpu.memory_space<vmem>>, %arg8: memref<16x64xf32, #tpu.memory_space<vmem>>, %arg9: memref<2x32x96xf32, #tpu.memory_space<vmem>>, %arg10: memref<2x32x32xf32, #tpu.memory_space<vmem>>, %arg11: memref<2x32x64xf32, #tpu.memory_space<vmem>>, %arg12: memref<2x64x32xf32, #tpu.memory_space<vmem>>, %arg13: memref<2x8x128xf32, #tpu.memory_space<vmem>>, %arg14: memref<2x32x96xf32, #tpu.memory_space<vmem>>, %arg15: memref<2x32x32xf32, #tpu.memory_space<vmem>>, %arg16: memref<2x32x32xf32, #tpu.memory_space<vmem>>, %arg17: memref<2x32x64xf32, #tpu.memory_space<vmem>>, %arg18: memref<2x32x32xf32, #tpu.memory_space<vmem>>, %arg19: memref<2x32x64xf32, #tpu.memory_space<vmem>>, %arg20: memref<2x64x32xf32, #tpu.memory_space<vmem>>, %arg21: memref<2x13x128xf32, #tpu.memory_space<vmem>>, %arg22: memref<32x128xf32, #tpu.memory_space<vmem>>, %arg23: memref<1x128xf32, #tpu.memory_space<vmem>>, %arg24: memref<16x128xf32, #tpu.memory_space<vmem>>) attributes {dimension_semantics = [], scalar_prefetch = 0 : i64, scratch_operands = 0 : i64, tpu.core_type = #tpu.core_type<tc>} {
    %c0 = arith.constant 0 : index
    %c0_0 = arith.constant 0 : index
    %0 = vector.load %arg4[%c0, %c0_0] : memref<64x16xf32, #tpu.memory_space<vmem>>, vector<64x16xf32>
    %c0_1 = arith.constant 0 : index
    %c0_2 = arith.constant 0 : index
    %1 = vector.load %arg5[%c0_1, %c0_2] : memref<64x32xf32, #tpu.memory_space<vmem>>, vector<64x32xf32>
    %c0_3 = arith.constant 0 : index
    %c0_4 = arith.constant 0 : index
    %2 = vector.load %arg6[%c0_3, %c0_4] : memref<64x64xf32, #tpu.memory_space<vmem>>, vector<64x64xf32>
    %c0_5 = arith.constant 0 : index
    %c0_6 = arith.constant 0 : index
    %3 = vector.load %arg7[%c0_5, %c0_6] : memref<16x64xf32, #tpu.memory_space<vmem>>, vector<16x64xf32>
    %c0_7 = arith.constant 0 : index
    %c0_8 = arith.constant 0 : index
    %4 = vector.load %arg8[%c0_7, %c0_8] : memref<16x64xf32, #tpu.memory_space<vmem>>, vector<16x64xf32>
    %5 = tpu.iota {dimensions = array<i32: 1>} : vector<16x128xi32>
    %c0_9 = arith.constant 0 : index
    %c0_10 = arith.constant 0 : index
    %6 = vector.load %arg0[%c0_9, %c0_10] : memref<16x1xi32, #tpu.memory_space<vmem>>, vector<16x1xi32>
    %7 = vector.broadcast %6 : vector<16x1xi32> to vector<16x128xi32>
    %8 = arith.cmpi eq, %5, %7 : vector<16x128xi32>
    %9 = arith.extui %8 : vector<16x128xi1> to vector<16x128xi32>
    %10 = arith.sitofp %9 : vector<16x128xi32> to vector<16x128xf32>
    %c0_11 = arith.constant 0 : index
    %c0_12 = arith.constant 0 : index
    %11 = vector.load %arg2[%c0_11, %c0_12] : memref<128x32xf32, #tpu.memory_space<vmem>>, vector<128x32xf32>
    %cst = arith.constant dense<0.000000e+00> : vector<16x32xf32>
    %12 = tpu.matmul %10, %11, %cst {dimension_numbers = #tpu.dot_dimension_numbers<[1], [0], [0], [1], [0, 0, 1, 1], [], []>} : vector<16x128xf32>, vector<128x32xf32>, vector<16x32xf32> -> vector<16x32xf32>
    %c0_13 = arith.constant 0 : index
    %c0_14 = arith.constant 0 : index
    %13 = vector.load %arg1[%c0_13, %c0_14] : memref<16x1xi32, #tpu.memory_space<vmem>>, vector<16x1xi32>
    %14 = vector.broadcast %13 : vector<16x1xi32> to vector<16x128xi32>
    %15 = arith.cmpi eq, %5, %14 : vector<16x128xi32>
    %16 = arith.extui %15 : vector<16x128xi1> to vector<16x128xi32>
    %17 = arith.sitofp %16 : vector<16x128xi32> to vector<16x128xf32>
    %c0_15 = arith.constant 0 : index
    %c0_16 = arith.constant 0 : index
    %18 = vector.load %arg3[%c0_15, %c0_16] : memref<128x32xf32, #tpu.memory_space<vmem>>, vector<128x32xf32>
    %cst_17 = arith.constant dense<0.000000e+00> : vector<16x32xf32>
    %19 = tpu.matmul %17, %18, %cst_17 {dimension_numbers = #tpu.dot_dimension_numbers<[1], [0], [0], [1], [0, 0, 1, 1], [], []>} : vector<16x128xf32>, vector<128x32xf32>, vector<16x32xf32> -> vector<16x32xf32>
    %c0_18 = arith.constant 0 : index
    %c0_19 = arith.constant 0 : index
    %c0_20 = arith.constant 0 : index
    %20 = vector.load %arg13[%c0_18, %c0_19, %c0_20] : memref<2x8x128xf32, #tpu.memory_space<vmem>>, vector<1x8x128xf32>
    %21 = vector.shape_cast %20 : vector<1x8x128xf32> to vector<8x128xf32>
    %c0_21 = arith.constant 0 : index
    %c0_22 = arith.constant 0 : index
    %c0_23 = arith.constant 0 : index
    %22 = vector.load %arg9[%c0_21, %c0_22, %c0_23] : memref<2x32x96xf32, #tpu.memory_space<vmem>>, vector<1x32x96xf32>
    %23 = vector.shape_cast %22 : vector<1x32x96xf32> to vector<32x96xf32>
    %cst_24 = arith.constant dense<0.000000e+00> : vector<16x96xf32>
    %24 = tpu.matmul %12, %23, %cst_24 {dimension_numbers = #tpu.dot_dimension_numbers<[1], [0], [0], [1], [0, 0, 1, 1], [], []>} : vector<16x32xf32>, vector<32x96xf32>, vector<16x96xf32> -> vector<16x96xf32>
    %25 = vector.extract_strided_slice %21 {offsets = [0, 0], sizes = [1, 96], strides = [1, 1]} : vector<8x128xf32> to vector<1x96xf32>
    %26 = vector.broadcast %25 : vector<1x96xf32> to vector<16x96xf32>
    %27 = arith.addf %24, %26 : vector<16x96xf32>
    %28 = vector.extract_strided_slice %27 {offsets = [0, 0], sizes = [16, 32], strides = [1, 1]} : vector<16x96xf32> to vector<16x32xf32>
    %29 = vector.extract_strided_slice %27 {offsets = [0, 32], sizes = [16, 32], strides = [1, 1]} : vector<16x96xf32> to vector<16x32xf32>
    %30 = vector.extract_strided_slice %27 {offsets = [0, 64], sizes = [16, 32], strides = [1, 1]} : vector<16x96xf32> to vector<16x32xf32>
    %cst_25 = arith.constant dense<0.000000e+00> : vector<64x32xf32>
    %31 = tpu.matmul %0, %29, %cst_25 {dimension_numbers = #tpu.dot_dimension_numbers<[1], [0], [0], [1], [0, 0, 1, 1], [], []>} : vector<64x16xf32>, vector<16x32xf32>, vector<64x32xf32> -> vector<64x32xf32>
    %32 = arith.mulf %31, %1 : vector<64x32xf32>
    %cst_26 = arith.constant dense<0.000000e+00> : vector<64x32xf32>
    %33 = tpu.matmul %0, %30, %cst_26 {dimension_numbers = #tpu.dot_dimension_numbers<[1], [0], [0], [1], [0, 0, 1, 1], [], []>} : vector<64x16xf32>, vector<16x32xf32>, vector<64x32xf32> -> vector<64x32xf32>
    %34 = arith.mulf %33, %1 : vector<64x32xf32>
    "tpu.trace_start"() <{level = 10 : i32, message = "rd,cd->rc"}> : () -> ()
    %cst_27 = arith.constant dense<0.000000e+00> : vector<16x64xf32>
    %35 = tpu.matmul %28, %32, %cst_27 {dimension_numbers = #tpu.dot_dimension_numbers<[1], [1], [0], [0], [0, 0, 1, 0], [], []>} : vector<16x32xf32>, vector<64x32xf32>, vector<16x64xf32> -> vector<16x64xf32>
    "tpu.trace_stop"() : () -> ()
    %36 = arith.addf %35, %3 : vector<16x64xf32>
    %cst_28 = arith.constant dense<0xFF800000> : vector<16xf32>
    %37 = vector.multi_reduction <maximumf>, %36, %cst_28 [1] : vector<16x64xf32> to vector<16xf32>
    %38 = vector.shape_cast %37 : vector<16xf32> to vector<16x1xf32>
    %39 = vector.broadcast %38 : vector<16x1xf32> to vector<16x64xf32>
    %40 = arith.subf %36, %39 : vector<16x64xf32>
    %41 = math.exp %40 : vector<16x64xf32>
    %cst_29 = arith.constant dense<0.000000e+00> : vector<16x64xf32>
    %42 = tpu.matmul %41, %2, %cst_29 {dimension_numbers = #tpu.dot_dimension_numbers<[1], [0], [0], [1], [0, 0, 1, 1], [], []>} : vector<16x64xf32>, vector<64x64xf32>, vector<16x64xf32> -> vector<16x64xf32>
    %43 = arith.addf %42, %4 : vector<16x64xf32>
    %44 = arith.divf %41, %43 : vector<16x64xf32>
    %cst_30 = arith.constant dense<0.000000e+00> : vector<16x32xf32>
    %45 = tpu.matmul %44, %34, %cst_30 {dimension_numbers = #tpu.dot_dimension_numbers<[1], [0], [0], [1], [0, 0, 1, 1], [], []>} : vector<16x64xf32>, vector<64x32xf32>, vector<16x32xf32> -> vector<16x32xf32>
    %c0_31 = arith.constant 0 : index
    %c0_32 = arith.constant 0 : index
    %c0_33 = arith.constant 0 : index
    %46 = vector.load %arg10[%c0_31, %c0_32, %c0_33] : memref<2x32x32xf32, #tpu.memory_space<vmem>>, vector<1x32x32xf32>
    %47 = vector.shape_cast %46 : vector<1x32x32xf32> to vector<32x32xf32>
    %cst_34 = arith.constant dense<0.000000e+00> : vector<16x32xf32>
    %48 = tpu.matmul %45, %47, %cst_34 {dimension_numbers = #tpu.dot_dimension_numbers<[1], [0], [0], [1], [0, 0, 1, 1], [], []>} : vector<16x32xf32>, vector<32x32xf32>, vector<16x32xf32> -> vector<16x32xf32>
    %49 = vector.extract_strided_slice %21 {offsets = [1, 0], sizes = [1, 32], strides = [1, 1]} : vector<8x128xf32> to vector<1x32xf32>
    %50 = vector.broadcast %49 : vector<1x32xf32> to vector<16x32xf32>
    %51 = arith.addf %48, %50 : vector<16x32xf32>
    %52 = arith.addf %12, %51 : vector<16x32xf32>
    %53 = vector.extract_strided_slice %21 {offsets = [2, 0], sizes = [1, 32], strides = [1, 1]} : vector<8x128xf32> to vector<1x32xf32>
    %54 = vector.extract_strided_slice %21 {offsets = [3, 0], sizes = [1, 32], strides = [1, 1]} : vector<8x128xf32> to vector<1x32xf32>
    %cst_35 = arith.constant dense<0.000000e+00> : vector<16xf32>
    %55 = vector.multi_reduction <add>, %52, %cst_35 [1] : vector<16x32xf32> to vector<16xf32>
    %56 = vector.shape_cast %55 : vector<16xf32> to vector<16x1xf32>
    %cst_36 = arith.constant 3.200000e+01 : f32
    %57 = vector.broadcast %cst_36 : f32 to vector<16x1xf32>
    %58 = arith.divf %56, %57 : vector<16x1xf32>
    %59 = arith.mulf %52, %52 : vector<16x32xf32>
    %cst_37 = arith.constant dense<0.000000e+00> : vector<16xf32>
    %60 = vector.multi_reduction <add>, %59, %cst_37 [1] : vector<16x32xf32> to vector<16xf32>
    %61 = vector.shape_cast %60 : vector<16xf32> to vector<16x1xf32>
    %cst_38 = arith.constant 3.200000e+01 : f32
    %62 = vector.broadcast %cst_38 : f32 to vector<16x1xf32>
    %63 = arith.divf %61, %62 : vector<16x1xf32>
    %64 = vector.broadcast %58 : vector<16x1xf32> to vector<16x32xf32>
    %65 = arith.subf %52, %64 : vector<16x32xf32>
    %66 = arith.mulf %58, %58 : vector<16x1xf32>
    %67 = arith.subf %63, %66 : vector<16x1xf32>
    %cst_39 = arith.constant 9.99999974E-6 : f32
    %68 = vector.broadcast %cst_39 : f32 to vector<16x1xf32>
    %69 = arith.addf %67, %68 : vector<16x1xf32>
    %70 = math.rsqrt %69 : vector<16x1xf32>
    %71 = vector.broadcast %70 : vector<16x1xf32> to vector<16x32xf32>
    %72 = arith.mulf %65, %71 : vector<16x32xf32>
    %73 = vector.broadcast %53 : vector<1x32xf32> to vector<16x32xf32>
    %74 = arith.mulf %72, %73 : vector<16x32xf32>
    %75 = vector.broadcast %54 : vector<1x32xf32> to vector<16x32xf32>
    %76 = arith.addf %74, %75 : vector<16x32xf32>
    %c0_40 = arith.constant 0 : index
    %c0_41 = arith.constant 0 : index
    %c0_42 = arith.constant 0 : index
    %77 = vector.load %arg11[%c0_40, %c0_41, %c0_42] : memref<2x32x64xf32, #tpu.memory_space<vmem>>, vector<1x32x64xf32>
    %78 = vector.shape_cast %77 : vector<1x32x64xf32> to vector<32x64xf32>
    %cst_43 = arith.constant dense<0.000000e+00> : vector<16x64xf32>
    %79 = tpu.matmul %76, %78, %cst_43 {dimension_numbers = #tpu.dot_dimension_numbers<[1], [0], [0], [1], [0, 0, 1, 1], [], []>} : vector<16x32xf32>, vector<32x64xf32>, vector<16x64xf32> -> vector<16x64xf32>
    %80 = vector.extract_strided_slice %21 {offsets = [4, 0], sizes = [1, 64], strides = [1, 1]} : vector<8x128xf32> to vector<1x64xf32>
    %81 = vector.broadcast %80 : vector<1x64xf32> to vector<16x64xf32>
    %82 = arith.addf %79, %81 : vector<16x64xf32>
    %cst_44 = arith.constant 0.000000e+00 : f32
    %83 = vector.broadcast %cst_44 : f32 to vector<16x64xf32>
    %84 = arith.maximumf %82, %83 : vector<16x64xf32>
    %c0_45 = arith.constant 0 : index
    %c0_46 = arith.constant 0 : index
    %c0_47 = arith.constant 0 : index
    %85 = vector.load %arg12[%c0_45, %c0_46, %c0_47] : memref<2x64x32xf32, #tpu.memory_space<vmem>>, vector<1x64x32xf32>
    %86 = vector.shape_cast %85 : vector<1x64x32xf32> to vector<64x32xf32>
    %cst_48 = arith.constant dense<0.000000e+00> : vector<16x32xf32>
    %87 = tpu.matmul %84, %86, %cst_48 {dimension_numbers = #tpu.dot_dimension_numbers<[1], [0], [0], [1], [0, 0, 1, 1], [], []>} : vector<16x64xf32>, vector<64x32xf32>, vector<16x32xf32> -> vector<16x32xf32>
    %88 = vector.extract_strided_slice %21 {offsets = [5, 0], sizes = [1, 32], strides = [1, 1]} : vector<8x128xf32> to vector<1x32xf32>
    %89 = vector.broadcast %88 : vector<1x32xf32> to vector<16x32xf32>
    %90 = arith.addf %87, %89 : vector<16x32xf32>
    %91 = arith.addf %76, %90 : vector<16x32xf32>
    %92 = vector.extract_strided_slice %21 {offsets = [6, 0], sizes = [1, 32], strides = [1, 1]} : vector<8x128xf32> to vector<1x32xf32>
    %93 = vector.extract_strided_slice %21 {offsets = [7, 0], sizes = [1, 32], strides = [1, 1]} : vector<8x128xf32> to vector<1x32xf32>
    %cst_49 = arith.constant dense<0.000000e+00> : vector<16xf32>
    %94 = vector.multi_reduction <add>, %91, %cst_49 [1] : vector<16x32xf32> to vector<16xf32>
    %95 = vector.shape_cast %94 : vector<16xf32> to vector<16x1xf32>
    %cst_50 = arith.constant 3.200000e+01 : f32
    %96 = vector.broadcast %cst_50 : f32 to vector<16x1xf32>
    %97 = arith.divf %95, %96 : vector<16x1xf32>
    %98 = arith.mulf %91, %91 : vector<16x32xf32>
    %cst_51 = arith.constant dense<0.000000e+00> : vector<16xf32>
    %99 = vector.multi_reduction <add>, %98, %cst_51 [1] : vector<16x32xf32> to vector<16xf32>
    %100 = vector.shape_cast %99 : vector<16xf32> to vector<16x1xf32>
    %cst_52 = arith.constant 3.200000e+01 : f32
    %101 = vector.broadcast %cst_52 : f32 to vector<16x1xf32>
    %102 = arith.divf %100, %101 : vector<16x1xf32>
    %103 = vector.broadcast %97 : vector<16x1xf32> to vector<16x32xf32>
    %104 = arith.subf %91, %103 : vector<16x32xf32>
    %105 = arith.mulf %97, %97 : vector<16x1xf32>
    %106 = arith.subf %102, %105 : vector<16x1xf32>
    %cst_53 = arith.constant 9.99999974E-6 : f32
    %107 = vector.broadcast %cst_53 : f32 to vector<16x1xf32>
    %108 = arith.addf %106, %107 : vector<16x1xf32>
    %109 = math.rsqrt %108 : vector<16x1xf32>
    %110 = vector.broadcast %109 : vector<16x1xf32> to vector<16x32xf32>
    %111 = arith.mulf %104, %110 : vector<16x32xf32>
    %112 = vector.broadcast %92 : vector<1x32xf32> to vector<16x32xf32>
    %113 = arith.mulf %111, %112 : vector<16x32xf32>
    %114 = vector.broadcast %93 : vector<1x32xf32> to vector<16x32xf32>
    %115 = arith.addf %113, %114 : vector<16x32xf32>
    %c1 = arith.constant 1 : index
    %c0_54 = arith.constant 0 : index
    %c0_55 = arith.constant 0 : index
    %116 = vector.load %arg13[%c1, %c0_54, %c0_55] : memref<2x8x128xf32, #tpu.memory_space<vmem>>, vector<1x8x128xf32>
    %117 = vector.shape_cast %116 : vector<1x8x128xf32> to vector<8x128xf32>
    %c1_56 = arith.constant 1 : index
    %c0_57 = arith.constant 0 : index
    %c0_58 = arith.constant 0 : index
    %118 = vector.load %arg9[%c1_56, %c0_57, %c0_58] : memref<2x32x96xf32, #tpu.memory_space<vmem>>, vector<1x32x96xf32>
    %119 = vector.shape_cast %118 : vector<1x32x96xf32> to vector<32x96xf32>
    %cst_59 = arith.constant dense<0.000000e+00> : vector<16x96xf32>
    %120 = tpu.matmul %115, %119, %cst_59 {dimension_numbers = #tpu.dot_dimension_numbers<[1], [0], [0], [1], [0, 0, 1, 1], [], []>} : vector<16x32xf32>, vector<32x96xf32>, vector<16x96xf32> -> vector<16x96xf32>
    %121 = vector.extract_strided_slice %117 {offsets = [0, 0], sizes = [1, 96], strides = [1, 1]} : vector<8x128xf32> to vector<1x96xf32>
    %122 = vector.broadcast %121 : vector<1x96xf32> to vector<16x96xf32>
    %123 = arith.addf %120, %122 : vector<16x96xf32>
    %124 = vector.extract_strided_slice %123 {offsets = [0, 0], sizes = [16, 32], strides = [1, 1]} : vector<16x96xf32> to vector<16x32xf32>
    %125 = vector.extract_strided_slice %123 {offsets = [0, 32], sizes = [16, 32], strides = [1, 1]} : vector<16x96xf32> to vector<16x32xf32>
    %126 = vector.extract_strided_slice %123 {offsets = [0, 64], sizes = [16, 32], strides = [1, 1]} : vector<16x96xf32> to vector<16x32xf32>
    %cst_60 = arith.constant dense<0.000000e+00> : vector<64x32xf32>
    %127 = tpu.matmul %0, %125, %cst_60 {dimension_numbers = #tpu.dot_dimension_numbers<[1], [0], [0], [1], [0, 0, 1, 1], [], []>} : vector<64x16xf32>, vector<16x32xf32>, vector<64x32xf32> -> vector<64x32xf32>
    %128 = arith.mulf %127, %1 : vector<64x32xf32>
    %cst_61 = arith.constant dense<0.000000e+00> : vector<64x32xf32>
    %129 = tpu.matmul %0, %126, %cst_61 {dimension_numbers = #tpu.dot_dimension_numbers<[1], [0], [0], [1], [0, 0, 1, 1], [], []>} : vector<64x16xf32>, vector<16x32xf32>, vector<64x32xf32> -> vector<64x32xf32>
    %130 = arith.mulf %129, %1 : vector<64x32xf32>
    "tpu.trace_start"() <{level = 10 : i32, message = "rd,cd->rc"}> : () -> ()
    %cst_62 = arith.constant dense<0.000000e+00> : vector<16x64xf32>
    %131 = tpu.matmul %124, %128, %cst_62 {dimension_numbers = #tpu.dot_dimension_numbers<[1], [1], [0], [0], [0, 0, 1, 0], [], []>} : vector<16x32xf32>, vector<64x32xf32>, vector<16x64xf32> -> vector<16x64xf32>
    "tpu.trace_stop"() : () -> ()
    %132 = arith.addf %131, %3 : vector<16x64xf32>
    %cst_63 = arith.constant dense<0xFF800000> : vector<16xf32>
    %133 = vector.multi_reduction <maximumf>, %132, %cst_63 [1] : vector<16x64xf32> to vector<16xf32>
    %134 = vector.shape_cast %133 : vector<16xf32> to vector<16x1xf32>
    %135 = vector.broadcast %134 : vector<16x1xf32> to vector<16x64xf32>
    %136 = arith.subf %132, %135 : vector<16x64xf32>
    %137 = math.exp %136 : vector<16x64xf32>
    %cst_64 = arith.constant dense<0.000000e+00> : vector<16x64xf32>
    %138 = tpu.matmul %137, %2, %cst_64 {dimension_numbers = #tpu.dot_dimension_numbers<[1], [0], [0], [1], [0, 0, 1, 1], [], []>} : vector<16x64xf32>, vector<64x64xf32>, vector<16x64xf32> -> vector<16x64xf32>
    %139 = arith.addf %138, %4 : vector<16x64xf32>
    %140 = arith.divf %137, %139 : vector<16x64xf32>
    %cst_65 = arith.constant dense<0.000000e+00> : vector<16x32xf32>
    %141 = tpu.matmul %140, %130, %cst_65 {dimension_numbers = #tpu.dot_dimension_numbers<[1], [0], [0], [1], [0, 0, 1, 1], [], []>} : vector<16x64xf32>, vector<64x32xf32>, vector<16x32xf32> -> vector<16x32xf32>
    %c1_66 = arith.constant 1 : index
    %c0_67 = arith.constant 0 : index
    %c0_68 = arith.constant 0 : index
    %142 = vector.load %arg10[%c1_66, %c0_67, %c0_68] : memref<2x32x32xf32, #tpu.memory_space<vmem>>, vector<1x32x32xf32>
    %143 = vector.shape_cast %142 : vector<1x32x32xf32> to vector<32x32xf32>
    %cst_69 = arith.constant dense<0.000000e+00> : vector<16x32xf32>
    %144 = tpu.matmul %141, %143, %cst_69 {dimension_numbers = #tpu.dot_dimension_numbers<[1], [0], [0], [1], [0, 0, 1, 1], [], []>} : vector<16x32xf32>, vector<32x32xf32>, vector<16x32xf32> -> vector<16x32xf32>
    %145 = vector.extract_strided_slice %117 {offsets = [1, 0], sizes = [1, 32], strides = [1, 1]} : vector<8x128xf32> to vector<1x32xf32>
    %146 = vector.broadcast %145 : vector<1x32xf32> to vector<16x32xf32>
    %147 = arith.addf %144, %146 : vector<16x32xf32>
    %148 = arith.addf %115, %147 : vector<16x32xf32>
    %149 = vector.extract_strided_slice %117 {offsets = [2, 0], sizes = [1, 32], strides = [1, 1]} : vector<8x128xf32> to vector<1x32xf32>
    %150 = vector.extract_strided_slice %117 {offsets = [3, 0], sizes = [1, 32], strides = [1, 1]} : vector<8x128xf32> to vector<1x32xf32>
    %cst_70 = arith.constant dense<0.000000e+00> : vector<16xf32>
    %151 = vector.multi_reduction <add>, %148, %cst_70 [1] : vector<16x32xf32> to vector<16xf32>
    %152 = vector.shape_cast %151 : vector<16xf32> to vector<16x1xf32>
    %cst_71 = arith.constant 3.200000e+01 : f32
    %153 = vector.broadcast %cst_71 : f32 to vector<16x1xf32>
    %154 = arith.divf %152, %153 : vector<16x1xf32>
    %155 = arith.mulf %148, %148 : vector<16x32xf32>
    %cst_72 = arith.constant dense<0.000000e+00> : vector<16xf32>
    %156 = vector.multi_reduction <add>, %155, %cst_72 [1] : vector<16x32xf32> to vector<16xf32>
    %157 = vector.shape_cast %156 : vector<16xf32> to vector<16x1xf32>
    %cst_73 = arith.constant 3.200000e+01 : f32
    %158 = vector.broadcast %cst_73 : f32 to vector<16x1xf32>
    %159 = arith.divf %157, %158 : vector<16x1xf32>
    %160 = vector.broadcast %154 : vector<16x1xf32> to vector<16x32xf32>
    %161 = arith.subf %148, %160 : vector<16x32xf32>
    %162 = arith.mulf %154, %154 : vector<16x1xf32>
    %163 = arith.subf %159, %162 : vector<16x1xf32>
    %cst_74 = arith.constant 9.99999974E-6 : f32
    %164 = vector.broadcast %cst_74 : f32 to vector<16x1xf32>
    %165 = arith.addf %163, %164 : vector<16x1xf32>
    %166 = math.rsqrt %165 : vector<16x1xf32>
    %167 = vector.broadcast %166 : vector<16x1xf32> to vector<16x32xf32>
    %168 = arith.mulf %161, %167 : vector<16x32xf32>
    %169 = vector.broadcast %149 : vector<1x32xf32> to vector<16x32xf32>
    %170 = arith.mulf %168, %169 : vector<16x32xf32>
    %171 = vector.broadcast %150 : vector<1x32xf32> to vector<16x32xf32>
    %172 = arith.addf %170, %171 : vector<16x32xf32>
    %c1_75 = arith.constant 1 : index
    %c0_76 = arith.constant 0 : index
    %c0_77 = arith.constant 0 : index
    %173 = vector.load %arg11[%c1_75, %c0_76, %c0_77] : memref<2x32x64xf32, #tpu.memory_space<vmem>>, vector<1x32x64xf32>
    %174 = vector.shape_cast %173 : vector<1x32x64xf32> to vector<32x64xf32>
    %cst_78 = arith.constant dense<0.000000e+00> : vector<16x64xf32>
    %175 = tpu.matmul %172, %174, %cst_78 {dimension_numbers = #tpu.dot_dimension_numbers<[1], [0], [0], [1], [0, 0, 1, 1], [], []>} : vector<16x32xf32>, vector<32x64xf32>, vector<16x64xf32> -> vector<16x64xf32>
    %176 = vector.extract_strided_slice %117 {offsets = [4, 0], sizes = [1, 64], strides = [1, 1]} : vector<8x128xf32> to vector<1x64xf32>
    %177 = vector.broadcast %176 : vector<1x64xf32> to vector<16x64xf32>
    %178 = arith.addf %175, %177 : vector<16x64xf32>
    %cst_79 = arith.constant 0.000000e+00 : f32
    %179 = vector.broadcast %cst_79 : f32 to vector<16x64xf32>
    %180 = arith.maximumf %178, %179 : vector<16x64xf32>
    %c1_80 = arith.constant 1 : index
    %c0_81 = arith.constant 0 : index
    %c0_82 = arith.constant 0 : index
    %181 = vector.load %arg12[%c1_80, %c0_81, %c0_82] : memref<2x64x32xf32, #tpu.memory_space<vmem>>, vector<1x64x32xf32>
    %182 = vector.shape_cast %181 : vector<1x64x32xf32> to vector<64x32xf32>
    %cst_83 = arith.constant dense<0.000000e+00> : vector<16x32xf32>
    %183 = tpu.matmul %180, %182, %cst_83 {dimension_numbers = #tpu.dot_dimension_numbers<[1], [0], [0], [1], [0, 0, 1, 1], [], []>} : vector<16x64xf32>, vector<64x32xf32>, vector<16x32xf32> -> vector<16x32xf32>
    %184 = vector.extract_strided_slice %117 {offsets = [5, 0], sizes = [1, 32], strides = [1, 1]} : vector<8x128xf32> to vector<1x32xf32>
    %185 = vector.broadcast %184 : vector<1x32xf32> to vector<16x32xf32>
    %186 = arith.addf %183, %185 : vector<16x32xf32>
    %187 = arith.addf %172, %186 : vector<16x32xf32>
    %188 = vector.extract_strided_slice %117 {offsets = [6, 0], sizes = [1, 32], strides = [1, 1]} : vector<8x128xf32> to vector<1x32xf32>
    %189 = vector.extract_strided_slice %117 {offsets = [7, 0], sizes = [1, 32], strides = [1, 1]} : vector<8x128xf32> to vector<1x32xf32>
    %cst_84 = arith.constant dense<0.000000e+00> : vector<16xf32>
    %190 = vector.multi_reduction <add>, %187, %cst_84 [1] : vector<16x32xf32> to vector<16xf32>
    %191 = vector.shape_cast %190 : vector<16xf32> to vector<16x1xf32>
    %cst_85 = arith.constant 3.200000e+01 : f32
    %192 = vector.broadcast %cst_85 : f32 to vector<16x1xf32>
    %193 = arith.divf %191, %192 : vector<16x1xf32>
    %194 = arith.mulf %187, %187 : vector<16x32xf32>
    %cst_86 = arith.constant dense<0.000000e+00> : vector<16xf32>
    %195 = vector.multi_reduction <add>, %194, %cst_86 [1] : vector<16x32xf32> to vector<16xf32>
    %196 = vector.shape_cast %195 : vector<16xf32> to vector<16x1xf32>
    %cst_87 = arith.constant 3.200000e+01 : f32
    %197 = vector.broadcast %cst_87 : f32 to vector<16x1xf32>
    %198 = arith.divf %196, %197 : vector<16x1xf32>
    %199 = vector.broadcast %193 : vector<16x1xf32> to vector<16x32xf32>
    %200 = arith.subf %187, %199 : vector<16x32xf32>
    %201 = arith.mulf %193, %193 : vector<16x1xf32>
    %202 = arith.subf %198, %201 : vector<16x1xf32>
    %cst_88 = arith.constant 9.99999974E-6 : f32
    %203 = vector.broadcast %cst_88 : f32 to vector<16x1xf32>
    %204 = arith.addf %202, %203 : vector<16x1xf32>
    %205 = math.rsqrt %204 : vector<16x1xf32>
    %206 = vector.broadcast %205 : vector<16x1xf32> to vector<16x32xf32>
    %207 = arith.mulf %200, %206 : vector<16x32xf32>
    %208 = vector.broadcast %188 : vector<1x32xf32> to vector<16x32xf32>
    %209 = arith.mulf %207, %208 : vector<16x32xf32>
    %210 = vector.broadcast %189 : vector<1x32xf32> to vector<16x32xf32>
    %211 = arith.addf %209, %210 : vector<16x32xf32>
    %c0_89 = arith.constant 0 : index
    %c0_90 = arith.constant 0 : index
    %c0_91 = arith.constant 0 : index
    %212 = vector.load %arg21[%c0_89, %c0_90, %c0_91] : memref<2x13x128xf32, #tpu.memory_space<vmem>>, vector<1x13x128xf32>
    %213 = vector.shape_cast %212 : vector<1x13x128xf32> to vector<13x128xf32>
    %c0_92 = arith.constant 0 : index
    %c0_93 = arith.constant 0 : index
    %c0_94 = arith.constant 0 : index
    %214 = vector.load %arg14[%c0_92, %c0_93, %c0_94] : memref<2x32x96xf32, #tpu.memory_space<vmem>>, vector<1x32x96xf32>
    %215 = vector.shape_cast %214 : vector<1x32x96xf32> to vector<32x96xf32>
    %cst_95 = arith.constant dense<0.000000e+00> : vector<16x96xf32>
    %216 = tpu.matmul %19, %215, %cst_95 {dimension_numbers = #tpu.dot_dimension_numbers<[1], [0], [0], [1], [0, 0, 1, 1], [], []>} : vector<16x32xf32>, vector<32x96xf32>, vector<16x96xf32> -> vector<16x96xf32>
    %217 = vector.extract_strided_slice %213 {offsets = [0, 0], sizes = [1, 96], strides = [1, 1]} : vector<13x128xf32> to vector<1x96xf32>
    %218 = vector.broadcast %217 : vector<1x96xf32> to vector<16x96xf32>
    %219 = arith.addf %216, %218 : vector<16x96xf32>
    %220 = vector.extract_strided_slice %219 {offsets = [0, 0], sizes = [16, 32], strides = [1, 1]} : vector<16x96xf32> to vector<16x32xf32>
    %221 = vector.extract_strided_slice %219 {offsets = [0, 32], sizes = [16, 32], strides = [1, 1]} : vector<16x96xf32> to vector<16x32xf32>
    %222 = vector.extract_strided_slice %219 {offsets = [0, 64], sizes = [16, 32], strides = [1, 1]} : vector<16x96xf32> to vector<16x32xf32>
    %cst_96 = arith.constant dense<0.000000e+00> : vector<64x32xf32>
    %223 = tpu.matmul %0, %221, %cst_96 {dimension_numbers = #tpu.dot_dimension_numbers<[1], [0], [0], [1], [0, 0, 1, 1], [], []>} : vector<64x16xf32>, vector<16x32xf32>, vector<64x32xf32> -> vector<64x32xf32>
    %224 = arith.mulf %223, %1 : vector<64x32xf32>
    %cst_97 = arith.constant dense<0.000000e+00> : vector<64x32xf32>
    %225 = tpu.matmul %0, %222, %cst_97 {dimension_numbers = #tpu.dot_dimension_numbers<[1], [0], [0], [1], [0, 0, 1, 1], [], []>} : vector<64x16xf32>, vector<16x32xf32>, vector<64x32xf32> -> vector<64x32xf32>
    %226 = arith.mulf %225, %1 : vector<64x32xf32>
    "tpu.trace_start"() <{level = 10 : i32, message = "rd,cd->rc"}> : () -> ()
    %cst_98 = arith.constant dense<0.000000e+00> : vector<16x64xf32>
    %227 = tpu.matmul %220, %224, %cst_98 {dimension_numbers = #tpu.dot_dimension_numbers<[1], [1], [0], [0], [0, 0, 1, 0], [], []>} : vector<16x32xf32>, vector<64x32xf32>, vector<16x64xf32> -> vector<16x64xf32>
    "tpu.trace_stop"() : () -> ()
    %228 = arith.addf %227, %3 : vector<16x64xf32>
    %cst_99 = arith.constant dense<0xFF800000> : vector<16xf32>
    %229 = vector.multi_reduction <maximumf>, %228, %cst_99 [1] : vector<16x64xf32> to vector<16xf32>
    %230 = vector.shape_cast %229 : vector<16xf32> to vector<16x1xf32>
    %231 = vector.broadcast %230 : vector<16x1xf32> to vector<16x64xf32>
    %232 = arith.subf %228, %231 : vector<16x64xf32>
    %233 = math.exp %232 : vector<16x64xf32>
    %cst_100 = arith.constant dense<0.000000e+00> : vector<16x64xf32>
    %234 = tpu.matmul %233, %2, %cst_100 {dimension_numbers = #tpu.dot_dimension_numbers<[1], [0], [0], [1], [0, 0, 1, 1], [], []>} : vector<16x64xf32>, vector<64x64xf32>, vector<16x64xf32> -> vector<16x64xf32>
    %235 = arith.addf %234, %4 : vector<16x64xf32>
    %236 = arith.divf %233, %235 : vector<16x64xf32>
    %cst_101 = arith.constant dense<0.000000e+00> : vector<16x32xf32>
    %237 = tpu.matmul %236, %226, %cst_101 {dimension_numbers = #tpu.dot_dimension_numbers<[1], [0], [0], [1], [0, 0, 1, 1], [], []>} : vector<16x64xf32>, vector<64x32xf32>, vector<16x32xf32> -> vector<16x32xf32>
    %c0_102 = arith.constant 0 : index
    %c0_103 = arith.constant 0 : index
    %c0_104 = arith.constant 0 : index
    %238 = vector.load %arg15[%c0_102, %c0_103, %c0_104] : memref<2x32x32xf32, #tpu.memory_space<vmem>>, vector<1x32x32xf32>
    %239 = vector.shape_cast %238 : vector<1x32x32xf32> to vector<32x32xf32>
    %cst_105 = arith.constant dense<0.000000e+00> : vector<16x32xf32>
    %240 = tpu.matmul %237, %239, %cst_105 {dimension_numbers = #tpu.dot_dimension_numbers<[1], [0], [0], [1], [0, 0, 1, 1], [], []>} : vector<16x32xf32>, vector<32x32xf32>, vector<16x32xf32> -> vector<16x32xf32>
    %241 = vector.extract_strided_slice %213 {offsets = [1, 0], sizes = [1, 32], strides = [1, 1]} : vector<13x128xf32> to vector<1x32xf32>
    %242 = vector.broadcast %241 : vector<1x32xf32> to vector<16x32xf32>
    %243 = arith.addf %240, %242 : vector<16x32xf32>
    %244 = arith.addf %19, %243 : vector<16x32xf32>
    %245 = vector.extract_strided_slice %213 {offsets = [2, 0], sizes = [1, 32], strides = [1, 1]} : vector<13x128xf32> to vector<1x32xf32>
    %246 = vector.extract_strided_slice %213 {offsets = [3, 0], sizes = [1, 32], strides = [1, 1]} : vector<13x128xf32> to vector<1x32xf32>
    %cst_106 = arith.constant dense<0.000000e+00> : vector<16xf32>
    %247 = vector.multi_reduction <add>, %244, %cst_106 [1] : vector<16x32xf32> to vector<16xf32>
    %248 = vector.shape_cast %247 : vector<16xf32> to vector<16x1xf32>
    %cst_107 = arith.constant 3.200000e+01 : f32
    %249 = vector.broadcast %cst_107 : f32 to vector<16x1xf32>
    %250 = arith.divf %248, %249 : vector<16x1xf32>
    %251 = arith.mulf %244, %244 : vector<16x32xf32>
    %cst_108 = arith.constant dense<0.000000e+00> : vector<16xf32>
    %252 = vector.multi_reduction <add>, %251, %cst_108 [1] : vector<16x32xf32> to vector<16xf32>
    %253 = vector.shape_cast %252 : vector<16xf32> to vector<16x1xf32>
    %cst_109 = arith.constant 3.200000e+01 : f32
    %254 = vector.broadcast %cst_109 : f32 to vector<16x1xf32>
    %255 = arith.divf %253, %254 : vector<16x1xf32>
    %256 = vector.broadcast %250 : vector<16x1xf32> to vector<16x32xf32>
    %257 = arith.subf %244, %256 : vector<16x32xf32>
    %258 = arith.mulf %250, %250 : vector<16x1xf32>
    %259 = arith.subf %255, %258 : vector<16x1xf32>
    %cst_110 = arith.constant 9.99999974E-6 : f32
    %260 = vector.broadcast %cst_110 : f32 to vector<16x1xf32>
    %261 = arith.addf %259, %260 : vector<16x1xf32>
    %262 = math.rsqrt %261 : vector<16x1xf32>
    %263 = vector.broadcast %262 : vector<16x1xf32> to vector<16x32xf32>
    %264 = arith.mulf %257, %263 : vector<16x32xf32>
    %265 = vector.broadcast %245 : vector<1x32xf32> to vector<16x32xf32>
    %266 = arith.mulf %264, %265 : vector<16x32xf32>
    %267 = vector.broadcast %246 : vector<1x32xf32> to vector<16x32xf32>
    %268 = arith.addf %266, %267 : vector<16x32xf32>
    %c0_111 = arith.constant 0 : index
    %c0_112 = arith.constant 0 : index
    %c0_113 = arith.constant 0 : index
    %269 = vector.load %arg16[%c0_111, %c0_112, %c0_113] : memref<2x32x32xf32, #tpu.memory_space<vmem>>, vector<1x32x32xf32>
    %270 = vector.shape_cast %269 : vector<1x32x32xf32> to vector<32x32xf32>
    %cst_114 = arith.constant dense<0.000000e+00> : vector<16x32xf32>
    %271 = tpu.matmul %268, %270, %cst_114 {dimension_numbers = #tpu.dot_dimension_numbers<[1], [0], [0], [1], [0, 0, 1, 1], [], []>} : vector<16x32xf32>, vector<32x32xf32>, vector<16x32xf32> -> vector<16x32xf32>
    %272 = vector.extract_strided_slice %213 {offsets = [4, 0], sizes = [1, 32], strides = [1, 1]} : vector<13x128xf32> to vector<1x32xf32>
    %273 = vector.broadcast %272 : vector<1x32xf32> to vector<16x32xf32>
    %274 = arith.addf %271, %273 : vector<16x32xf32>
    %c0_115 = arith.constant 0 : index
    %c0_116 = arith.constant 0 : index
    %c0_117 = arith.constant 0 : index
    %275 = vector.load %arg17[%c0_115, %c0_116, %c0_117] : memref<2x32x64xf32, #tpu.memory_space<vmem>>, vector<1x32x64xf32>
    %276 = vector.shape_cast %275 : vector<1x32x64xf32> to vector<32x64xf32>
    %cst_118 = arith.constant dense<0.000000e+00> : vector<16x64xf32>
    %277 = tpu.matmul %211, %276, %cst_118 {dimension_numbers = #tpu.dot_dimension_numbers<[1], [0], [0], [1], [0, 0, 1, 1], [], []>} : vector<16x32xf32>, vector<32x64xf32>, vector<16x64xf32> -> vector<16x64xf32>
    %278 = vector.extract_strided_slice %213 {offsets = [5, 0], sizes = [1, 64], strides = [1, 1]} : vector<13x128xf32> to vector<1x64xf32>
    %279 = vector.broadcast %278 : vector<1x64xf32> to vector<16x64xf32>
    %280 = arith.addf %277, %279 : vector<16x64xf32>
    %281 = vector.extract_strided_slice %280 {offsets = [0, 0], sizes = [16, 32], strides = [1, 1]} : vector<16x64xf32> to vector<16x32xf32>
    %282 = vector.extract_strided_slice %280 {offsets = [0, 32], sizes = [16, 32], strides = [1, 1]} : vector<16x64xf32> to vector<16x32xf32>
    %cst_119 = arith.constant dense<0.000000e+00> : vector<64x32xf32>
    %283 = tpu.matmul %0, %281, %cst_119 {dimension_numbers = #tpu.dot_dimension_numbers<[1], [0], [0], [1], [0, 0, 1, 1], [], []>} : vector<64x16xf32>, vector<16x32xf32>, vector<64x32xf32> -> vector<64x32xf32>
    %284 = arith.mulf %283, %1 : vector<64x32xf32>
    %cst_120 = arith.constant dense<0.000000e+00> : vector<64x32xf32>
    %285 = tpu.matmul %0, %282, %cst_120 {dimension_numbers = #tpu.dot_dimension_numbers<[1], [0], [0], [1], [0, 0, 1, 1], [], []>} : vector<64x16xf32>, vector<16x32xf32>, vector<64x32xf32> -> vector<64x32xf32>
    %286 = arith.mulf %285, %1 : vector<64x32xf32>
    "tpu.trace_start"() <{level = 10 : i32, message = "rd,cd->rc"}> : () -> ()
    %cst_121 = arith.constant dense<0.000000e+00> : vector<16x64xf32>
    %287 = tpu.matmul %274, %284, %cst_121 {dimension_numbers = #tpu.dot_dimension_numbers<[1], [1], [0], [0], [0, 0, 1, 0], [], []>} : vector<16x32xf32>, vector<64x32xf32>, vector<16x64xf32> -> vector<16x64xf32>
    "tpu.trace_stop"() : () -> ()
    %288 = arith.addf %287, %3 : vector<16x64xf32>
    %cst_122 = arith.constant dense<0xFF800000> : vector<16xf32>
    %289 = vector.multi_reduction <maximumf>, %288, %cst_122 [1] : vector<16x64xf32> to vector<16xf32>
    %290 = vector.shape_cast %289 : vector<16xf32> to vector<16x1xf32>
    %291 = vector.broadcast %290 : vector<16x1xf32> to vector<16x64xf32>
    %292 = arith.subf %288, %291 : vector<16x64xf32>
    %293 = math.exp %292 : vector<16x64xf32>
    %cst_123 = arith.constant dense<0.000000e+00> : vector<16x64xf32>
    %294 = tpu.matmul %293, %2, %cst_123 {dimension_numbers = #tpu.dot_dimension_numbers<[1], [0], [0], [1], [0, 0, 1, 1], [], []>} : vector<16x64xf32>, vector<64x64xf32>, vector<16x64xf32> -> vector<16x64xf32>
    %295 = arith.addf %294, %4 : vector<16x64xf32>
    %296 = arith.divf %293, %295 : vector<16x64xf32>
    %cst_124 = arith.constant dense<0.000000e+00> : vector<16x32xf32>
    %297 = tpu.matmul %296, %286, %cst_124 {dimension_numbers = #tpu.dot_dimension_numbers<[1], [0], [0], [1], [0, 0, 1, 1], [], []>} : vector<16x64xf32>, vector<64x32xf32>, vector<16x32xf32> -> vector<16x32xf32>
    %c0_125 = arith.constant 0 : index
    %c0_126 = arith.constant 0 : index
    %c0_127 = arith.constant 0 : index
    %298 = vector.load %arg18[%c0_125, %c0_126, %c0_127] : memref<2x32x32xf32, #tpu.memory_space<vmem>>, vector<1x32x32xf32>
    %299 = vector.shape_cast %298 : vector<1x32x32xf32> to vector<32x32xf32>
    %cst_128 = arith.constant dense<0.000000e+00> : vector<16x32xf32>
    %300 = tpu.matmul %297, %299, %cst_128 {dimension_numbers = #tpu.dot_dimension_numbers<[1], [0], [0], [1], [0, 0, 1, 1], [], []>} : vector<16x32xf32>, vector<32x32xf32>, vector<16x32xf32> -> vector<16x32xf32>
    %301 = vector.extract_strided_slice %213 {offsets = [6, 0], sizes = [1, 32], strides = [1, 1]} : vector<13x128xf32> to vector<1x32xf32>
    %302 = vector.broadcast %301 : vector<1x32xf32> to vector<16x32xf32>
    %303 = arith.addf %300, %302 : vector<16x32xf32>
    %304 = arith.addf %268, %303 : vector<16x32xf32>
    %305 = vector.extract_strided_slice %213 {offsets = [7, 0], sizes = [1, 32], strides = [1, 1]} : vector<13x128xf32> to vector<1x32xf32>
    %306 = vector.extract_strided_slice %213 {offsets = [8, 0], sizes = [1, 32], strides = [1, 1]} : vector<13x128xf32> to vector<1x32xf32>
    %cst_129 = arith.constant dense<0.000000e+00> : vector<16xf32>
    %307 = vector.multi_reduction <add>, %304, %cst_129 [1] : vector<16x32xf32> to vector<16xf32>
    %308 = vector.shape_cast %307 : vector<16xf32> to vector<16x1xf32>
    %cst_130 = arith.constant 3.200000e+01 : f32
    %309 = vector.broadcast %cst_130 : f32 to vector<16x1xf32>
    %310 = arith.divf %308, %309 : vector<16x1xf32>
    %311 = arith.mulf %304, %304 : vector<16x32xf32>
    %cst_131 = arith.constant dense<0.000000e+00> : vector<16xf32>
    %312 = vector.multi_reduction <add>, %311, %cst_131 [1] : vector<16x32xf32> to vector<16xf32>
    %313 = vector.shape_cast %312 : vector<16xf32> to vector<16x1xf32>
    %cst_132 = arith.constant 3.200000e+01 : f32
    %314 = vector.broadcast %cst_132 : f32 to vector<16x1xf32>
    %315 = arith.divf %313, %314 : vector<16x1xf32>
    %316 = vector.broadcast %310 : vector<16x1xf32> to vector<16x32xf32>
    %317 = arith.subf %304, %316 : vector<16x32xf32>
    %318 = arith.mulf %310, %310 : vector<16x1xf32>
    %319 = arith.subf %315, %318 : vector<16x1xf32>
    %cst_133 = arith.constant 9.99999974E-6 : f32
    %320 = vector.broadcast %cst_133 : f32 to vector<16x1xf32>
    %321 = arith.addf %319, %320 : vector<16x1xf32>
    %322 = math.rsqrt %321 : vector<16x1xf32>
    %323 = vector.broadcast %322 : vector<16x1xf32> to vector<16x32xf32>
    %324 = arith.mulf %317, %323 : vector<16x32xf32>
    %325 = vector.broadcast %305 : vector<1x32xf32> to vector<16x32xf32>
    %326 = arith.mulf %324, %325 : vector<16x32xf32>
    %327 = vector.broadcast %306 : vector<1x32xf32> to vector<16x32xf32>
    %328 = arith.addf %326, %327 : vector<16x32xf32>
    %c0_134 = arith.constant 0 : index
    %c0_135 = arith.constant 0 : index
    %c0_136 = arith.constant 0 : index
    %329 = vector.load %arg19[%c0_134, %c0_135, %c0_136] : memref<2x32x64xf32, #tpu.memory_space<vmem>>, vector<1x32x64xf32>
    %330 = vector.shape_cast %329 : vector<1x32x64xf32> to vector<32x64xf32>
    %cst_137 = arith.constant dense<0.000000e+00> : vector<16x64xf32>
    %331 = tpu.matmul %328, %330, %cst_137 {dimension_numbers = #tpu.dot_dimension_numbers<[1], [0], [0], [1], [0, 0, 1, 1], [], []>} : vector<16x32xf32>, vector<32x64xf32>, vector<16x64xf32> -> vector<16x64xf32>
    %332 = vector.extract_strided_slice %213 {offsets = [9, 0], sizes = [1, 64], strides = [1, 1]} : vector<13x128xf32> to vector<1x64xf32>
    %333 = vector.broadcast %332 : vector<1x64xf32> to vector<16x64xf32>
    %334 = arith.addf %331, %333 : vector<16x64xf32>
    %cst_138 = arith.constant 0.000000e+00 : f32
    %335 = vector.broadcast %cst_138 : f32 to vector<16x64xf32>
    %336 = arith.maximumf %334, %335 : vector<16x64xf32>
    %c0_139 = arith.constant 0 : index
    %c0_140 = arith.constant 0 : index
    %c0_141 = arith.constant 0 : index
    %337 = vector.load %arg20[%c0_139, %c0_140, %c0_141] : memref<2x64x32xf32, #tpu.memory_space<vmem>>, vector<1x64x32xf32>
    %338 = vector.shape_cast %337 : vector<1x64x32xf32> to vector<64x32xf32>
    %cst_142 = arith.constant dense<0.000000e+00> : vector<16x32xf32>
    %339 = tpu.matmul %336, %338, %cst_142 {dimension_numbers = #tpu.dot_dimension_numbers<[1], [0], [0], [1], [0, 0, 1, 1], [], []>} : vector<16x64xf32>, vector<64x32xf32>, vector<16x32xf32> -> vector<16x32xf32>
    %340 = vector.extract_strided_slice %213 {offsets = [10, 0], sizes = [1, 32], strides = [1, 1]} : vector<13x128xf32> to vector<1x32xf32>
    %341 = vector.broadcast %340 : vector<1x32xf32> to vector<16x32xf32>
    %342 = arith.addf %339, %341 : vector<16x32xf32>
    %343 = arith.addf %328, %342 : vector<16x32xf32>
    %344 = vector.extract_strided_slice %213 {offsets = [11, 0], sizes = [1, 32], strides = [1, 1]} : vector<13x128xf32> to vector<1x32xf32>
    %345 = vector.extract_strided_slice %213 {offsets = [12, 0], sizes = [1, 32], strides = [1, 1]} : vector<13x128xf32> to vector<1x32xf32>
    %cst_143 = arith.constant dense<0.000000e+00> : vector<16xf32>
    %346 = vector.multi_reduction <add>, %343, %cst_143 [1] : vector<16x32xf32> to vector<16xf32>
    %347 = vector.shape_cast %346 : vector<16xf32> to vector<16x1xf32>
    %cst_144 = arith.constant 3.200000e+01 : f32
    %348 = vector.broadcast %cst_144 : f32 to vector<16x1xf32>
    %349 = arith.divf %347, %348 : vector<16x1xf32>
    %350 = arith.mulf %343, %343 : vector<16x32xf32>
    %cst_145 = arith.constant dense<0.000000e+00> : vector<16xf32>
    %351 = vector.multi_reduction <add>, %350, %cst_145 [1] : vector<16x32xf32> to vector<16xf32>
    %352 = vector.shape_cast %351 : vector<16xf32> to vector<16x1xf32>
    %cst_146 = arith.constant 3.200000e+01 : f32
    %353 = vector.broadcast %cst_146 : f32 to vector<16x1xf32>
    %354 = arith.divf %352, %353 : vector<16x1xf32>
    %355 = vector.broadcast %349 : vector<16x1xf32> to vector<16x32xf32>
    %356 = arith.subf %343, %355 : vector<16x32xf32>
    %357 = arith.mulf %349, %349 : vector<16x1xf32>
    %358 = arith.subf %354, %357 : vector<16x1xf32>
    %cst_147 = arith.constant 9.99999974E-6 : f32
    %359 = vector.broadcast %cst_147 : f32 to vector<16x1xf32>
    %360 = arith.addf %358, %359 : vector<16x1xf32>
    %361 = math.rsqrt %360 : vector<16x1xf32>
    %362 = vector.broadcast %361 : vector<16x1xf32> to vector<16x32xf32>
    %363 = arith.mulf %356, %362 : vector<16x32xf32>
    %364 = vector.broadcast %344 : vector<1x32xf32> to vector<16x32xf32>
    %365 = arith.mulf %363, %364 : vector<16x32xf32>
    %366 = vector.broadcast %345 : vector<1x32xf32> to vector<16x32xf32>
    %367 = arith.addf %365, %366 : vector<16x32xf32>
    %c1_148 = arith.constant 1 : index
    %c0_149 = arith.constant 0 : index
    %c0_150 = arith.constant 0 : index
    %368 = vector.load %arg21[%c1_148, %c0_149, %c0_150] : memref<2x13x128xf32, #tpu.memory_space<vmem>>, vector<1x13x128xf32>
    %369 = vector.shape_cast %368 : vector<1x13x128xf32> to vector<13x128xf32>
    %c1_151 = arith.constant 1 : index
    %c0_152 = arith.constant 0 : index
    %c0_153 = arith.constant 0 : index
    %370 = vector.load %arg14[%c1_151, %c0_152, %c0_153] : memref<2x32x96xf32, #tpu.memory_space<vmem>>, vector<1x32x96xf32>
    %371 = vector.shape_cast %370 : vector<1x32x96xf32> to vector<32x96xf32>
    %cst_154 = arith.constant dense<0.000000e+00> : vector<16x96xf32>
    %372 = tpu.matmul %367, %371, %cst_154 {dimension_numbers = #tpu.dot_dimension_numbers<[1], [0], [0], [1], [0, 0, 1, 1], [], []>} : vector<16x32xf32>, vector<32x96xf32>, vector<16x96xf32> -> vector<16x96xf32>
    %373 = vector.extract_strided_slice %369 {offsets = [0, 0], sizes = [1, 96], strides = [1, 1]} : vector<13x128xf32> to vector<1x96xf32>
    %374 = vector.broadcast %373 : vector<1x96xf32> to vector<16x96xf32>
    %375 = arith.addf %372, %374 : vector<16x96xf32>
    %376 = vector.extract_strided_slice %375 {offsets = [0, 0], sizes = [16, 32], strides = [1, 1]} : vector<16x96xf32> to vector<16x32xf32>
    %377 = vector.extract_strided_slice %375 {offsets = [0, 32], sizes = [16, 32], strides = [1, 1]} : vector<16x96xf32> to vector<16x32xf32>
    %378 = vector.extract_strided_slice %375 {offsets = [0, 64], sizes = [16, 32], strides = [1, 1]} : vector<16x96xf32> to vector<16x32xf32>
    %cst_155 = arith.constant dense<0.000000e+00> : vector<64x32xf32>
    %379 = tpu.matmul %0, %377, %cst_155 {dimension_numbers = #tpu.dot_dimension_numbers<[1], [0], [0], [1], [0, 0, 1, 1], [], []>} : vector<64x16xf32>, vector<16x32xf32>, vector<64x32xf32> -> vector<64x32xf32>
    %380 = arith.mulf %379, %1 : vector<64x32xf32>
    %cst_156 = arith.constant dense<0.000000e+00> : vector<64x32xf32>
    %381 = tpu.matmul %0, %378, %cst_156 {dimension_numbers = #tpu.dot_dimension_numbers<[1], [0], [0], [1], [0, 0, 1, 1], [], []>} : vector<64x16xf32>, vector<16x32xf32>, vector<64x32xf32> -> vector<64x32xf32>
    %382 = arith.mulf %381, %1 : vector<64x32xf32>
    "tpu.trace_start"() <{level = 10 : i32, message = "rd,cd->rc"}> : () -> ()
    %cst_157 = arith.constant dense<0.000000e+00> : vector<16x64xf32>
    %383 = tpu.matmul %376, %380, %cst_157 {dimension_numbers = #tpu.dot_dimension_numbers<[1], [1], [0], [0], [0, 0, 1, 0], [], []>} : vector<16x32xf32>, vector<64x32xf32>, vector<16x64xf32> -> vector<16x64xf32>
    "tpu.trace_stop"() : () -> ()
    %384 = arith.addf %383, %3 : vector<16x64xf32>
    %cst_158 = arith.constant dense<0xFF800000> : vector<16xf32>
    %385 = vector.multi_reduction <maximumf>, %384, %cst_158 [1] : vector<16x64xf32> to vector<16xf32>
    %386 = vector.shape_cast %385 : vector<16xf32> to vector<16x1xf32>
    %387 = vector.broadcast %386 : vector<16x1xf32> to vector<16x64xf32>
    %388 = arith.subf %384, %387 : vector<16x64xf32>
    %389 = math.exp %388 : vector<16x64xf32>
    %cst_159 = arith.constant dense<0.000000e+00> : vector<16x64xf32>
    %390 = tpu.matmul %389, %2, %cst_159 {dimension_numbers = #tpu.dot_dimension_numbers<[1], [0], [0], [1], [0, 0, 1, 1], [], []>} : vector<16x64xf32>, vector<64x64xf32>, vector<16x64xf32> -> vector<16x64xf32>
    %391 = arith.addf %390, %4 : vector<16x64xf32>
    %392 = arith.divf %389, %391 : vector<16x64xf32>
    %cst_160 = arith.constant dense<0.000000e+00> : vector<16x32xf32>
    %393 = tpu.matmul %392, %382, %cst_160 {dimension_numbers = #tpu.dot_dimension_numbers<[1], [0], [0], [1], [0, 0, 1, 1], [], []>} : vector<16x64xf32>, vector<64x32xf32>, vector<16x32xf32> -> vector<16x32xf32>
    %c1_161 = arith.constant 1 : index
    %c0_162 = arith.constant 0 : index
    %c0_163 = arith.constant 0 : index
    %394 = vector.load %arg15[%c1_161, %c0_162, %c0_163] : memref<2x32x32xf32, #tpu.memory_space<vmem>>, vector<1x32x32xf32>
    %395 = vector.shape_cast %394 : vector<1x32x32xf32> to vector<32x32xf32>
    %cst_164 = arith.constant dense<0.000000e+00> : vector<16x32xf32>
    %396 = tpu.matmul %393, %395, %cst_164 {dimension_numbers = #tpu.dot_dimension_numbers<[1], [0], [0], [1], [0, 0, 1, 1], [], []>} : vector<16x32xf32>, vector<32x32xf32>, vector<16x32xf32> -> vector<16x32xf32>
    %397 = vector.extract_strided_slice %369 {offsets = [1, 0], sizes = [1, 32], strides = [1, 1]} : vector<13x128xf32> to vector<1x32xf32>
    %398 = vector.broadcast %397 : vector<1x32xf32> to vector<16x32xf32>
    %399 = arith.addf %396, %398 : vector<16x32xf32>
    %400 = arith.addf %367, %399 : vector<16x32xf32>
    %401 = vector.extract_strided_slice %369 {offsets = [2, 0], sizes = [1, 32], strides = [1, 1]} : vector<13x128xf32> to vector<1x32xf32>
    %402 = vector.extract_strided_slice %369 {offsets = [3, 0], sizes = [1, 32], strides = [1, 1]} : vector<13x128xf32> to vector<1x32xf32>
    %cst_165 = arith.constant dense<0.000000e+00> : vector<16xf32>
    %403 = vector.multi_reduction <add>, %400, %cst_165 [1] : vector<16x32xf32> to vector<16xf32>
    %404 = vector.shape_cast %403 : vector<16xf32> to vector<16x1xf32>
    %cst_166 = arith.constant 3.200000e+01 : f32
    %405 = vector.broadcast %cst_166 : f32 to vector<16x1xf32>
    %406 = arith.divf %404, %405 : vector<16x1xf32>
    %407 = arith.mulf %400, %400 : vector<16x32xf32>
    %cst_167 = arith.constant dense<0.000000e+00> : vector<16xf32>
    %408 = vector.multi_reduction <add>, %407, %cst_167 [1] : vector<16x32xf32> to vector<16xf32>
    %409 = vector.shape_cast %408 : vector<16xf32> to vector<16x1xf32>
    %cst_168 = arith.constant 3.200000e+01 : f32
    %410 = vector.broadcast %cst_168 : f32 to vector<16x1xf32>
    %411 = arith.divf %409, %410 : vector<16x1xf32>
    %412 = vector.broadcast %406 : vector<16x1xf32> to vector<16x32xf32>
    %413 = arith.subf %400, %412 : vector<16x32xf32>
    %414 = arith.mulf %406, %406 : vector<16x1xf32>
    %415 = arith.subf %411, %414 : vector<16x1xf32>
    %cst_169 = arith.constant 9.99999974E-6 : f32
    %416 = vector.broadcast %cst_169 : f32 to vector<16x1xf32>
    %417 = arith.addf %415, %416 : vector<16x1xf32>
    %418 = math.rsqrt %417 : vector<16x1xf32>
    %419 = vector.broadcast %418 : vector<16x1xf32> to vector<16x32xf32>
    %420 = arith.mulf %413, %419 : vector<16x32xf32>
    %421 = vector.broadcast %401 : vector<1x32xf32> to vector<16x32xf32>
    %422 = arith.mulf %420, %421 : vector<16x32xf32>
    %423 = vector.broadcast %402 : vector<1x32xf32> to vector<16x32xf32>
    %424 = arith.addf %422, %423 : vector<16x32xf32>
    %c1_170 = arith.constant 1 : index
    %c0_171 = arith.constant 0 : index
    %c0_172 = arith.constant 0 : index
    %425 = vector.load %arg16[%c1_170, %c0_171, %c0_172] : memref<2x32x32xf32, #tpu.memory_space<vmem>>, vector<1x32x32xf32>
    %426 = vector.shape_cast %425 : vector<1x32x32xf32> to vector<32x32xf32>
    %cst_173 = arith.constant dense<0.000000e+00> : vector<16x32xf32>
    %427 = tpu.matmul %424, %426, %cst_173 {dimension_numbers = #tpu.dot_dimension_numbers<[1], [0], [0], [1], [0, 0, 1, 1], [], []>} : vector<16x32xf32>, vector<32x32xf32>, vector<16x32xf32> -> vector<16x32xf32>
    %428 = vector.extract_strided_slice %369 {offsets = [4, 0], sizes = [1, 32], strides = [1, 1]} : vector<13x128xf32> to vector<1x32xf32>
    %429 = vector.broadcast %428 : vector<1x32xf32> to vector<16x32xf32>
    %430 = arith.addf %427, %429 : vector<16x32xf32>
    %c1_174 = arith.constant 1 : index
    %c0_175 = arith.constant 0 : index
    %c0_176 = arith.constant 0 : index
    %431 = vector.load %arg17[%c1_174, %c0_175, %c0_176] : memref<2x32x64xf32, #tpu.memory_space<vmem>>, vector<1x32x64xf32>
    %432 = vector.shape_cast %431 : vector<1x32x64xf32> to vector<32x64xf32>
    %cst_177 = arith.constant dense<0.000000e+00> : vector<16x64xf32>
    %433 = tpu.matmul %211, %432, %cst_177 {dimension_numbers = #tpu.dot_dimension_numbers<[1], [0], [0], [1], [0, 0, 1, 1], [], []>} : vector<16x32xf32>, vector<32x64xf32>, vector<16x64xf32> -> vector<16x64xf32>
    %434 = vector.extract_strided_slice %369 {offsets = [5, 0], sizes = [1, 64], strides = [1, 1]} : vector<13x128xf32> to vector<1x64xf32>
    %435 = vector.broadcast %434 : vector<1x64xf32> to vector<16x64xf32>
    %436 = arith.addf %433, %435 : vector<16x64xf32>
    %437 = vector.extract_strided_slice %436 {offsets = [0, 0], sizes = [16, 32], strides = [1, 1]} : vector<16x64xf32> to vector<16x32xf32>
    %438 = vector.extract_strided_slice %436 {offsets = [0, 32], sizes = [16, 32], strides = [1, 1]} : vector<16x64xf32> to vector<16x32xf32>
    %cst_178 = arith.constant dense<0.000000e+00> : vector<64x32xf32>
    %439 = tpu.matmul %0, %437, %cst_178 {dimension_numbers = #tpu.dot_dimension_numbers<[1], [0], [0], [1], [0, 0, 1, 1], [], []>} : vector<64x16xf32>, vector<16x32xf32>, vector<64x32xf32> -> vector<64x32xf32>
    %440 = arith.mulf %439, %1 : vector<64x32xf32>
    %cst_179 = arith.constant dense<0.000000e+00> : vector<64x32xf32>
    %441 = tpu.matmul %0, %438, %cst_179 {dimension_numbers = #tpu.dot_dimension_numbers<[1], [0], [0], [1], [0, 0, 1, 1], [], []>} : vector<64x16xf32>, vector<16x32xf32>, vector<64x32xf32> -> vector<64x32xf32>
    %442 = arith.mulf %441, %1 : vector<64x32xf32>
    "tpu.trace_start"() <{level = 10 : i32, message = "rd,cd->rc"}> : () -> ()
    %cst_180 = arith.constant dense<0.000000e+00> : vector<16x64xf32>
    %443 = tpu.matmul %430, %440, %cst_180 {dimension_numbers = #tpu.dot_dimension_numbers<[1], [1], [0], [0], [0, 0, 1, 0], [], []>} : vector<16x32xf32>, vector<64x32xf32>, vector<16x64xf32> -> vector<16x64xf32>
    "tpu.trace_stop"() : () -> ()
    %444 = arith.addf %443, %3 : vector<16x64xf32>
    %cst_181 = arith.constant dense<0xFF800000> : vector<16xf32>
    %445 = vector.multi_reduction <maximumf>, %444, %cst_181 [1] : vector<16x64xf32> to vector<16xf32>
    %446 = vector.shape_cast %445 : vector<16xf32> to vector<16x1xf32>
    %447 = vector.broadcast %446 : vector<16x1xf32> to vector<16x64xf32>
    %448 = arith.subf %444, %447 : vector<16x64xf32>
    %449 = math.exp %448 : vector<16x64xf32>
    %cst_182 = arith.constant dense<0.000000e+00> : vector<16x64xf32>
    %450 = tpu.matmul %449, %2, %cst_182 {dimension_numbers = #tpu.dot_dimension_numbers<[1], [0], [0], [1], [0, 0, 1, 1], [], []>} : vector<16x64xf32>, vector<64x64xf32>, vector<16x64xf32> -> vector<16x64xf32>
    %451 = arith.addf %450, %4 : vector<16x64xf32>
    %452 = arith.divf %449, %451 : vector<16x64xf32>
    %cst_183 = arith.constant dense<0.000000e+00> : vector<16x32xf32>
    %453 = tpu.matmul %452, %442, %cst_183 {dimension_numbers = #tpu.dot_dimension_numbers<[1], [0], [0], [1], [0, 0, 1, 1], [], []>} : vector<16x64xf32>, vector<64x32xf32>, vector<16x32xf32> -> vector<16x32xf32>
    %c1_184 = arith.constant 1 : index
    %c0_185 = arith.constant 0 : index
    %c0_186 = arith.constant 0 : index
    %454 = vector.load %arg18[%c1_184, %c0_185, %c0_186] : memref<2x32x32xf32, #tpu.memory_space<vmem>>, vector<1x32x32xf32>
    %455 = vector.shape_cast %454 : vector<1x32x32xf32> to vector<32x32xf32>
    %cst_187 = arith.constant dense<0.000000e+00> : vector<16x32xf32>
    %456 = tpu.matmul %453, %455, %cst_187 {dimension_numbers = #tpu.dot_dimension_numbers<[1], [0], [0], [1], [0, 0, 1, 1], [], []>} : vector<16x32xf32>, vector<32x32xf32>, vector<16x32xf32> -> vector<16x32xf32>
    %457 = vector.extract_strided_slice %369 {offsets = [6, 0], sizes = [1, 32], strides = [1, 1]} : vector<13x128xf32> to vector<1x32xf32>
    %458 = vector.broadcast %457 : vector<1x32xf32> to vector<16x32xf32>
    %459 = arith.addf %456, %458 : vector<16x32xf32>
    %460 = arith.addf %424, %459 : vector<16x32xf32>
    %461 = vector.extract_strided_slice %369 {offsets = [7, 0], sizes = [1, 32], strides = [1, 1]} : vector<13x128xf32> to vector<1x32xf32>
    %462 = vector.extract_strided_slice %369 {offsets = [8, 0], sizes = [1, 32], strides = [1, 1]} : vector<13x128xf32> to vector<1x32xf32>
    %cst_188 = arith.constant dense<0.000000e+00> : vector<16xf32>
    %463 = vector.multi_reduction <add>, %460, %cst_188 [1] : vector<16x32xf32> to vector<16xf32>
    %464 = vector.shape_cast %463 : vector<16xf32> to vector<16x1xf32>
    %cst_189 = arith.constant 3.200000e+01 : f32
    %465 = vector.broadcast %cst_189 : f32 to vector<16x1xf32>
    %466 = arith.divf %464, %465 : vector<16x1xf32>
    %467 = arith.mulf %460, %460 : vector<16x32xf32>
    %cst_190 = arith.constant dense<0.000000e+00> : vector<16xf32>
    %468 = vector.multi_reduction <add>, %467, %cst_190 [1] : vector<16x32xf32> to vector<16xf32>
    %469 = vector.shape_cast %468 : vector<16xf32> to vector<16x1xf32>
    %cst_191 = arith.constant 3.200000e+01 : f32
    %470 = vector.broadcast %cst_191 : f32 to vector<16x1xf32>
    %471 = arith.divf %469, %470 : vector<16x1xf32>
    %472 = vector.broadcast %466 : vector<16x1xf32> to vector<16x32xf32>
    %473 = arith.subf %460, %472 : vector<16x32xf32>
    %474 = arith.mulf %466, %466 : vector<16x1xf32>
    %475 = arith.subf %471, %474 : vector<16x1xf32>
    %cst_192 = arith.constant 9.99999974E-6 : f32
    %476 = vector.broadcast %cst_192 : f32 to vector<16x1xf32>
    %477 = arith.addf %475, %476 : vector<16x1xf32>
    %478 = math.rsqrt %477 : vector<16x1xf32>
    %479 = vector.broadcast %478 : vector<16x1xf32> to vector<16x32xf32>
    %480 = arith.mulf %473, %479 : vector<16x32xf32>
    %481 = vector.broadcast %461 : vector<1x32xf32> to vector<16x32xf32>
    %482 = arith.mulf %480, %481 : vector<16x32xf32>
    %483 = vector.broadcast %462 : vector<1x32xf32> to vector<16x32xf32>
    %484 = arith.addf %482, %483 : vector<16x32xf32>
    %c1_193 = arith.constant 1 : index
    %c0_194 = arith.constant 0 : index
    %c0_195 = arith.constant 0 : index
    %485 = vector.load %arg19[%c1_193, %c0_194, %c0_195] : memref<2x32x64xf32, #tpu.memory_space<vmem>>, vector<1x32x64xf32>
    %486 = vector.shape_cast %485 : vector<1x32x64xf32> to vector<32x64xf32>
    %cst_196 = arith.constant dense<0.000000e+00> : vector<16x64xf32>
    %487 = tpu.matmul %484, %486, %cst_196 {dimension_numbers = #tpu.dot_dimension_numbers<[1], [0], [0], [1], [0, 0, 1, 1], [], []>} : vector<16x32xf32>, vector<32x64xf32>, vector<16x64xf32> -> vector<16x64xf32>
    %488 = vector.extract_strided_slice %369 {offsets = [9, 0], sizes = [1, 64], strides = [1, 1]} : vector<13x128xf32> to vector<1x64xf32>
    %489 = vector.broadcast %488 : vector<1x64xf32> to vector<16x64xf32>
    %490 = arith.addf %487, %489 : vector<16x64xf32>
    %cst_197 = arith.constant 0.000000e+00 : f32
    %491 = vector.broadcast %cst_197 : f32 to vector<16x64xf32>
    %492 = arith.maximumf %490, %491 : vector<16x64xf32>
    %c1_198 = arith.constant 1 : index
    %c0_199 = arith.constant 0 : index
    %c0_200 = arith.constant 0 : index
    %493 = vector.load %arg20[%c1_198, %c0_199, %c0_200] : memref<2x64x32xf32, #tpu.memory_space<vmem>>, vector<1x64x32xf32>
    %494 = vector.shape_cast %493 : vector<1x64x32xf32> to vector<64x32xf32>
    %cst_201 = arith.constant dense<0.000000e+00> : vector<16x32xf32>
    %495 = tpu.matmul %492, %494, %cst_201 {dimension_numbers = #tpu.dot_dimension_numbers<[1], [0], [0], [1], [0, 0, 1, 1], [], []>} : vector<16x64xf32>, vector<64x32xf32>, vector<16x32xf32> -> vector<16x32xf32>
    %496 = vector.extract_strided_slice %369 {offsets = [10, 0], sizes = [1, 32], strides = [1, 1]} : vector<13x128xf32> to vector<1x32xf32>
    %497 = vector.broadcast %496 : vector<1x32xf32> to vector<16x32xf32>
    %498 = arith.addf %495, %497 : vector<16x32xf32>
    %499 = arith.addf %484, %498 : vector<16x32xf32>
    %500 = vector.extract_strided_slice %369 {offsets = [11, 0], sizes = [1, 32], strides = [1, 1]} : vector<13x128xf32> to vector<1x32xf32>
    %501 = vector.extract_strided_slice %369 {offsets = [12, 0], sizes = [1, 32], strides = [1, 1]} : vector<13x128xf32> to vector<1x32xf32>
    %cst_202 = arith.constant dense<0.000000e+00> : vector<16xf32>
    %502 = vector.multi_reduction <add>, %499, %cst_202 [1] : vector<16x32xf32> to vector<16xf32>
    %503 = vector.shape_cast %502 : vector<16xf32> to vector<16x1xf32>
    %cst_203 = arith.constant 3.200000e+01 : f32
    %504 = vector.broadcast %cst_203 : f32 to vector<16x1xf32>
    %505 = arith.divf %503, %504 : vector<16x1xf32>
    %506 = arith.mulf %499, %499 : vector<16x32xf32>
    %cst_204 = arith.constant dense<0.000000e+00> : vector<16xf32>
    %507 = vector.multi_reduction <add>, %506, %cst_204 [1] : vector<16x32xf32> to vector<16xf32>
    %508 = vector.shape_cast %507 : vector<16xf32> to vector<16x1xf32>
    %cst_205 = arith.constant 3.200000e+01 : f32
    %509 = vector.broadcast %cst_205 : f32 to vector<16x1xf32>
    %510 = arith.divf %508, %509 : vector<16x1xf32>
    %511 = vector.broadcast %505 : vector<16x1xf32> to vector<16x32xf32>
    %512 = arith.subf %499, %511 : vector<16x32xf32>
    %513 = arith.mulf %505, %505 : vector<16x1xf32>
    %514 = arith.subf %510, %513 : vector<16x1xf32>
    %cst_206 = arith.constant 9.99999974E-6 : f32
    %515 = vector.broadcast %cst_206 : f32 to vector<16x1xf32>
    %516 = arith.addf %514, %515 : vector<16x1xf32>
    %517 = math.rsqrt %516 : vector<16x1xf32>
    %518 = vector.broadcast %517 : vector<16x1xf32> to vector<16x32xf32>
    %519 = arith.mulf %512, %518 : vector<16x32xf32>
    %520 = vector.broadcast %500 : vector<1x32xf32> to vector<16x32xf32>
    %521 = arith.mulf %519, %520 : vector<16x32xf32>
    %522 = vector.broadcast %501 : vector<1x32xf32> to vector<16x32xf32>
    %523 = arith.addf %521, %522 : vector<16x32xf32>
    %c0_207 = arith.constant 0 : index
    %c0_208 = arith.constant 0 : index
    %524 = vector.load %arg22[%c0_207, %c0_208] : memref<32x128xf32, #tpu.memory_space<vmem>>, vector<32x128xf32>
    %cst_209 = arith.constant dense<0.000000e+00> : vector<16x128xf32>
    %525 = tpu.matmul %523, %524, %cst_209 {dimension_numbers = #tpu.dot_dimension_numbers<[1], [0], [0], [1], [0, 0, 1, 1], [], []>} : vector<16x32xf32>, vector<32x128xf32>, vector<16x128xf32> -> vector<16x128xf32>
    %c0_210 = arith.constant 0 : index
    %c0_211 = arith.constant 0 : index
    %526 = vector.load %arg23[%c0_210, %c0_211] : memref<1x128xf32, #tpu.memory_space<vmem>>, vector<1x128xf32>
    %527 = vector.broadcast %526 : vector<1x128xf32> to vector<16x128xf32>
    %528 = arith.addf %525, %527 : vector<16x128xf32>
    %c0_212 = arith.constant 0 : index
    %c0_213 = arith.constant 0 : index
    %529 = vector.load %arg24[%c0_212, %c0_213] : memref<16x128xf32, #tpu.memory_space<vmem>>, vector<16x128xf32>
    tpu.vector_store %arg24[%c0_212, %c0_213], %528 {strides = array<i32>} : memref<16x128xf32, #tpu.memory_space<vmem>>, vector<16x128xf32>,
    return
  }
}

</mosaic_0001>

<llo_original>
// kernel: transformer_forward.1
$region0: #{transformer_forward.1}
  #allocation0 [shape = 'u32[]', space=smem, size = 0x4, offset = 0x4, fixed_abs, tag = 'smem constant byte address 0x4 - core index']
  #allocation1 [shape = 'u32[144,128]{1,0:T(1,128)}', space=vmem, size = 0x12000, scoped, tag = 'internal scratch']
  %s0 = inlined_call_operand.vmem [shape: s32[16,1], index: 0, kind: input, shape index: {}]
  %s1 = inlined_call_operand.vmem [shape: s32[16,1], index: 1, kind: input, shape index: {}]
  %s2 = inlined_call_operand.vmem [shape: f32[128,32], index: 2, kind: input, shape index: {}]
  %s3 = inlined_call_operand.vmem [shape: f32[128,32], index: 3, kind: input, shape index: {}]
  %s4 = inlined_call_operand.vmem [shape: f32[64,16], index: 4, kind: input, shape index: {}]
  %s5 = inlined_call_operand.vmem [shape: f32[64,32], index: 5, kind: input, shape index: {}]
  %s6 = inlined_call_operand.vmem [shape: f32[64,64], index: 6, kind: input, shape index: {}]
  %s7 = inlined_call_operand.vmem [shape: f32[16,64], index: 7, kind: input, shape index: {}]
  %s8 = inlined_call_operand.vmem [shape: f32[16,64], index: 8, kind: input, shape index: {}]
  %s9 = inlined_call_operand.vmem [shape: f32[2,32,96], index: 9, kind: input, shape index: {}]
  %s10 = inlined_call_operand.vmem [shape: f32[2,32,32], index: 10, kind: input, shape index: {}]
  %s11 = inlined_call_operand.vmem [shape: f32[2,32,64], index: 11, kind: input, shape index: {}]
  %s12 = inlined_call_operand.vmem [shape: f32[2,64,32], index: 12, kind: input, shape index: {}]
  %s13 = inlined_call_operand.vmem [shape: f32[2,8,128], index: 13, kind: input, shape index: {}]
  %s14 = inlined_call_operand.vmem [shape: f32[2,32,96], index: 14, kind: input, shape index: {}]
  %s15 = inlined_call_operand.vmem [shape: f32[2,32,32], index: 15, kind: input, shape index: {}]
  %s16 = inlined_call_operand.vmem [shape: f32[2,32,32], index: 16, kind: input, shape index: {}]
  %s17 = inlined_call_operand.vmem [shape: f32[2,32,64], index: 17, kind: input, shape index: {}]
  %s18 = inlined_call_operand.vmem [shape: f32[2,32,32], index: 18, kind: input, shape index: {}]
  %s19 = inlined_call_operand.vmem [shape: f32[2,32,64], index: 19, kind: input, shape index: {}]
  %s20 = inlined_call_operand.vmem [shape: f32[2,64,32], index: 20, kind: input, shape index: {}]
  %s21 = inlined_call_operand.vmem [shape: f32[2,13,128], index: 21, kind: input, shape index: {}]
  %s22 = inlined_call_operand.vmem [shape: f32[32,128], index: 22, kind: input, shape index: {}]
  %s23 = inlined_call_operand.vmem [shape: f32[1,128], index: 23, kind: input, shape index: {}]
  %s24 = inlined_call_operand.hbm [shape: f32[16,128], index: 24, kind: output, shape index: {}]
  %s25 = sld [smem:[#allocation0]]
  $region106: #{transformer_forward.1} parent=0
    _
  %s27 = ssub.s32 1, %s25
  %s28 = scalar_select 0, %s27, %s25
  $region1: #{transformer_forward.1} parent=0
    #allocation2 [shape = 'u8[8192]{0}', space=vmem, size = 0x2000, scoped, tag = 'output window, operand 0, single buffered']
    #allocation3 [shape = 's32[1]{0}', space=sflag, size = 0x4, scoped, tag = 'scoped memory for transformer_forward.1']
    %29 = vsyncpa [#allocation3], 0
    // Predicated region
    $region2: #{transformer_forward.1} parent=1 // pred_check
      _
    $region3: #{transformer_forward.1} parent=1 // pred_check_branch
      %31 = sbr.rel (0) target = $region5
    $region4: #{transformer_forward.1} parent=1 // pred_region
      _
    $region5: #{transformer_forward.1} parent=1 // pred_fallthru
      _
    // Predicated region
    $region6: #{transformer_forward.1} parent=1 // pred_check
      _
    $region7: #{transformer_forward.1} parent=1 // pred_check_branch
      %33 = sbr.rel (0) target = $region9
    $region8: #{transformer_forward.1} parent=1 // pred_region
      _
    $region9: #{transformer_forward.1} parent=1 // pred_fallthru
      _
    // Predicated region
    $region10: #{transformer_forward.1} parent=1 // pred_check
      _
    $region11: #{transformer_forward.1} parent=1 // pred_check_branch
      %35 = sbr.rel (0) target = $region13
    $region12: #{transformer_forward.1} parent=1 // pred_region
      _
    $region13: #{transformer_forward.1} parent=1 // pred_fallthru
      _
    // Predicated region
    $region14: #{transformer_forward.1} parent=1 // pred_check
      _
    $region15: #{transformer_forward.1} parent=1 // pred_check_branch
      %37 = sbr.rel (0) target = $region17
    $region16: #{transformer_forward.1} parent=1 // pred_region
      _
    $region17: #{transformer_forward.1} parent=1 // pred_fallthru
      _
    // Predicated region
    $region18: #{transformer_forward.1} parent=1 // pred_check
      _
    $region19: #{transformer_forward.1} parent=1 // pred_check_branch
      %39 = sbr.rel (0) target = $region21
    $region20: #{transformer_forward.1} parent=1 // pred_region
      _
    $region21: #{transformer_forward.1} parent=1 // pred_fallthru
      _
    // Predicated region
    $region22: #{transformer_forward.1} parent=1 // pred_check
      _
    $region23: #{transformer_forward.1} parent=1 // pred_check_branch
      %41 = sbr.rel (0) target = $region25
    $region24: #{transformer_forward.1} parent=1 // pred_region
      _
    $region25: #{transformer_forward.1} parent=1 // pred_fallthru
      _
    // Predicated region
    $region26: #{transformer_forward.1} parent=1 // pred_check
      _
    $region27: #{transformer_forward.1} parent=1 // pred_check_branch
      %43 = sbr.rel (0) target = $region29
    $region28: #{transformer_forward.1} parent=1 // pred_region
      _
    $region29: #{transformer_forward.1} parent=1 // pred_fallthru
      _
    // Predicated region
    $region30: #{transformer_forward.1} parent=1 // pred_check
      _
    $region31: #{transformer_forward.1} parent=1 // pred_check_branch
      %45 = sbr.rel (0) target = $region33
    $region32: #{transformer_forward.1} parent=1 // pred_region
      _
    $region33: #{transformer_forward.1} parent=1 // pred_fallthru
      _
    // Predicated region
    $region34: #{transformer_forward.1} parent=1 // pred_check
      _
    $region35: #{transformer_forward.1} parent=1 // pred_check_branch
      %47 = sbr.rel (0) target = $region37
    $region36: #{transformer_forward.1} parent=1 // pred_region
      _
    $region37: #{transformer_forward.1} parent=1 // pred_fallthru
      _
    // Predicated region
    $region38: #{transformer_forward.1} parent=1 // pred_check
      _
    $region39: #{transformer_forward.1} parent=1 // pred_check_branch
      %49 = sbr.rel (0) target = $region41
    $region40: #{transformer_forward.1} parent=1 // pred_region
      _
    $region41: #{transformer_forward.1} parent=1 // pred_fallthru
      _
    // Predicated region
    $region42: #{transformer_forward.1} parent=1 // pred_check
      _
    $region43: #{transformer_forward.1} parent=1 // pred_check_branch
      %51 = sbr.rel (0) target = $region45
    $region44: #{transformer_forward.1} parent=1 // pred_region
      _
    $region45: #{transformer_forward.1} parent=1 // pred_fallthru
      _
    // Predicated region
    $region46: #{transformer_forward.1} parent=1 // pred_check
      _
    $region47: #{transformer_forward.1} parent=1 // pred_check_branch
      %53 = sbr.rel (0) target = $region49
    $region48: #{transformer_forward.1} parent=1 // pred_region
      _
    $region49: #{transformer_forward.1} parent=1 // pred_fallthru
      _
    // Predicated region
    $region50: #{transformer_forward.1} parent=1 // pred_check
      _
    $region51: #{transformer_forward.1} parent=1 // pred_check_branch
      %55 = sbr.rel (0) target = $region53
    $region52: #{transformer_forward.1} parent=1 // pred_region
      _
    $region53: #{transformer_forward.1} parent=1 // pred_fallthru
      _
    // Predicated region
    $region54: #{transformer_forward.1} parent=1 // pred_check
      _
    $region55: #{transformer_forward.1} parent=1 // pred_check_branch
      %57 = sbr.rel (0) target = $region57
    $region56: #{transformer_forward.1} parent=1 // pred_region
      _
    $region57: #{transformer_forward.1} parent=1 // pred_fallthru
      _
    // Predicated region
    $region58: #{transformer_forward.1} parent=1 // pred_check
      _
    $region59: #{transformer_forward.1} parent=1 // pred_check_branch
      %59 = sbr.rel (0) target = $region61
    $region60: #{transformer_forward.1} parent=1 // pred_region
      _
    $region61: #{transformer_forward.1} parent=1 // pred_fallthru
      _
    // Predicated region
    $region62: #{transformer_forward.1} parent=1 // pred_check
      _
    $region63: #{transformer_forward.1} parent=1 // pred_check_branch
      %61 = sbr.rel (0) target = $region65
    $region64: #{transformer_forward.1} parent=1 // pred_region
      _
    $region65: #{transformer_forward.1} parent=1 // pred_fallthru
      _
    // Predicated region
    $region66: #{transformer_forward.1} parent=1 // pred_check
      _
    $region67: #{transformer_forward.1} parent=1 // pred_check_branch
      %63 = sbr.rel (0) target = $region69
    $region68: #{transformer_forward.1} parent=1 // pred_region
      _
    $region69: #{transformer_forward.1} parent=1 // pred_fallthru
      _
    // Predicated region
    $region70: #{transformer_forward.1} parent=1 // pred_check
      _
    $region71: #{transformer_forward.1} parent=1 // pred_check_branch
      %65 = sbr.rel (0) target = $region73
    $region72: #{transformer_forward.1} parent=1 // pred_region
      _
    $region73: #{transformer_forward.1} parent=1 // pred_fallthru
      _
    // Predicated region
    $region74: #{transformer_forward.1} parent=1 // pred_check
      _
    $region75: #{transformer_forward.1} parent=1 // pred_check_branch
      %67 = sbr.rel (0) target = $region77
    $region76: #{transformer_forward.1} parent=1 // pred_region
      _
    $region77: #{transformer_forward.1} parent=1 // pred_fallthru
      _
    // Predicated region
    $region78: #{transformer_forward.1} parent=1 // pred_check
      _
    $region79: #{transformer_forward.1} parent=1 // pred_check_branch
      %69 = sbr.rel (0) target = $region81
    $region80: #{transformer_forward.1} parent=1 // pred_region
      _
    $region81: #{transformer_forward.1} parent=1 // pred_fallthru
      _
    // Predicated region
    $region82: #{transformer_forward.1} parent=1 // pred_check
      _
    $region83: #{transformer_forward.1} parent=1 // pred_check_branch
      %71 = sbr.rel (0) target = $region85
    $region84: #{transformer_forward.1} parent=1 // pred_region
      _
    $region85: #{transformer_forward.1} parent=1 // pred_fallthru
      _
    // Predicated region
    $region86: #{transformer_forward.1} parent=1 // pred_check
      _
    $region87: #{transformer_forward.1} parent=1 // pred_check_branch
      %73 = sbr.rel (0) target = $region89
    $region88: #{transformer_forward.1} parent=1 // pred_region
      _
    $region89: #{transformer_forward.1} parent=1 // pred_fallthru
      _
    // Predicated region
    $region90: #{transformer_forward.1} parent=1 // pred_check
      _
    $region91: #{transformer_forward.1} parent=1 // pred_check_branch
      %75 = sbr.rel (0) target = $region93
    $region92: #{transformer_forward.1} parent=1 // pred_region
      _
    $region93: #{transformer_forward.1} parent=1 // pred_fallthru
      _
    // Predicated region
    $region94: #{transformer_forward.1} parent=1 // pred_check
      _
    $region95: #{transformer_forward.1} parent=1 // pred_check_branch
      %77 = sbr.rel (0) target = $region97
    $region96: #{transformer_forward.1} parent=1 // pred_region
      _
    $region97: #{transformer_forward.1} parent=1 // pred_fallthru
      _
    %v78 = vld [vmem:[%s4] sm:$0xff]
    %v79 = vld [vmem:[%s4 + $0x8] sm:$0xff]
    %v80 = vld [vmem:[%s4 + $0x10] sm:$0xff]
    %v81 = vld [vmem:[%s4 + $0x18] sm:$0xff]
    %v82 = vld [vmem:[%s4 + $0x20] sm:$0xff]
    %v83 = vld [vmem:[%s4 + $0x28] sm:$0xff]
    %v84 = vld [vmem:[%s4 + $0x30] sm:$0xff]
    %v85 = vld [vmem:[%s4 + $0x38] sm:$0xff]
    %v86 = vld [vmem:[%s5] sm:$0xff]
    %v87 = vld [vmem:[%s5 + $0x8] sm:$0xff]
    %v88 = vld [vmem:[%s5 + $0x10] sm:$0xff]
    %v89 = vld [vmem:[%s5 + $0x18] sm:$0xff]
    %v90 = vld [vmem:[%s5 + $0x20] sm:$0xff]
    %v91 = vld [vmem:[%s5 + $0x28] sm:$0xff]
    %v92 = vld [vmem:[%s5 + $0x30] sm:$0xff]
    %v93 = vld [vmem:[%s5 + $0x38] sm:$0xff]
    %v94 = vld [vmem:[%s6] sm:$0xff]
    %v95 = vld [vmem:[%s6 + $0x8] sm:$0xff]
    %v96 = vld [vmem:[%s6 + $0x10] sm:$0xff]
    %v97 = vld [vmem:[%s6 + $0x18] sm:$0xff]
    %v98 = vld [vmem:[%s6 + $0x20] sm:$0xff]
    %v99 = vld [vmem:[%s6 + $0x28] sm:$0xff]
    %v100 = vld [vmem:[%s6 + $0x30] sm:$0xff]
    %v101 = vld [vmem:[%s6 + $0x38] sm:$0xff]
    %v102 = vld [vmem:[%s7] sm:$0xff]
    %v103 = vld [vmem:[%s7 + $0x8] sm:$0xff]
    %v104 = vld [vmem:[%s8] sm:$0xff]
    %v105 = vld [vmem:[%s8 + $0x8] sm:$0xff]
    %v106 = vlaneseq
    %v107 = vand.u32 %v106, 127
    %v108 = vld [vmem:[%s0] sm:$0xff]
    %v109 = vld [vmem:[%s0 + $0x8] sm:$0xff]
    %110 = vset.pattern.permute.xlu0 0
    %111 = vperm.xlu0 %110, %v108
    %v112 = vpop.permute.xlu0 %111
    %113 = vset.pattern.permute.xlu0 0
    %114 = vperm.xlu0 %113, %v109
    %v115 = vpop.permute.xlu0 %114
    %vm116 = vcmp.eq.s32.totalorder %v107, %v112
    %vm117 = vcmp.eq.s32.totalorder %v107, %v115
    %v118 = vsel %vm116, 1, 0
    %v119 = vsel %vm117, 1, 0
    %v120 = vcvt.s32.f32 %v118
    %v121 = vcvt.s32.f32 %v119
    %v122 = vld [vmem:[%s2] sm:$0xff]
    %v123 = vld [vmem:[%s2 + $0x8] sm:$0xff]
    %v124 = vld [vmem:[%s2 + $0x10] sm:$0xff]
    %v125 = vld [vmem:[%s2 + $0x18] sm:$0xff]
    %v126 = vld [vmem:[%s2 + $0x20] sm:$0xff]
    %v127 = vld [vmem:[%s2 + $0x28] sm:$0xff]
    %v128 = vld [vmem:[%s2 + $0x30] sm:$0xff]
    %v129 = vld [vmem:[%s2 + $0x38] sm:$0xff]
    %v130 = vld [vmem:[%s2 + $0x40] sm:$0xff]
    %v131 = vld [vmem:[%s2 + $0x48] sm:$0xff]
    %v132 = vld [vmem:[%s2 + $0x50] sm:$0xff]
    %v133 = vld [vmem:[%s2 + $0x58] sm:$0xff]
    %v134 = vld [vmem:[%s2 + $0x60] sm:$0xff]
    %v135 = vld [vmem:[%s2 + $0x68] sm:$0xff]
    %v136 = vld [vmem:[%s2 + $0x70] sm:$0xff]
    %v137 = vld [vmem:[%s2 + $0x78] sm:$0xff]
    %138 = vmatprep.subr.mxu0 0.0
    %139 = vmatpush1.msra.mxu0 %v137
    %140 = vmatprep.subr.mxu0 0.0
    %141 = vmatpush1.msra.mxu0 %v136
    %142 = vmatprep.subr.mxu0 0.0
    %143 = vmatpush1.msra.mxu0 %v135
    %144 = vmatprep.subr.mxu0 0.0
    %145 = vmatpush1.msra.mxu0 %v134
    %146 = vmatprep.subr.mxu0 0.0
    %147 = vmatpush1.msra.mxu0 %v133
    %148 = vmatprep.subr.mxu0 0.0
    %149 = vmatpush1.msra.mxu0 %v132
    %150 = vmatprep.subr.mxu0 0.0
    %151 = vmatpush1.msra.mxu0 %v131
    %152 = vmatprep.subr.mxu0 0.0
    %153 = vmatpush1.msra.mxu0 %v130
    %154 = vmatprep.subr.mxu0 0.0
    %155 = vmatpush1.msra.mxu0 %v129
    %156 = vmatprep.subr.mxu0 0.0
    %157 = vmatpush1.msra.mxu0 %v128
    %158 = vmatprep.subr.mxu0 0.0
    %159 = vmatpush1.msra.mxu0 %v127
    %160 = vmatprep.subr.mxu0 0.0
    %161 = vmatpush1.msra.mxu0 %v126
    %162 = vmatprep.subr.mxu0 0.0
    %163 = vmatpush1.msra.mxu0 %v125
    %164 = vmatprep.subr.mxu0 0.0
    %165 = vmatpush1.msra.mxu0 %v124
    %166 = vmatprep.subr.mxu0 0.0
    %167 = vmatpush1.msra.mxu0 %v123
    %168 = vmatprep.subr.mxu0 0.0
    %169 = vmatpush1.msra.mxu0 %v122
    %170 = vmatprep.subr.mxu0 0.0
    %171 = vmatpush2.msra.mxu0 0.0
    %172 = vmatprep.subr.mxu0 0.0
    %173 = vmatpush2.msra.mxu0 0.0
    %174 = vmatprep.subr.mxu0 0.0
    %175 = vmatpush2.msra.mxu0 0.0
    %176 = vmatprep.subr.mxu0 0.0
    %177 = vmatpush2.msra.mxu0 0.0
    %178 = vmatprep.subr.mxu0 0.0
    %179 = vmatpush2.msra.mxu0 0.0
    %180 = vmatprep.subr.mxu0 0.0
    %181 = vmatpush2.msra.mxu0 0.0
    %182 = vmatprep.subr.mxu0 0.0
    %183 = vmatpush2.msra.mxu0 0.0
    %184 = vmatprep.subr.mxu0 0.0
    %185 = vmatpush2.msra.mxu0 0.0
    %186 = vmatprep.subr.mxu0 0.0
    %187 = vmatpush2.msra.mxu0 0.0
    %188 = vmatprep.subr.mxu0 0.0
    %189 = vmatpush2.msra.mxu0 0.0
    %190 = vmatprep.subr.mxu0 0.0
    %191 = vmatpush2.msra.mxu0 0.0
    %192 = vmatprep.subr.mxu0 0.0
    %193 = vmatpush2.msra.mxu0 0.0
    %194 = vmatprep.subr.mxu0 0.0
    %195 = vmatpush2.msra.mxu0 0.0
    %196 = vmatprep.subr.mxu0 0.0
    %197 = vmatpush2.msra.mxu0 0.0
    %198 = vmatprep.subr.mxu0 0.0
    %199 = vmatpush2.msra.mxu0 0.0
    %200 = vmatprep.subr.mxu0 0.0
    %201 = vmatpush2.msra.mxu0 0.0
    %202 = vmatprep.mubr.f32.mxu0 0.0
    %203 = vmatmul.mubr.f32.gmra.mxu0 %v120
    %v204 = vpop.f32.mrf.mxu0
    %v205 = vadd.f32 0.0, %v204
    %v206 = vpop.f32.mrf.mxu0
    %207 = vmatprep.mubr.f32.mxu0 0.0
    %208 = vmatmul.mubr.f32.gmra.mxu0 %v121
    %v209 = vpop.f32.mrf.mxu0
    %v210 = vadd.f32 0.0, %v209
    %v211 = vpop.f32.mrf.mxu0
    %212 = vdwg.mxu0
    %v213 = vld [vmem:[%s1] sm:$0xff]
    %v214 = vld [vmem:[%s1 + $0x8] sm:$0xff]
    %215 = vset.pattern.permute.xlu0 0
    %216 = vperm.xlu0 %215, %v213
    %v217 = vpop.permute.xlu0 %216
    %218 = vset.pattern.permute.xlu0 0
    %219 = vperm.xlu0 %218, %v214
    %v220 = vpop.permute.xlu0 %219
    %vm221 = vcmp.eq.s32.totalorder %v107, %v217
    %vm222 = vcmp.eq.s32.totalorder %v107, %v220
    %v223 = vsel %vm221, 1, 0
    %v224 = vsel %vm222, 1, 0
    %v225 = vcvt.s32.f32 %v223
    %v226 = vcvt.s32.f32 %v224
    %v227 = vld [vmem:[%s3] sm:$0xff]
    %v228 = vld [vmem:[%s3 + $0x8] sm:$0xff]
    %v229 = vld [vmem:[%s3 + $0x10] sm:$0xff]
    %v230 = vld [vmem:[%s3 + $0x18] sm:$0xff]
    %v231 = vld [vmem:[%s3 + $0x20] sm:$0xff]
    %v232 = vld [vmem:[%s3 + $0x28] sm:$0xff]
    %v233 = vld [vmem:[%s3 + $0x30] sm:$0xff]
    %v234 = vld [vmem:[%s3 + $0x38] sm:$0xff]
    %v235 = vld [vmem:[%s3 + $0x40] sm:$0xff]
    %v236 = vld [vmem:[%s3 + $0x48] sm:$0xff]
    %v237 = vld [vmem:[%s3 + $0x50] sm:$0xff]
    %v238 = vld [vmem:[%s3 + $0x58] sm:$0xff]
    %v239 = vld [vmem:[%s3 + $0x60] sm:$0xff]
    %v240 = vld [vmem:[%s3 + $0x68] sm:$0xff]
    %v241 = vld [vmem:[%s3 + $0x70] sm:$0xff]
    %v242 = vld [vmem:[%s3 + $0x78] sm:$0xff]
    %243 = vmatprep.subr.mxu0 0.0
    %244 = vmatpush1.msra.mxu0 %v242
    %245 = vmatprep.subr.mxu0 0.0
    %246 = vmatpush1.msra.mxu0 %v241
    %247 = vmatprep.subr.mxu0 0.0
    %248 = vmatpush1.msra.mxu0 %v240
    %249 = vmatprep.subr.mxu0 0.0
    %250 = vmatpush1.msra.mxu0 %v239
    %251 = vmatprep.subr.mxu0 0.0
    %252 = vmatpush1.msra.mxu0 %v238
    %253 = vmatprep.subr.mxu0 0.0
    %254 = vmatpush1.msra.mxu0 %v237
    %255 = vmatprep.subr.mxu0 0.0
    %256 = vmatpush1.msra.mxu0 %v236
    %257 = vmatprep.subr.mxu0 0.0
    %258 = vmatpush1.msra.mxu0 %v235
    %259 = vmatprep.subr.mxu0 0.0
    %260 = vmatpush1.msra.mxu0 %v234
    %261 = vmatprep.subr.mxu0 0.0
    %262 = vmatpush1.msra.mxu0 %v233
    %263 = vmatprep.subr.mxu0 0.0
    %264 = vmatpush1.msra.mxu0 %v232
    %265 = vmatprep.subr.mxu0 0.0
    %266 = vmatpush1.msra.mxu0 %v231
    %267 = vmatprep.subr.mxu0 0.0
    %268 = vmatpush1.msra.mxu0 %v230
    %269 = vmatprep.subr.mxu0 0.0
    %270 = vmatpush1.msra.mxu0 %v229
    %271 = vmatprep.subr.mxu0 0.0
    %272 = vmatpush1.msra.mxu0 %v228
    %273 = vmatprep.subr.mxu0 0.0
    %274 = vmatpush1.msra.mxu0 %v227
    %275 = vmatprep.subr.mxu0 0.0
    %276 = vmatpush2.msra.mxu0 0.0
    %277 = vmatprep.subr.mxu0 0.0
    %278 = vmatpush2.msra.mxu0 0.0
    %279 = vmatprep.subr.mxu0 0.0
    %280 = vmatpush2.msra.mxu0 0.0
    %281 = vmatprep.subr.mxu0 0.0
    %282 = vmatpush2.msra.mxu0 0.0
    %283 = vmatprep.subr.mxu0 0.0
    %284 = vmatpush2.msra.mxu0 0.0
    %285 = vmatprep.subr.mxu0 0.0
    %286 = vmatpush2.msra.mxu0 0.0
    %287 = vmatprep.subr.mxu0 0.0
    %288 = vmatpush2.msra.mxu0 0.0
    %289 = vmatprep.subr.mxu0 0.0
    %290 = vmatpush2.msra.mxu0 0.0
    %291 = vmatprep.subr.mxu0 0.0
    %292 = vmatpush2.msra.mxu0 0.0
    %293 = vmatprep.subr.mxu0 0.0
    %294 = vmatpush2.msra.mxu0 0.0
    %295 = vmatprep.subr.mxu0 0.0
    %296 = vmatpush2.msra.mxu0 0.0
    %297 = vmatprep.subr.mxu0 0.0
    %298 = vmatpush2.msra.mxu0 0.0
    %299 = vmatprep.subr.mxu0 0.0
    %300 = vmatpush2.msra.mxu0 0.0
    %301 = vmatprep.subr.mxu0 0.0
    %302 = vmatpush2.msra.mxu0 0.0
    %303 = vmatprep.subr.mxu0 0.0
    %304 = vmatpush2.msra.mxu0 0.0
    %305 = vmatprep.subr.mxu0 0.0
    %306 = vmatpush2.msra.mxu0 0.0
    %307 = vmatprep.mubr.f32.mxu0 0.0
    %308 = vmatmul.mubr.f32.gmra.mxu0 %v225
    %v309 = vpop.f32.mrf.mxu0
    %v310 = vadd.f32 0.0, %v309
    %v311 = vpop.f32.mrf.mxu0
    %312 = vmatprep.mubr.f32.mxu0 0.0
    %313 = vmatmul.mubr.f32.gmra.mxu0 %v226
    %v314 = vpop.f32.mrf.mxu0
    %v315 = vadd.f32 0.0, %v314
    %v316 = vpop.f32.mrf.mxu0
    %317 = vdwg.mxu0
    %v318 = vld [vmem:[%s13] sm:$0xff]
    %v319 = vld [vmem:[%s9] sm:$0xff]
    %v320 = vld [vmem:[%s9 + $0x8] sm:$0xff]
    %v321 = vld [vmem:[%s9 + $0x10] sm:$0xff]
    %v322 = vld [vmem:[%s9 + $0x18] sm:$0xff]
    %v323 = vlaneseq
    %v324 = vshrl.u32 %v323, 7
    %v325 = vsub.s32 0, %v324
    %v326 = vrot.slane %v318, %v325
    %vm327 = vcmask 261120
    %v329 = vsel %vm327, %v205, 0
    %v332 = vsel %vm327, %v210, 0
    %334 = vmatprep.subr.mxu0 0.0
    %335 = vmatpush1.msra.mxu0 0.0
    %336 = vmatprep.subr.mxu0 0.0
    %337 = vmatpush1.msra.mxu0 0.0
    %338 = vmatprep.subr.mxu0 0.0
    %339 = vmatpush1.msra.mxu0 0.0
    %340 = vmatprep.subr.mxu0 0.0
    %341 = vmatpush1.msra.mxu0 0.0
    %342 = vmatprep.subr.mxu0 0.0
    %343 = vmatpush1.msra.mxu0 0.0
    %344 = vmatprep.subr.mxu0 0.0
    %345 = vmatpush1.msra.mxu0 0.0
    %346 = vmatprep.subr.mxu0 0.0
    %347 = vmatpush1.msra.mxu0 0.0
    %348 = vmatprep.subr.mxu0 0.0
    %349 = vmatpush1.msra.mxu0 0.0
    %350 = vmatprep.subr.mxu0 0.0
    %351 = vmatpush1.msra.mxu0 0.0
    %352 = vmatprep.subr.mxu0 0.0
    %353 = vmatpush1.msra.mxu0 0.0
    %354 = vmatprep.subr.mxu0 0.0
    %355 = vmatpush1.msra.mxu0 0.0
    %356 = vmatprep.subr.mxu0 0.0
    %357 = vmatpush1.msra.mxu0 0.0
    %358 = vmatprep.subr.mxu0 0.0
    %359 = vmatpush1.msra.mxu0 %v322
    %360 = vmatprep.subr.mxu0 0.0
    %361 = vmatpush1.msra.mxu0 %v321
    %362 = vmatprep.subr.mxu0 0.0
    %363 = vmatpush1.msra.mxu0 %v320
    %364 = vmatprep.subr.mxu0 0.0
    %365 = vmatpush1.msra.mxu0 %v319
    %366 = vmatprep.subr.mxu0 0.0
    %367 = vmatpush2.msra.mxu0 0.0
    %368 = vmatprep.subr.mxu0 0.0
    %369 = vmatpush2.msra.mxu0 0.0
    %370 = vmatprep.subr.mxu0 0.0
    %371 = vmatpush2.msra.mxu0 0.0
    %372 = vmatprep.subr.mxu0 0.0
    %373 = vmatpush2.msra.mxu0 0.0
    %374 = vmatprep.subr.mxu0 0.0
    %375 = vmatpush2.msra.mxu0 0.0
    %376 = vmatprep.subr.mxu0 0.0
    %377 = vmatpush2.msra.mxu0 0.0
    %378 = vmatprep.subr.mxu0 0.0
    %379 = vmatpush2.msra.mxu0 0.0
    %380 = vmatprep.subr.mxu0 0.0
    %381 = vmatpush2.msra.mxu0 0.0
    %382 = vmatprep.subr.mxu0 0.0
    %383 = vmatpush2.msra.mxu0 0.0
    %384 = vmatprep.subr.mxu0 0.0
    %385 = vmatpush2.msra.mxu0 0.0
    %386 = vmatprep.subr.mxu0 0.0
    %387 = vmatpush2.msra.mxu0 0.0
    %388 = vmatprep.subr.mxu0 0.0
    %389 = vmatpush2.msra.mxu0 0.0
    %390 = vmatprep.subr.mxu0 0.0
    %391 = vmatpush2.msra.mxu0 0.0
    %392 = vmatprep.subr.mxu0 0.0
    %393 = vmatpush2.msra.mxu0 0.0
    %394 = vmatprep.subr.mxu0 0.0
    %395 = vmatpush2.msra.mxu0 0.0
    %396 = vmatprep.subr.mxu0 0.0
    %397 = vmatpush2.msra.mxu0 0.0
    %398 = vmatprep.mubr.f32.mxu0 0.0
    %399 = vmatmul.mubr.f32.gmra.mxu0 %v329
    %v400 = vpop.f32.mrf.mxu0
    %v401 = vadd.f32 %v326, %v400
    %v402 = vpop.f32.mrf.mxu0
    %403 = vmatprep.mubr.f32.mxu0 0.0
    %404 = vmatmul.mubr.f32.gmra.mxu0 %v332
    %v405 = vpop.f32.mrf.mxu0
    %v406 = vadd.f32 %v326, %v405
    %v407 = vpop.f32.mrf.mxu0
    %408 = vdwg.mxu0
    %411 = vrot.lane.b32.xlu0 %v401, 96
    %v412 = vpop.permute.xlu0 %411
    %413 = vrot.lane.b32.xlu0 %v406, 96
    %v414 = vpop.permute.xlu0 %413
    %vm417 = vcmask 130048
    %v419 = vsel %vm417, %v78, 0
    %v422 = vsel %vm417, %v79, 0
    %v425 = vsel %vm417, %v80, 0
    %v428 = vsel %vm417, %v81, 0
    %v431 = vsel %vm417, %v82, 0
    %v434 = vsel %vm417, %v83, 0
    %v437 = vsel %vm417, %v84, 0
    %v440 = vsel %vm417, %v85, 0
    %442 = vmatprep.subr.mxu0 0.0
    %443 = vmatpush1.msra.mxu0 0.0
    %444 = vmatprep.subr.mxu0 0.0
    %445 = vmatpush1.msra.mxu0 0.0
    %446 = vmatprep.subr.mxu0 0.0
    %447 = vmatpush1.msra.mxu0 0.0
    %448 = vmatprep.subr.mxu0 0.0
    %449 = vmatpush1.msra.mxu0 0.0
    %450 = vmatprep.subr.mxu0 0.0
    %451 = vmatpush1.msra.mxu0 0.0
    %452 = vmatprep.subr.mxu0 0.0
    %453 = vmatpush1.msra.mxu0 0.0
    %454 = vmatprep.subr.mxu0 0.0
    %455 = vmatpush1.msra.mxu0 0.0
    %456 = vmatprep.subr.mxu0 0.0
    %457 = vmatpush1.msra.mxu0 0.0
    %458 = vmatprep.subr.mxu0 0.0
    %459 = vmatpush1.msra.mxu0 0.0
    %460 = vmatprep.subr.mxu0 0.0
    %461 = vmatpush1.msra.mxu0 0.0
    %462 = vmatprep.subr.mxu0 0.0
    %463 = vmatpush1.msra.mxu0 0.0
    %464 = vmatprep.subr.mxu0 0.0
    %465 = vmatpush1.msra.mxu0 0.0
    %466 = vmatprep.subr.mxu0 0.0
    %467 = vmatpush1.msra.mxu0 0.0
    %468 = vmatprep.subr.mxu0 0.0
    %469 = vmatpush1.msra.mxu0 0.0
    %470 = vmatprep.subr.mxu0 0.0
    %471 = vmatpush1.msra.mxu0 %v414
    %472 = vmatprep.subr.mxu0 0.0
    %473 = vmatpush1.msra.mxu0 %v412
    %474 = vmatprep.subr.mxu0 0.0
    %475 = vmatpush2.msra.mxu0 0.0
    %476 = vmatprep.subr.mxu0 0.0
    %477 = vmatpush2.msra.mxu0 0.0
    %478 = vmatprep.subr.mxu0 0.0
    %479 = vmatpush2.msra.mxu0 0.0
    %480 = vmatprep.subr.mxu0 0.0
    %481 = vmatpush2.msra.mxu0 0.0
    %482 = vmatprep.subr.mxu0 0.0
    %483 = vmatpush2.msra.mxu0 0.0
    %484 = vmatprep.subr.mxu0 0.0
    %485 = vmatpush2.msra.mxu0 0.0
    %486 = vmatprep.subr.mxu0 0.0
    %487 = vmatpush2.msra.mxu0 0.0
    %488 = vmatprep.subr.mxu0 0.0
    %489 = vmatpush2.msra.mxu0 0.0
    %490 = vmatprep.subr.mxu0 0.0
    %491 = vmatpush2.msra.mxu0 0.0
    %492 = vmatprep.subr.mxu0 0.0
    %493 = vmatpush2.msra.mxu0 0.0
    %494 = vmatprep.subr.mxu0 0.0
    %495 = vmatpush2.msra.mxu0 0.0
    %496 = vmatprep.subr.mxu0 0.0
    %497 = vmatpush2.msra.mxu0 0.0
    %498 = vmatprep.subr.mxu0 0.0
    %499 = vmatpush2.msra.mxu0 0.0
    %500 = vmatprep.subr.mxu0 0.0
    %501 = vmatpush2.msra.mxu0 0.0
    %502 = vmatprep.subr.mxu0 0.0
    %503 = vmatpush2.msra.mxu0 0.0
    %504 = vmatprep.subr.mxu0 0.0
    %505 = vmatpush2.msra.mxu0 0.0
    %506 = vmatprep.mubr.f32.mxu0 0.0
    %507 = vmatmul.mubr.f32.gmra.mxu0 %v419
    %v508 = vpop.f32.mrf.mxu0
    %v509 = vadd.f32 0.0, %v508
    %v510 = vpop.f32.mrf.mxu0
    %511 = vmatprep.mubr.f32.mxu0 0.0
    %512 = vmatmul.mubr.f32.gmra.mxu0 %v422
    %v513 = vpop.f32.mrf.mxu0
    %v514 = vadd.f32 0.0, %v513
    %v515 = vpop.f32.mrf.mxu0
    %516 = vmatprep.mubr.f32.mxu0 0.0
    %517 = vmatmul.mubr.f32.gmra.mxu0 %v425
    %v518 = vpop.f32.mrf.mxu0
    %v519 = vadd.f32 0.0, %v518
    %v520 = vpop.f32.mrf.mxu0
    %521 = vmatprep.mubr.f32.mxu0 0.0
    %522 = vmatmul.mubr.f32.gmra.mxu0 %v428
    %v523 = vpop.f32.mrf.mxu0
    %v524 = vadd.f32 0.0, %v523
    %v525 = vpop.f32.mrf.mxu0
    %526 = vmatprep.mubr.f32.mxu0 0.0
    %527 = vmatmul.mubr.f32.gmra.mxu0 %v431
    %v528 = vpop.f32.mrf.mxu0
    %v529 = vadd.f32 0.0, %v528
    %v530 = vpop.f32.mrf.mxu0
    %531 = vmatprep.mubr.f32.mxu0 0.0
    %532 = vmatmul.mubr.f32.gmra.mxu0 %v434
    %v533 = vpop.f32.mrf.mxu0
    %v534 = vadd.f32 0.0, %v533
    %v535 = vpop.f32.mrf.mxu0
    %536 = vmatprep.mubr.f32.mxu0 0.0
    %537 = vmatmul.mubr.f32.gmra.mxu0 %v437
    %v538 = vpop.f32.mrf.mxu0
    %v539 = vadd.f32 0.0, %v538
    %v540 = vpop.f32.mrf.mxu0
    %541 = vmatprep.mubr.f32.mxu0 0.0
    %542 = vmatmul.mubr.f32.gmra.mxu0 %v440
    %v543 = vpop.f32.mrf.mxu0
    %v544 = vadd.f32 0.0, %v543
    %v545 = vpop.f32.mrf.mxu0
    %546 = vdwg.mxu0
    %v547 = vmul.f32 %v509, %v86
    %v548 = vmul.f32 %v514, %v87
    %v549 = vmul.f32 %v519, %v88
    %v550 = vmul.f32 %v524, %v89
    %v551 = vmul.f32 %v529, %v90
    %v552 = vmul.f32 %v534, %v91
    %v553 = vmul.f32 %v539, %v92
    %v554 = vmul.f32 %v544, %v93
    %555 = vrot.lane.b32.xlu0 %v401, 64
    %v556 = vpop.permute.xlu0 %555
    %557 = vrot.lane.b32.xlu0 %v406, 64
    %v558 = vpop.permute.xlu0 %557
    %561 = vmatprep.subr.mxu0 0.0
    %562 = vmatpush1.msra.mxu0 0.0
    %563 = vmatprep.subr.mxu0 0.0
    %564 = vmatpush1.msra.mxu0 0.0
    %565 = vmatprep.subr.mxu0 0.0
    %566 = vmatpush1.msra.mxu0 0.0
    %567 = vmatprep.subr.mxu0 0.0
    %568 = vmatpush1.msra.mxu0 0.0
    %569 = vmatprep.subr.mxu0 0.0
    %570 = vmatpush1.msra.mxu0 0.0
    %571 = vmatprep.subr.mxu0 0.0
    %572 = vmatpush1.msra.mxu0 0.0
    %573 = vmatprep.subr.mxu0 0.0
    %574 = vmatpush1.msra.mxu0 0.0
    %575 = vmatprep.subr.mxu0 0.0
    %576 = vmatpush1.msra.mxu0 0.0
    %577 = vmatprep.subr.mxu0 0.0
    %578 = vmatpush1.msra.mxu0 0.0
    %579 = vmatprep.subr.mxu0 0.0
    %580 = vmatpush1.msra.mxu0 0.0
    %581 = vmatprep.subr.mxu0 0.0
    %582 = vmatpush1.msra.mxu0 0.0
    %583 = vmatprep.subr.mxu0 0.0
    %584 = vmatpush1.msra.mxu0 0.0
    %585 = vmatprep.subr.mxu0 0.0
    %586 = vmatpush1.msra.mxu0 0.0
    %587 = vmatprep.subr.mxu0 0.0
    %588 = vmatpush1.msra.mxu0 0.0
    %589 = vmatprep.subr.mxu0 0.0
    %590 = vmatpush1.msra.mxu0 %v558
    %591 = vmatprep.subr.mxu0 0.0
    %592 = vmatpush1.msra.mxu0 %v556
    %593 = vmatprep.subr.mxu0 0.0
    %594 = vmatpush2.msra.mxu0 0.0
    %595 = vmatprep.subr.mxu0 0.0
    %596 = vmatpush2.msra.mxu0 0.0
    %597 = vmatprep.subr.mxu0 0.0
    %598 = vmatpush2.msra.mxu0 0.0
    %599 = vmatprep.subr.mxu0 0.0
    %600 = vmatpush2.msra.mxu0 0.0
    %601 = vmatprep.subr.mxu0 0.0
    %602 = vmatpush2.msra.mxu0 0.0
    %603 = vmatprep.subr.mxu0 0.0
    %604 = vmatpush2.msra.mxu0 0.0
    %605 = vmatprep.subr.mxu0 0.0
    %606 = vmatpush2.msra.mxu0 0.0
    %607 = vmatprep.subr.mxu0 0.0
    %608 = vmatpush2.msra.mxu0 0.0
    %609 = vmatprep.subr.mxu0 0.0
    %610 = vmatpush2.msra.mxu0 0.0
    %611 = vmatprep.subr.mxu0 0.0
    %612 = vmatpush2.msra.mxu0 0.0
    %613 = vmatprep.subr.mxu0 0.0
    %614 = vmatpush2.msra.mxu0 0.0
    %615 = vmatprep.subr.mxu0 0.0
    %616 = vmatpush2.msra.mxu0 0.0
    %617 = vmatprep.subr.mxu0 0.0
    %618 = vmatpush2.msra.mxu0 0.0
    %619 = vmatprep.subr.mxu0 0.0
    %620 = vmatpush2.msra.mxu0 0.0
    %621 = vmatprep.subr.mxu0 0.0
    %622 = vmatpush2.msra.mxu0 0.0
    %623 = vmatprep.subr.mxu0 0.0
    %624 = vmatpush2.msra.mxu0 0.0
    %625 = vmatprep.mubr.f32.mxu0 0.0
    %626 = vmatmul.mubr.f32.gmra.mxu0 %v419
    %v627 = vpop.f32.mrf.mxu0
    %v628 = vadd.f32 0.0, %v627
    %v629 = vpop.f32.mrf.mxu0
    %630 = vmatprep.mubr.f32.mxu0 0.0
    %631 = vmatmul.mubr.f32.gmra.mxu0 %v422
    %v632 = vpop.f32.mrf.mxu0
    %v633 = vadd.f32 0.0, %v632
    %v634 = vpop.f32.mrf.mxu0
    %635 = vmatprep.mubr.f32.mxu0 0.0
    %636 = vmatmul.mubr.f32.gmra.mxu0 %v425
    %v637 = vpop.f32.mrf.mxu0
    %v638 = vadd.f32 0.0, %v637
    %v639 = vpop.f32.mrf.mxu0
    %640 = vmatprep.mubr.f32.mxu0 0.0
    %641 = vmatmul.mubr.f32.gmra.mxu0 %v428
    %v642 = vpop.f32.mrf.mxu0
    %v643 = vadd.f32 0.0, %v642
    %v644 = vpop.f32.mrf.mxu0
    %645 = vmatprep.mubr.f32.mxu0 0.0
    %646 = vmatmul.mubr.f32.gmra.mxu0 %v431
    %v647 = vpop.f32.mrf.mxu0
    %v648 = vadd.f32 0.0, %v647
    %v649 = vpop.f32.mrf.mxu0
    %650 = vmatprep.mubr.f32.mxu0 0.0
    %651 = vmatmul.mubr.f32.gmra.mxu0 %v434
    %v652 = vpop.f32.mrf.mxu0
    %v653 = vadd.f32 0.0, %v652
    %v654 = vpop.f32.mrf.mxu0
    %655 = vmatprep.mubr.f32.mxu0 0.0
    %656 = vmatmul.mubr.f32.gmra.mxu0 %v437
    %v657 = vpop.f32.mrf.mxu0
    %v658 = vadd.f32 0.0, %v657
    %v659 = vpop.f32.mrf.mxu0
    %660 = vmatprep.mubr.f32.mxu0 0.0
    %661 = vmatmul.mubr.f32.gmra.mxu0 %v440
    %v662 = vpop.f32.mrf.mxu0
    %v663 = vadd.f32 0.0, %v662
    %v664 = vpop.f32.mrf.mxu0
    %665 = vdwg.mxu0
    %v666 = vmul.f32 %v628, %v86
    %v667 = vmul.f32 %v633, %v87
    %v668 = vmul.f32 %v638, %v88
    %v669 = vmul.f32 %v643, %v89
    %v670 = vmul.f32 %v648, %v90
    %v671 = vmul.f32 %v653, %v91
    %v672 = vmul.f32 %v658, %v92
    %v673 = vmul.f32 %v663, %v93
    %v674 = vsel %vm327, %v401, 0
    %v676 = vsel %vm327, %v406, 0
    %v679 = vsel %vm327, %v547, 0
    %v682 = vsel %vm327, %v548, 0
    %v685 = vsel %vm327, %v549, 0
    %v688 = vsel %vm327, %v550, 0
    %v691 = vsel %vm327, %v551, 0
    %v694 = vsel %vm327, %v552, 0
    %v697 = vsel %vm327, %v553, 0
    %v700 = vsel %vm327, %v554, 0
    %702 = vmatprep.subr.mxu0 0.0
    %703 = vmatpush1.xpose.msra.mxu0 0.0
    %704 = vmatprep.subr.mxu0 0.0
    %705 = vmatpush1.xpose.msra.mxu0 0.0
    %706 = vmatprep.subr.mxu0 0.0
    %707 = vmatpush1.xpose.msra.mxu0 0.0
    %708 = vmatprep.subr.mxu0 0.0
    %709 = vmatpush1.xpose.msra.mxu0 0.0
    %710 = vmatprep.subr.mxu0 0.0
    %711 = vmatpush1.xpose.msra.mxu0 0.0
    %712 = vmatprep.subr.mxu0 0.0
    %713 = vmatpush1.xpose.msra.mxu0 0.0
    %714 = vmatprep.subr.mxu0 0.0
    %715 = vmatpush1.xpose.msra.mxu0 0.0
    %716 = vmatprep.subr.mxu0 0.0
    %717 = vmatpush1.xpose.msra.mxu0 0.0
    %718 = vmatprep.subr.mxu0 0.0
    %719 = vmatpush1.xpose.msra.mxu0 %v700
    %720 = vmatprep.subr.mxu0 0.0
    %721 = vmatpush1.xpose.msra.mxu0 %v697
    %722 = vmatprep.subr.mxu0 0.0
    %723 = vmatpush1.xpose.msra.mxu0 %v694
    %724 = vmatprep.subr.mxu0 0.0
    %725 = vmatpush1.xpose.msra.mxu0 %v691
    %726 = vmatprep.subr.mxu0 0.0
    %727 = vmatpush1.xpose.msra.mxu0 %v688
    %728 = vmatprep.subr.mxu0 0.0
    %729 = vmatpush1.xpose.msra.mxu0 %v685
    %730 = vmatprep.subr.mxu0 0.0
    %731 = vmatpush1.xpose.msra.mxu0 %v682
    %732 = vmatprep.subr.mxu0 0.0
    %733 = vmatpush1.xpose.msra.mxu0 %v679
    %734 = vmatprep.subr.mxu0 0.0
    %735 = vmatpush2.xpose.msra.mxu0 0.0
    %736 = vmatprep.subr.mxu0 0.0
    %737 = vmatpush2.xpose.msra.mxu0 0.0
    %738 = vmatprep.subr.mxu0 0.0
    %739 = vmatpush2.xpose.msra.mxu0 0.0
    %740 = vmatprep.subr.mxu0 0.0
    %741 = vmatpush2.xpose.msra.mxu0 0.0
    %742 = vmatprep.subr.mxu0 0.0
    %743 = vmatpush2.xpose.msra.mxu0 0.0
    %744 = vmatprep.subr.mxu0 0.0
    %745 = vmatpush2.xpose.msra.mxu0 0.0
    %746 = vmatprep.subr.mxu0 0.0
    %747 = vmatpush2.xpose.msra.mxu0 0.0
    %748 = vmatprep.subr.mxu0 0.0
    %749 = vmatpush2.xpose.msra.mxu0 0.0
    %750 = vmatprep.subr.mxu0 0.0
    %751 = vmatpush2.xpose.msra.mxu0 0.0
    %752 = vmatprep.subr.mxu0 0.0
    %753 = vmatpush2.xpose.msra.mxu0 0.0
    %754 = vmatprep.subr.mxu0 0.0
    %755 = vmatpush2.xpose.msra.mxu0 0.0
    %756 = vmatprep.subr.mxu0 0.0
    %757 = vmatpush2.xpose.msra.mxu0 0.0
    %758 = vmatprep.subr.mxu0 0.0
    %759 = vmatpush2.xpose.msra.mxu0 0.0
    %760 = vmatprep.subr.mxu0 0.0
    %761 = vmatpush2.xpose.msra.mxu0 0.0
    %762 = vmatprep.subr.mxu0 0.0
    %763 = vmatpush2.xpose.msra.mxu0 0.0
    %764 = vmatprep.subr.mxu0 0.0
    %765 = vmatpush2.xpose.msra.mxu0 0.0
    %766 = vmatprep.mubr.f32.mxu0 0.0
    %767 = vmatmul.mubr.f32.gmra.mxu0 %v674
    %v768 = vpop.f32.mrf.mxu0
    %v769 = vadd.f32 %v102, %v768
    %v770 = vpop.f32.mrf.mxu0
    %771 = vmatprep.mubr.f32.mxu0 0.0
    %772 = vmatmul.mubr.f32.gmra.mxu0 %v676
    %v773 = vpop.f32.mrf.mxu0
    %v774 = vadd.f32 %v103, %v773
    %v775 = vpop.f32.mrf.mxu0
    %776 = vdwg.mxu0
    %vm777 = vcmask 523264
    %v778 = vsel %vm777, %v769, -inf
    %779 = vmax.xlane.f32.xlu0 %v778
    %v780 = vpop.xlane.xlu0 %779
    %v781 = vsel %vm777, %v774, -inf
    %782 = vmax.xlane.f32.xlu0 %v781
    %v783 = vpop.xlane.xlu0 %782
    %v784 = vsub.f32 %v769, %v780
    %v785 = vsub.f32 %v774, %v783
    %v786 = vmul.f32 %v784, 1.442695
    %v787 = vpow.pop %v786
    %v788 = vmul.f32 %v785, 1.442695
    %v789 = vpow.pop %v788
    %v791 = vsel %vm777, %v787, 0
    %v794 = vsel %vm777, %v789, 0
    %796 = vmatprep.subr.mxu0 0.0
    %797 = vmatpush1.msra.mxu0 0.0
    %798 = vmatprep.subr.mxu0 0.0
    %799 = vmatpush1.msra.mxu0 0.0
    %800 = vmatprep.subr.mxu0 0.0
    %801 = vmatpush1.msra.mxu0 0.0
    %802 = vmatprep.subr.mxu0 0.0
    %803 = vmatpush1.msra.mxu0 0.0
    %804 = vmatprep.subr.mxu0 0.0
    %805 = vmatpush1.msra.mxu0 0.0
    %806 = vmatprep.subr.mxu0 0.0
    %807 = vmatpush1.msra.mxu0 0.0
    %808 = vmatprep.subr.mxu0 0.0
    %809 = vmatpush1.msra.mxu0 0.0
    %810 = vmatprep.subr.mxu0 0.0
    %811 = vmatpush1.msra.mxu0 0.0
    %812 = vmatprep.subr.mxu0 0.0
    %813 = vmatpush1.msra.mxu0 %v101
    %814 = vmatprep.subr.mxu0 0.0
    %815 = vmatpush1.msra.mxu0 %v100
    %816 = vmatprep.subr.mxu0 0.0
    %817 = vmatpush1.msra.mxu0 %v99
    %818 = vmatprep.subr.mxu0 0.0
    %819 = vmatpush1.msra.mxu0 %v98
    %820 = vmatprep.subr.mxu0 0.0
    %821 = vmatpush1.msra.mxu0 %v97
    %822 = vmatprep.subr.mxu0 0.0
    %823 = vmatpush1.msra.mxu0 %v96
    %824 = vmatprep.subr.mxu0 0.0
    %825 = vmatpush1.msra.mxu0 %v95
    %826 = vmatprep.subr.mxu0 0.0
    %827 = vmatpush1.msra.mxu0 %v94
    %828 = vmatprep.subr.mxu0 0.0
    %829 = vmatpush2.msra.mxu0 0.0
    %830 = vmatprep.subr.mxu0 0.0
    %831 = vmatpush2.msra.mxu0 0.0
    %832 = vmatprep.subr.mxu0 0.0
    %833 = vmatpush2.msra.mxu0 0.0
    %834 = vmatprep.subr.mxu0 0.0
    %835 = vmatpush2.msra.mxu0 0.0
    %836 = vmatprep.subr.mxu0 0.0
    %837 = vmatpush2.msra.mxu0 0.0
    %838 = vmatprep.subr.mxu0 0.0
    %839 = vmatpush2.msra.mxu0 0.0
    %840 = vmatprep.subr.mxu0 0.0
    %841 = vmatpush2.msra.mxu0 0.0
    %842 = vmatprep.subr.mxu0 0.0
    %843 = vmatpush2.msra.mxu0 0.0
    %844 = vmatprep.subr.mxu0 0.0
    %845 = vmatpush2.msra.mxu0 0.0
    %846 = vmatprep.subr.mxu0 0.0
    %847 = vmatpush2.msra.mxu0 0.0
    %848 = vmatprep.subr.mxu0 0.0
    %849 = vmatpush2.msra.mxu0 0.0
    %850 = vmatprep.subr.mxu0 0.0
    %851 = vmatpush2.msra.mxu0 0.0
    %852 = vmatprep.subr.mxu0 0.0
    %853 = vmatpush2.msra.mxu0 0.0
    %854 = vmatprep.subr.mxu0 0.0
    %855 = vmatpush2.msra.mxu0 0.0
    %856 = vmatprep.subr.mxu0 0.0
    %857 = vmatpush2.msra.mxu0 0.0
    %858 = vmatprep.subr.mxu0 0.0
    %859 = vmatpush2.msra.mxu0 0.0
    %860 = vmatprep.mubr.f32.mxu0 0.0
    %861 = vmatmul.mubr.f32.gmra.mxu0 %v791
    %v862 = vpop.f32.mrf.mxu0
    %v863 = vadd.f32 %v104, %v862
    %v864 = vpop.f32.mrf.mxu0
    %865 = vmatprep.mubr.f32.mxu0 0.0
    %866 = vmatmul.mubr.f32.gmra.mxu0 %v794
    %v867 = vpop.f32.mrf.mxu0
    %v868 = vadd.f32 %v105, %v867
    %v869 = vpop.f32.mrf.mxu0
    %870 = vdwg.mxu0
    %v871 = vrcp.pop %v863
    %v872 = vmul.f32 %v787, %v871
    %v873 = vrcp.pop %v868
    %v874 = vmul.f32 %v789, %v873
    %v876 = vsel %vm777, %v872, 0
    %v879 = vsel %vm777, %v874, 0
    %881 = vmatprep.subr.mxu0 0.0
    %882 = vmatpush1.msra.mxu0 0.0
    %883 = vmatprep.subr.mxu0 0.0
    %884 = vmatpush1.msra.mxu0 0.0
    %885 = vmatprep.subr.mxu0 0.0
    %886 = vmatpush1.msra.mxu0 0.0
    %887 = vmatprep.subr.mxu0 0.0
    %888 = vmatpush1.msra.mxu0 0.0
    %889 = vmatprep.subr.mxu0 0.0
    %890 = vmatpush1.msra.mxu0 0.0
    %891 = vmatprep.subr.mxu0 0.0
    %892 = vmatpush1.msra.mxu0 0.0
    %893 = vmatprep.subr.mxu0 0.0
    %894 = vmatpush1.msra.mxu0 0.0
    %895 = vmatprep.subr.mxu0 0.0
    %896 = vmatpush1.msra.mxu0 0.0
    %897 = vmatprep.subr.mxu0 0.0
    %898 = vmatpush1.msra.mxu0 %v673
    %899 = vmatprep.subr.mxu0 0.0
    %900 = vmatpush1.msra.mxu0 %v672
    %901 = vmatprep.subr.mxu0 0.0
    %902 = vmatpush1.msra.mxu0 %v671
    %903 = vmatprep.subr.mxu0 0.0
    %904 = vmatpush1.msra.mxu0 %v670
    %905 = vmatprep.subr.mxu0 0.0
    %906 = vmatpush1.msra.mxu0 %v669
    %907 = vmatprep.subr.mxu0 0.0
    %908 = vmatpush1.msra.mxu0 %v668
    %909 = vmatprep.subr.mxu0 0.0
    %910 = vmatpush1.msra.mxu0 %v667
    %911 = vmatprep.subr.mxu0 0.0
    %912 = vmatpush1.msra.mxu0 %v666
    %913 = vmatprep.subr.mxu0 0.0
    %914 = vmatpush2.msra.mxu0 0.0
    %915 = vmatprep.subr.mxu0 0.0
    %916 = vmatpush2.msra.mxu0 0.0
    %917 = vmatprep.subr.mxu0 0.0
    %918 = vmatpush2.msra.mxu0 0.0
    %919 = vmatprep.subr.mxu0 0.0
    %920 = vmatpush2.msra.mxu0 0.0
    %921 = vmatprep.subr.mxu0 0.0
    %922 = vmatpush2.msra.mxu0 0.0
    %923 = vmatprep.subr.mxu0 0.0
    %924 = vmatpush2.msra.mxu0 0.0
    %925 = vmatprep.subr.mxu0 0.0
    %926 = vmatpush2.msra.mxu0 0.0
    %927 = vmatprep.subr.mxu0 0.0
    %928 = vmatpush2.msra.mxu0 0.0
    %929 = vmatprep.subr.mxu0 0.0
    %930 = vmatpush2.msra.mxu0 0.0
    %931 = vmatprep.subr.mxu0 0.0
    %932 = vmatpush2.msra.mxu0 0.0
    %933 = vmatprep.subr.mxu0 0.0
    %934 = vmatpush2.msra.mxu0 0.0
    %935 = vmatprep.subr.mxu0 0.0
    %936 = vmatpush2.msra.mxu0 0.0
    %937 = vmatprep.subr.mxu0 0.0
    %938 = vmatpush2.msra.mxu0 0.0
    %939 = vmatprep.subr.mxu0 0.0
    %940 = vmatpush2.msra.mxu0 0.0
    %941 = vmatprep.subr.mxu0 0.0
    %942 = vmatpush2.msra.mxu0 0.0
    %943 = vmatprep.subr.mxu0 0.0
    %944 = vmatpush2.msra.mxu0 0.0
    %945 = vmatprep.mubr.f32.mxu0 0.0
    %946 = vmatmul.mubr.f32.gmra.mxu0 %v876
    %v947 = vpop.f32.mrf.mxu0
    %v948 = vadd.f32 0.0, %v947
    %v949 = vpop.f32.mrf.mxu0
    %950 = vmatprep.mubr.f32.mxu0 0.0
    %951 = vmatmul.mubr.f32.gmra.mxu0 %v879
    %v952 = vpop.f32.mrf.mxu0
    %v953 = vadd.f32 0.0, %v952
    %v954 = vpop.f32.mrf.mxu0
    %955 = vdwg.mxu0
    %v956 = vld [vmem:[%s10] sm:$0xff]
    %v957 = vld [vmem:[%s10 + $0x8] sm:$0xff]
    %v958 = vld [vmem:[%s10 + $0x10] sm:$0xff]
    %v959 = vld [vmem:[%s10 + $0x18] sm:$0xff]
    %v960 = vlaneseq
    %v961 = vshrl.u32 %v960, 7
    %v962 = vsub.s32 1, %v961
    %v963 = vrot.slane %v318, %v962
    %v965 = vsel %vm327, %v948, 0
    %v968 = vsel %vm327, %v953, 0
    %970 = vmatprep.subr.mxu0 0.0
    %971 = vmatpush1.msra.mxu0 0.0
    %972 = vmatprep.subr.mxu0 0.0
    %973 = vmatpush1.msra.mxu0 0.0
    %974 = vmatprep.subr.mxu0 0.0
    %975 = vmatpush1.msra.mxu0 0.0
    %976 = vmatprep.subr.mxu0 0.0
    %977 = vmatpush1.msra.mxu0 0.0
    %978 = vmatprep.subr.mxu0 0.0
    %979 = vmatpush1.msra.mxu0 0.0
    %980 = vmatprep.subr.mxu0 0.0
    %981 = vmatpush1.msra.mxu0 0.0
    %982 = vmatprep.subr.mxu0 0.0
    %983 = vmatpush1.msra.mxu0 0.0
    %984 = vmatprep.subr.mxu0 0.0
    %985 = vmatpush1.msra.mxu0 0.0
    %986 = vmatprep.subr.mxu0 0.0
    %987 = vmatpush1.msra.mxu0 0.0
    %988 = vmatprep.subr.mxu0 0.0
    %989 = vmatpush1.msra.mxu0 0.0
    %990 = vmatprep.subr.mxu0 0.0
    %991 = vmatpush1.msra.mxu0 0.0
    %992 = vmatprep.subr.mxu0 0.0
    %993 = vmatpush1.msra.mxu0 0.0
    %994 = vmatprep.subr.mxu0 0.0
    %995 = vmatpush1.msra.mxu0 %v959
    %996 = vmatprep.subr.mxu0 0.0
    %997 = vmatpush1.msra.mxu0 %v958
    %998 = vmatprep.subr.mxu0 0.0
    %999 = vmatpush1.msra.mxu0 %v957
    %1000 = vmatprep.subr.mxu0 0.0
    %1001 = vmatpush1.msra.mxu0 %v956
    %1002 = vmatprep.subr.mxu0 0.0
    %1003 = vmatpush2.msra.mxu0 0.0
    %1004 = vmatprep.subr.mxu0 0.0
    %1005 = vmatpush2.msra.mxu0 0.0
    %1006 = vmatprep.subr.mxu0 0.0
    %1007 = vmatpush2.msra.mxu0 0.0
    %1008 = vmatprep.subr.mxu0 0.0
    %1009 = vmatpush2.msra.mxu0 0.0
    %1010 = vmatprep.subr.mxu0 0.0
    %1011 = vmatpush2.msra.mxu0 0.0
    %1012 = vmatprep.subr.mxu0 0.0
    %1013 = vmatpush2.msra.mxu0 0.0
    %1014 = vmatprep.subr.mxu0 0.0
    %1015 = vmatpush2.msra.mxu0 0.0
    %1016 = vmatprep.subr.mxu0 0.0
    %1017 = vmatpush2.msra.mxu0 0.0
    %1018 = vmatprep.subr.mxu0 0.0
    %1019 = vmatpush2.msra.mxu0 0.0
    %1020 = vmatprep.subr.mxu0 0.0
    %1021 = vmatpush2.msra.mxu0 0.0
    %1022 = vmatprep.subr.mxu0 0.0
    %1023 = vmatpush2.msra.mxu0 0.0
    %1024 = vmatprep.subr.mxu0 0.0
    %1025 = vmatpush2.msra.mxu0 0.0
    %1026 = vmatprep.subr.mxu0 0.0
    %1027 = vmatpush2.msra.mxu0 0.0
    %1028 = vmatprep.subr.mxu0 0.0
    %1029 = vmatpush2.msra.mxu0 0.0
    %1030 = vmatprep.subr.mxu0 0.0
    %1031 = vmatpush2.msra.mxu0 0.0
    %1032 = vmatprep.subr.mxu0 0.0
    %1033 = vmatpush2.msra.mxu0 0.0
    %1034 = vmatprep.mubr.f32.mxu0 0.0
    %1035 = vmatmul.mubr.f32.gmra.mxu0 %v965
    %v1036 = vpop.f32.mrf.mxu0
    %v1037 = vadd.f32 %v963, %v1036
    %v1038 = vpop.f32.mrf.mxu0
    %1039 = vmatprep.mubr.f32.mxu0 0.0
    %1040 = vmatmul.mubr.f32.gmra.mxu0 %v968
    %v1041 = vpop.f32.mrf.mxu0
    %v1042 = vadd.f32 %v963, %v1041
    %v1043 = vpop.f32.mrf.mxu0
    %1044 = vdwg.mxu0
    %v1045 = vadd.f32 %v205, %v1037
    %v1046 = vadd.f32 %v210, %v1042
    %v1047 = vsel %vm327, %v1045, 0.0
    %1048 = vadd.xlane.f32.xlu0 %v1047
    %v1049 = vpop.xlane.xlu0 %1048
    %v1050 = vsel %vm327, %v1046, 0.0
    %1051 = vadd.xlane.f32.xlu0 %v1050
    %v1052 = vpop.xlane.xlu0 %1051
    %v1053 = vrcp.pop 32.0
    %v1054 = vmul.f32 %v1049, %v1053
    %v1055 = vmul.f32 %v1052, %v1053
    %v1056 = vmul.f32 %v1045, %v1045
    %v1057 = vmul.f32 %v1046, %v1046
    %v1058 = vsel %vm327, %v1056, 0.0
    %1059 = vadd.xlane.f32.xlu0 %v1058
    %v1060 = vpop.xlane.xlu0 %1059
    %v1061 = vsel %vm327, %v1057, 0.0
    %1062 = vadd.xlane.f32.xlu0 %v1061
    %v1063 = vpop.xlane.xlu0 %1062
    %v1064 = vmul.f32 %v1060, %v1053
    %v1065 = vmul.f32 %v1063, %v1053
    %v1066 = vsub.f32 %v1045, %v1054
    %v1067 = vsub.f32 %v1046, %v1055
    %v1068 = vmul.f32 %v1054, %v1054
    %v1069 = vmul.f32 %v1055, %v1055
    %v1070 = vsub.f32 %v1064, %v1068
    %v1071 = vsub.f32 %v1065, %v1069
    %v1072 = vadd.f32 %v1070, 1e-05
    %v1073 = vadd.f32 %v1071, 1e-05
    %v1074 = vrsqrt.pop %v1072
    %v1075 = vrsqrt.pop %v1073
    %v1076 = vmul.f32 %v1066, %v1074
    %v1077 = vmul.f32 %v1067, %v1075
    %v1078 = vlaneseq
    %v1079 = vshrl.u32 %v1078, 7
    %v1080 = vsub.s32 2, %v1079
    %v1081 = vrot.slane %v318, %v1080
    %v1082 = vmul.f32 %v1076, %v1081
    %v1083 = vmul.f32 %v1077, %v1081
    %v1084 = vlaneseq
    %v1085 = vshrl.u32 %v1084, 7
    %v1086 = vsub.s32 3, %v1085
    %v1087 = vrot.slane %v318, %v1086
    %v1088 = vadd.f32 %v1082, %v1087
    %v1089 = vadd.f32 %v1083, %v1087
    %v1090 = vld [vmem:[%s11] sm:$0xff]
    %v1091 = vld [vmem:[%s11 + $0x8] sm:$0xff]
    %v1092 = vld [vmem:[%s11 + $0x10] sm:$0xff]
    %v1093 = vld [vmem:[%s11 + $0x18] sm:$0xff]
    %v1094 = vlaneseq
    %v1095 = vshrl.u32 %v1094, 7
    %v1096 = vsub.s32 4, %v1095
    %v1097 = vrot.slane %v318, %v1096
    %v1099 = vsel %vm327, %v1088, 0
    %v1102 = vsel %vm327, %v1089, 0
    %1104 = vmatprep.subr.mxu0 0.0
    %1105 = vmatpush1.msra.mxu0 0.0
    %1106 = vmatprep.subr.mxu0 0.0
    %1107 = vmatpush1.msra.mxu0 0.0
    %1108 = vmatprep.subr.mxu0 0.0
    %1109 = vmatpush1.msra.mxu0 0.0
    %1110 = vmatprep.subr.mxu0 0.0
    %1111 = vmatpush1.msra.mxu0 0.0
    %1112 = vmatprep.subr.mxu0 0.0
    %1113 = vmatpush1.msra.mxu0 0.0
    %1114 = vmatprep.subr.mxu0 0.0
    %1115 = vmatpush1.msra.mxu0 0.0
    %1116 = vmatprep.subr.mxu0 0.0
    %1117 = vmatpush1.msra.mxu0 0.0
    %1118 = vmatprep.subr.mxu0 0.0
    %1119 = vmatpush1.msra.mxu0 0.0
    %1120 = vmatprep.subr.mxu0 0.0
    %1121 = vmatpush1.msra.mxu0 0.0
    %1122 = vmatprep.subr.mxu0 0.0
    %1123 = vmatpush1.msra.mxu0 0.0
    %1124 = vmatprep.subr.mxu0 0.0
    %1125 = vmatpush1.msra.mxu0 0.0
    %1126 = vmatprep.subr.mxu0 0.0
    %1127 = vmatpush1.msra.mxu0 0.0
    %1128 = vmatprep.subr.mxu0 0.0
    %1129 = vmatpush1.msra.mxu0 %v1093
    %1130 = vmatprep.subr.mxu0 0.0
    %1131 = vmatpush1.msra.mxu0 %v1092
    %1132 = vmatprep.subr.mxu0 0.0
    %1133 = vmatpush1.msra.mxu0 %v1091
    %1134 = vmatprep.subr.mxu0 0.0
    %1135 = vmatpush1.msra.mxu0 %v1090
    %1136 = vmatprep.subr.mxu0 0.0
    %1137 = vmatpush2.msra.mxu0 0.0
    %1138 = vmatprep.subr.mxu0 0.0
    %1139 = vmatpush2.msra.mxu0 0.0
    %1140 = vmatprep.subr.mxu0 0.0
    %1141 = vmatpush2.msra.mxu0 0.0
    %1142 = vmatprep.subr.mxu0 0.0
    %1143 = vmatpush2.msra.mxu0 0.0
    %1144 = vmatprep.subr.mxu0 0.0
    %1145 = vmatpush2.msra.mxu0 0.0
    %1146 = vmatprep.subr.mxu0 0.0
    %1147 = vmatpush2.msra.mxu0 0.0
    %1148 = vmatprep.subr.mxu0 0.0
    %1149 = vmatpush2.msra.mxu0 0.0
    %1150 = vmatprep.subr.mxu0 0.0
    %1151 = vmatpush2.msra.mxu0 0.0
    %1152 = vmatprep.subr.mxu0 0.0
    %1153 = vmatpush2.msra.mxu0 0.0
    %1154 = vmatprep.subr.mxu0 0.0
    %1155 = vmatpush2.msra.mxu0 0.0
    %1156 = vmatprep.subr.mxu0 0.0
    %1157 = vmatpush2.msra.mxu0 0.0
    %1158 = vmatprep.subr.mxu0 0.0
    %1159 = vmatpush2.msra.mxu0 0.0
    %1160 = vmatprep.subr.mxu0 0.0
    %1161 = vmatpush2.msra.mxu0 0.0
    %1162 = vmatprep.subr.mxu0 0.0
    %1163 = vmatpush2.msra.mxu0 0.0
    %1164 = vmatprep.subr.mxu0 0.0
    %1165 = vmatpush2.msra.mxu0 0.0
    %1166 = vmatprep.subr.mxu0 0.0
    %1167 = vmatpush2.msra.mxu0 0.0
    %1168 = vmatprep.mubr.f32.mxu0 0.0
    %1169 = vmatmul.mubr.f32.gmra.mxu0 %v1099
    %v1170 = vpop.f32.mrf.mxu0
    %v1171 = vadd.f32 %v1097, %v1170
    %v1172 = vpop.f32.mrf.mxu0
    %1173 = vmatprep.mubr.f32.mxu0 0.0
    %1174 = vmatmul.mubr.f32.gmra.mxu0 %v1102
    %v1175 = vpop.f32.mrf.mxu0
    %v1176 = vadd.f32 %v1097, %v1175
    %v1177 = vpop.f32.mrf.mxu0
    %1178 = vdwg.mxu0
    %v1179 = vmax.f32 %v1171, 0.0
    %v1180 = vmax.f32 %v1176, 0.0
    %v1181 = vld [vmem:[%s12] sm:$0xff]
    %v1182 = vld [vmem:[%s12 + $0x8] sm:$0xff]
    %v1183 = vld [vmem:[%s12 + $0x10] sm:$0xff]
    %v1184 = vld [vmem:[%s12 + $0x18] sm:$0xff]
    %v1185 = vld [vmem:[%s12 + $0x20] sm:$0xff]
    %v1186 = vld [vmem:[%s12 + $0x28] sm:$0xff]
    %v1187 = vld [vmem:[%s12 + $0x30] sm:$0xff]
    %v1188 = vld [vmem:[%s12 + $0x38] sm:$0xff]
    %v1189 = vlaneseq
    %v1190 = vshrl.u32 %v1189, 7
    %v1191 = vsub.s32 5, %v1190
    %v1192 = vrot.slane %v318, %v1191
    %v1194 = vsel %vm777, %v1179, 0
    %v1197 = vsel %vm777, %v1180, 0
    %1199 = vmatprep.subr.mxu0 0.0
    %1200 = vmatpush1.msra.mxu0 0.0
    %1201 = vmatprep.subr.mxu0 0.0
    %1202 = vmatpush1.msra.mxu0 0.0
    %1203 = vmatprep.subr.mxu0 0.0
    %1204 = vmatpush1.msra.mxu0 0.0
    %1205 = vmatprep.subr.mxu0 0.0
    %1206 = vmatpush1.msra.mxu0 0.0
    %1207 = vmatprep.subr.mxu0 0.0
    %1208 = vmatpush1.msra.mxu0 0.0
    %1209 = vmatprep.subr.mxu0 0.0
    %1210 = vmatpush1.msra.mxu0 0.0
    %1211 = vmatprep.subr.mxu0 0.0
    %1212 = vmatpush1.msra.mxu0 0.0
    %1213 = vmatprep.subr.mxu0 0.0
    %1214 = vmatpush1.msra.mxu0 0.0
    %1215 = vmatprep.subr.mxu0 0.0
    %1216 = vmatpush1.msra.mxu0 %v1188
    %1217 = vmatprep.subr.mxu0 0.0
    %1218 = vmatpush1.msra.mxu0 %v1187
    %1219 = vmatprep.subr.mxu0 0.0
    %1220 = vmatpush1.msra.mxu0 %v1186
    %1221 = vmatprep.subr.mxu0 0.0
    %1222 = vmatpush1.msra.mxu0 %v1185
    %1223 = vmatprep.subr.mxu0 0.0
    %1224 = vmatpush1.msra.mxu0 %v1184
    %1225 = vmatprep.subr.mxu0 0.0
    %1226 = vmatpush1.msra.mxu0 %v1183
    %1227 = vmatprep.subr.mxu0 0.0
    %1228 = vmatpush1.msra.mxu0 %v1182
    %1229 = vmatprep.subr.mxu0 0.0
    %1230 = vmatpush1.msra.mxu0 %v1181
    %1231 = vmatprep.subr.mxu0 0.0
    %1232 = vmatpush2.msra.mxu0 0.0
    %1233 = vmatprep.subr.mxu0 0.0
    %1234 = vmatpush2.msra.mxu0 0.0
    %1235 = vmatprep.subr.mxu0 0.0
    %1236 = vmatpush2.msra.mxu0 0.0
    %1237 = vmatprep.subr.mxu0 0.0
    %1238 = vmatpush2.msra.mxu0 0.0
    %1239 = vmatprep.subr.mxu0 0.0
    %1240 = vmatpush2.msra.mxu0 0.0
    %1241 = vmatprep.subr.mxu0 0.0
    %1242 = vmatpush2.msra.mxu0 0.0
    %1243 = vmatprep.subr.mxu0 0.0
    %1244 = vmatpush2.msra.mxu0 0.0
    %1245 = vmatprep.subr.mxu0 0.0
    %1246 = vmatpush2.msra.mxu0 0.0
    %1247 = vmatprep.subr.mxu0 0.0
    %1248 = vmatpush2.msra.mxu0 0.0
    %1249 = vmatprep.subr.mxu0 0.0
    %1250 = vmatpush2.msra.mxu0 0.0
    %1251 = vmatprep.subr.mxu0 0.0
    %1252 = vmatpush2.msra.mxu0 0.0
    %1253 = vmatprep.subr.mxu0 0.0
    %1254 = vmatpush2.msra.mxu0 0.0
    %1255 = vmatprep.subr.mxu0 0.0
    %1256 = vmatpush2.msra.mxu0 0.0
    %1257 = vmatprep.subr.mxu0 0.0
    %1258 = vmatpush2.msra.mxu0 0.0
    %1259 = vmatprep.subr.mxu0 0.0
    %1260 = vmatpush2.msra.mxu0 0.0
    %1261 = vmatprep.subr.mxu0 0.0
    %1262 = vmatpush2.msra.mxu0 0.0
    %1263 = vmatprep.mubr.f32.mxu0 0.0
    %1264 = vmatmul.mubr.f32.gmra.mxu0 %v1194
    %v1265 = vpop.f32.mrf.mxu0
    %v1266 = vadd.f32 %v1192, %v1265
    %v1267 = vpop.f32.mrf.mxu0
    %1268 = vmatprep.mubr.f32.mxu0 0.0
    %1269 = vmatmul.mubr.f32.gmra.mxu0 %v1197
    %v1270 = vpop.f32.mrf.mxu0
    %v1271 = vadd.f32 %v1192, %v1270
    %v1272 = vpop.f32.mrf.mxu0
    %1273 = vdwg.mxu0
    %v1274 = vadd.f32 %v1088, %v1266
    %v1275 = vadd.f32 %v1089, %v1271
    %v1276 = vsel %vm327, %v1274, 0.0
    %1277 = vadd.xlane.f32.xlu0 %v1276
    %v1278 = vpop.xlane.xlu0 %1277
    %v1279 = vsel %vm327, %v1275, 0.0
    %1280 = vadd.xlane.f32.xlu0 %v1279
    %v1281 = vpop.xlane.xlu0 %1280
    %v1282 = vmul.f32 %v1278, %v1053
    %v1283 = vmul.f32 %v1281, %v1053
    %v1284 = vmul.f32 %v1274, %v1274
    %v1285 = vmul.f32 %v1275, %v1275
    %v1286 = vsel %vm327, %v1284, 0.0
    %1287 = vadd.xlane.f32.xlu0 %v1286
    %v1288 = vpop.xlane.xlu0 %1287
    %v1289 = vsel %vm327, %v1285, 0.0
    %1290 = vadd.xlane.f32.xlu0 %v1289
    %v1291 = vpop.xlane.xlu0 %1290
    %v1292 = vmul.f32 %v1288, %v1053
    %v1293 = vmul.f32 %v1291, %v1053
    %v1294 = vsub.f32 %v1274, %v1282
    %v1295 = vsub.f32 %v1275, %v1283
    %v1296 = vmul.f32 %v1282, %v1282
    %v1297 = vmul.f32 %v1283, %v1283
    %v1298 = vsub.f32 %v1292, %v1296
    %v1299 = vsub.f32 %v1293, %v1297
    %v1300 = vadd.f32 %v1298, 1e-05
    %v1301 = vadd.f32 %v1299, 1e-05
    %v1302 = vrsqrt.pop %v1300
    %v1303 = vrsqrt.pop %v1301
    %v1304 = vmul.f32 %v1294, %v1302
    %v1305 = vmul.f32 %v1295, %v1303
    %v1306 = vlaneseq
    %v1307 = vshrl.u32 %v1306, 7
    %v1308 = vsub.s32 6, %v1307
    %v1309 = vrot.slane %v318, %v1308
    %v1310 = vmul.f32 %v1304, %v1309
    %v1311 = vmul.f32 %v1305, %v1309
    %v1312 = vlaneseq
    %v1313 = vshrl.u32 %v1312, 7
    %v1314 = vsub.s32 7, %v1313
    %v1315 = vrot.slane %v318, %v1314
    %v1316 = vadd.f32 %v1310, %v1315
    %v1317 = vadd.f32 %v1311, %v1315
    %s1318 = scalar_lea.vmem %s13, 8
    %v1319 = vld [vmem:[%s1318] sm:$0xff]
    %s1320 = scalar_lea.vmem %s9, 32
    %v1321 = vld [vmem:[%s1320] sm:$0xff]
    %v1322 = vld [vmem:[%s1320 + $0x8] sm:$0xff]
    %v1323 = vld [vmem:[%s1320 + $0x10] sm:$0xff]
    %v1324 = vld [vmem:[%s1320 + $0x18] sm:$0xff]
    %v1325 = vlaneseq
    %v1326 = vshrl.u32 %v1325, 7
    %v1327 = vsub.s32 0, %v1326
    %v1328 = vrot.slane %v1319, %v1327
    %v1330 = vsel %vm327, %v1316, 0
    %v1333 = vsel %vm327, %v1317, 0
    %1335 = vmatprep.subr.mxu0 0.0
    %1336 = vmatpush1.msra.mxu0 0.0
    %1337 = vmatprep.subr.mxu0 0.0
    %1338 = vmatpush1.msra.mxu0 0.0
    %1339 = vmatprep.subr.mxu0 0.0
    %1340 = vmatpush1.msra.mxu0 0.0
    %1341 = vmatprep.subr.mxu0 0.0
    %1342 = vmatpush1.msra.mxu0 0.0
    %1343 = vmatprep.subr.mxu0 0.0
    %1344 = vmatpush1.msra.mxu0 0.0
    %1345 = vmatprep.subr.mxu0 0.0
    %1346 = vmatpush1.msra.mxu0 0.0
    %1347 = vmatprep.subr.mxu0 0.0
    %1348 = vmatpush1.msra.mxu0 0.0
    %1349 = vmatprep.subr.mxu0 0.0
    %1350 = vmatpush1.msra.mxu0 0.0
    %1351 = vmatprep.subr.mxu0 0.0
    %1352 = vmatpush1.msra.mxu0 0.0
    %1353 = vmatprep.subr.mxu0 0.0
    %1354 = vmatpush1.msra.mxu0 0.0
    %1355 = vmatprep.subr.mxu0 0.0
    %1356 = vmatpush1.msra.mxu0 0.0
    %1357 = vmatprep.subr.mxu0 0.0
    %1358 = vmatpush1.msra.mxu0 0.0
    %1359 = vmatprep.subr.mxu0 0.0
    %1360 = vmatpush1.msra.mxu0 %v1324
    %1361 = vmatprep.subr.mxu0 0.0
    %1362 = vmatpush1.msra.mxu0 %v1323
    %1363 = vmatprep.subr.mxu0 0.0
    %1364 = vmatpush1.msra.mxu0 %v1322
    %1365 = vmatprep.subr.mxu0 0.0
    %1366 = vmatpush1.msra.mxu0 %v1321
    %1367 = vmatprep.subr.mxu0 0.0
    %1368 = vmatpush2.msra.mxu0 0.0
    %1369 = vmatprep.subr.mxu0 0.0
    %1370 = vmatpush2.msra.mxu0 0.0
    %1371 = vmatprep.subr.mxu0 0.0
    %1372 = vmatpush2.msra.mxu0 0.0
    %1373 = vmatprep.subr.mxu0 0.0
    %1374 = vmatpush2.msra.mxu0 0.0
    %1375 = vmatprep.subr.mxu0 0.0
    %1376 = vmatpush2.msra.mxu0 0.0
    %1377 = vmatprep.subr.mxu0 0.0
    %1378 = vmatpush2.msra.mxu0 0.0
    %1379 = vmatprep.subr.mxu0 0.0
    %1380 = vmatpush2.msra.mxu0 0.0
    %1381 = vmatprep.subr.mxu0 0.0
    %1382 = vmatpush2.msra.mxu0 0.0
    %1383 = vmatprep.subr.mxu0 0.0
    %1384 = vmatpush2.msra.mxu0 0.0
    %1385 = vmatprep.subr.mxu0 0.0
    %1386 = vmatpush2.msra.mxu0 0.0
    %1387 = vmatprep.subr.mxu0 0.0
    %1388 = vmatpush2.msra.mxu0 0.0
    %1389 = vmatprep.subr.mxu0 0.0
    %1390 = vmatpush2.msra.mxu0 0.0
    %1391 = vmatprep.subr.mxu0 0.0
    %1392 = vmatpush2.msra.mxu0 0.0
    %1393 = vmatprep.subr.mxu0 0.0
    %1394 = vmatpush2.msra.mxu0 0.0
    %1395 = vmatprep.subr.mxu0 0.0
    %1396 = vmatpush2.msra.mxu0 0.0
    %1397 = vmatprep.subr.mxu0 0.0
    %1398 = vmatpush2.msra.mxu0 0.0
    %1399 = vmatprep.mubr.f32.mxu0 0.0
    %1400 = vmatmul.mubr.f32.gmra.mxu0 %v1330
    %v1401 = vpop.f32.mrf.mxu0
    %v1402 = vadd.f32 %v1328, %v1401
    %v1403 = vpop.f32.mrf.mxu0
    %1404 = vmatprep.mubr.f32.mxu0 0.0
    %1405 = vmatmul.mubr.f32.gmra.mxu0 %v1333
    %v1406 = vpop.f32.mrf.mxu0
    %v1407 = vadd.f32 %v1328, %v1406
    %v1408 = vpop.f32.mrf.mxu0
    %1409 = vdwg.mxu0
    %1412 = vrot.lane.b32.xlu0 %v1402, 96
    %v1413 = vpop.permute.xlu0 %1412
    %1414 = vrot.lane.b32.xlu0 %v1407, 96
    %v1415 = vpop.permute.xlu0 %1414
    %1418 = vmatprep.subr.mxu0 0.0
    %1419 = vmatpush1.msra.mxu0 0.0
    %1420 = vmatprep.subr.mxu0 0.0
    %1421 = vmatpush1.msra.mxu0 0.0
    %1422 = vmatprep.subr.mxu0 0.0
    %1423 = vmatpush1.msra.mxu0 0.0
    %1424 = vmatprep.subr.mxu0 0.0
    %1425 = vmatpush1.msra.mxu0 0.0
    %1426 = vmatprep.subr.mxu0 0.0
    %1427 = vmatpush1.msra.mxu0 0.0
    %1428 = vmatprep.subr.mxu0 0.0
    %1429 = vmatpush1.msra.mxu0 0.0
    %1430 = vmatprep.subr.mxu0 0.0
    %1431 = vmatpush1.msra.mxu0 0.0
    %1432 = vmatprep.subr.mxu0 0.0
    %1433 = vmatpush1.msra.mxu0 0.0
    %1434 = vmatprep.subr.mxu0 0.0
    %1435 = vmatpush1.msra.mxu0 0.0
    %1436 = vmatprep.subr.mxu0 0.0
    %1437 = vmatpush1.msra.mxu0 0.0
    %1438 = vmatprep.subr.mxu0 0.0
    %1439 = vmatpush1.msra.mxu0 0.0
    %1440 = vmatprep.subr.mxu0 0.0
    %1441 = vmatpush1.msra.mxu0 0.0
    %1442 = vmatprep.subr.mxu0 0.0
    %1443 = vmatpush1.msra.mxu0 0.0
    %1444 = vmatprep.subr.mxu0 0.0
    %1445 = vmatpush1.msra.mxu0 0.0
    %1446 = vmatprep.subr.mxu0 0.0
    %1447 = vmatpush1.msra.mxu0 %v1415
    %1448 = vmatprep.subr.mxu0 0.0
    %1449 = vmatpush1.msra.mxu0 %v1413
    %1450 = vmatprep.subr.mxu0 0.0
    %1451 = vmatpush2.msra.mxu0 0.0
    %1452 = vmatprep.subr.mxu0 0.0
    %1453 = vmatpush2.msra.mxu0 0.0
    %1454 = vmatprep.subr.mxu0 0.0
    %1455 = vmatpush2.msra.mxu0 0.0
    %1456 = vmatprep.subr.mxu0 0.0
    %1457 = vmatpush2.msra.mxu0 0.0
    %1458 = vmatprep.subr.mxu0 0.0
    %1459 = vmatpush2.msra.mxu0 0.0
    %1460 = vmatprep.subr.mxu0 0.0
    %1461 = vmatpush2.msra.mxu0 0.0
    %1462 = vmatprep.subr.mxu0 0.0
    %1463 = vmatpush2.msra.mxu0 0.0
    %1464 = vmatprep.subr.mxu0 0.0
    %1465 = vmatpush2.msra.mxu0 0.0
    %1466 = vmatprep.subr.mxu0 0.0
    %1467 = vmatpush2.msra.mxu0 0.0
    %1468 = vmatprep.subr.mxu0 0.0
    %1469 = vmatpush2.msra.mxu0 0.0
    %1470 = vmatprep.subr.mxu0 0.0
    %1471 = vmatpush2.msra.mxu0 0.0
    %1472 = vmatprep.subr.mxu0 0.0
    %1473 = vmatpush2.msra.mxu0 0.0
    %1474 = vmatprep.subr.mxu0 0.0
    %1475 = vmatpush2.msra.mxu0 0.0
    %1476 = vmatprep.subr.mxu0 0.0
    %1477 = vmatpush2.msra.mxu0 0.0
    %1478 = vmatprep.subr.mxu0 0.0
    %1479 = vmatpush2.msra.mxu0 0.0
    %1480 = vmatprep.subr.mxu0 0.0
    %1481 = vmatpush2.msra.mxu0 0.0
    %1482 = vmatprep.mubr.f32.mxu0 0.0
    %1483 = vmatmul.mubr.f32.gmra.mxu0 %v419
    %v1484 = vpop.f32.mrf.mxu0
    %v1485 = vadd.f32 0.0, %v1484
    %v1486 = vpop.f32.mrf.mxu0
    %1487 = vmatprep.mubr.f32.mxu0 0.0
    %1488 = vmatmul.mubr.f32.gmra.mxu0 %v422
    %v1489 = vpop.f32.mrf.mxu0
    %v1490 = vadd.f32 0.0, %v1489
    %v1491 = vpop.f32.mrf.mxu0
    %1492 = vmatprep.mubr.f32.mxu0 0.0
    %1493 = vmatmul.mubr.f32.gmra.mxu0 %v425
    %v1494 = vpop.f32.mrf.mxu0
    %v1495 = vadd.f32 0.0, %v1494
    %v1496 = vpop.f32.mrf.mxu0
    %1497 = vmatprep.mubr.f32.mxu0 0.0
    %1498 = vmatmul.mubr.f32.gmra.mxu0 %v428
    %v1499 = vpop.f32.mrf.mxu0
    %v1500 = vadd.f32 0.0, %v1499
    %v1501 = vpop.f32.mrf.mxu0
    %1502 = vmatprep.mubr.f32.mxu0 0.0
    %1503 = vmatmul.mubr.f32.gmra.mxu0 %v431
    %v1504 = vpop.f32.mrf.mxu0
    %v1505 = vadd.f32 0.0, %v1504
    %v1506 = vpop.f32.mrf.mxu0
    %1507 = vmatprep.mubr.f32.mxu0 0.0
    %1508 = vmatmul.mubr.f32.gmra.mxu0 %v434
    %v1509 = vpop.f32.mrf.mxu0
    %v1510 = vadd.f32 0.0, %v1509
    %v1511 = vpop.f32.mrf.mxu0
    %1512 = vmatprep.mubr.f32.mxu0 0.0
    %1513 = vmatmul.mubr.f32.gmra.mxu0 %v437
    %v1514 = vpop.f32.mrf.mxu0
    %v1515 = vadd.f32 0.0, %v1514
    %v1516 = vpop.f32.mrf.mxu0
    %1517 = vmatprep.mubr.f32.mxu0 0.0
    %1518 = vmatmul.mubr.f32.gmra.mxu0 %v440
    %v1519 = vpop.f32.mrf.mxu0
    %v1520 = vadd.f32 0.0, %v1519
    %v1521 = vpop.f32.mrf.mxu0
    %1522 = vdwg.mxu0
    %v1523 = vmul.f32 %v1485, %v86
    %v1524 = vmul.f32 %v1490, %v87
    %v1525 = vmul.f32 %v1495, %v88
    %v1526 = vmul.f32 %v1500, %v89
    %v1527 = vmul.f32 %v1505, %v90
    %v1528 = vmul.f32 %v1510, %v91
    %v1529 = vmul.f32 %v1515, %v92
    %v1530 = vmul.f32 %v1520, %v93
    %1531 = vrot.lane.b32.xlu0 %v1402, 64
    %v1532 = vpop.permute.xlu0 %1531
    %1533 = vrot.lane.b32.xlu0 %v1407, 64
    %v1534 = vpop.permute.xlu0 %1533
    %1537 = vmatprep.subr.mxu0 0.0
    %1538 = vmatpush1.msra.mxu0 0.0
    %1539 = vmatprep.subr.mxu0 0.0
    %1540 = vmatpush1.msra.mxu0 0.0
    %1541 = vmatprep.subr.mxu0 0.0
    %1542 = vmatpush1.msra.mxu0 0.0
    %1543 = vmatprep.subr.mxu0 0.0
    %1544 = vmatpush1.msra.mxu0 0.0
    %1545 = vmatprep.subr.mxu0 0.0
    %1546 = vmatpush1.msra.mxu0 0.0
    %1547 = vmatprep.subr.mxu0 0.0
    %1548 = vmatpush1.msra.mxu0 0.0
    %1549 = vmatprep.subr.mxu0 0.0
    %1550 = vmatpush1.msra.mxu0 0.0
    %1551 = vmatprep.subr.mxu0 0.0
    %1552 = vmatpush1.msra.mxu0 0.0
    %1553 = vmatprep.subr.mxu0 0.0
    %1554 = vmatpush1.msra.mxu0 0.0
    %1555 = vmatprep.subr.mxu0 0.0
    %1556 = vmatpush1.msra.mxu0 0.0
    %1557 = vmatprep.subr.mxu0 0.0
    %1558 = vmatpush1.msra.mxu0 0.0
    %1559 = vmatprep.subr.mxu0 0.0
    %1560 = vmatpush1.msra.mxu0 0.0
    %1561 = vmatprep.subr.mxu0 0.0
    %1562 = vmatpush1.msra.mxu0 0.0
    %1563 = vmatprep.subr.mxu0 0.0
    %1564 = vmatpush1.msra.mxu0 0.0
    %1565 = vmatprep.subr.mxu0 0.0
    %1566 = vmatpush1.msra.mxu0 %v1534
    %1567 = vmatprep.subr.mxu0 0.0
    %1568 = vmatpush1.msra.mxu0 %v1532
    %1569 = vmatprep.subr.mxu0 0.0
    %1570 = vmatpush2.msra.mxu0 0.0
    %1571 = vmatprep.subr.mxu0 0.0
    %1572 = vmatpush2.msra.mxu0 0.0
    %1573 = vmatprep.subr.mxu0 0.0
    %1574 = vmatpush2.msra.mxu0 0.0
    %1575 = vmatprep.subr.mxu0 0.0
    %1576 = vmatpush2.msra.mxu0 0.0
    %1577 = vmatprep.subr.mxu0 0.0
    %1578 = vmatpush2.msra.mxu0 0.0
    %1579 = vmatprep.subr.mxu0 0.0
    %1580 = vmatpush2.msra.mxu0 0.0
    %1581 = vmatprep.subr.mxu0 0.0
    %1582 = vmatpush2.msra.mxu0 0.0
    %1583 = vmatprep.subr.mxu0 0.0
    %1584 = vmatpush2.msra.mxu0 0.0
    %1585 = vmatprep.subr.mxu0 0.0
    %1586 = vmatpush2.msra.mxu0 0.0
    %1587 = vmatprep.subr.mxu0 0.0
    %1588 = vmatpush2.msra.mxu0 0.0
    %1589 = vmatprep.subr.mxu0 0.0
    %1590 = vmatpush2.msra.mxu0 0.0
    %1591 = vmatprep.subr.mxu0 0.0
    %1592 = vmatpush2.msra.mxu0 0.0
    %1593 = vmatprep.subr.mxu0 0.0
    %1594 = vmatpush2.msra.mxu0 0.0
    %1595 = vmatprep.subr.mxu0 0.0
    %1596 = vmatpush2.msra.mxu0 0.0
    %1597 = vmatprep.subr.mxu0 0.0
    %1598 = vmatpush2.msra.mxu0 0.0
    %1599 = vmatprep.subr.mxu0 0.0
    %1600 = vmatpush2.msra.mxu0 0.0
    %1601 = vmatprep.mubr.f32.mxu0 0.0
    %1602 = vmatmul.mubr.f32.gmra.mxu0 %v419
    %v1603 = vpop.f32.mrf.mxu0
    %v1604 = vadd.f32 0.0, %v1603
    %v1605 = vpop.f32.mrf.mxu0
    %1606 = vmatprep.mubr.f32.mxu0 0.0
    %1607 = vmatmul.mubr.f32.gmra.mxu0 %v422
    %v1608 = vpop.f32.mrf.mxu0
    %v1609 = vadd.f32 0.0, %v1608
    %v1610 = vpop.f32.mrf.mxu0
    %1611 = vmatprep.mubr.f32.mxu0 0.0
    %1612 = vmatmul.mubr.f32.gmra.mxu0 %v425
    %v1613 = vpop.f32.mrf.mxu0
    %v1614 = vadd.f32 0.0, %v1613
    %v1615 = vpop.f32.mrf.mxu0
    %1616 = vmatprep.mubr.f32.mxu0 0.0
    %1617 = vmatmul.mubr.f32.gmra.mxu0 %v428
    %v1618 = vpop.f32.mrf.mxu0
    %v1619 = vadd.f32 0.0, %v1618
    %v1620 = vpop.f32.mrf.mxu0
    %1621 = vmatprep.mubr.f32.mxu0 0.0
    %1622 = vmatmul.mubr.f32.gmra.mxu0 %v431
    %v1623 = vpop.f32.mrf.mxu0
    %v1624 = vadd.f32 0.0, %v1623
    %v1625 = vpop.f32.mrf.mxu0
    %1626 = vmatprep.mubr.f32.mxu0 0.0
    %1627 = vmatmul.mubr.f32.gmra.mxu0 %v434
    %v1628 = vpop.f32.mrf.mxu0
    %v1629 = vadd.f32 0.0, %v1628
    %v1630 = vpop.f32.mrf.mxu0
    %1631 = vmatprep.mubr.f32.mxu0 0.0
    %1632 = vmatmul.mubr.f32.gmra.mxu0 %v437
    %v1633 = vpop.f32.mrf.mxu0
    %v1634 = vadd.f32 0.0, %v1633
    %v1635 = vpop.f32.mrf.mxu0
    %1636 = vmatprep.mubr.f32.mxu0 0.0
    %1637 = vmatmul.mubr.f32.gmra.mxu0 %v440
    %v1638 = vpop.f32.mrf.mxu0
    %v1639 = vadd.f32 0.0, %v1638
    %v1640 = vpop.f32.mrf.mxu0
    %1641 = vdwg.mxu0
    %v1642 = vmul.f32 %v1604, %v86
    %v1643 = vmul.f32 %v1609, %v87
    %v1644 = vmul.f32 %v1614, %v88
    %v1645 = vmul.f32 %v1619, %v89
    %v1646 = vmul.f32 %v1624, %v90
    %v1647 = vmul.f32 %v1629, %v91
    %v1648 = vmul.f32 %v1634, %v92
    %v1649 = vmul.f32 %v1639, %v93
    %v1650 = vsel %vm327, %v1402, 0
    %v1652 = vsel %vm327, %v1407, 0
    %v1655 = vsel %vm327, %v1523, 0
    %v1658 = vsel %vm327, %v1524, 0
    %v1661 = vsel %vm327, %v1525, 0
    %v1664 = vsel %vm327, %v1526, 0
    %v1667 = vsel %vm327, %v1527, 0
    %v1670 = vsel %vm327, %v1528, 0
    %v1673 = vsel %vm327, %v1529, 0
    %v1676 = vsel %vm327, %v1530, 0
    %1678 = vmatprep.subr.mxu0 0.0
    %1679 = vmatpush1.xpose.msra.mxu0 0.0
    %1680 = vmatprep.subr.mxu0 0.0
    %1681 = vmatpush1.xpose.msra.mxu0 0.0
    %1682 = vmatprep.subr.mxu0 0.0
    %1683 = vmatpush1.xpose.msra.mxu0 0.0
    %1684 = vmatprep.subr.mxu0 0.0
    %1685 = vmatpush1.xpose.msra.mxu0 0.0
    %1686 = vmatprep.subr.mxu0 0.0
    %1687 = vmatpush1.xpose.msra.mxu0 0.0
    %1688 = vmatprep.subr.mxu0 0.0
    %1689 = vmatpush1.xpose.msra.mxu0 0.0
    %1690 = vmatprep.subr.mxu0 0.0
    %1691 = vmatpush1.xpose.msra.mxu0 0.0
    %1692 = vmatprep.subr.mxu0 0.0
    %1693 = vmatpush1.xpose.msra.mxu0 0.0
    %1694 = vmatprep.subr.mxu0 0.0
    %1695 = vmatpush1.xpose.msra.mxu0 %v1676
    %1696 = vmatprep.subr.mxu0 0.0
    %1697 = vmatpush1.xpose.msra.mxu0 %v1673
    %1698 = vmatprep.subr.mxu0 0.0
    %1699 = vmatpush1.xpose.msra.mxu0 %v1670
    %1700 = vmatprep.subr.mxu0 0.0
    %1701 = vmatpush1.xpose.msra.mxu0 %v1667
    %1702 = vmatprep.subr.mxu0 0.0
    %1703 = vmatpush1.xpose.msra.mxu0 %v1664
    %1704 = vmatprep.subr.mxu0 0.0
    %1705 = vmatpush1.xpose.msra.mxu0 %v1661
    %1706 = vmatprep.subr.mxu0 0.0
    %1707 = vmatpush1.xpose.msra.mxu0 %v1658
    %1708 = vmatprep.subr.mxu0 0.0
    %1709 = vmatpush1.xpose.msra.mxu0 %v1655
    %1710 = vmatprep.subr.mxu0 0.0
    %1711 = vmatpush2.xpose.msra.mxu0 0.0
    %1712 = vmatprep.subr.mxu0 0.0
    %1713 = vmatpush2.xpose.msra.mxu0 0.0
    %1714 = vmatprep.subr.mxu0 0.0
    %1715 = vmatpush2.xpose.msra.mxu0 0.0
    %1716 = vmatprep.subr.mxu0 0.0
    %1717 = vmatpush2.xpose.msra.mxu0 0.0
    %1718 = vmatprep.subr.mxu0 0.0
    %1719 = vmatpush2.xpose.msra.mxu0 0.0
    %1720 = vmatprep.subr.mxu0 0.0
    %1721 = vmatpush2.xpose.msra.mxu0 0.0
    %1722 = vmatprep.subr.mxu0 0.0
    %1723 = vmatpush2.xpose.msra.mxu0 0.0
    %1724 = vmatprep.subr.mxu0 0.0
    %1725 = vmatpush2.xpose.msra.mxu0 0.0
    %1726 = vmatprep.subr.mxu0 0.0
    %1727 = vmatpush2.xpose.msra.mxu0 0.0
    %1728 = vmatprep.subr.mxu0 0.0
    %1729 = vmatpush2.xpose.msra.mxu0 0.0
    %1730 = vmatprep.subr.mxu0 0.0
    %1731 = vmatpush2.xpose.msra.mxu0 0.0
    %1732 = vmatprep.subr.mxu0 0.0
    %1733 = vmatpush2.xpose.msra.mxu0 0.0
    %1734 = vmatprep.subr.mxu0 0.0
    %1735 = vmatpush2.xpose.msra.mxu0 0.0
    %1736 = vmatprep.subr.mxu0 0.0
    %1737 = vmatpush2.xpose.msra.mxu0 0.0
    %1738 = vmatprep.subr.mxu0 0.0
    %1739 = vmatpush2.xpose.msra.mxu0 0.0
    %1740 = vmatprep.subr.mxu0 0.0
    %1741 = vmatpush2.xpose.msra.mxu0 0.0
    %1742 = vmatprep.mubr.f32.mxu0 0.0
    %1743 = vmatmul.mubr.f32.gmra.mxu0 %v1650
    %v1744 = vpop.f32.mrf.mxu0
    %v1745 = vadd.f32 %v102, %v1744
    %v1746 = vpop.f32.mrf.mxu0
    %1747 = vmatprep.mubr.f32.mxu0 0.0
    %1748 = vmatmul.mubr.f32.gmra.mxu0 %v1652
    %v1749 = vpop.f32.mrf.mxu0
    %v1750 = vadd.f32 %v103, %v1749
    %v1751 = vpop.f32.mrf.mxu0
    %1752 = vdwg.mxu0
    %v1753 = vsel %vm777, %v1745, -inf
    %1754 = vmax.xlane.f32.xlu0 %v1753
    %v1755 = vpop.xlane.xlu0 %1754
    %v1756 = vsel %vm777, %v1750, -inf
    %1757 = vmax.xlane.f32.xlu0 %v1756
    %v1758 = vpop.xlane.xlu0 %1757
    %v1759 = vsub.f32 %v1745, %v1755
    %v1760 = vsub.f32 %v1750, %v1758
    %v1761 = vmul.f32 %v1759, 1.442695
    %v1762 = vpow.pop %v1761
    %v1763 = vmul.f32 %v1760, 1.442695
    %v1764 = vpow.pop %v1763
    %v1766 = vsel %vm777, %v1762, 0
    %v1769 = vsel %vm777, %v1764, 0
    %1771 = vmatprep.subr.mxu0 0.0
    %1772 = vmatpush1.msra.mxu0 0.0
    %1773 = vmatprep.subr.mxu0 0.0
    %1774 = vmatpush1.msra.mxu0 0.0
    %1775 = vmatprep.subr.mxu0 0.0
    %1776 = vmatpush1.msra.mxu0 0.0
    %1777 = vmatprep.subr.mxu0 0.0
    %1778 = vmatpush1.msra.mxu0 0.0
    %1779 = vmatprep.subr.mxu0 0.0
    %1780 = vmatpush1.msra.mxu0 0.0
    %1781 = vmatprep.subr.mxu0 0.0
    %1782 = vmatpush1.msra.mxu0 0.0
    %1783 = vmatprep.subr.mxu0 0.0
    %1784 = vmatpush1.msra.mxu0 0.0
    %1785 = vmatprep.subr.mxu0 0.0
    %1786 = vmatpush1.msra.mxu0 0.0
    %1787 = vmatprep.subr.mxu0 0.0
    %1788 = vmatpush1.msra.mxu0 %v101
    %1789 = vmatprep.subr.mxu0 0.0
    %1790 = vmatpush1.msra.mxu0 %v100
    %1791 = vmatprep.subr.mxu0 0.0
    %1792 = vmatpush1.msra.mxu0 %v99
    %1793 = vmatprep.subr.mxu0 0.0
    %1794 = vmatpush1.msra.mxu0 %v98
    %1795 = vmatprep.subr.mxu0 0.0
    %1796 = vmatpush1.msra.mxu0 %v97
    %1797 = vmatprep.subr.mxu0 0.0
    %1798 = vmatpush1.msra.mxu0 %v96
    %1799 = vmatprep.subr.mxu0 0.0
    %1800 = vmatpush1.msra.mxu0 %v95
    %1801 = vmatprep.subr.mxu0 0.0
    %1802 = vmatpush1.msra.mxu0 %v94
    %1803 = vmatprep.subr.mxu0 0.0
    %1804 = vmatpush2.msra.mxu0 0.0
    %1805 = vmatprep.subr.mxu0 0.0
    %1806 = vmatpush2.msra.mxu0 0.0
    %1807 = vmatprep.subr.mxu0 0.0
    %1808 = vmatpush2.msra.mxu0 0.0
    %1809 = vmatprep.subr.mxu0 0.0
    %1810 = vmatpush2.msra.mxu0 0.0
    %1811 = vmatprep.subr.mxu0 0.0
    %1812 = vmatpush2.msra.mxu0 0.0
    %1813 = vmatprep.subr.mxu0 0.0
    %1814 = vmatpush2.msra.mxu0 0.0
    %1815 = vmatprep.subr.mxu0 0.0
    %1816 = vmatpush2.msra.mxu0 0.0
    %1817 = vmatprep.subr.mxu0 0.0
    %1818 = vmatpush2.msra.mxu0 0.0
    %1819 = vmatprep.subr.mxu0 0.0
    %1820 = vmatpush2.msra.mxu0 0.0
    %1821 = vmatprep.subr.mxu0 0.0
    %1822 = vmatpush2.msra.mxu0 0.0
    %1823 = vmatprep.subr.mxu0 0.0
    %1824 = vmatpush2.msra.mxu0 0.0
    %1825 = vmatprep.subr.mxu0 0.0
    %1826 = vmatpush2.msra.mxu0 0.0
    %1827 = vmatprep.subr.mxu0 0.0
    %1828 = vmatpush2.msra.mxu0 0.0
    %1829 = vmatprep.subr.mxu0 0.0
    %1830 = vmatpush2.msra.mxu0 0.0
    %1831 = vmatprep.subr.mxu0 0.0
    %1832 = vmatpush2.msra.mxu0 0.0
    %1833 = vmatprep.subr.mxu0 0.0
    %1834 = vmatpush2.msra.mxu0 0.0
    %1835 = vmatprep.mubr.f32.mxu0 0.0
    %1836 = vmatmul.mubr.f32.gmra.mxu0 %v1766
    %v1837 = vpop.f32.mrf.mxu0
    %v1838 = vadd.f32 %v104, %v1837
    %v1839 = vpop.f32.mrf.mxu0
    %1840 = vmatprep.mubr.f32.mxu0 0.0
    %1841 = vmatmul.mubr.f32.gmra.mxu0 %v1769
    %v1842 = vpop.f32.mrf.mxu0
    %v1843 = vadd.f32 %v105, %v1842
    %v1844 = vpop.f32.mrf.mxu0
    %1845 = vdwg.mxu0
    %v1846 = vrcp.pop %v1838
    %v1847 = vmul.f32 %v1762, %v1846
    %v1848 = vrcp.pop %v1843
    %v1849 = vmul.f32 %v1764, %v1848
    %v1851 = vsel %vm777, %v1847, 0
    %v1854 = vsel %vm777, %v1849, 0
    %1856 = vmatprep.subr.mxu0 0.0
    %1857 = vmatpush1.msra.mxu0 0.0
    %1858 = vmatprep.subr.mxu0 0.0
    %1859 = vmatpush1.msra.mxu0 0.0
    %1860 = vmatprep.subr.mxu0 0.0
    %1861 = vmatpush1.msra.mxu0 0.0
    %1862 = vmatprep.subr.mxu0 0.0
    %1863 = vmatpush1.msra.mxu0 0.0
    %1864 = vmatprep.subr.mxu0 0.0
    %1865 = vmatpush1.msra.mxu0 0.0
    %1866 = vmatprep.subr.mxu0 0.0
    %1867 = vmatpush1.msra.mxu0 0.0
    %1868 = vmatprep.subr.mxu0 0.0
    %1869 = vmatpush1.msra.mxu0 0.0
    %1870 = vmatprep.subr.mxu0 0.0
    %1871 = vmatpush1.msra.mxu0 0.0
    %1872 = vmatprep.subr.mxu0 0.0
    %1873 = vmatpush1.msra.mxu0 %v1649
    %1874 = vmatprep.subr.mxu0 0.0
    %1875 = vmatpush1.msra.mxu0 %v1648
    %1876 = vmatprep.subr.mxu0 0.0
    %1877 = vmatpush1.msra.mxu0 %v1647
    %1878 = vmatprep.subr.mxu0 0.0
    %1879 = vmatpush1.msra.mxu0 %v1646
    %1880 = vmatprep.subr.mxu0 0.0
    %1881 = vmatpush1.msra.mxu0 %v1645
    %1882 = vmatprep.subr.mxu0 0.0
    %1883 = vmatpush1.msra.mxu0 %v1644
    %1884 = vmatprep.subr.mxu0 0.0
    %1885 = vmatpush1.msra.mxu0 %v1643
    %1886 = vmatprep.subr.mxu0 0.0
    %1887 = vmatpush1.msra.mxu0 %v1642
    %1888 = vmatprep.subr.mxu0 0.0
    %1889 = vmatpush2.msra.mxu0 0.0
    %1890 = vmatprep.subr.mxu0 0.0
    %1891 = vmatpush2.msra.mxu0 0.0
    %1892 = vmatprep.subr.mxu0 0.0
    %1893 = vmatpush2.msra.mxu0 0.0
    %1894 = vmatprep.subr.mxu0 0.0
    %1895 = vmatpush2.msra.mxu0 0.0
    %1896 = vmatprep.subr.mxu0 0.0
    %1897 = vmatpush2.msra.mxu0 0.0
    %1898 = vmatprep.subr.mxu0 0.0
    %1899 = vmatpush2.msra.mxu0 0.0
    %1900 = vmatprep.subr.mxu0 0.0
    %1901 = vmatpush2.msra.mxu0 0.0
    %1902 = vmatprep.subr.mxu0 0.0
    %1903 = vmatpush2.msra.mxu0 0.0
    %1904 = vmatprep.subr.mxu0 0.0
    %1905 = vmatpush2.msra.mxu0 0.0
    %1906 = vmatprep.subr.mxu0 0.0
    %1907 = vmatpush2.msra.mxu0 0.0
    %1908 = vmatprep.subr.mxu0 0.0
    %1909 = vmatpush2.msra.mxu0 0.0
    %1910 = vmatprep.subr.mxu0 0.0
    %1911 = vmatpush2.msra.mxu0 0.0
    %1912 = vmatprep.subr.mxu0 0.0
    %1913 = vmatpush2.msra.mxu0 0.0
    %1914 = vmatprep.subr.mxu0 0.0
    %1915 = vmatpush2.msra.mxu0 0.0
    %1916 = vmatprep.subr.mxu0 0.0
    %1917 = vmatpush2.msra.mxu0 0.0
    %1918 = vmatprep.subr.mxu0 0.0
    %1919 = vmatpush2.msra.mxu0 0.0
    %1920 = vmatprep.mubr.f32.mxu0 0.0
    %1921 = vmatmul.mubr.f32.gmra.mxu0 %v1851
    %v1922 = vpop.f32.mrf.mxu0
    %v1923 = vadd.f32 0.0, %v1922
    %v1924 = vpop.f32.mrf.mxu0
    %1925 = vmatprep.mubr.f32.mxu0 0.0
    %1926 = vmatmul.mubr.f32.gmra.mxu0 %v1854
    %v1927 = vpop.f32.mrf.mxu0
    %v1928 = vadd.f32 0.0, %v1927
    %v1929 = vpop.f32.mrf.mxu0
    %1930 = vdwg.mxu0
    %s1931 = scalar_lea.vmem %s10, 32
    %v1932 = vld [vmem:[%s1931] sm:$0xff]
    %v1933 = vld [vmem:[%s1931 + $0x8] sm:$0xff]
    %v1934 = vld [vmem:[%s1931 + $0x10] sm:$0xff]
    %v1935 = vld [vmem:[%s1931 + $0x18] sm:$0xff]
    %v1936 = vlaneseq
    %v1937 = vshrl.u32 %v1936, 7
    %v1938 = vsub.s32 1, %v1937
    %v1939 = vrot.slane %v1319, %v1938
    %v1941 = vsel %vm327, %v1923, 0
    %v1944 = vsel %vm327, %v1928, 0
    %1946 = vmatprep.subr.mxu0 0.0
    %1947 = vmatpush1.msra.mxu0 0.0
    %1948 = vmatprep.subr.mxu0 0.0
    %1949 = vmatpush1.msra.mxu0 0.0
    %1950 = vmatprep.subr.mxu0 0.0
    %1951 = vmatpush1.msra.mxu0 0.0
    %1952 = vmatprep.subr.mxu0 0.0
    %1953 = vmatpush1.msra.mxu0 0.0
    %1954 = vmatprep.subr.mxu0 0.0
    %1955 = vmatpush1.msra.mxu0 0.0
    %1956 = vmatprep.subr.mxu0 0.0
    %1957 = vmatpush1.msra.mxu0 0.0
    %1958 = vmatprep.subr.mxu0 0.0
    %1959 = vmatpush1.msra.mxu0 0.0
    %1960 = vmatprep.subr.mxu0 0.0
    %1961 = vmatpush1.msra.mxu0 0.0
    %1962 = vmatprep.subr.mxu0 0.0
    %1963 = vmatpush1.msra.mxu0 0.0
    %1964 = vmatprep.subr.mxu0 0.0
    %1965 = vmatpush1.msra.mxu0 0.0
    %1966 = vmatprep.subr.mxu0 0.0
    %1967 = vmatpush1.msra.mxu0 0.0
    %1968 = vmatprep.subr.mxu0 0.0
    %1969 = vmatpush1.msra.mxu0 0.0
    %1970 = vmatprep.subr.mxu0 0.0
    %1971 = vmatpush1.msra.mxu0 %v1935
    %1972 = vmatprep.subr.mxu0 0.0
    %1973 = vmatpush1.msra.mxu0 %v1934
    %1974 = vmatprep.subr.mxu0 0.0
    %1975 = vmatpush1.msra.mxu0 %v1933
    %1976 = vmatprep.subr.mxu0 0.0
    %1977 = vmatpush1.msra.mxu0 %v1932
    %1978 = vmatprep.subr.mxu0 0.0
    %1979 = vmatpush2.msra.mxu0 0.0
    %1980 = vmatprep.subr.mxu0 0.0
    %1981 = vmatpush2.msra.mxu0 0.0
    %1982 = vmatprep.subr.mxu0 0.0
    %1983 = vmatpush2.msra.mxu0 0.0
    %1984 = vmatprep.subr.mxu0 0.0
    %1985 = vmatpush2.msra.mxu0 0.0
    %1986 = vmatprep.subr.mxu0 0.0
    %1987 = vmatpush2.msra.mxu0 0.0
    %1988 = vmatprep.subr.mxu0 0.0
    %1989 = vmatpush2.msra.mxu0 0.0
    %1990 = vmatprep.subr.mxu0 0.0
    %1991 = vmatpush2.msra.mxu0 0.0
    %1992 = vmatprep.subr.mxu0 0.0
    %1993 = vmatpush2.msra.mxu0 0.0
    %1994 = vmatprep.subr.mxu0 0.0
    %1995 = vmatpush2.msra.mxu0 0.0
    %1996 = vmatprep.subr.mxu0 0.0
    %1997 = vmatpush2.msra.mxu0 0.0
    %1998 = vmatprep.subr.mxu0 0.0
    %1999 = vmatpush2.msra.mxu0 0.0
    %2000 = vmatprep.subr.mxu0 0.0
    %2001 = vmatpush2.msra.mxu0 0.0
    %2002 = vmatprep.subr.mxu0 0.0
    %2003 = vmatpush2.msra.mxu0 0.0
    %2004 = vmatprep.subr.mxu0 0.0
    %2005 = vmatpush2.msra.mxu0 0.0
    %2006 = vmatprep.subr.mxu0 0.0
    %2007 = vmatpush2.msra.mxu0 0.0
    %2008 = vmatprep.subr.mxu0 0.0
    %2009 = vmatpush2.msra.mxu0 0.0
    %2010 = vmatprep.mubr.f32.mxu0 0.0
    %2011 = vmatmul.mubr.f32.gmra.mxu0 %v1941
    %v2012 = vpop.f32.mrf.mxu0
    %v2013 = vadd.f32 %v1939, %v2012
    %v2014 = vpop.f32.mrf.mxu0
    %2015 = vmatprep.mubr.f32.mxu0 0.0
    %2016 = vmatmul.mubr.f32.gmra.mxu0 %v1944
    %v2017 = vpop.f32.mrf.mxu0
    %v2018 = vadd.f32 %v1939, %v2017
    %v2019 = vpop.f32.mrf.mxu0
    %2020 = vdwg.mxu0
    %v2021 = vadd.f32 %v1316, %v2013
    %v2022 = vadd.f32 %v1317, %v2018
    %v2023 = vsel %vm327, %v2021, 0.0
    %2024 = vadd.xlane.f32.xlu0 %v2023
    %v2025 = vpop.xlane.xlu0 %2024
    %v2026 = vsel %vm327, %v2022, 0.0
    %2027 = vadd.xlane.f32.xlu0 %v2026
    %v2028 = vpop.xlane.xlu0 %2027
    %v2029 = vmul.f32 %v2025, %v1053
    %v2030 = vmul.f32 %v2028, %v1053
    %v2031 = vmul.f32 %v2021, %v2021
    %v2032 = vmul.f32 %v2022, %v2022
    %v2033 = vsel %vm327, %v2031, 0.0
    %2034 = vadd.xlane.f32.xlu0 %v2033
    %v2035 = vpop.xlane.xlu0 %2034
    %v2036 = vsel %vm327, %v2032, 0.0
    %2037 = vadd.xlane.f32.xlu0 %v2036
    %v2038 = vpop.xlane.xlu0 %2037
    %v2039 = vmul.f32 %v2035, %v1053
    %v2040 = vmul.f32 %v2038, %v1053
    %v2041 = vsub.f32 %v2021, %v2029
    %v2042 = vsub.f32 %v2022, %v2030
    %v2043 = vmul.f32 %v2029, %v2029
    %v2044 = vmul.f32 %v2030, %v2030
    %v2045 = vsub.f32 %v2039, %v2043
    %v2046 = vsub.f32 %v2040, %v2044
    %v2047 = vadd.f32 %v2045, 1e-05
    %v2048 = vadd.f32 %v2046, 1e-05
    %v2049 = vrsqrt.pop %v2047
    %v2050 = vrsqrt.pop %v2048
    %v2051 = vmul.f32 %v2041, %v2049
    %v2052 = vmul.f32 %v2042, %v2050
    %v2053 = vlaneseq
    %v2054 = vshrl.u32 %v2053, 7
    %v2055 = vsub.s32 2, %v2054
    %v2056 = vrot.slane %v1319, %v2055
    %v2057 = vmul.f32 %v2051, %v2056
    %v2058 = vmul.f32 %v2052, %v2056
    %v2059 = vlaneseq
    %v2060 = vshrl.u32 %v2059, 7
    %v2061 = vsub.s32 3, %v2060
    %v2062 = vrot.slane %v1319, %v2061
    %v2063 = vadd.f32 %v2057, %v2062
    %v2064 = vadd.f32 %v2058, %v2062
    %s2065 = scalar_lea.vmem %s11, 32
    %v2066 = vld [vmem:[%s2065] sm:$0xff]
    %v2067 = vld [vmem:[%s2065 + $0x8] sm:$0xff]
    %v2068 = vld [vmem:[%s2065 + $0x10] sm:$0xff]
    %v2069 = vld [vmem:[%s2065 + $0x18] sm:$0xff]
    %v2070 = vlaneseq
    %v2071 = vshrl.u32 %v2070, 7
    %v2072 = vsub.s32 4, %v2071
    %v2073 = vrot.slane %v1319, %v2072
    %v2075 = vsel %vm327, %v2063, 0
    %v2078 = vsel %vm327, %v2064, 0
    %2080 = vmatprep.subr.mxu0 0.0
    %2081 = vmatpush1.msra.mxu0 0.0
    %2082 = vmatprep.subr.mxu0 0.0
    %2083 = vmatpush1.msra.mxu0 0.0
    %2084 = vmatprep.subr.mxu0 0.0
    %2085 = vmatpush1.msra.mxu0 0.0
    %2086 = vmatprep.subr.mxu0 0.0
    %2087 = vmatpush1.msra.mxu0 0.0
    %2088 = vmatprep.subr.mxu0 0.0
    %2089 = vmatpush1.msra.mxu0 0.0
    %2090 = vmatprep.subr.mxu0 0.0
    %2091 = vmatpush1.msra.mxu0 0.0
    %2092 = vmatprep.subr.mxu0 0.0
    %2093 = vmatpush1.msra.mxu0 0.0
    %2094 = vmatprep.subr.mxu0 0.0
    %2095 = vmatpush1.msra.mxu0 0.0
    %2096 = vmatprep.subr.mxu0 0.0
    %2097 = vmatpush1.msra.mxu0 0.0
    %2098 = vmatprep.subr.mxu0 0.0
    %2099 = vmatpush1.msra.mxu0 0.0
    %2100 = vmatprep.subr.mxu0 0.0
    %2101 = vmatpush1.msra.mxu0 0.0
    %2102 = vmatprep.subr.mxu0 0.0
    %2103 = vmatpush1.msra.mxu0 0.0
    %2104 = vmatprep.subr.mxu0 0.0
    %2105 = vmatpush1.msra.mxu0 %v2069
    %2106 = vmatprep.subr.mxu0 0.0
    %2107 = vmatpush1.msra.mxu0 %v2068
    %2108 = vmatprep.subr.mxu0 0.0
    %2109 = vmatpush1.msra.mxu0 %v2067
    %2110 = vmatprep.subr.mxu0 0.0
    %2111 = vmatpush1.msra.mxu0 %v2066
    %2112 = vmatprep.subr.mxu0 0.0
    %2113 = vmatpush2.msra.mxu0 0.0
    %2114 = vmatprep.subr.mxu0 0.0
    %2115 = vmatpush2.msra.mxu0 0.0
    %2116 = vmatprep.subr.mxu0 0.0
    %2117 = vmatpush2.msra.mxu0 0.0
    %2118 = vmatprep.subr.mxu0 0.0
    %2119 = vmatpush2.msra.mxu0 0.0
    %2120 = vmatprep.subr.mxu0 0.0
    %2121 = vmatpush2.msra.mxu0 0.0
    %2122 = vmatprep.subr.mxu0 0.0
    %2123 = vmatpush2.msra.mxu0 0.0
    %2124 = vmatprep.subr.mxu0 0.0
    %2125 = vmatpush2.msra.mxu0 0.0
    %2126 = vmatprep.subr.mxu0 0.0
    %2127 = vmatpush2.msra.mxu0 0.0
    %2128 = vmatprep.subr.mxu0 0.0
    %2129 = vmatpush2.msra.mxu0 0.0
    %2130 = vmatprep.subr.mxu0 0.0
    %2131 = vmatpush2.msra.mxu0 0.0
    %2132 = vmatprep.subr.mxu0 0.0
    %2133 = vmatpush2.msra.mxu0 0.0
    %2134 = vmatprep.subr.mxu0 0.0
    %2135 = vmatpush2.msra.mxu0 0.0
    %2136 = vmatprep.subr.mxu0 0.0
    %2137 = vmatpush2.msra.mxu0 0.0
    %2138 = vmatprep.subr.mxu0 0.0
    %2139 = vmatpush2.msra.mxu0 0.0
    %2140 = vmatprep.subr.mxu0 0.0
    %2141 = vmatpush2.msra.mxu0 0.0
    %2142 = vmatprep.subr.mxu0 0.0
    %2143 = vmatpush2.msra.mxu0 0.0
    %2144 = vmatprep.mubr.f32.mxu0 0.0
    %2145 = vmatmul.mubr.f32.gmra.mxu0 %v2075
    %v2146 = vpop.f32.mrf.mxu0
    %v2147 = vadd.f32 %v2073, %v2146
    %v2148 = vpop.f32.mrf.mxu0
    %2149 = vmatprep.mubr.f32.mxu0 0.0
    %2150 = vmatmul.mubr.f32.gmra.mxu0 %v2078
    %v2151 = vpop.f32.mrf.mxu0
    %v2152 = vadd.f32 %v2073, %v2151
    %v2153 = vpop.f32.mrf.mxu0
    %2154 = vdwg.mxu0
    %v2155 = vmax.f32 %v2147, 0.0
    %v2156 = vmax.f32 %v2152, 0.0
    %s2157 = scalar_lea.vmem %s12, 64
    %v2158 = vld [vmem:[%s2157] sm:$0xff]
    %v2159 = vld [vmem:[%s2157 + $0x8] sm:$0xff]
    %v2160 = vld [vmem:[%s2157 + $0x10] sm:$0xff]
    %v2161 = vld [vmem:[%s2157 + $0x18] sm:$0xff]
    %v2162 = vld [vmem:[%s2157 + $0x20] sm:$0xff]
    %v2163 = vld [vmem:[%s2157 + $0x28] sm:$0xff]
    %v2164 = vld [vmem:[%s2157 + $0x30] sm:$0xff]
    %v2165 = vld [vmem:[%s2157 + $0x38] sm:$0xff]
    %v2166 = vlaneseq
    %v2167 = vshrl.u32 %v2166, 7
    %v2168 = vsub.s32 5, %v2167
    %v2169 = vrot.slane %v1319, %v2168
    %v2171 = vsel %vm777, %v2155, 0
    %v2174 = vsel %vm777, %v2156, 0
    %2176 = vmatprep.subr.mxu0 0.0
    %2177 = vmatpush1.msra.mxu0 0.0
    %2178 = vmatprep.subr.mxu0 0.0
    %2179 = vmatpush1.msra.mxu0 0.0
    %2180 = vmatprep.subr.mxu0 0.0
    %2181 = vmatpush1.msra.mxu0 0.0
    %2182 = vmatprep.subr.mxu0 0.0
    %2183 = vmatpush1.msra.mxu0 0.0
    %2184 = vmatprep.subr.mxu0 0.0
    %2185 = vmatpush1.msra.mxu0 0.0
    %2186 = vmatprep.subr.mxu0 0.0
    %2187 = vmatpush1.msra.mxu0 0.0
    %2188 = vmatprep.subr.mxu0 0.0
    %2189 = vmatpush1.msra.mxu0 0.0
    %2190 = vmatprep.subr.mxu0 0.0
    %2191 = vmatpush1.msra.mxu0 0.0
    %2192 = vmatprep.subr.mxu0 0.0
    %2193 = vmatpush1.msra.mxu0 %v2165
    %2194 = vmatprep.subr.mxu0 0.0
    %2195 = vmatpush1.msra.mxu0 %v2164
    %2196 = vmatprep.subr.mxu0 0.0
    %2197 = vmatpush1.msra.mxu0 %v2163
    %2198 = vmatprep.subr.mxu0 0.0
    %2199 = vmatpush1.msra.mxu0 %v2162
    %2200 = vmatprep.subr.mxu0 0.0
    %2201 = vmatpush1.msra.mxu0 %v2161
    %2202 = vmatprep.subr.mxu0 0.0
    %2203 = vmatpush1.msra.mxu0 %v2160
    %2204 = vmatprep.subr.mxu0 0.0
    %2205 = vmatpush1.msra.mxu0 %v2159
    %2206 = vmatprep.subr.mxu0 0.0
    %2207 = vmatpush1.msra.mxu0 %v2158
    %2208 = vmatprep.subr.mxu0 0.0
    %2209 = vmatpush2.msra.mxu0 0.0
    %2210 = vmatprep.subr.mxu0 0.0
    %2211 = vmatpush2.msra.mxu0 0.0
    %2212 = vmatprep.subr.mxu0 0.0
    %2213 = vmatpush2.msra.mxu0 0.0
    %2214 = vmatprep.subr.mxu0 0.0
    %2215 = vmatpush2.msra.mxu0 0.0
    %2216 = vmatprep.subr.mxu0 0.0
    %2217 = vmatpush2.msra.mxu0 0.0
    %2218 = vmatprep.subr.mxu0 0.0
    %2219 = vmatpush2.msra.mxu0 0.0
    %2220 = vmatprep.subr.mxu0 0.0
    %2221 = vmatpush2.msra.mxu0 0.0
    %2222 = vmatprep.subr.mxu0 0.0
    %2223 = vmatpush2.msra.mxu0 0.0
    %2224 = vmatprep.subr.mxu0 0.0
    %2225 = vmatpush2.msra.mxu0 0.0
    %2226 = vmatprep.subr.mxu0 0.0
    %2227 = vmatpush2.msra.mxu0 0.0
    %2228 = vmatprep.subr.mxu0 0.0
    %2229 = vmatpush2.msra.mxu0 0.0
    %2230 = vmatprep.subr.mxu0 0.0
    %2231 = vmatpush2.msra.mxu0 0.0
    %2232 = vmatprep.subr.mxu0 0.0
    %2233 = vmatpush2.msra.mxu0 0.0
    %2234 = vmatprep.subr.mxu0 0.0
    %2235 = vmatpush2.msra.mxu0 0.0
    %2236 = vmatprep.subr.mxu0 0.0
    %2237 = vmatpush2.msra.mxu0 0.0
    %2238 = vmatprep.subr.mxu0 0.0
    %2239 = vmatpush2.msra.mxu0 0.0
    %2240 = vmatprep.mubr.f32.mxu0 0.0
    %2241 = vmatmul.mubr.f32.gmra.mxu0 %v2171
    %v2242 = vpop.f32.mrf.mxu0
    %v2243 = vadd.f32 %v2169, %v2242
    %v2244 = vpop.f32.mrf.mxu0
    %2245 = vmatprep.mubr.f32.mxu0 0.0
    %2246 = vmatmul.mubr.f32.gmra.mxu0 %v2174
    %v2247 = vpop.f32.mrf.mxu0
    %v2248 = vadd.f32 %v2169, %v2247
    %v2249 = vpop.f32.mrf.mxu0
    %2250 = vdwg.mxu0
    %v2251 = vadd.f32 %v2063, %v2243
    %v2252 = vadd.f32 %v2064, %v2248
    %v2253 = vsel %vm327, %v2251, 0.0
    %2254 = vadd.xlane.f32.xlu0 %v2253
    %v2255 = vpop.xlane.xlu0 %2254
    %v2256 = vsel %vm327, %v2252, 0.0
    %2257 = vadd.xlane.f32.xlu0 %v2256
    %v2258 = vpop.xlane.xlu0 %2257
    %v2259 = vmul.f32 %v2255, %v1053
    %v2260 = vmul.f32 %v2258, %v1053
    %v2261 = vmul.f32 %v2251, %v2251
    %v2262 = vmul.f32 %v2252, %v2252
    %v2263 = vsel %vm327, %v2261, 0.0
    %2264 = vadd.xlane.f32.xlu0 %v2263
    %v2265 = vpop.xlane.xlu0 %2264
    %v2266 = vsel %vm327, %v2262, 0.0
    %2267 = vadd.xlane.f32.xlu0 %v2266
    %v2268 = vpop.xlane.xlu0 %2267
    %v2269 = vmul.f32 %v2265, %v1053
    %v2270 = vmul.f32 %v2268, %v1053
    %v2271 = vsub.f32 %v2251, %v2259
    %v2272 = vsub.f32 %v2252, %v2260
    %v2273 = vmul.f32 %v2259, %v2259
    %v2274 = vmul.f32 %v2260, %v2260
    %v2275 = vsub.f32 %v2269, %v2273
    %v2276 = vsub.f32 %v2270, %v2274
    %v2277 = vadd.f32 %v2275, 1e-05
    %v2278 = vadd.f32 %v2276, 1e-05
    %v2279 = vrsqrt.pop %v2277
    %v2280 = vrsqrt.pop %v2278
    %v2281 = vmul.f32 %v2271, %v2279
    %v2282 = vmul.f32 %v2272, %v2280
    %v2283 = vlaneseq
    %v2284 = vshrl.u32 %v2283, 7
    %v2285 = vsub.s32 6, %v2284
    %v2286 = vrot.slane %v1319, %v2285
    %v2287 = vmul.f32 %v2281, %v2286
    %v2288 = vmul.f32 %v2282, %v2286
    %v2289 = vlaneseq
    %v2290 = vshrl.u32 %v2289, 7
    %v2291 = vsub.s32 7, %v2290
    %v2292 = vrot.slane %v1319, %v2291
    %v2293 = vadd.f32 %v2287, %v2292
    %v2294 = vadd.f32 %v2288, %v2292
    %v2295 = vld [vmem:[%s21] sm:$0xff]
    %v2296 = vld [vmem:[%s21 + $0x8] sm:$0x1f]
    %v2297 = vld [vmem:[%s14] sm:$0xff]
    %v2298 = vld [vmem:[%s14 + $0x8] sm:$0xff]
    %v2299 = vld [vmem:[%s14 + $0x10] sm:$0xff]
    %v2300 = vld [vmem:[%s14 + $0x18] sm:$0xff]
    %v2301 = vlaneseq
    %v2302 = vshrl.u32 %v2301, 7
    %v2303 = vsub.s32 0, %v2302
    %v2304 = vrot.slane %v2295, %v2303
    %v2306 = vsel %vm327, %v310, 0
    %v2309 = vsel %vm327, %v315, 0
    %2311 = vmatprep.subr.mxu0 0.0
    %2312 = vmatpush1.msra.mxu0 0.0
    %2313 = vmatprep.subr.mxu0 0.0
    %2314 = vmatpush1.msra.mxu0 0.0
    %2315 = vmatprep.subr.mxu0 0.0
    %2316 = vmatpush1.msra.mxu0 0.0
    %2317 = vmatprep.subr.mxu0 0.0
    %2318 = vmatpush1.msra.mxu0 0.0
    %2319 = vmatprep.subr.mxu0 0.0
    %2320 = vmatpush1.msra.mxu0 0.0
    %2321 = vmatprep.subr.mxu0 0.0
    %2322 = vmatpush1.msra.mxu0 0.0
    %2323 = vmatprep.subr.mxu0 0.0
    %2324 = vmatpush1.msra.mxu0 0.0
    %2325 = vmatprep.subr.mxu0 0.0
    %2326 = vmatpush1.msra.mxu0 0.0
    %2327 = vmatprep.subr.mxu0 0.0
    %2328 = vmatpush1.msra.mxu0 0.0
    %2329 = vmatprep.subr.mxu0 0.0
    %2330 = vmatpush1.msra.mxu0 0.0
    %2331 = vmatprep.subr.mxu0 0.0
    %2332 = vmatpush1.msra.mxu0 0.0
    %2333 = vmatprep.subr.mxu0 0.0
    %2334 = vmatpush1.msra.mxu0 0.0
    %2335 = vmatprep.subr.mxu0 0.0
    %2336 = vmatpush1.msra.mxu0 %v2300
    %2337 = vmatprep.subr.mxu0 0.0
    %2338 = vmatpush1.msra.mxu0 %v2299
    %2339 = vmatprep.subr.mxu0 0.0
    %2340 = vmatpush1.msra.mxu0 %v2298
    %2341 = vmatprep.subr.mxu0 0.0
    %2342 = vmatpush1.msra.mxu0 %v2297
    %2343 = vmatprep.subr.mxu0 0.0
    %2344 = vmatpush2.msra.mxu0 0.0
    %2345 = vmatprep.subr.mxu0 0.0
    %2346 = vmatpush2.msra.mxu0 0.0
    %2347 = vmatprep.subr.mxu0 0.0
    %2348 = vmatpush2.msra.mxu0 0.0
    %2349 = vmatprep.subr.mxu0 0.0
    %2350 = vmatpush2.msra.mxu0 0.0
    %2351 = vmatprep.subr.mxu0 0.0
    %2352 = vmatpush2.msra.mxu0 0.0
    %2353 = vmatprep.subr.mxu0 0.0
    %2354 = vmatpush2.msra.mxu0 0.0
    %2355 = vmatprep.subr.mxu0 0.0
    %2356 = vmatpush2.msra.mxu0 0.0
    %2357 = vmatprep.subr.mxu0 0.0
    %2358 = vmatpush2.msra.mxu0 0.0
    %2359 = vmatprep.subr.mxu0 0.0
    %2360 = vmatpush2.msra.mxu0 0.0
    %2361 = vmatprep.subr.mxu0 0.0
    %2362 = vmatpush2.msra.mxu0 0.0
    %2363 = vmatprep.subr.mxu0 0.0
    %2364 = vmatpush2.msra.mxu0 0.0
    %2365 = vmatprep.subr.mxu0 0.0
    %2366 = vmatpush2.msra.mxu0 0.0
    %2367 = vmatprep.subr.mxu0 0.0
    %2368 = vmatpush2.msra.mxu0 0.0
    %2369 = vmatprep.subr.mxu0 0.0
    %2370 = vmatpush2.msra.mxu0 0.0
    %2371 = vmatprep.subr.mxu0 0.0
    %2372 = vmatpush2.msra.mxu0 0.0
    %2373 = vmatprep.subr.mxu0 0.0
    %2374 = vmatpush2.msra.mxu0 0.0
    %2375 = vmatprep.mubr.f32.mxu0 0.0
    %2376 = vmatmul.mubr.f32.gmra.mxu0 %v2306
    %v2377 = vpop.f32.mrf.mxu0
    %v2378 = vadd.f32 %v2304, %v2377
    %v2379 = vpop.f32.mrf.mxu0
    %2380 = vmatprep.mubr.f32.mxu0 0.0
    %2381 = vmatmul.mubr.f32.gmra.mxu0 %v2309
    %v2382 = vpop.f32.mrf.mxu0
    %v2383 = vadd.f32 %v2304, %v2382
    %v2384 = vpop.f32.mrf.mxu0
    %2385 = vdwg.mxu0
    %2388 = vrot.lane.b32.xlu0 %v2378, 96
    %v2389 = vpop.permute.xlu0 %2388
    %2390 = vrot.lane.b32.xlu0 %v2383, 96
    %v2391 = vpop.permute.xlu0 %2390
    %2394 = vmatprep.subr.mxu0 0.0
    %2395 = vmatpush1.msra.mxu0 0.0
    %2396 = vmatprep.subr.mxu0 0.0
    %2397 = vmatpush1.msra.mxu0 0.0
    %2398 = vmatprep.subr.mxu0 0.0
    %2399 = vmatpush1.msra.mxu0 0.0
    %2400 = vmatprep.subr.mxu0 0.0
    %2401 = vmatpush1.msra.mxu0 0.0
    %2402 = vmatprep.subr.mxu0 0.0
    %2403 = vmatpush1.msra.mxu0 0.0
    %2404 = vmatprep.subr.mxu0 0.0
    %2405 = vmatpush1.msra.mxu0 0.0
    %2406 = vmatprep.subr.mxu0 0.0
    %2407 = vmatpush1.msra.mxu0 0.0
    %2408 = vmatprep.subr.mxu0 0.0
    %2409 = vmatpush1.msra.mxu0 0.0
    %2410 = vmatprep.subr.mxu0 0.0
    %2411 = vmatpush1.msra.mxu0 0.0
    %2412 = vmatprep.subr.mxu0 0.0
    %2413 = vmatpush1.msra.mxu0 0.0
    %2414 = vmatprep.subr.mxu0 0.0
    %2415 = vmatpush1.msra.mxu0 0.0
    %2416 = vmatprep.subr.mxu0 0.0
    %2417 = vmatpush1.msra.mxu0 0.0
    %2418 = vmatprep.subr.mxu0 0.0
    %2419 = vmatpush1.msra.mxu0 0.0
    %2420 = vmatprep.subr.mxu0 0.0
    %2421 = vmatpush1.msra.mxu0 0.0
    %2422 = vmatprep.subr.mxu0 0.0
    %2423 = vmatpush1.msra.mxu0 %v2391
    %2424 = vmatprep.subr.mxu0 0.0
    %2425 = vmatpush1.msra.mxu0 %v2389
    %2426 = vmatprep.subr.mxu0 0.0
    %2427 = vmatpush2.msra.mxu0 0.0
    %2428 = vmatprep.subr.mxu0 0.0
    %2429 = vmatpush2.msra.mxu0 0.0
    %2430 = vmatprep.subr.mxu0 0.0
    %2431 = vmatpush2.msra.mxu0 0.0
    %2432 = vmatprep.subr.mxu0 0.0
    %2433 = vmatpush2.msra.mxu0 0.0
    %2434 = vmatprep.subr.mxu0 0.0
    %2435 = vmatpush2.msra.mxu0 0.0
    %2436 = vmatprep.subr.mxu0 0.0
    %2437 = vmatpush2.msra.mxu0 0.0
    %2438 = vmatprep.subr.mxu0 0.0
    %2439 = vmatpush2.msra.mxu0 0.0
    %2440 = vmatprep.subr.mxu0 0.0
    %2441 = vmatpush2.msra.mxu0 0.0
    %2442 = vmatprep.subr.mxu0 0.0
    %2443 = vmatpush2.msra.mxu0 0.0
    %2444 = vmatprep.subr.mxu0 0.0
    %2445 = vmatpush2.msra.mxu0 0.0
    %2446 = vmatprep.subr.mxu0 0.0
    %2447 = vmatpush2.msra.mxu0 0.0
    %2448 = vmatprep.subr.mxu0 0.0
    %2449 = vmatpush2.msra.mxu0 0.0
    %2450 = vmatprep.subr.mxu0 0.0
    %2451 = vmatpush2.msra.mxu0 0.0
    %2452 = vmatprep.subr.mxu0 0.0
    %2453 = vmatpush2.msra.mxu0 0.0
    %2454 = vmatprep.subr.mxu0 0.0
    %2455 = vmatpush2.msra.mxu0 0.0
    %2456 = vmatprep.subr.mxu0 0.0
    %2457 = vmatpush2.msra.mxu0 0.0
    %2458 = vmatprep.mubr.f32.mxu0 0.0
    %2459 = vmatmul.mubr.f32.gmra.mxu0 %v419
    %v2460 = vpop.f32.mrf.mxu0
    %v2461 = vadd.f32 0.0, %v2460
    %v2462 = vpop.f32.mrf.mxu0
    %2463 = vmatprep.mubr.f32.mxu0 0.0
    %2464 = vmatmul.mubr.f32.gmra.mxu0 %v422
    %v2465 = vpop.f32.mrf.mxu0
    %v2466 = vadd.f32 0.0, %v2465
    %v2467 = vpop.f32.mrf.mxu0
    %2468 = vmatprep.mubr.f32.mxu0 0.0
    %2469 = vmatmul.mubr.f32.gmra.mxu0 %v425
    %v2470 = vpop.f32.mrf.mxu0
    %v2471 = vadd.f32 0.0, %v2470
    %v2472 = vpop.f32.mrf.mxu0
    %2473 = vmatprep.mubr.f32.mxu0 0.0
    %2474 = vmatmul.mubr.f32.gmra.mxu0 %v428
    %v2475 = vpop.f32.mrf.mxu0
    %v2476 = vadd.f32 0.0, %v2475
    %v2477 = vpop.f32.mrf.mxu0
    %2478 = vmatprep.mubr.f32.mxu0 0.0
    %2479 = vmatmul.mubr.f32.gmra.mxu0 %v431
    %v2480 = vpop.f32.mrf.mxu0
    %v2481 = vadd.f32 0.0, %v2480
    %v2482 = vpop.f32.mrf.mxu0
    %2483 = vmatprep.mubr.f32.mxu0 0.0
    %2484 = vmatmul.mubr.f32.gmra.mxu0 %v434
    %v2485 = vpop.f32.mrf.mxu0
    %v2486 = vadd.f32 0.0, %v2485
    %v2487 = vpop.f32.mrf.mxu0
    %2488 = vmatprep.mubr.f32.mxu0 0.0
    %2489 = vmatmul.mubr.f32.gmra.mxu0 %v437
    %v2490 = vpop.f32.mrf.mxu0
    %v2491 = vadd.f32 0.0, %v2490
    %v2492 = vpop.f32.mrf.mxu0
    %2493 = vmatprep.mubr.f32.mxu0 0.0
    %2494 = vmatmul.mubr.f32.gmra.mxu0 %v440
    %v2495 = vpop.f32.mrf.mxu0
    %v2496 = vadd.f32 0.0, %v2495
    %v2497 = vpop.f32.mrf.mxu0
    %2498 = vdwg.mxu0
    %v2499 = vmul.f32 %v2461, %v86
    %v2500 = vmul.f32 %v2466, %v87
    %v2501 = vmul.f32 %v2471, %v88
    %v2502 = vmul.f32 %v2476, %v89
    %v2503 = vmul.f32 %v2481, %v90
    %v2504 = vmul.f32 %v2486, %v91
    %v2505 = vmul.f32 %v2491, %v92
    %v2506 = vmul.f32 %v2496, %v93
    %2507 = vrot.lane.b32.xlu0 %v2378, 64
    %v2508 = vpop.permute.xlu0 %2507
    %2509 = vrot.lane.b32.xlu0 %v2383, 64
    %v2510 = vpop.permute.xlu0 %2509
    %2513 = vmatprep.subr.mxu0 0.0
    %2514 = vmatpush1.msra.mxu0 0.0
    %2515 = vmatprep.subr.mxu0 0.0
    %2516 = vmatpush1.msra.mxu0 0.0
    %2517 = vmatprep.subr.mxu0 0.0
    %2518 = vmatpush1.msra.mxu0 0.0
    %2519 = vmatprep.subr.mxu0 0.0
    %2520 = vmatpush1.msra.mxu0 0.0
    %2521 = vmatprep.subr.mxu0 0.0
    %2522 = vmatpush1.msra.mxu0 0.0
    %2523 = vmatprep.subr.mxu0 0.0
    %2524 = vmatpush1.msra.mxu0 0.0
    %2525 = vmatprep.subr.mxu0 0.0
    %2526 = vmatpush1.msra.mxu0 0.0
    %2527 = vmatprep.subr.mxu0 0.0
    %2528 = vmatpush1.msra.mxu0 0.0
    %2529 = vmatprep.subr.mxu0 0.0
    %2530 = vmatpush1.msra.mxu0 0.0
    %2531 = vmatprep.subr.mxu0 0.0
    %2532 = vmatpush1.msra.mxu0 0.0
    %2533 = vmatprep.subr.mxu0 0.0
    %2534 = vmatpush1.msra.mxu0 0.0
    %2535 = vmatprep.subr.mxu0 0.0
    %2536 = vmatpush1.msra.mxu0 0.0
    %2537 = vmatprep.subr.mxu0 0.0
    %2538 = vmatpush1.msra.mxu0 0.0
    %2539 = vmatprep.subr.mxu0 0.0
    %2540 = vmatpush1.msra.mxu0 0.0
    %2541 = vmatprep.subr.mxu0 0.0
    %2542 = vmatpush1.msra.mxu0 %v2510
    %2543 = vmatprep.subr.mxu0 0.0
    %2544 = vmatpush1.msra.mxu0 %v2508
    %2545 = vmatprep.subr.mxu0 0.0
    %2546 = vmatpush2.msra.mxu0 0.0
    %2547 = vmatprep.subr.mxu0 0.0
    %2548 = vmatpush2.msra.mxu0 0.0
    %2549 = vmatprep.subr.mxu0 0.0
    %2550 = vmatpush2.msra.mxu0 0.0
    %2551 = vmatprep.subr.mxu0 0.0
    %2552 = vmatpush2.msra.mxu0 0.0
    %2553 = vmatprep.subr.mxu0 0.0
    %2554 = vmatpush2.msra.mxu0 0.0
    %2555 = vmatprep.subr.mxu0 0.0
    %2556 = vmatpush2.msra.mxu0 0.0
    %2557 = vmatprep.subr.mxu0 0.0
    %2558 = vmatpush2.msra.mxu0 0.0
    %2559 = vmatprep.subr.mxu0 0.0
    %2560 = vmatpush2.msra.mxu0 0.0
    %2561 = vmatprep.subr.mxu0 0.0
    %2562 = vmatpush2.msra.mxu0 0.0
    %2563 = vmatprep.subr.mxu0 0.0
    %2564 = vmatpush2.msra.mxu0 0.0
    %2565 = vmatprep.subr.mxu0 0.0
    %2566 = vmatpush2.msra.mxu0 0.0
    %2567 = vmatprep.subr.mxu0 0.0
    %2568 = vmatpush2.msra.mxu0 0.0
    %2569 = vmatprep.subr.mxu0 0.0
    %2570 = vmatpush2.msra.mxu0 0.0
    %2571 = vmatprep.subr.mxu0 0.0
    %2572 = vmatpush2.msra.mxu0 0.0
    %2573 = vmatprep.subr.mxu0 0.0
    %2574 = vmatpush2.msra.mxu0 0.0
    %2575 = vmatprep.subr.mxu0 0.0
    %2576 = vmatpush2.msra.mxu0 0.0
    %2577 = vmatprep.mubr.f32.mxu0 0.0
    %2578 = vmatmul.mubr.f32.gmra.mxu0 %v419
    %v2579 = vpop.f32.mrf.mxu0
    %v2580 = vadd.f32 0.0, %v2579
    %v2581 = vpop.f32.mrf.mxu0
    %2582 = vmatprep.mubr.f32.mxu0 0.0
    %2583 = vmatmul.mubr.f32.gmra.mxu0 %v422
    %v2584 = vpop.f32.mrf.mxu0
    %v2585 = vadd.f32 0.0, %v2584
    %v2586 = vpop.f32.mrf.mxu0
    %2587 = vmatprep.mubr.f32.mxu0 0.0
    %2588 = vmatmul.mubr.f32.gmra.mxu0 %v425
    %v2589 = vpop.f32.mrf.mxu0
    %v2590 = vadd.f32 0.0, %v2589
    %v2591 = vpop.f32.mrf.mxu0
    %2592 = vmatprep.mubr.f32.mxu0 0.0
    %2593 = vmatmul.mubr.f32.gmra.mxu0 %v428
    %v2594 = vpop.f32.mrf.mxu0
    %v2595 = vadd.f32 0.0, %v2594
    %v2596 = vpop.f32.mrf.mxu0
    %2597 = vmatprep.mubr.f32.mxu0 0.0
    %2598 = vmatmul.mubr.f32.gmra.mxu0 %v431
    %v2599 = vpop.f32.mrf.mxu0
    %v2600 = vadd.f32 0.0, %v2599
    %v2601 = vpop.f32.mrf.mxu0
    %2602 = vmatprep.mubr.f32.mxu0 0.0
    %2603 = vmatmul.mubr.f32.gmra.mxu0 %v434
    %v2604 = vpop.f32.mrf.mxu0
    %v2605 = vadd.f32 0.0, %v2604
    %v2606 = vpop.f32.mrf.mxu0
    %2607 = vmatprep.mubr.f32.mxu0 0.0
    %2608 = vmatmul.mubr.f32.gmra.mxu0 %v437
    %v2609 = vpop.f32.mrf.mxu0
    %v2610 = vadd.f32 0.0, %v2609
    %v2611 = vpop.f32.mrf.mxu0
    %2612 = vmatprep.mubr.f32.mxu0 0.0
    %2613 = vmatmul.mubr.f32.gmra.mxu0 %v440
    %v2614 = vpop.f32.mrf.mxu0
    %v2615 = vadd.f32 0.0, %v2614
    %v2616 = vpop.f32.mrf.mxu0
    %2617 = vdwg.mxu0
    %v2618 = vmul.f32 %v2580, %v86
    %v2619 = vmul.f32 %v2585, %v87
    %v2620 = vmul.f32 %v2590, %v88
    %v2621 = vmul.f32 %v2595, %v89
    %v2622 = vmul.f32 %v2600, %v90
    %v2623 = vmul.f32 %v2605, %v91
    %v2624 = vmul.f32 %v2610, %v92
    %v2625 = vmul.f32 %v2615, %v93
    %v2626 = vsel %vm327, %v2378, 0
    %v2628 = vsel %vm327, %v2383, 0
    %v2631 = vsel %vm327, %v2499, 0
    %v2634 = vsel %vm327, %v2500, 0
    %v2637 = vsel %vm327, %v2501, 0
    %v2640 = vsel %vm327, %v2502, 0
    %v2643 = vsel %vm327, %v2503, 0
    %v2646 = vsel %vm327, %v2504, 0
    %v2649 = vsel %vm327, %v2505, 0
    %v2652 = vsel %vm327, %v2506, 0
    %2654 = vmatprep.subr.mxu0 0.0
    %2655 = vmatpush1.xpose.msra.mxu0 0.0
    %2656 = vmatprep.subr.mxu0 0.0
    %2657 = vmatpush1.xpose.msra.mxu0 0.0
    %2658 = vmatprep.subr.mxu0 0.0
    %2659 = vmatpush1.xpose.msra.mxu0 0.0
    %2660 = vmatprep.subr.mxu0 0.0
    %2661 = vmatpush1.xpose.msra.mxu0 0.0
    %2662 = vmatprep.subr.mxu0 0.0
    %2663 = vmatpush1.xpose.msra.mxu0 0.0
    %2664 = vmatprep.subr.mxu0 0.0
    %2665 = vmatpush1.xpose.msra.mxu0 0.0
    %2666 = vmatprep.subr.mxu0 0.0
    %2667 = vmatpush1.xpose.msra.mxu0 0.0
    %2668 = vmatprep.subr.mxu0 0.0
    %2669 = vmatpush1.xpose.msra.mxu0 0.0
    %2670 = vmatprep.subr.mxu0 0.0
    %2671 = vmatpush1.xpose.msra.mxu0 %v2652
    %2672 = vmatprep.subr.mxu0 0.0
    %2673 = vmatpush1.xpose.msra.mxu0 %v2649
    %2674 = vmatprep.subr.mxu0 0.0
    %2675 = vmatpush1.xpose.msra.mxu0 %v2646
    %2676 = vmatprep.subr.mxu0 0.0
    %2677 = vmatpush1.xpose.msra.mxu0 %v2643
    %2678 = vmatprep.subr.mxu0 0.0
    %2679 = vmatpush1.xpose.msra.mxu0 %v2640
    %2680 = vmatprep.subr.mxu0 0.0
    %2681 = vmatpush1.xpose.msra.mxu0 %v2637
    %2682 = vmatprep.subr.mxu0 0.0
    %2683 = vmatpush1.xpose.msra.mxu0 %v2634
    %2684 = vmatprep.subr.mxu0 0.0
    %2685 = vmatpush1.xpose.msra.mxu0 %v2631
    %2686 = vmatprep.subr.mxu0 0.0
    %2687 = vmatpush2.xpose.msra.mxu0 0.0
    %2688 = vmatprep.subr.mxu0 0.0
    %2689 = vmatpush2.xpose.msra.mxu0 0.0
    %2690 = vmatprep.subr.mxu0 0.0
    %2691 = vmatpush2.xpose.msra.mxu0 0.0
    %2692 = vmatprep.subr.mxu0 0.0
    %2693 = vmatpush2.xpose.msra.mxu0 0.0
    %2694 = vmatprep.subr.mxu0 0.0
    %2695 = vmatpush2.xpose.msra.mxu0 0.0
    %2696 = vmatprep.subr.mxu0 0.0
    %2697 = vmatpush2.xpose.msra.mxu0 0.0
    %2698 = vmatprep.subr.mxu0 0.0
    %2699 = vmatpush2.xpose.msra.mxu0 0.0
    %2700 = vmatprep.subr.mxu0 0.0
    %2701 = vmatpush2.xpose.msra.mxu0 0.0
    %2702 = vmatprep.subr.mxu0 0.0
    %2703 = vmatpush2.xpose.msra.mxu0 0.0
    %2704 = vmatprep.subr.mxu0 0.0
    %2705 = vmatpush2.xpose.msra.mxu0 0.0
    %2706 = vmatprep.subr.mxu0 0.0
    %2707 = vmatpush2.xpose.msra.mxu0 0.0
    %2708 = vmatprep.subr.mxu0 0.0
    %2709 = vmatpush2.xpose.msra.mxu0 0.0
    %2710 = vmatprep.subr.mxu0 0.0
    %2711 = vmatpush2.xpose.msra.mxu0 0.0
    %2712 = vmatprep.subr.mxu0 0.0
    %2713 = vmatpush2.xpose.msra.mxu0 0.0
    %2714 = vmatprep.subr.mxu0 0.0
    %2715 = vmatpush2.xpose.msra.mxu0 0.0
    %2716 = vmatprep.subr.mxu0 0.0
    %2717 = vmatpush2.xpose.msra.mxu0 0.0
    %2718 = vmatprep.mubr.f32.mxu0 0.0
    %2719 = vmatmul.mubr.f32.gmra.mxu0 %v2626
    %v2720 = vpop.f32.mrf.mxu0
    %v2721 = vadd.f32 %v102, %v2720
    %v2722 = vpop.f32.mrf.mxu0
    %2723 = vmatprep.mubr.f32.mxu0 0.0
    %2724 = vmatmul.mubr.f32.gmra.mxu0 %v2628
    %v2725 = vpop.f32.mrf.mxu0
    %v2726 = vadd.f32 %v103, %v2725
    %v2727 = vpop.f32.mrf.mxu0
    %2728 = vdwg.mxu0
    %v2729 = vsel %vm777, %v2721, -inf
    %2730 = vmax.xlane.f32.xlu0 %v2729
    %v2731 = vpop.xlane.xlu0 %2730
    %v2732 = vsel %vm777, %v2726, -inf
    %2733 = vmax.xlane.f32.xlu0 %v2732
    %v2734 = vpop.xlane.xlu0 %2733
    %v2735 = vsub.f32 %v2721, %v2731
    %v2736 = vsub.f32 %v2726, %v2734
    %v2737 = vmul.f32 %v2735, 1.442695
    %v2738 = vpow.pop %v2737
    %v2739 = vmul.f32 %v2736, 1.442695
    %v2740 = vpow.pop %v2739
    %v2742 = vsel %vm777, %v2738, 0
    %v2745 = vsel %vm777, %v2740, 0
    %2747 = vmatprep.subr.mxu0 0.0
    %2748 = vmatpush1.msra.mxu0 0.0
    %2749 = vmatprep.subr.mxu0 0.0
    %2750 = vmatpush1.msra.mxu0 0.0
    %2751 = vmatprep.subr.mxu0 0.0
    %2752 = vmatpush1.msra.mxu0 0.0
    %2753 = vmatprep.subr.mxu0 0.0
    %2754 = vmatpush1.msra.mxu0 0.0
    %2755 = vmatprep.subr.mxu0 0.0
    %2756 = vmatpush1.msra.mxu0 0.0
    %2757 = vmatprep.subr.mxu0 0.0
    %2758 = vmatpush1.msra.mxu0 0.0
    %2759 = vmatprep.subr.mxu0 0.0
    %2760 = vmatpush1.msra.mxu0 0.0
    %2761 = vmatprep.subr.mxu0 0.0
    %2762 = vmatpush1.msra.mxu0 0.0
    %2763 = vmatprep.subr.mxu0 0.0
    %2764 = vmatpush1.msra.mxu0 %v101
    %2765 = vmatprep.subr.mxu0 0.0
    %2766 = vmatpush1.msra.mxu0 %v100
    %2767 = vmatprep.subr.mxu0 0.0
    %2768 = vmatpush1.msra.mxu0 %v99
    %2769 = vmatprep.subr.mxu0 0.0
    %2770 = vmatpush1.msra.mxu0 %v98
    %2771 = vmatprep.subr.mxu0 0.0
    %2772 = vmatpush1.msra.mxu0 %v97
    %2773 = vmatprep.subr.mxu0 0.0
    %2774 = vmatpush1.msra.mxu0 %v96
    %2775 = vmatprep.subr.mxu0 0.0
    %2776 = vmatpush1.msra.mxu0 %v95
    %2777 = vmatprep.subr.mxu0 0.0
    %2778 = vmatpush1.msra.mxu0 %v94
    %2779 = vmatprep.subr.mxu0 0.0
    %2780 = vmatpush2.msra.mxu0 0.0
    %2781 = vmatprep.subr.mxu0 0.0
    %2782 = vmatpush2.msra.mxu0 0.0
    %2783 = vmatprep.subr.mxu0 0.0
    %2784 = vmatpush2.msra.mxu0 0.0
    %2785 = vmatprep.subr.mxu0 0.0
    %2786 = vmatpush2.msra.mxu0 0.0
    %2787 = vmatprep.subr.mxu0 0.0
    %2788 = vmatpush2.msra.mxu0 0.0
    %2789 = vmatprep.subr.mxu0 0.0
    %2790 = vmatpush2.msra.mxu0 0.0
    %2791 = vmatprep.subr.mxu0 0.0
    %2792 = vmatpush2.msra.mxu0 0.0
    %2793 = vmatprep.subr.mxu0 0.0
    %2794 = vmatpush2.msra.mxu0 0.0
    %2795 = vmatprep.subr.mxu0 0.0
    %2796 = vmatpush2.msra.mxu0 0.0
    %2797 = vmatprep.subr.mxu0 0.0
    %2798 = vmatpush2.msra.mxu0 0.0
    %2799 = vmatprep.subr.mxu0 0.0
    %2800 = vmatpush2.msra.mxu0 0.0
    %2801 = vmatprep.subr.mxu0 0.0
    %2802 = vmatpush2.msra.mxu0 0.0
    %2803 = vmatprep.subr.mxu0 0.0
    %2804 = vmatpush2.msra.mxu0 0.0
    %2805 = vmatprep.subr.mxu0 0.0
    %2806 = vmatpush2.msra.mxu0 0.0
    %2807 = vmatprep.subr.mxu0 0.0
    %2808 = vmatpush2.msra.mxu0 0.0
    %2809 = vmatprep.subr.mxu0 0.0
    %2810 = vmatpush2.msra.mxu0 0.0
    %2811 = vmatprep.mubr.f32.mxu0 0.0
    %2812 = vmatmul.mubr.f32.gmra.mxu0 %v2742
    %v2813 = vpop.f32.mrf.mxu0
    %v2814 = vadd.f32 %v104, %v2813
    %v2815 = vpop.f32.mrf.mxu0
    %2816 = vmatprep.mubr.f32.mxu0 0.0
    %2817 = vmatmul.mubr.f32.gmra.mxu0 %v2745
    %v2818 = vpop.f32.mrf.mxu0
    %v2819 = vadd.f32 %v105, %v2818
    %v2820 = vpop.f32.mrf.mxu0
    %2821 = vdwg.mxu0
    %v2822 = vrcp.pop %v2814
    %v2823 = vmul.f32 %v2738, %v2822
    %v2824 = vrcp.pop %v2819
    %v2825 = vmul.f32 %v2740, %v2824
    %v2827 = vsel %vm777, %v2823, 0
    %v2830 = vsel %vm777, %v2825, 0
    %2832 = vmatprep.subr.mxu0 0.0
    %2833 = vmatpush1.msra.mxu0 0.0
    %2834 = vmatprep.subr.mxu0 0.0
    %2835 = vmatpush1.msra.mxu0 0.0
    %2836 = vmatprep.subr.mxu0 0.0
    %2837 = vmatpush1.msra.mxu0 0.0
    %2838 = vmatprep.subr.mxu0 0.0
    %2839 = vmatpush1.msra.mxu0 0.0
    %2840 = vmatprep.subr.mxu0 0.0
    %2841 = vmatpush1.msra.mxu0 0.0
    %2842 = vmatprep.subr.mxu0 0.0
    %2843 = vmatpush1.msra.mxu0 0.0
    %2844 = vmatprep.subr.mxu0 0.0
    %2845 = vmatpush1.msra.mxu0 0.0
    %2846 = vmatprep.subr.mxu0 0.0
    %2847 = vmatpush1.msra.mxu0 0.0
    %2848 = vmatprep.subr.mxu0 0.0
    %2849 = vmatpush1.msra.mxu0 %v2625
    %2850 = vmatprep.subr.mxu0 0.0
    %2851 = vmatpush1.msra.mxu0 %v2624
    %2852 = vmatprep.subr.mxu0 0.0
    %2853 = vmatpush1.msra.mxu0 %v2623
    %2854 = vmatprep.subr.mxu0 0.0
    %2855 = vmatpush1.msra.mxu0 %v2622
    %2856 = vmatprep.subr.mxu0 0.0
    %2857 = vmatpush1.msra.mxu0 %v2621
    %2858 = vmatprep.subr.mxu0 0.0
    %2859 = vmatpush1.msra.mxu0 %v2620
    %2860 = vmatprep.subr.mxu0 0.0
    %2861 = vmatpush1.msra.mxu0 %v2619
    %2862 = vmatprep.subr.mxu0 0.0
    %2863 = vmatpush1.msra.mxu0 %v2618
    %2864 = vmatprep.subr.mxu0 0.0
    %2865 = vmatpush2.msra.mxu0 0.0
    %2866 = vmatprep.subr.mxu0 0.0
    %2867 = vmatpush2.msra.mxu0 0.0
    %2868 = vmatprep.subr.mxu0 0.0
    %2869 = vmatpush2.msra.mxu0 0.0
    %2870 = vmatprep.subr.mxu0 0.0
    %2871 = vmatpush2.msra.mxu0 0.0
    %2872 = vmatprep.subr.mxu0 0.0
    %2873 = vmatpush2.msra.mxu0 0.0
    %2874 = vmatprep.subr.mxu0 0.0
    %2875 = vmatpush2.msra.mxu0 0.0
    %2876 = vmatprep.subr.mxu0 0.0
    %2877 = vmatpush2.msra.mxu0 0.0
    %2878 = vmatprep.subr.mxu0 0.0
    %2879 = vmatpush2.msra.mxu0 0.0
    %2880 = vmatprep.subr.mxu0 0.0
    %2881 = vmatpush2.msra.mxu0 0.0
    %2882 = vmatprep.subr.mxu0 0.0
    %2883 = vmatpush2.msra.mxu0 0.0
    %2884 = vmatprep.subr.mxu0 0.0
    %2885 = vmatpush2.msra.mxu0 0.0
    %2886 = vmatprep.subr.mxu0 0.0
    %2887 = vmatpush2.msra.mxu0 0.0
    %2888 = vmatprep.subr.mxu0 0.0
    %2889 = vmatpush2.msra.mxu0 0.0
    %2890 = vmatprep.subr.mxu0 0.0
    %2891 = vmatpush2.msra.mxu0 0.0
    %2892 = vmatprep.subr.mxu0 0.0
    %2893 = vmatpush2.msra.mxu0 0.0
    %2894 = vmatprep.subr.mxu0 0.0
    %2895 = vmatpush2.msra.mxu0 0.0
    %2896 = vmatprep.mubr.f32.mxu0 0.0
    %2897 = vmatmul.mubr.f32.gmra.mxu0 %v2827
    %v2898 = vpop.f32.mrf.mxu0
    %v2899 = vadd.f32 0.0, %v2898
    %v2900 = vpop.f32.mrf.mxu0
    %2901 = vmatprep.mubr.f32.mxu0 0.0
    %2902 = vmatmul.mubr.f32.gmra.mxu0 %v2830
    %v2903 = vpop.f32.mrf.mxu0
    %v2904 = vadd.f32 0.0, %v2903
    %v2905 = vpop.f32.mrf.mxu0
    %2906 = vdwg.mxu0
    %v2907 = vld [vmem:[%s15] sm:$0xff]
    %v2908 = vld [vmem:[%s15 + $0x8] sm:$0xff]
    %v2909 = vld [vmem:[%s15 + $0x10] sm:$0xff]
    %v2910 = vld [vmem:[%s15 + $0x18] sm:$0xff]
    %v2911 = vlaneseq
    %v2912 = vshrl.u32 %v2911, 7
    %v2913 = vsub.s32 1, %v2912
    %v2914 = vrot.slane %v2295, %v2913
    %v2916 = vsel %vm327, %v2899, 0
    %v2919 = vsel %vm327, %v2904, 0
    %2921 = vmatprep.subr.mxu0 0.0
    %2922 = vmatpush1.msra.mxu0 0.0
    %2923 = vmatprep.subr.mxu0 0.0
    %2924 = vmatpush1.msra.mxu0 0.0
    %2925 = vmatprep.subr.mxu0 0.0
    %2926 = vmatpush1.msra.mxu0 0.0
    %2927 = vmatprep.subr.mxu0 0.0
    %2928 = vmatpush1.msra.mxu0 0.0
    %2929 = vmatprep.subr.mxu0 0.0
    %2930 = vmatpush1.msra.mxu0 0.0
    %2931 = vmatprep.subr.mxu0 0.0
    %2932 = vmatpush1.msra.mxu0 0.0
    %2933 = vmatprep.subr.mxu0 0.0
    %2934 = vmatpush1.msra.mxu0 0.0
    %2935 = vmatprep.subr.mxu0 0.0
    %2936 = vmatpush1.msra.mxu0 0.0
    %2937 = vmatprep.subr.mxu0 0.0
    %2938 = vmatpush1.msra.mxu0 0.0
    %2939 = vmatprep.subr.mxu0 0.0
    %2940 = vmatpush1.msra.mxu0 0.0
    %2941 = vmatprep.subr.mxu0 0.0
    %2942 = vmatpush1.msra.mxu0 0.0
    %2943 = vmatprep.subr.mxu0 0.0
    %2944 = vmatpush1.msra.mxu0 0.0
    %2945 = vmatprep.subr.mxu0 0.0
    %2946 = vmatpush1.msra.mxu0 %v2910
    %2947 = vmatprep.subr.mxu0 0.0
    %2948 = vmatpush1.msra.mxu0 %v2909
    %2949 = vmatprep.subr.mxu0 0.0
    %2950 = vmatpush1.msra.mxu0 %v2908
    %2951 = vmatprep.subr.mxu0 0.0
    %2952 = vmatpush1.msra.mxu0 %v2907
    %2953 = vmatprep.subr.mxu0 0.0
    %2954 = vmatpush2.msra.mxu0 0.0
    %2955 = vmatprep.subr.mxu0 0.0
    %2956 = vmatpush2.msra.mxu0 0.0
    %2957 = vmatprep.subr.mxu0 0.0
    %2958 = vmatpush2.msra.mxu0 0.0
    %2959 = vmatprep.subr.mxu0 0.0
    %2960 = vmatpush2.msra.mxu0 0.0
    %2961 = vmatprep.subr.mxu0 0.0
    %2962 = vmatpush2.msra.mxu0 0.0
    %2963 = vmatprep.subr.mxu0 0.0
    %2964 = vmatpush2.msra.mxu0 0.0
    %2965 = vmatprep.subr.mxu0 0.0
    %2966 = vmatpush2.msra.mxu0 0.0
    %2967 = vmatprep.subr.mxu0 0.0
    %2968 = vmatpush2.msra.mxu0 0.0
    %2969 = vmatprep.subr.mxu0 0.0
    %2970 = vmatpush2.msra.mxu0 0.0
    %2971 = vmatprep.subr.mxu0 0.0
    %2972 = vmatpush2.msra.mxu0 0.0
    %2973 = vmatprep.subr.mxu0 0.0
    %2974 = vmatpush2.msra.mxu0 0.0
    %2975 = vmatprep.subr.mxu0 0.0
    %2976 = vmatpush2.msra.mxu0 0.0
    %2977 = vmatprep.subr.mxu0 0.0
    %2978 = vmatpush2.msra.mxu0 0.0
    %2979 = vmatprep.subr.mxu0 0.0
    %2980 = vmatpush2.msra.mxu0 0.0
    %2981 = vmatprep.subr.mxu0 0.0
    %2982 = vmatpush2.msra.mxu0 0.0
    %2983 = vmatprep.subr.mxu0 0.0
    %2984 = vmatpush2.msra.mxu0 0.0
    %2985 = vmatprep.mubr.f32.mxu0 0.0
    %2986 = vmatmul.mubr.f32.gmra.mxu0 %v2916
    %v2987 = vpop.f32.mrf.mxu0
    %v2988 = vadd.f32 %v2914, %v2987
    %v2989 = vpop.f32.mrf.mxu0
    %2990 = vmatprep.mubr.f32.mxu0 0.0
    %2991 = vmatmul.mubr.f32.gmra.mxu0 %v2919
    %v2992 = vpop.f32.mrf.mxu0
    %v2993 = vadd.f32 %v2914, %v2992
    %v2994 = vpop.f32.mrf.mxu0
    %2995 = vdwg.mxu0
    %v2996 = vadd.f32 %v310, %v2988
    %v2997 = vadd.f32 %v315, %v2993
    %v2998 = vsel %vm327, %v2996, 0.0
    %2999 = vadd.xlane.f32.xlu0 %v2998
    %v3000 = vpop.xlane.xlu0 %2999
    %v3001 = vsel %vm327, %v2997, 0.0
    %3002 = vadd.xlane.f32.xlu0 %v3001
    %v3003 = vpop.xlane.xlu0 %3002
    %v3004 = vmul.f32 %v3000, %v1053
    %v3005 = vmul.f32 %v3003, %v1053
    %v3006 = vmul.f32 %v2996, %v2996
    %v3007 = vmul.f32 %v2997, %v2997
    %v3008 = vsel %vm327, %v3006, 0.0
    %3009 = vadd.xlane.f32.xlu0 %v3008
    %v3010 = vpop.xlane.xlu0 %3009
    %v3011 = vsel %vm327, %v3007, 0.0
    %3012 = vadd.xlane.f32.xlu0 %v3011
    %v3013 = vpop.xlane.xlu0 %3012
    %v3014 = vmul.f32 %v3010, %v1053
    %v3015 = vmul.f32 %v3013, %v1053
    %v3016 = vsub.f32 %v2996, %v3004
    %v3017 = vsub.f32 %v2997, %v3005
    %v3018 = vmul.f32 %v3004, %v3004
    %v3019 = vmul.f32 %v3005, %v3005
    %v3020 = vsub.f32 %v3014, %v3018
    %v3021 = vsub.f32 %v3015, %v3019
    %v3022 = vadd.f32 %v3020, 1e-05
    %v3023 = vadd.f32 %v3021, 1e-05
    %v3024 = vrsqrt.pop %v3022
    %v3025 = vrsqrt.pop %v3023
    %v3026 = vmul.f32 %v3016, %v3024
    %v3027 = vmul.f32 %v3017, %v3025
    %v3028 = vlaneseq
    %v3029 = vshrl.u32 %v3028, 7
    %v3030 = vsub.s32 2, %v3029
    %v3031 = vrot.slane %v2295, %v3030
    %v3032 = vmul.f32 %v3026, %v3031
    %v3033 = vmul.f32 %v3027, %v3031
    %v3034 = vlaneseq
    %v3035 = vshrl.u32 %v3034, 7
    %v3036 = vsub.s32 3, %v3035
    %v3037 = vrot.slane %v2295, %v3036
    %v3038 = vadd.f32 %v3032, %v3037
    %v3039 = vadd.f32 %v3033, %v3037
    %v3040 = vld [vmem:[%s16] sm:$0xff]
    %v3041 = vld [vmem:[%s16 + $0x8] sm:$0xff]
    %v3042 = vld [vmem:[%s16 + $0x10] sm:$0xff]
    %v3043 = vld [vmem:[%s16 + $0x18] sm:$0xff]
    %v3044 = vlaneseq
    %v3045 = vshrl.u32 %v3044, 7
    %v3046 = vsub.s32 4, %v3045
    %v3047 = vrot.slane %v2295, %v3046
    %v3049 = vsel %vm327, %v3038, 0
    %v3052 = vsel %vm327, %v3039, 0
    %3054 = vmatprep.subr.mxu0 0.0
    %3055 = vmatpush1.msra.mxu0 0.0
    %3056 = vmatprep.subr.mxu0 0.0
    %3057 = vmatpush1.msra.mxu0 0.0
    %3058 = vmatprep.subr.mxu0 0.0
    %3059 = vmatpush1.msra.mxu0 0.0
    %3060 = vmatprep.subr.mxu0 0.0
    %3061 = vmatpush1.msra.mxu0 0.0
    %3062 = vmatprep.subr.mxu0 0.0
    %3063 = vmatpush1.msra.mxu0 0.0
    %3064 = vmatprep.subr.mxu0 0.0
    %3065 = vmatpush1.msra.mxu0 0.0
    %3066 = vmatprep.subr.mxu0 0.0
    %3067 = vmatpush1.msra.mxu0 0.0
    %3068 = vmatprep.subr.mxu0 0.0
    %3069 = vmatpush1.msra.mxu0 0.0
    %3070 = vmatprep.subr.mxu0 0.0
    %3071 = vmatpush1.msra.mxu0 0.0
    %3072 = vmatprep.subr.mxu0 0.0
    %3073 = vmatpush1.msra.mxu0 0.0
    %3074 = vmatprep.subr.mxu0 0.0
    %3075 = vmatpush1.msra.mxu0 0.0
    %3076 = vmatprep.subr.mxu0 0.0
    %3077 = vmatpush1.msra.mxu0 0.0
    %3078 = vmatprep.subr.mxu0 0.0
    %3079 = vmatpush1.msra.mxu0 %v3043
    %3080 = vmatprep.subr.mxu0 0.0
    %3081 = vmatpush1.msra.mxu0 %v3042
    %3082 = vmatprep.subr.mxu0 0.0
    %3083 = vmatpush1.msra.mxu0 %v3041
    %3084 = vmatprep.subr.mxu0 0.0
    %3085 = vmatpush1.msra.mxu0 %v3040
    %3086 = vmatprep.subr.mxu0 0.0
    %3087 = vmatpush2.msra.mxu0 0.0
    %3088 = vmatprep.subr.mxu0 0.0
    %3089 = vmatpush2.msra.mxu0 0.0
    %3090 = vmatprep.subr.mxu0 0.0
    %3091 = vmatpush2.msra.mxu0 0.0
    %3092 = vmatprep.subr.mxu0 0.0
    %3093 = vmatpush2.msra.mxu0 0.0
    %3094 = vmatprep.subr.mxu0 0.0
    %3095 = vmatpush2.msra.mxu0 0.0
    %3096 = vmatprep.subr.mxu0 0.0
    %3097 = vmatpush2.msra.mxu0 0.0
    %3098 = vmatprep.subr.mxu0 0.0
    %3099 = vmatpush2.msra.mxu0 0.0
    %3100 = vmatprep.subr.mxu0 0.0
    %3101 = vmatpush2.msra.mxu0 0.0
    %3102 = vmatprep.subr.mxu0 0.0
    %3103 = vmatpush2.msra.mxu0 0.0
    %3104 = vmatprep.subr.mxu0 0.0
    %3105 = vmatpush2.msra.mxu0 0.0
    %3106 = vmatprep.subr.mxu0 0.0
    %3107 = vmatpush2.msra.mxu0 0.0
    %3108 = vmatprep.subr.mxu0 0.0
    %3109 = vmatpush2.msra.mxu0 0.0
    %3110 = vmatprep.subr.mxu0 0.0
    %3111 = vmatpush2.msra.mxu0 0.0
    %3112 = vmatprep.subr.mxu0 0.0
    %3113 = vmatpush2.msra.mxu0 0.0
    %3114 = vmatprep.subr.mxu0 0.0
    %3115 = vmatpush2.msra.mxu0 0.0
    %3116 = vmatprep.subr.mxu0 0.0
    %3117 = vmatpush2.msra.mxu0 0.0
    %3118 = vmatprep.mubr.f32.mxu0 0.0
    %3119 = vmatmul.mubr.f32.gmra.mxu0 %v3049
    %v3120 = vpop.f32.mrf.mxu0
    %v3121 = vadd.f32 %v3047, %v3120
    %v3122 = vpop.f32.mrf.mxu0
    %3123 = vmatprep.mubr.f32.mxu0 0.0
    %3124 = vmatmul.mubr.f32.gmra.mxu0 %v3052
    %v3125 = vpop.f32.mrf.mxu0
    %v3126 = vadd.f32 %v3047, %v3125
    %v3127 = vpop.f32.mrf.mxu0
    %3128 = vdwg.mxu0
    %v3129 = vld [vmem:[%s17] sm:$0xff]
    %v3130 = vld [vmem:[%s17 + $0x8] sm:$0xff]
    %v3131 = vld [vmem:[%s17 + $0x10] sm:$0xff]
    %v3132 = vld [vmem:[%s17 + $0x18] sm:$0xff]
    %v3133 = vlaneseq
    %v3134 = vshrl.u32 %v3133, 7
    %v3135 = vsub.s32 5, %v3134
    %v3136 = vrot.slane %v2295, %v3135
    %v3138 = vsel %vm327, %v2293, 0
    %v3141 = vsel %vm327, %v2294, 0
    %3143 = vmatprep.subr.mxu0 0.0
    %3144 = vmatpush1.msra.mxu0 0.0
    %3145 = vmatprep.subr.mxu0 0.0
    %3146 = vmatpush1.msra.mxu0 0.0
    %3147 = vmatprep.subr.mxu0 0.0
    %3148 = vmatpush1.msra.mxu0 0.0
    %3149 = vmatprep.subr.mxu0 0.0
    %3150 = vmatpush1.msra.mxu0 0.0
    %3151 = vmatprep.subr.mxu0 0.0
    %3152 = vmatpush1.msra.mxu0 0.0
    %3153 = vmatprep.subr.mxu0 0.0
    %3154 = vmatpush1.msra.mxu0 0.0
    %3155 = vmatprep.subr.mxu0 0.0
    %3156 = vmatpush1.msra.mxu0 0.0
    %3157 = vmatprep.subr.mxu0 0.0
    %3158 = vmatpush1.msra.mxu0 0.0
    %3159 = vmatprep.subr.mxu0 0.0
    %3160 = vmatpush1.msra.mxu0 0.0
    %3161 = vmatprep.subr.mxu0 0.0
    %3162 = vmatpush1.msra.mxu0 0.0
    %3163 = vmatprep.subr.mxu0 0.0
    %3164 = vmatpush1.msra.mxu0 0.0
    %3165 = vmatprep.subr.mxu0 0.0
    %3166 = vmatpush1.msra.mxu0 0.0
    %3167 = vmatprep.subr.mxu0 0.0
    %3168 = vmatpush1.msra.mxu0 %v3132
    %3169 = vmatprep.subr.mxu0 0.0
    %3170 = vmatpush1.msra.mxu0 %v3131
    %3171 = vmatprep.subr.mxu0 0.0
    %3172 = vmatpush1.msra.mxu0 %v3130
    %3173 = vmatprep.subr.mxu0 0.0
    %3174 = vmatpush1.msra.mxu0 %v3129
    %3175 = vmatprep.subr.mxu0 0.0
    %3176 = vmatpush2.msra.mxu0 0.0
    %3177 = vmatprep.subr.mxu0 0.0
    %3178 = vmatpush2.msra.mxu0 0.0
    %3179 = vmatprep.subr.mxu0 0.0
    %3180 = vmatpush2.msra.mxu0 0.0
    %3181 = vmatprep.subr.mxu0 0.0
    %3182 = vmatpush2.msra.mxu0 0.0
    %3183 = vmatprep.subr.mxu0 0.0
    %3184 = vmatpush2.msra.mxu0 0.0
    %3185 = vmatprep.subr.mxu0 0.0
    %3186 = vmatpush2.msra.mxu0 0.0
    %3187 = vmatprep.subr.mxu0 0.0
    %3188 = vmatpush2.msra.mxu0 0.0
    %3189 = vmatprep.subr.mxu0 0.0
    %3190 = vmatpush2.msra.mxu0 0.0
    %3191 = vmatprep.subr.mxu0 0.0
    %3192 = vmatpush2.msra.mxu0 0.0
    %3193 = vmatprep.subr.mxu0 0.0
    %3194 = vmatpush2.msra.mxu0 0.0
    %3195 = vmatprep.subr.mxu0 0.0
    %3196 = vmatpush2.msra.mxu0 0.0
    %3197 = vmatprep.subr.mxu0 0.0
    %3198 = vmatpush2.msra.mxu0 0.0
    %3199 = vmatprep.subr.mxu0 0.0
    %3200 = vmatpush2.msra.mxu0 0.0
    %3201 = vmatprep.subr.mxu0 0.0
    %3202 = vmatpush2.msra.mxu0 0.0
    %3203 = vmatprep.subr.mxu0 0.0
    %3204 = vmatpush2.msra.mxu0 0.0
    %3205 = vmatprep.subr.mxu0 0.0
    %3206 = vmatpush2.msra.mxu0 0.0
    %3207 = vmatprep.mubr.f32.mxu0 0.0
    %3208 = vmatmul.mubr.f32.gmra.mxu0 %v3138
    %v3209 = vpop.f32.mrf.mxu0
    %v3210 = vadd.f32 %v3136, %v3209
    %v3211 = vpop.f32.mrf.mxu0
    %3212 = vmatprep.mubr.f32.mxu0 0.0
    %3213 = vmatmul.mubr.f32.gmra.mxu0 %v3141
    %v3214 = vpop.f32.mrf.mxu0
    %v3215 = vadd.f32 %v3136, %v3214
    %v3216 = vpop.f32.mrf.mxu0
    %3217 = vdwg.mxu0
    %3218 = vmatprep.subr.mxu0 0.0
    %3219 = vmatpush1.msra.mxu0 0.0
    %3220 = vmatprep.subr.mxu0 0.0
    %3221 = vmatpush1.msra.mxu0 0.0
    %3222 = vmatprep.subr.mxu0 0.0
    %3223 = vmatpush1.msra.mxu0 0.0
    %3224 = vmatprep.subr.mxu0 0.0
    %3225 = vmatpush1.msra.mxu0 0.0
    %3226 = vmatprep.subr.mxu0 0.0
    %3227 = vmatpush1.msra.mxu0 0.0
    %3228 = vmatprep.subr.mxu0 0.0
    %3229 = vmatpush1.msra.mxu0 0.0
    %3230 = vmatprep.subr.mxu0 0.0
    %3231 = vmatpush1.msra.mxu0 0.0
    %3232 = vmatprep.subr.mxu0 0.0
    %3233 = vmatpush1.msra.mxu0 0.0
    %3234 = vmatprep.subr.mxu0 0.0
    %3235 = vmatpush1.msra.mxu0 0.0
    %3236 = vmatprep.subr.mxu0 0.0
    %3237 = vmatpush1.msra.mxu0 0.0
    %3238 = vmatprep.subr.mxu0 0.0
    %3239 = vmatpush1.msra.mxu0 0.0
    %3240 = vmatprep.subr.mxu0 0.0
    %3241 = vmatpush1.msra.mxu0 0.0
    %3242 = vmatprep.subr.mxu0 0.0
    %3243 = vmatpush1.msra.mxu0 0.0
    %3244 = vmatprep.subr.mxu0 0.0
    %3245 = vmatpush1.msra.mxu0 0.0
    %3246 = vmatprep.subr.mxu0 0.0
    %3247 = vmatpush1.msra.mxu0 %v3215
    %3248 = vmatprep.subr.mxu0 0.0
    %3249 = vmatpush1.msra.mxu0 %v3210
    %3250 = vmatprep.subr.mxu0 0.0
    %3251 = vmatpush2.msra.mxu0 0.0
    %3252 = vmatprep.subr.mxu0 0.0
    %3253 = vmatpush2.msra.mxu0 0.0
    %3254 = vmatprep.subr.mxu0 0.0
    %3255 = vmatpush2.msra.mxu0 0.0
    %3256 = vmatprep.subr.mxu0 0.0
    %3257 = vmatpush2.msra.mxu0 0.0
    %3258 = vmatprep.subr.mxu0 0.0
    %3259 = vmatpush2.msra.mxu0 0.0
    %3260 = vmatprep.subr.mxu0 0.0
    %3261 = vmatpush2.msra.mxu0 0.0
    %3262 = vmatprep.subr.mxu0 0.0
    %3263 = vmatpush2.msra.mxu0 0.0
    %3264 = vmatprep.subr.mxu0 0.0
    %3265 = vmatpush2.msra.mxu0 0.0
    %3266 = vmatprep.subr.mxu0 0.0
    %3267 = vmatpush2.msra.mxu0 0.0
    %3268 = vmatprep.subr.mxu0 0.0
    %3269 = vmatpush2.msra.mxu0 0.0
    %3270 = vmatprep.subr.mxu0 0.0
    %3271 = vmatpush2.msra.mxu0 0.0
    %3272 = vmatprep.subr.mxu0 0.0
    %3273 = vmatpush2.msra.mxu0 0.0
    %3274 = vmatprep.subr.mxu0 0.0
    %3275 = vmatpush2.msra.mxu0 0.0
    %3276 = vmatprep.subr.mxu0 0.0
    %3277 = vmatpush2.msra.mxu0 0.0
    %3278 = vmatprep.subr.mxu0 0.0
    %3279 = vmatpush2.msra.mxu0 0.0
    %3280 = vmatprep.subr.mxu0 0.0
    %3281 = vmatpush2.msra.mxu0 0.0
    %3282 = vmatprep.mubr.f32.mxu0 0.0
    %3283 = vmatmul.mubr.f32.gmra.mxu0 %v419
    %v3284 = vpop.f32.mrf.mxu0
    %v3285 = vadd.f32 0.0, %v3284
    %v3286 = vpop.f32.mrf.mxu0
    %3287 = vmatprep.mubr.f32.mxu0 0.0
    %3288 = vmatmul.mubr.f32.gmra.mxu0 %v422
    %v3289 = vpop.f32.mrf.mxu0
    %v3290 = vadd.f32 0.0, %v3289
    %v3291 = vpop.f32.mrf.mxu0
    %3292 = vmatprep.mubr.f32.mxu0 0.0
    %3293 = vmatmul.mubr.f32.gmra.mxu0 %v425
    %v3294 = vpop.f32.mrf.mxu0
    %v3295 = vadd.f32 0.0, %v3294
    %v3296 = vpop.f32.mrf.mxu0
    %3297 = vmatprep.mubr.f32.mxu0 0.0
    %3298 = vmatmul.mubr.f32.gmra.mxu0 %v428
    %v3299 = vpop.f32.mrf.mxu0
    %v3300 = vadd.f32 0.0, %v3299
    %v3301 = vpop.f32.mrf.mxu0
    %3302 = vmatprep.mubr.f32.mxu0 0.0
    %3303 = vmatmul.mubr.f32.gmra.mxu0 %v431
    %v3304 = vpop.f32.mrf.mxu0
    %v3305 = vadd.f32 0.0, %v3304
    %v3306 = vpop.f32.mrf.mxu0
    %3307 = vmatprep.mubr.f32.mxu0 0.0
    %3308 = vmatmul.mubr.f32.gmra.mxu0 %v434
    %v3309 = vpop.f32.mrf.mxu0
    %v3310 = vadd.f32 0.0, %v3309
    %v3311 = vpop.f32.mrf.mxu0
    %3312 = vmatprep.mubr.f32.mxu0 0.0
    %3313 = vmatmul.mubr.f32.gmra.mxu0 %v437
    %v3314 = vpop.f32.mrf.mxu0
    %v3315 = vadd.f32 0.0, %v3314
    %v3316 = vpop.f32.mrf.mxu0
    %3317 = vmatprep.mubr.f32.mxu0 0.0
    %3318 = vmatmul.mubr.f32.gmra.mxu0 %v440
    %v3319 = vpop.f32.mrf.mxu0
    %v3320 = vadd.f32 0.0, %v3319
    %v3321 = vpop.f32.mrf.mxu0
    %3322 = vdwg.mxu0
    %v3323 = vmul.f32 %v3285, %v86
    %v3324 = vmul.f32 %v3290, %v87
    %v3325 = vmul.f32 %v3295, %v88
    %v3326 = vmul.f32 %v3300, %v89
    %v3327 = vmul.f32 %v3305, %v90
    %v3328 = vmul.f32 %v3310, %v91
    %v3329 = vmul.f32 %v3315, %v92
    %v3330 = vmul.f32 %v3320, %v93
    %3333 = vrot.lane.b32.xlu0 %v3210, 96
    %v3334 = vpop.permute.xlu0 %3333
    %3335 = vrot.lane.b32.xlu0 %v3215, 96
    %v3336 = vpop.permute.xlu0 %3335
    %3339 = vmatprep.subr.mxu0 0.0
    %3340 = vmatpush1.msra.mxu0 0.0
    %3341 = vmatprep.subr.mxu0 0.0
    %3342 = vmatpush1.msra.mxu0 0.0
    %3343 = vmatprep.subr.mxu0 0.0
    %3344 = vmatpush1.msra.mxu0 0.0
    %3345 = vmatprep.subr.mxu0 0.0
    %3346 = vmatpush1.msra.mxu0 0.0
    %3347 = vmatprep.subr.mxu0 0.0
    %3348 = vmatpush1.msra.mxu0 0.0
    %3349 = vmatprep.subr.mxu0 0.0
    %3350 = vmatpush1.msra.mxu0 0.0
    %3351 = vmatprep.subr.mxu0 0.0
    %3352 = vmatpush1.msra.mxu0 0.0
    %3353 = vmatprep.subr.mxu0 0.0
    %3354 = vmatpush1.msra.mxu0 0.0
    %3355 = vmatprep.subr.mxu0 0.0
    %3356 = vmatpush1.msra.mxu0 0.0
    %3357 = vmatprep.subr.mxu0 0.0
    %3358 = vmatpush1.msra.mxu0 0.0
    %3359 = vmatprep.subr.mxu0 0.0
    %3360 = vmatpush1.msra.mxu0 0.0
    %3361 = vmatprep.subr.mxu0 0.0
    %3362 = vmatpush1.msra.mxu0 0.0
    %3363 = vmatprep.subr.mxu0 0.0
    %3364 = vmatpush1.msra.mxu0 0.0
    %3365 = vmatprep.subr.mxu0 0.0
    %3366 = vmatpush1.msra.mxu0 0.0
    %3367 = vmatprep.subr.mxu0 0.0
    %3368 = vmatpush1.msra.mxu0 %v3336
    %3369 = vmatprep.subr.mxu0 0.0
    %3370 = vmatpush1.msra.mxu0 %v3334
    %3371 = vmatprep.subr.mxu0 0.0
    %3372 = vmatpush2.msra.mxu0 0.0
    %3373 = vmatprep.subr.mxu0 0.0
    %3374 = vmatpush2.msra.mxu0 0.0
    %3375 = vmatprep.subr.mxu0 0.0
    %3376 = vmatpush2.msra.mxu0 0.0
    %3377 = vmatprep.subr.mxu0 0.0
    %3378 = vmatpush2.msra.mxu0 0.0
    %3379 = vmatprep.subr.mxu0 0.0
    %3380 = vmatpush2.msra.mxu0 0.0
    %3381 = vmatprep.subr.mxu0 0.0
    %3382 = vmatpush2.msra.mxu0 0.0
    %3383 = vmatprep.subr.mxu0 0.0
    %3384 = vmatpush2.msra.mxu0 0.0
    %3385 = vmatprep.subr.mxu0 0.0
    %3386 = vmatpush2.msra.mxu0 0.0
    %3387 = vmatprep.subr.mxu0 0.0
    %3388 = vmatpush2.msra.mxu0 0.0
    %3389 = vmatprep.subr.mxu0 0.0
    %3390 = vmatpush2.msra.mxu0 0.0
    %3391 = vmatprep.subr.mxu0 0.0
    %3392 = vmatpush2.msra.mxu0 0.0
    %3393 = vmatprep.subr.mxu0 0.0
    %3394 = vmatpush2.msra.mxu0 0.0
    %3395 = vmatprep.subr.mxu0 0.0
    %3396 = vmatpush2.msra.mxu0 0.0
    %3397 = vmatprep.subr.mxu0 0.0
    %3398 = vmatpush2.msra.mxu0 0.0
    %3399 = vmatprep.subr.mxu0 0.0
    %3400 = vmatpush2.msra.mxu0 0.0
    %3401 = vmatprep.subr.mxu0 0.0
    %3402 = vmatpush2.msra.mxu0 0.0
    %3403 = vmatprep.mubr.f32.mxu0 0.0
    %3404 = vmatmul.mubr.f32.gmra.mxu0 %v419
    %v3405 = vpop.f32.mrf.mxu0
    %v3406 = vadd.f32 0.0, %v3405
    %v3407 = vpop.f32.mrf.mxu0
    %3408 = vmatprep.mubr.f32.mxu0 0.0
    %3409 = vmatmul.mubr.f32.gmra.mxu0 %v422
    %v3410 = vpop.f32.mrf.mxu0
    %v3411 = vadd.f32 0.0, %v3410
    %v3412 = vpop.f32.mrf.mxu0
    %3413 = vmatprep.mubr.f32.mxu0 0.0
    %3414 = vmatmul.mubr.f32.gmra.mxu0 %v425
    %v3415 = vpop.f32.mrf.mxu0
    %v3416 = vadd.f32 0.0, %v3415
    %v3417 = vpop.f32.mrf.mxu0
    %3418 = vmatprep.mubr.f32.mxu0 0.0
    %3419 = vmatmul.mubr.f32.gmra.mxu0 %v428
    %v3420 = vpop.f32.mrf.mxu0
    %v3421 = vadd.f32 0.0, %v3420
    %v3422 = vpop.f32.mrf.mxu0
    %3423 = vmatprep.mubr.f32.mxu0 0.0
    %3424 = vmatmul.mubr.f32.gmra.mxu0 %v431
    %v3425 = vpop.f32.mrf.mxu0
    %v3426 = vadd.f32 0.0, %v3425
    %v3427 = vpop.f32.mrf.mxu0
    %3428 = vmatprep.mubr.f32.mxu0 0.0
    %3429 = vmatmul.mubr.f32.gmra.mxu0 %v434
    %v3430 = vpop.f32.mrf.mxu0
    %v3431 = vadd.f32 0.0, %v3430
    %v3432 = vpop.f32.mrf.mxu0
    %3433 = vmatprep.mubr.f32.mxu0 0.0
    %3434 = vmatmul.mubr.f32.gmra.mxu0 %v437
    %v3435 = vpop.f32.mrf.mxu0
    %v3436 = vadd.f32 0.0, %v3435
    %v3437 = vpop.f32.mrf.mxu0
    %3438 = vmatprep.mubr.f32.mxu0 0.0
    %3439 = vmatmul.mubr.f32.gmra.mxu0 %v440
    %v3440 = vpop.f32.mrf.mxu0
    %v3441 = vadd.f32 0.0, %v3440
    %v3442 = vpop.f32.mrf.mxu0
    %3443 = vdwg.mxu0
    %v3444 = vmul.f32 %v3406, %v86
    %v3445 = vmul.f32 %v3411, %v87
    %v3446 = vmul.f32 %v3416, %v88
    %v3447 = vmul.f32 %v3421, %v89
    %v3448 = vmul.f32 %v3426, %v90
    %v3449 = vmul.f32 %v3431, %v91
    %v3450 = vmul.f32 %v3436, %v92
    %v3451 = vmul.f32 %v3441, %v93
    %v3453 = vsel %vm327, %v3121, 0
    %v3456 = vsel %vm327, %v3126, 0
    %v3459 = vsel %vm327, %v3323, 0
    %v3462 = vsel %vm327, %v3324, 0
    %v3465 = vsel %vm327, %v3325, 0
    %v3468 = vsel %vm327, %v3326, 0
    %v3471 = vsel %vm327, %v3327, 0
    %v3474 = vsel %vm327, %v3328, 0
    %v3477 = vsel %vm327, %v3329, 0
    %v3480 = vsel %vm327, %v3330, 0
    %3482 = vmatprep.subr.mxu0 0.0
    %3483 = vmatpush1.xpose.msra.mxu0 0.0
    %3484 = vmatprep.subr.mxu0 0.0
    %3485 = vmatpush1.xpose.msra.mxu0 0.0
    %3486 = vmatprep.subr.mxu0 0.0
    %3487 = vmatpush1.xpose.msra.mxu0 0.0
    %3488 = vmatprep.subr.mxu0 0.0
    %3489 = vmatpush1.xpose.msra.mxu0 0.0
    %3490 = vmatprep.subr.mxu0 0.0
    %3491 = vmatpush1.xpose.msra.mxu0 0.0
    %3492 = vmatprep.subr.mxu0 0.0
    %3493 = vmatpush1.xpose.msra.mxu0 0.0
    %3494 = vmatprep.subr.mxu0 0.0
    %3495 = vmatpush1.xpose.msra.mxu0 0.0
    %3496 = vmatprep.subr.mxu0 0.0
    %3497 = vmatpush1.xpose.msra.mxu0 0.0
    %3498 = vmatprep.subr.mxu0 0.0
    %3499 = vmatpush1.xpose.msra.mxu0 %v3480
    %3500 = vmatprep.subr.mxu0 0.0
    %3501 = vmatpush1.xpose.msra.mxu0 %v3477
    %3502 = vmatprep.subr.mxu0 0.0
    %3503 = vmatpush1.xpose.msra.mxu0 %v3474
    %3504 = vmatprep.subr.mxu0 0.0
    %3505 = vmatpush1.xpose.msra.mxu0 %v3471
    %3506 = vmatprep.subr.mxu0 0.0
    %3507 = vmatpush1.xpose.msra.mxu0 %v3468
    %3508 = vmatprep.subr.mxu0 0.0
    %3509 = vmatpush1.xpose.msra.mxu0 %v3465
    %3510 = vmatprep.subr.mxu0 0.0
    %3511 = vmatpush1.xpose.msra.mxu0 %v3462
    %3512 = vmatprep.subr.mxu0 0.0
    %3513 = vmatpush1.xpose.msra.mxu0 %v3459
    %3514 = vmatprep.subr.mxu0 0.0
    %3515 = vmatpush2.xpose.msra.mxu0 0.0
    %3516 = vmatprep.subr.mxu0 0.0
    %3517 = vmatpush2.xpose.msra.mxu0 0.0
    %3518 = vmatprep.subr.mxu0 0.0
    %3519 = vmatpush2.xpose.msra.mxu0 0.0
    %3520 = vmatprep.subr.mxu0 0.0
    %3521 = vmatpush2.xpose.msra.mxu0 0.0
    %3522 = vmatprep.subr.mxu0 0.0
    %3523 = vmatpush2.xpose.msra.mxu0 0.0
    %3524 = vmatprep.subr.mxu0 0.0
    %3525 = vmatpush2.xpose.msra.mxu0 0.0
    %3526 = vmatprep.subr.mxu0 0.0
    %3527 = vmatpush2.xpose.msra.mxu0 0.0
    %3528 = vmatprep.subr.mxu0 0.0
    %3529 = vmatpush2.xpose.msra.mxu0 0.0
    %3530 = vmatprep.subr.mxu0 0.0
    %3531 = vmatpush2.xpose.msra.mxu0 0.0
    %3532 = vmatprep.subr.mxu0 0.0
    %3533 = vmatpush2.xpose.msra.mxu0 0.0
    %3534 = vmatprep.subr.mxu0 0.0
    %3535 = vmatpush2.xpose.msra.mxu0 0.0
    %3536 = vmatprep.subr.mxu0 0.0
    %3537 = vmatpush2.xpose.msra.mxu0 0.0
    %3538 = vmatprep.subr.mxu0 0.0
    %3539 = vmatpush2.xpose.msra.mxu0 0.0
    %3540 = vmatprep.subr.mxu0 0.0
    %3541 = vmatpush2.xpose.msra.mxu0 0.0
    %3542 = vmatprep.subr.mxu0 0.0
    %3543 = vmatpush2.xpose.msra.mxu0 0.0
    %3544 = vmatprep.subr.mxu0 0.0
    %3545 = vmatpush2.xpose.msra.mxu0 0.0
    %3546 = vmatprep.mubr.f32.mxu0 0.0
    %3547 = vmatmul.mubr.f32.gmra.mxu0 %v3453
    %v3548 = vpop.f32.mrf.mxu0
    %v3549 = vadd.f32 %v102, %v3548
    %v3550 = vpop.f32.mrf.mxu0
    %3551 = vmatprep.mubr.f32.mxu0 0.0
    %3552 = vmatmul.mubr.f32.gmra.mxu0 %v3456
    %v3553 = vpop.f32.mrf.mxu0
    %v3554 = vadd.f32 %v103, %v3553
    %v3555 = vpop.f32.mrf.mxu0
    %3556 = vdwg.mxu0
    %v3557 = vsel %vm777, %v3549, -inf
    %3558 = vmax.xlane.f32.xlu0 %v3557
    %v3559 = vpop.xlane.xlu0 %3558
    %v3560 = vsel %vm777, %v3554, -inf
    %3561 = vmax.xlane.f32.xlu0 %v3560
    %v3562 = vpop.xlane.xlu0 %3561
    %v3563 = vsub.f32 %v3549, %v3559
    %v3564 = vsub.f32 %v3554, %v3562
    %v3565 = vmul.f32 %v3563, 1.442695
    %v3566 = vpow.pop %v3565
    %v3567 = vmul.f32 %v3564, 1.442695
    %v3568 = vpow.pop %v3567
    %v3570 = vsel %vm777, %v3566, 0
    %v3573 = vsel %vm777, %v3568, 0
    %3575 = vmatprep.subr.mxu0 0.0
    %3576 = vmatpush1.msra.mxu0 0.0
    %3577 = vmatprep.subr.mxu0 0.0
    %3578 = vmatpush1.msra.mxu0 0.0
    %3579 = vmatprep.subr.mxu0 0.0
    %3580 = vmatpush1.msra.mxu0 0.0
    %3581 = vmatprep.subr.mxu0 0.0
    %3582 = vmatpush1.msra.mxu0 0.0
    %3583 = vmatprep.subr.mxu0 0.0
    %3584 = vmatpush1.msra.mxu0 0.0
    %3585 = vmatprep.subr.mxu0 0.0
    %3586 = vmatpush1.msra.mxu0 0.0
    %3587 = vmatprep.subr.mxu0 0.0
    %3588 = vmatpush1.msra.mxu0 0.0
    %3589 = vmatprep.subr.mxu0 0.0
    %3590 = vmatpush1.msra.mxu0 0.0
    %3591 = vmatprep.subr.mxu0 0.0
    %3592 = vmatpush1.msra.mxu0 %v101
    %3593 = vmatprep.subr.mxu0 0.0
    %3594 = vmatpush1.msra.mxu0 %v100
    %3595 = vmatprep.subr.mxu0 0.0
    %3596 = vmatpush1.msra.mxu0 %v99
    %3597 = vmatprep.subr.mxu0 0.0
    %3598 = vmatpush1.msra.mxu0 %v98
    %3599 = vmatprep.subr.mxu0 0.0
    %3600 = vmatpush1.msra.mxu0 %v97
    %3601 = vmatprep.subr.mxu0 0.0
    %3602 = vmatpush1.msra.mxu0 %v96
    %3603 = vmatprep.subr.mxu0 0.0
    %3604 = vmatpush1.msra.mxu0 %v95
    %3605 = vmatprep.subr.mxu0 0.0
    %3606 = vmatpush1.msra.mxu0 %v94
    %3607 = vmatprep.subr.mxu0 0.0
    %3608 = vmatpush2.msra.mxu0 0.0
    %3609 = vmatprep.subr.mxu0 0.0
    %3610 = vmatpush2.msra.mxu0 0.0
    %3611 = vmatprep.subr.mxu0 0.0
    %3612 = vmatpush2.msra.mxu0 0.0
    %3613 = vmatprep.subr.mxu0 0.0
    %3614 = vmatpush2.msra.mxu0 0.0
    %3615 = vmatprep.subr.mxu0 0.0
    %3616 = vmatpush2.msra.mxu0 0.0
    %3617 = vmatprep.subr.mxu0 0.0
    %3618 = vmatpush2.msra.mxu0 0.0
    %3619 = vmatprep.subr.mxu0 0.0
    %3620 = vmatpush2.msra.mxu0 0.0
    %3621 = vmatprep.subr.mxu0 0.0
    %3622 = vmatpush2.msra.mxu0 0.0
    %3623 = vmatprep.subr.mxu0 0.0
    %3624 = vmatpush2.msra.mxu0 0.0
    %3625 = vmatprep.subr.mxu0 0.0
    %3626 = vmatpush2.msra.mxu0 0.0
    %3627 = vmatprep.subr.mxu0 0.0
    %3628 = vmatpush2.msra.mxu0 0.0
    %3629 = vmatprep.subr.mxu0 0.0
    %3630 = vmatpush2.msra.mxu0 0.0
    %3631 = vmatprep.subr.mxu0 0.0
    %3632 = vmatpush2.msra.mxu0 0.0
    %3633 = vmatprep.subr.mxu0 0.0
    %3634 = vmatpush2.msra.mxu0 0.0
    %3635 = vmatprep.subr.mxu0 0.0
    %3636 = vmatpush2.msra.mxu0 0.0
    %3637 = vmatprep.subr.mxu0 0.0
    %3638 = vmatpush2.msra.mxu0 0.0
    %3639 = vmatprep.mubr.f32.mxu0 0.0
    %3640 = vmatmul.mubr.f32.gmra.mxu0 %v3570
    %v3641 = vpop.f32.mrf.mxu0
    %v3642 = vadd.f32 %v104, %v3641
    %v3643 = vpop.f32.mrf.mxu0
    %3644 = vmatprep.mubr.f32.mxu0 0.0
    %3645 = vmatmul.mubr.f32.gmra.mxu0 %v3573
    %v3646 = vpop.f32.mrf.mxu0
    %v3647 = vadd.f32 %v105, %v3646
    %v3648 = vpop.f32.mrf.mxu0
    %3649 = vdwg.mxu0
    %v3650 = vrcp.pop %v3642
    %v3651 = vmul.f32 %v3566, %v3650
    %v3652 = vrcp.pop %v3647
    %v3653 = vmul.f32 %v3568, %v3652
    %v3655 = vsel %vm777, %v3651, 0
    %v3658 = vsel %vm777, %v3653, 0
    %3660 = vmatprep.subr.mxu0 0.0
    %3661 = vmatpush1.msra.mxu0 0.0
    %3662 = vmatprep.subr.mxu0 0.0
    %3663 = vmatpush1.msra.mxu0 0.0
    %3664 = vmatprep.subr.mxu0 0.0
    %3665 = vmatpush1.msra.mxu0 0.0
    %3666 = vmatprep.subr.mxu0 0.0
    %3667 = vmatpush1.msra.mxu0 0.0
    %3668 = vmatprep.subr.mxu0 0.0
    %3669 = vmatpush1.msra.mxu0 0.0
    %3670 = vmatprep.subr.mxu0 0.0
    %3671 = vmatpush1.msra.mxu0 0.0
    %3672 = vmatprep.subr.mxu0 0.0
    %3673 = vmatpush1.msra.mxu0 0.0
    %3674 = vmatprep.subr.mxu0 0.0
    %3675 = vmatpush1.msra.mxu0 0.0
    %3676 = vmatprep.subr.mxu0 0.0
    %3677 = vmatpush1.msra.mxu0 %v3451
    %3678 = vmatprep.subr.mxu0 0.0
    %3679 = vmatpush1.msra.mxu0 %v3450
    %3680 = vmatprep.subr.mxu0 0.0
    %3681 = vmatpush1.msra.mxu0 %v3449
    %3682 = vmatprep.subr.mxu0 0.0
    %3683 = vmatpush1.msra.mxu0 %v3448
    %3684 = vmatprep.subr.mxu0 0.0
    %3685 = vmatpush1.msra.mxu0 %v3447
    %3686 = vmatprep.subr.mxu0 0.0
    %3687 = vmatpush1.msra.mxu0 %v3446
    %3688 = vmatprep.subr.mxu0 0.0
    %3689 = vmatpush1.msra.mxu0 %v3445
    %3690 = vmatprep.subr.mxu0 0.0
    %3691 = vmatpush1.msra.mxu0 %v3444
    %3692 = vmatprep.subr.mxu0 0.0
    %3693 = vmatpush2.msra.mxu0 0.0
    %3694 = vmatprep.subr.mxu0 0.0
    %3695 = vmatpush2.msra.mxu0 0.0
    %3696 = vmatprep.subr.mxu0 0.0
    %3697 = vmatpush2.msra.mxu0 0.0
    %3698 = vmatprep.subr.mxu0 0.0
    %3699 = vmatpush2.msra.mxu0 0.0
    %3700 = vmatprep.subr.mxu0 0.0
    %3701 = vmatpush2.msra.mxu0 0.0
    %3702 = vmatprep.subr.mxu0 0.0
    %3703 = vmatpush2.msra.mxu0 0.0
    %3704 = vmatprep.subr.mxu0 0.0
    %3705 = vmatpush2.msra.mxu0 0.0
    %3706 = vmatprep.subr.mxu0 0.0
    %3707 = vmatpush2.msra.mxu0 0.0
    %3708 = vmatprep.subr.mxu0 0.0
    %3709 = vmatpush2.msra.mxu0 0.0
    %3710 = vmatprep.subr.mxu0 0.0
    %3711 = vmatpush2.msra.mxu0 0.0
    %3712 = vmatprep.subr.mxu0 0.0
    %3713 = vmatpush2.msra.mxu0 0.0
    %3714 = vmatprep.subr.mxu0 0.0
    %3715 = vmatpush2.msra.mxu0 0.0
    %3716 = vmatprep.subr.mxu0 0.0
    %3717 = vmatpush2.msra.mxu0 0.0
    %3718 = vmatprep.subr.mxu0 0.0
    %3719 = vmatpush2.msra.mxu0 0.0
    %3720 = vmatprep.subr.mxu0 0.0
    %3721 = vmatpush2.msra.mxu0 0.0
    %3722 = vmatprep.subr.mxu0 0.0
    %3723 = vmatpush2.msra.mxu0 0.0
    %3724 = vmatprep.mubr.f32.mxu0 0.0
    %3725 = vmatmul.mubr.f32.gmra.mxu0 %v3655
    %v3726 = vpop.f32.mrf.mxu0
    %v3727 = vadd.f32 0.0, %v3726
    %v3728 = vpop.f32.mrf.mxu0
    %3729 = vmatprep.mubr.f32.mxu0 0.0
    %3730 = vmatmul.mubr.f32.gmra.mxu0 %v3658
    %v3731 = vpop.f32.mrf.mxu0
    %v3732 = vadd.f32 0.0, %v3731
    %v3733 = vpop.f32.mrf.mxu0
    %3734 = vdwg.mxu0
    %v3735 = vld [vmem:[%s18] sm:$0xff]
    %v3736 = vld [vmem:[%s18 + $0x8] sm:$0xff]
    %v3737 = vld [vmem:[%s18 + $0x10] sm:$0xff]
    %v3738 = vld [vmem:[%s18 + $0x18] sm:$0xff]
    %v3739 = vlaneseq
    %v3740 = vshrl.u32 %v3739, 7
    %v3741 = vsub.s32 6, %v3740
    %v3742 = vrot.slane %v2295, %v3741
    %v3744 = vsel %vm327, %v3727, 0
    %v3747 = vsel %vm327, %v3732, 0
    %3749 = vmatprep.subr.mxu0 0.0
    %3750 = vmatpush1.msra.mxu0 0.0
    %3751 = vmatprep.subr.mxu0 0.0
    %3752 = vmatpush1.msra.mxu0 0.0
    %3753 = vmatprep.subr.mxu0 0.0
    %3754 = vmatpush1.msra.mxu0 0.0
    %3755 = vmatprep.subr.mxu0 0.0
    %3756 = vmatpush1.msra.mxu0 0.0
    %3757 = vmatprep.subr.mxu0 0.0
    %3758 = vmatpush1.msra.mxu0 0.0
    %3759 = vmatprep.subr.mxu0 0.0
    %3760 = vmatpush1.msra.mxu0 0.0
    %3761 = vmatprep.subr.mxu0 0.0
    %3762 = vmatpush1.msra.mxu0 0.0
    %3763 = vmatprep.subr.mxu0 0.0
    %3764 = vmatpush1.msra.mxu0 0.0
    %3765 = vmatprep.subr.mxu0 0.0
    %3766 = vmatpush1.msra.mxu0 0.0
    %3767 = vmatprep.subr.mxu0 0.0
    %3768 = vmatpush1.msra.mxu0 0.0
    %3769 = vmatprep.subr.mxu0 0.0
    %3770 = vmatpush1.msra.mxu0 0.0
    %3771 = vmatprep.subr.mxu0 0.0
    %3772 = vmatpush1.msra.mxu0 0.0
    %3773 = vmatprep.subr.mxu0 0.0
    %3774 = vmatpush1.msra.mxu0 %v3738
    %3775 = vmatprep.subr.mxu0 0.0
    %3776 = vmatpush1.msra.mxu0 %v3737
    %3777 = vmatprep.subr.mxu0 0.0
    %3778 = vmatpush1.msra.mxu0 %v3736
    %3779 = vmatprep.subr.mxu0 0.0
    %3780 = vmatpush1.msra.mxu0 %v3735
    %3781 = vmatprep.subr.mxu0 0.0
    %3782 = vmatpush2.msra.mxu0 0.0
    %3783 = vmatprep.subr.mxu0 0.0
    %3784 = vmatpush2.msra.mxu0 0.0
    %3785 = vmatprep.subr.mxu0 0.0
    %3786 = vmatpush2.msra.mxu0 0.0
    %3787 = vmatprep.subr.mxu0 0.0
    %3788 = vmatpush2.msra.mxu0 0.0
    %3789 = vmatprep.subr.mxu0 0.0
    %3790 = vmatpush2.msra.mxu0 0.0
    %3791 = vmatprep.subr.mxu0 0.0
    %3792 = vmatpush2.msra.mxu0 0.0
    %3793 = vmatprep.subr.mxu0 0.0
    %3794 = vmatpush2.msra.mxu0 0.0
    %3795 = vmatprep.subr.mxu0 0.0
    %3796 = vmatpush2.msra.mxu0 0.0
    %3797 = vmatprep.subr.mxu0 0.0
    %3798 = vmatpush2.msra.mxu0 0.0
    %3799 = vmatprep.subr.mxu0 0.0
    %3800 = vmatpush2.msra.mxu0 0.0
    %3801 = vmatprep.subr.mxu0 0.0
    %3802 = vmatpush2.msra.mxu0 0.0
    %3803 = vmatprep.subr.mxu0 0.0
    %3804 = vmatpush2.msra.mxu0 0.0
    %3805 = vmatprep.subr.mxu0 0.0
    %3806 = vmatpush2.msra.mxu0 0.0
    %3807 = vmatprep.subr.mxu0 0.0
    %3808 = vmatpush2.msra.mxu0 0.0
    %3809 = vmatprep.subr.mxu0 0.0
    %3810 = vmatpush2.msra.mxu0 0.0
    %3811 = vmatprep.subr.mxu0 0.0
    %3812 = vmatpush2.msra.mxu0 0.0
    %3813 = vmatprep.mubr.f32.mxu0 0.0
    %3814 = vmatmul.mubr.f32.gmra.mxu0 %v3744
    %v3815 = vpop.f32.mrf.mxu0
    %v3816 = vadd.f32 %v3742, %v3815
    %v3817 = vpop.f32.mrf.mxu0
    %3818 = vmatprep.mubr.f32.mxu0 0.0
    %3819 = vmatmul.mubr.f32.gmra.mxu0 %v3747
    %v3820 = vpop.f32.mrf.mxu0
    %v3821 = vadd.f32 %v3742, %v3820
    %v3822 = vpop.f32.mrf.mxu0
    %3823 = vdwg.mxu0
    %v3824 = vadd.f32 %v3038, %v3816
    %v3825 = vadd.f32 %v3039, %v3821
    %v3826 = vsel %vm327, %v3824, 0.0
    %3827 = vadd.xlane.f32.xlu0 %v3826
    %v3828 = vpop.xlane.xlu0 %3827
    %v3829 = vsel %vm327, %v3825, 0.0
    %3830 = vadd.xlane.f32.xlu0 %v3829
    %v3831 = vpop.xlane.xlu0 %3830
    %v3832 = vmul.f32 %v3828, %v1053
    %v3833 = vmul.f32 %v3831, %v1053
    %v3834 = vmul.f32 %v3824, %v3824
    %v3835 = vmul.f32 %v3825, %v3825
    %v3836 = vsel %vm327, %v3834, 0.0
    %3837 = vadd.xlane.f32.xlu0 %v3836
    %v3838 = vpop.xlane.xlu0 %3837
    %v3839 = vsel %vm327, %v3835, 0.0
    %3840 = vadd.xlane.f32.xlu0 %v3839
    %v3841 = vpop.xlane.xlu0 %3840
    %v3842 = vmul.f32 %v3838, %v1053
    %v3843 = vmul.f32 %v3841, %v1053
    %v3844 = vsub.f32 %v3824, %v3832
    %v3845 = vsub.f32 %v3825, %v3833
    %v3846 = vmul.f32 %v3832, %v3832
    %v3847 = vmul.f32 %v3833, %v3833
    %v3848 = vsub.f32 %v3842, %v3846
    %v3849 = vsub.f32 %v3843, %v3847
    %v3850 = vadd.f32 %v3848, 1e-05
    %v3851 = vadd.f32 %v3849, 1e-05
    %v3852 = vrsqrt.pop %v3850
    %v3853 = vrsqrt.pop %v3851
    %v3854 = vmul.f32 %v3844, %v3852
    %v3855 = vmul.f32 %v3845, %v3853
    %v3856 = vlaneseq
    %v3857 = vshrl.u32 %v3856, 7
    %v3858 = vsub.s32 7, %v3857
    %v3859 = vrot.slane %v2295, %v3858
    %v3860 = vmul.f32 %v3854, %v3859
    %v3861 = vmul.f32 %v3855, %v3859
    %v3862 = vlaneseq
    %v3863 = vshrl.u32 %v3862, 7
    %v3864 = vsub.s32 0, %v3863
    %v3865 = vrot.slane %v2296, %v3864
    %v3866 = vadd.f32 %v3860, %v3865
    %v3867 = vadd.f32 %v3861, %v3865
    %v3868 = vld [vmem:[%s19] sm:$0xff]
    %v3869 = vld [vmem:[%s19 + $0x8] sm:$0xff]
    %v3870 = vld [vmem:[%s19 + $0x10] sm:$0xff]
    %v3871 = vld [vmem:[%s19 + $0x18] sm:$0xff]
    %v3872 = vlaneseq
    %v3873 = vshrl.u32 %v3872, 7
    %v3874 = vsub.s32 1, %v3873
    %v3875 = vrot.slane %v2296, %v3874
    %v3877 = vsel %vm327, %v3866, 0
    %v3880 = vsel %vm327, %v3867, 0
    %3882 = vmatprep.subr.mxu0 0.0
    %3883 = vmatpush1.msra.mxu0 0.0
    %3884 = vmatprep.subr.mxu0 0.0
    %3885 = vmatpush1.msra.mxu0 0.0
    %3886 = vmatprep.subr.mxu0 0.0
    %3887 = vmatpush1.msra.mxu0 0.0
    %3888 = vmatprep.subr.mxu0 0.0
    %3889 = vmatpush1.msra.mxu0 0.0
    %3890 = vmatprep.subr.mxu0 0.0
    %3891 = vmatpush1.msra.mxu0 0.0
    %3892 = vmatprep.subr.mxu0 0.0
    %3893 = vmatpush1.msra.mxu0 0.0
    %3894 = vmatprep.subr.mxu0 0.0
    %3895 = vmatpush1.msra.mxu0 0.0
    %3896 = vmatprep.subr.mxu0 0.0
    %3897 = vmatpush1.msra.mxu0 0.0
    %3898 = vmatprep.subr.mxu0 0.0
    %3899 = vmatpush1.msra.mxu0 0.0
    %3900 = vmatprep.subr.mxu0 0.0
    %3901 = vmatpush1.msra.mxu0 0.0
    %3902 = vmatprep.subr.mxu0 0.0
    %3903 = vmatpush1.msra.mxu0 0.0
    %3904 = vmatprep.subr.mxu0 0.0
    %3905 = vmatpush1.msra.mxu0 0.0
    %3906 = vmatprep.subr.mxu0 0.0
    %3907 = vmatpush1.msra.mxu0 %v3871
    %3908 = vmatprep.subr.mxu0 0.0
    %3909 = vmatpush1.msra.mxu0 %v3870
    %3910 = vmatprep.subr.mxu0 0.0
    %3911 = vmatpush1.msra.mxu0 %v3869
    %3912 = vmatprep.subr.mxu0 0.0
    %3913 = vmatpush1.msra.mxu0 %v3868
    %3914 = vmatprep.subr.mxu0 0.0
    %3915 = vmatpush2.msra.mxu0 0.0
    %3916 = vmatprep.subr.mxu0 0.0
    %3917 = vmatpush2.msra.mxu0 0.0
    %3918 = vmatprep.subr.mxu0 0.0
    %3919 = vmatpush2.msra.mxu0 0.0
    %3920 = vmatprep.subr.mxu0 0.0
    %3921 = vmatpush2.msra.mxu0 0.0
    %3922 = vmatprep.subr.mxu0 0.0
    %3923 = vmatpush2.msra.mxu0 0.0
    %3924 = vmatprep.subr.mxu0 0.0
    %3925 = vmatpush2.msra.mxu0 0.0
    %3926 = vmatprep.subr.mxu0 0.0
    %3927 = vmatpush2.msra.mxu0 0.0
    %3928 = vmatprep.subr.mxu0 0.0
    %3929 = vmatpush2.msra.mxu0 0.0
    %3930 = vmatprep.subr.mxu0 0.0
    %3931 = vmatpush2.msra.mxu0 0.0
    %3932 = vmatprep.subr.mxu0 0.0
    %3933 = vmatpush2.msra.mxu0 0.0
    %3934 = vmatprep.subr.mxu0 0.0
    %3935 = vmatpush2.msra.mxu0 0.0
    %3936 = vmatprep.subr.mxu0 0.0
    %3937 = vmatpush2.msra.mxu0 0.0
    %3938 = vmatprep.subr.mxu0 0.0
    %3939 = vmatpush2.msra.mxu0 0.0
    %3940 = vmatprep.subr.mxu0 0.0
    %3941 = vmatpush2.msra.mxu0 0.0
    %3942 = vmatprep.subr.mxu0 0.0
    %3943 = vmatpush2.msra.mxu0 0.0
    %3944 = vmatprep.subr.mxu0 0.0
    %3945 = vmatpush2.msra.mxu0 0.0
    %3946 = vmatprep.mubr.f32.mxu0 0.0
    %3947 = vmatmul.mubr.f32.gmra.mxu0 %v3877
    %v3948 = vpop.f32.mrf.mxu0
    %v3949 = vadd.f32 %v3875, %v3948
    %v3950 = vpop.f32.mrf.mxu0
    %3951 = vmatprep.mubr.f32.mxu0 0.0
    %3952 = vmatmul.mubr.f32.gmra.mxu0 %v3880
    %v3953 = vpop.f32.mrf.mxu0
    %v3954 = vadd.f32 %v3875, %v3953
    %v3955 = vpop.f32.mrf.mxu0
    %3956 = vdwg.mxu0
    %v3957 = vmax.f32 %v3949, 0.0
    %v3958 = vmax.f32 %v3954, 0.0
    %v3959 = vld [vmem:[%s20] sm:$0xff]
    %v3960 = vld [vmem:[%s20 + $0x8] sm:$0xff]
    %v3961 = vld [vmem:[%s20 + $0x10] sm:$0xff]
    %v3962 = vld [vmem:[%s20 + $0x18] sm:$0xff]
    %v3963 = vld [vmem:[%s20 + $0x20] sm:$0xff]
    %v3964 = vld [vmem:[%s20 + $0x28] sm:$0xff]
    %v3965 = vld [vmem:[%s20 + $0x30] sm:$0xff]
    %v3966 = vld [vmem:[%s20 + $0x38] sm:$0xff]
    %v3967 = vlaneseq
    %v3968 = vshrl.u32 %v3967, 7
    %v3969 = vsub.s32 2, %v3968
    %v3970 = vrot.slane %v2296, %v3969
    %v3972 = vsel %vm777, %v3957, 0
    %v3975 = vsel %vm777, %v3958, 0
    %3977 = vmatprep.subr.mxu0 0.0
    %3978 = vmatpush1.msra.mxu0 0.0
    %3979 = vmatprep.subr.mxu0 0.0
    %3980 = vmatpush1.msra.mxu0 0.0
    %3981 = vmatprep.subr.mxu0 0.0
    %3982 = vmatpush1.msra.mxu0 0.0
    %3983 = vmatprep.subr.mxu0 0.0
    %3984 = vmatpush1.msra.mxu0 0.0
    %3985 = vmatprep.subr.mxu0 0.0
    %3986 = vmatpush1.msra.mxu0 0.0
    %3987 = vmatprep.subr.mxu0 0.0
    %3988 = vmatpush1.msra.mxu0 0.0
    %3989 = vmatprep.subr.mxu0 0.0
    %3990 = vmatpush1.msra.mxu0 0.0
    %3991 = vmatprep.subr.mxu0 0.0
    %3992 = vmatpush1.msra.mxu0 0.0
    %3993 = vmatprep.subr.mxu0 0.0
    %3994 = vmatpush1.msra.mxu0 %v3966
    %3995 = vmatprep.subr.mxu0 0.0
    %3996 = vmatpush1.msra.mxu0 %v3965
    %3997 = vmatprep.subr.mxu0 0.0
    %3998 = vmatpush1.msra.mxu0 %v3964
    %3999 = vmatprep.subr.mxu0 0.0
    %4000 = vmatpush1.msra.mxu0 %v3963
    %4001 = vmatprep.subr.mxu0 0.0
    %4002 = vmatpush1.msra.mxu0 %v3962
    %4003 = vmatprep.subr.mxu0 0.0
    %4004 = vmatpush1.msra.mxu0 %v3961
    %4005 = vmatprep.subr.mxu0 0.0
    %4006 = vmatpush1.msra.mxu0 %v3960
    %4007 = vmatprep.subr.mxu0 0.0
    %4008 = vmatpush1.msra.mxu0 %v3959
    %4009 = vmatprep.subr.mxu0 0.0
    %4010 = vmatpush2.msra.mxu0 0.0
    %4011 = vmatprep.subr.mxu0 0.0
    %4012 = vmatpush2.msra.mxu0 0.0
    %4013 = vmatprep.subr.mxu0 0.0
    %4014 = vmatpush2.msra.mxu0 0.0
    %4015 = vmatprep.subr.mxu0 0.0
    %4016 = vmatpush2.msra.mxu0 0.0
    %4017 = vmatprep.subr.mxu0 0.0
    %4018 = vmatpush2.msra.mxu0 0.0
    %4019 = vmatprep.subr.mxu0 0.0
    %4020 = vmatpush2.msra.mxu0 0.0
    %4021 = vmatprep.subr.mxu0 0.0
    %4022 = vmatpush2.msra.mxu0 0.0
    %4023 = vmatprep.subr.mxu0 0.0
    %4024 = vmatpush2.msra.mxu0 0.0
    %4025 = vmatprep.subr.mxu0 0.0
    %4026 = vmatpush2.msra.mxu0 0.0
    %4027 = vmatprep.subr.mxu0 0.0
    %4028 = vmatpush2.msra.mxu0 0.0
    %4029 = vmatprep.subr.mxu0 0.0
    %4030 = vmatpush2.msra.mxu0 0.0
    %4031 = vmatprep.subr.mxu0 0.0
    %4032 = vmatpush2.msra.mxu0 0.0
    %4033 = vmatprep.subr.mxu0 0.0
    %4034 = vmatpush2.msra.mxu0 0.0
    %4035 = vmatprep.subr.mxu0 0.0
    %4036 = vmatpush2.msra.mxu0 0.0
    %4037 = vmatprep.subr.mxu0 0.0
    %4038 = vmatpush2.msra.mxu0 0.0
    %4039 = vmatprep.subr.mxu0 0.0
    %4040 = vmatpush2.msra.mxu0 0.0
    %4041 = vmatprep.mubr.f32.mxu0 0.0
    %4042 = vmatmul.mubr.f32.gmra.mxu0 %v3972
    %v4043 = vpop.f32.mrf.mxu0
    %v4044 = vadd.f32 %v3970, %v4043
    %v4045 = vpop.f32.mrf.mxu0
    %4046 = vmatprep.mubr.f32.mxu0 0.0
    %4047 = vmatmul.mubr.f32.gmra.mxu0 %v3975
    %v4048 = vpop.f32.mrf.mxu0
    %v4049 = vadd.f32 %v3970, %v4048
    %v4050 = vpop.f32.mrf.mxu0
    %4051 = vdwg.mxu0
    %v4052 = vadd.f32 %v3866, %v4044
    %v4053 = vadd.f32 %v3867, %v4049
    %v4054 = vsel %vm327, %v4052, 0.0
    %4055 = vadd.xlane.f32.xlu0 %v4054
    %v4056 = vpop.xlane.xlu0 %4055
    %v4057 = vsel %vm327, %v4053, 0.0
    %4058 = vadd.xlane.f32.xlu0 %v4057
    %v4059 = vpop.xlane.xlu0 %4058
    %v4060 = vmul.f32 %v4056, %v1053
    %v4061 = vmul.f32 %v4059, %v1053
    %v4062 = vmul.f32 %v4052, %v4052
    %v4063 = vmul.f32 %v4053, %v4053
    %v4064 = vsel %vm327, %v4062, 0.0
    %4065 = vadd.xlane.f32.xlu0 %v4064
    %v4066 = vpop.xlane.xlu0 %4065
    %v4067 = vsel %vm327, %v4063, 0.0
    %4068 = vadd.xlane.f32.xlu0 %v4067
    %v4069 = vpop.xlane.xlu0 %4068
    %v4070 = vmul.f32 %v4066, %v1053
    %v4071 = vmul.f32 %v4069, %v1053
    %v4072 = vsub.f32 %v4052, %v4060
    %v4073 = vsub.f32 %v4053, %v4061
    %v4074 = vmul.f32 %v4060, %v4060
    %v4075 = vmul.f32 %v4061, %v4061
    %v4076 = vsub.f32 %v4070, %v4074
    %v4077 = vsub.f32 %v4071, %v4075
    %v4078 = vadd.f32 %v4076, 1e-05
    %v4079 = vadd.f32 %v4077, 1e-05
    %v4080 = vrsqrt.pop %v4078
    %v4081 = vrsqrt.pop %v4079
    %v4082 = vmul.f32 %v4072, %v4080
    %v4083 = vmul.f32 %v4073, %v4081
    %v4084 = vlaneseq
    %v4085 = vshrl.u32 %v4084, 7
    %v4086 = vsub.s32 3, %v4085
    %v4087 = vrot.slane %v2296, %v4086
    %v4088 = vmul.f32 %v4082, %v4087
    %v4089 = vmul.f32 %v4083, %v4087
    %v4090 = vlaneseq
    %v4091 = vshrl.u32 %v4090, 7
    %v4092 = vsub.s32 4, %v4091
    %v4093 = vrot.slane %v2296, %v4092
    %v4094 = vadd.f32 %v4088, %v4093
    %v4095 = vadd.f32 %v4089, %v4093
    %s4096 = scalar_lea.vmem %s21, 16
    %v4097 = vld [vmem:[%s4096] sm:$0xff]
    %v4098 = vld [vmem:[%s4096 + $0x8] sm:$0x1f]
    %s4099 = scalar_lea.vmem %s14, 32
    %v4100 = vld [vmem:[%s4099] sm:$0xff]
    %v4101 = vld [vmem:[%s4099 + $0x8] sm:$0xff]
    %v4102 = vld [vmem:[%s4099 + $0x10] sm:$0xff]
    %v4103 = vld [vmem:[%s4099 + $0x18] sm:$0xff]
    %v4104 = vlaneseq
    %v4105 = vshrl.u32 %v4104, 7
    %v4106 = vsub.s32 0, %v4105
    %v4107 = vrot.slane %v4097, %v4106
    %v4109 = vsel %vm327, %v4094, 0
    %v4112 = vsel %vm327, %v4095, 0
    %4114 = vmatprep.subr.mxu0 0.0
    %4115 = vmatpush1.msra.mxu0 0.0
    %4116 = vmatprep.subr.mxu0 0.0
    %4117 = vmatpush1.msra.mxu0 0.0
    %4118 = vmatprep.subr.mxu0 0.0
    %4119 = vmatpush1.msra.mxu0 0.0
    %4120 = vmatprep.subr.mxu0 0.0
    %4121 = vmatpush1.msra.mxu0 0.0
    %4122 = vmatprep.subr.mxu0 0.0
    %4123 = vmatpush1.msra.mxu0 0.0
    %4124 = vmatprep.subr.mxu0 0.0
    %4125 = vmatpush1.msra.mxu0 0.0
    %4126 = vmatprep.subr.mxu0 0.0
    %4127 = vmatpush1.msra.mxu0 0.0
    %4128 = vmatprep.subr.mxu0 0.0
    %4129 = vmatpush1.msra.mxu0 0.0
    %4130 = vmatprep.subr.mxu0 0.0
    %4131 = vmatpush1.msra.mxu0 0.0
    %4132 = vmatprep.subr.mxu0 0.0
    %4133 = vmatpush1.msra.mxu0 0.0
    %4134 = vmatprep.subr.mxu0 0.0
    %4135 = vmatpush1.msra.mxu0 0.0
    %4136 = vmatprep.subr.mxu0 0.0
    %4137 = vmatpush1.msra.mxu0 0.0
    %4138 = vmatprep.subr.mxu0 0.0
    %4139 = vmatpush1.msra.mxu0 %v4103
    %4140 = vmatprep.subr.mxu0 0.0
    %4141 = vmatpush1.msra.mxu0 %v4102
    %4142 = vmatprep.subr.mxu0 0.0
    %4143 = vmatpush1.msra.mxu0 %v4101
    %4144 = vmatprep.subr.mxu0 0.0
    %4145 = vmatpush1.msra.mxu0 %v4100
    %4146 = vmatprep.subr.mxu0 0.0
    %4147 = vmatpush2.msra.mxu0 0.0
    %4148 = vmatprep.subr.mxu0 0.0
    %4149 = vmatpush2.msra.mxu0 0.0
    %4150 = vmatprep.subr.mxu0 0.0
    %4151 = vmatpush2.msra.mxu0 0.0
    %4152 = vmatprep.subr.mxu0 0.0
    %4153 = vmatpush2.msra.mxu0 0.0
    %4154 = vmatprep.subr.mxu0 0.0
    %4155 = vmatpush2.msra.mxu0 0.0
    %4156 = vmatprep.subr.mxu0 0.0
    %4157 = vmatpush2.msra.mxu0 0.0
    %4158 = vmatprep.subr.mxu0 0.0
    %4159 = vmatpush2.msra.mxu0 0.0
    %4160 = vmatprep.subr.mxu0 0.0
    %4161 = vmatpush2.msra.mxu0 0.0
    %4162 = vmatprep.subr.mxu0 0.0
    %4163 = vmatpush2.msra.mxu0 0.0
    %4164 = vmatprep.subr.mxu0 0.0
    %4165 = vmatpush2.msra.mxu0 0.0
    %4166 = vmatprep.subr.mxu0 0.0
    %4167 = vmatpush2.msra.mxu0 0.0
    %4168 = vmatprep.subr.mxu0 0.0
    %4169 = vmatpush2.msra.mxu0 0.0
    %4170 = vmatprep.subr.mxu0 0.0
    %4171 = vmatpush2.msra.mxu0 0.0
    %4172 = vmatprep.subr.mxu0 0.0
    %4173 = vmatpush2.msra.mxu0 0.0
    %4174 = vmatprep.subr.mxu0 0.0
    %4175 = vmatpush2.msra.mxu0 0.0
    %4176 = vmatprep.subr.mxu0 0.0
    %4177 = vmatpush2.msra.mxu0 0.0
    %4178 = vmatprep.mubr.f32.mxu0 0.0
    %4179 = vmatmul.mubr.f32.gmra.mxu0 %v4109
    %v4180 = vpop.f32.mrf.mxu0
    %v4181 = vadd.f32 %v4107, %v4180
    %v4182 = vpop.f32.mrf.mxu0
    %4183 = vmatprep.mubr.f32.mxu0 0.0
    %4184 = vmatmul.mubr.f32.gmra.mxu0 %v4112
    %v4185 = vpop.f32.mrf.mxu0
    %v4186 = vadd.f32 %v4107, %v4185
    %v4187 = vpop.f32.mrf.mxu0
    %4188 = vdwg.mxu0
    %4191 = vrot.lane.b32.xlu0 %v4181, 96
    %v4192 = vpop.permute.xlu0 %4191
    %4193 = vrot.lane.b32.xlu0 %v4186, 96
    %v4194 = vpop.permute.xlu0 %4193
    %4197 = vmatprep.subr.mxu0 0.0
    %4198 = vmatpush1.msra.mxu0 0.0
    %4199 = vmatprep.subr.mxu0 0.0
    %4200 = vmatpush1.msra.mxu0 0.0
    %4201 = vmatprep.subr.mxu0 0.0
    %4202 = vmatpush1.msra.mxu0 0.0
    %4203 = vmatprep.subr.mxu0 0.0
    %4204 = vmatpush1.msra.mxu0 0.0
    %4205 = vmatprep.subr.mxu0 0.0
    %4206 = vmatpush1.msra.mxu0 0.0
    %4207 = vmatprep.subr.mxu0 0.0
    %4208 = vmatpush1.msra.mxu0 0.0
    %4209 = vmatprep.subr.mxu0 0.0
    %4210 = vmatpush1.msra.mxu0 0.0
    %4211 = vmatprep.subr.mxu0 0.0
    %4212 = vmatpush1.msra.mxu0 0.0
    %4213 = vmatprep.subr.mxu0 0.0
    %4214 = vmatpush1.msra.mxu0 0.0
    %4215 = vmatprep.subr.mxu0 0.0
    %4216 = vmatpush1.msra.mxu0 0.0
    %4217 = vmatprep.subr.mxu0 0.0
    %4218 = vmatpush1.msra.mxu0 0.0
    %4219 = vmatprep.subr.mxu0 0.0
    %4220 = vmatpush1.msra.mxu0 0.0
    %4221 = vmatprep.subr.mxu0 0.0
    %4222 = vmatpush1.msra.mxu0 0.0
    %4223 = vmatprep.subr.mxu0 0.0
    %4224 = vmatpush1.msra.mxu0 0.0
    %4225 = vmatprep.subr.mxu0 0.0
    %4226 = vmatpush1.msra.mxu0 %v4194
    %4227 = vmatprep.subr.mxu0 0.0
    %4228 = vmatpush1.msra.mxu0 %v4192
    %4229 = vmatprep.subr.mxu0 0.0
    %4230 = vmatpush2.msra.mxu0 0.0
    %4231 = vmatprep.subr.mxu0 0.0
    %4232 = vmatpush2.msra.mxu0 0.0
    %4233 = vmatprep.subr.mxu0 0.0
    %4234 = vmatpush2.msra.mxu0 0.0
    %4235 = vmatprep.subr.mxu0 0.0
    %4236 = vmatpush2.msra.mxu0 0.0
    %4237 = vmatprep.subr.mxu0 0.0
    %4238 = vmatpush2.msra.mxu0 0.0
    %4239 = vmatprep.subr.mxu0 0.0
    %4240 = vmatpush2.msra.mxu0 0.0
    %4241 = vmatprep.subr.mxu0 0.0
    %4242 = vmatpush2.msra.mxu0 0.0
    %4243 = vmatprep.subr.mxu0 0.0
    %4244 = vmatpush2.msra.mxu0 0.0
    %4245 = vmatprep.subr.mxu0 0.0
    %4246 = vmatpush2.msra.mxu0 0.0
    %4247 = vmatprep.subr.mxu0 0.0
    %4248 = vmatpush2.msra.mxu0 0.0
    %4249 = vmatprep.subr.mxu0 0.0
    %4250 = vmatpush2.msra.mxu0 0.0
    %4251 = vmatprep.subr.mxu0 0.0
    %4252 = vmatpush2.msra.mxu0 0.0
    %4253 = vmatprep.subr.mxu0 0.0
    %4254 = vmatpush2.msra.mxu0 0.0
    %4255 = vmatprep.subr.mxu0 0.0
    %4256 = vmatpush2.msra.mxu0 0.0
    %4257 = vmatprep.subr.mxu0 0.0
    %4258 = vmatpush2.msra.mxu0 0.0
    %4259 = vmatprep.subr.mxu0 0.0
    %4260 = vmatpush2.msra.mxu0 0.0
    %4261 = vmatprep.mubr.f32.mxu0 0.0
    %4262 = vmatmul.mubr.f32.gmra.mxu0 %v419
    %v4263 = vpop.f32.mrf.mxu0
    %v4264 = vadd.f32 0.0, %v4263
    %v4265 = vpop.f32.mrf.mxu0
    %4266 = vmatprep.mubr.f32.mxu0 0.0
    %4267 = vmatmul.mubr.f32.gmra.mxu0 %v422
    %v4268 = vpop.f32.mrf.mxu0
    %v4269 = vadd.f32 0.0, %v4268
    %v4270 = vpop.f32.mrf.mxu0
    %4271 = vmatprep.mubr.f32.mxu0 0.0
    %4272 = vmatmul.mubr.f32.gmra.mxu0 %v425
    %v4273 = vpop.f32.mrf.mxu0
    %v4274 = vadd.f32 0.0, %v4273
    %v4275 = vpop.f32.mrf.mxu0
    %4276 = vmatprep.mubr.f32.mxu0 0.0
    %4277 = vmatmul.mubr.f32.gmra.mxu0 %v428
    %v4278 = vpop.f32.mrf.mxu0
    %v4279 = vadd.f32 0.0, %v4278
    %v4280 = vpop.f32.mrf.mxu0
    %4281 = vmatprep.mubr.f32.mxu0 0.0
    %4282 = vmatmul.mubr.f32.gmra.mxu0 %v431
    %v4283 = vpop.f32.mrf.mxu0
    %v4284 = vadd.f32 0.0, %v4283
    %v4285 = vpop.f32.mrf.mxu0
    %4286 = vmatprep.mubr.f32.mxu0 0.0
    %4287 = vmatmul.mubr.f32.gmra.mxu0 %v434
    %v4288 = vpop.f32.mrf.mxu0
    %v4289 = vadd.f32 0.0, %v4288
    %v4290 = vpop.f32.mrf.mxu0
    %4291 = vmatprep.mubr.f32.mxu0 0.0
    %4292 = vmatmul.mubr.f32.gmra.mxu0 %v437
    %v4293 = vpop.f32.mrf.mxu0
    %v4294 = vadd.f32 0.0, %v4293
    %v4295 = vpop.f32.mrf.mxu0
    %4296 = vmatprep.mubr.f32.mxu0 0.0
    %4297 = vmatmul.mubr.f32.gmra.mxu0 %v440
    %v4298 = vpop.f32.mrf.mxu0
    %v4299 = vadd.f32 0.0, %v4298
    %v4300 = vpop.f32.mrf.mxu0
    %4301 = vdwg.mxu0
    %v4302 = vmul.f32 %v4264, %v86
    %v4303 = vmul.f32 %v4269, %v87
    %v4304 = vmul.f32 %v4274, %v88
    %v4305 = vmul.f32 %v4279, %v89
    %v4306 = vmul.f32 %v4284, %v90
    %v4307 = vmul.f32 %v4289, %v91
    %v4308 = vmul.f32 %v4294, %v92
    %v4309 = vmul.f32 %v4299, %v93
    %4310 = vrot.lane.b32.xlu0 %v4181, 64
    %v4311 = vpop.permute.xlu0 %4310
    %4312 = vrot.lane.b32.xlu0 %v4186, 64
    %v4313 = vpop.permute.xlu0 %4312
    %4316 = vmatprep.subr.mxu0 0.0
    %4317 = vmatpush1.msra.mxu0 0.0
    %4318 = vmatprep.subr.mxu0 0.0
    %4319 = vmatpush1.msra.mxu0 0.0
    %4320 = vmatprep.subr.mxu0 0.0
    %4321 = vmatpush1.msra.mxu0 0.0
    %4322 = vmatprep.subr.mxu0 0.0
    %4323 = vmatpush1.msra.mxu0 0.0
    %4324 = vmatprep.subr.mxu0 0.0
    %4325 = vmatpush1.msra.mxu0 0.0
    %4326 = vmatprep.subr.mxu0 0.0
    %4327 = vmatpush1.msra.mxu0 0.0
    %4328 = vmatprep.subr.mxu0 0.0
    %4329 = vmatpush1.msra.mxu0 0.0
    %4330 = vmatprep.subr.mxu0 0.0
    %4331 = vmatpush1.msra.mxu0 0.0
    %4332 = vmatprep.subr.mxu0 0.0
    %4333 = vmatpush1.msra.mxu0 0.0
    %4334 = vmatprep.subr.mxu0 0.0
    %4335 = vmatpush1.msra.mxu0 0.0
    %4336 = vmatprep.subr.mxu0 0.0
    %4337 = vmatpush1.msra.mxu0 0.0
    %4338 = vmatprep.subr.mxu0 0.0
    %4339 = vmatpush1.msra.mxu0 0.0
    %4340 = vmatprep.subr.mxu0 0.0
    %4341 = vmatpush1.msra.mxu0 0.0
    %4342 = vmatprep.subr.mxu0 0.0
    %4343 = vmatpush1.msra.mxu0 0.0
    %4344 = vmatprep.subr.mxu0 0.0
    %4345 = vmatpush1.msra.mxu0 %v4313
    %4346 = vmatprep.subr.mxu0 0.0
    %4347 = vmatpush1.msra.mxu0 %v4311
    %4348 = vmatprep.subr.mxu0 0.0
    %4349 = vmatpush2.msra.mxu0 0.0
    %4350 = vmatprep.subr.mxu0 0.0
    %4351 = vmatpush2.msra.mxu0 0.0
    %4352 = vmatprep.subr.mxu0 0.0
    %4353 = vmatpush2.msra.mxu0 0.0
    %4354 = vmatprep.subr.mxu0 0.0
    %4355 = vmatpush2.msra.mxu0 0.0
    %4356 = vmatprep.subr.mxu0 0.0
    %4357 = vmatpush2.msra.mxu0 0.0
    %4358 = vmatprep.subr.mxu0 0.0
    %4359 = vmatpush2.msra.mxu0 0.0
    %4360 = vmatprep.subr.mxu0 0.0
    %4361 = vmatpush2.msra.mxu0 0.0
    %4362 = vmatprep.subr.mxu0 0.0
    %4363 = vmatpush2.msra.mxu0 0.0
    %4364 = vmatprep.subr.mxu0 0.0
    %4365 = vmatpush2.msra.mxu0 0.0
    %4366 = vmatprep.subr.mxu0 0.0
    %4367 = vmatpush2.msra.mxu0 0.0
    %4368 = vmatprep.subr.mxu0 0.0
    %4369 = vmatpush2.msra.mxu0 0.0
    %4370 = vmatprep.subr.mxu0 0.0
    %4371 = vmatpush2.msra.mxu0 0.0
    %4372 = vmatprep.subr.mxu0 0.0
    %4373 = vmatpush2.msra.mxu0 0.0
    %4374 = vmatprep.subr.mxu0 0.0
    %4375 = vmatpush2.msra.mxu0 0.0
    %4376 = vmatprep.subr.mxu0 0.0
    %4377 = vmatpush2.msra.mxu0 0.0
    %4378 = vmatprep.subr.mxu0 0.0
    %4379 = vmatpush2.msra.mxu0 0.0
    %4380 = vmatprep.mubr.f32.mxu0 0.0
    %4381 = vmatmul.mubr.f32.gmra.mxu0 %v419
    %v4382 = vpop.f32.mrf.mxu0
    %v4383 = vadd.f32 0.0, %v4382
    %v4384 = vpop.f32.mrf.mxu0
    %4385 = vmatprep.mubr.f32.mxu0 0.0
    %4386 = vmatmul.mubr.f32.gmra.mxu0 %v422
    %v4387 = vpop.f32.mrf.mxu0
    %v4388 = vadd.f32 0.0, %v4387
    %v4389 = vpop.f32.mrf.mxu0
    %4390 = vmatprep.mubr.f32.mxu0 0.0
    %4391 = vmatmul.mubr.f32.gmra.mxu0 %v425
    %v4392 = vpop.f32.mrf.mxu0
    %v4393 = vadd.f32 0.0, %v4392
    %v4394 = vpop.f32.mrf.mxu0
    %4395 = vmatprep.mubr.f32.mxu0 0.0
    %4396 = vmatmul.mubr.f32.gmra.mxu0 %v428
    %v4397 = vpop.f32.mrf.mxu0
    %v4398 = vadd.f32 0.0, %v4397
    %v4399 = vpop.f32.mrf.mxu0
    %4400 = vmatprep.mubr.f32.mxu0 0.0
    %4401 = vmatmul.mubr.f32.gmra.mxu0 %v431
    %v4402 = vpop.f32.mrf.mxu0
    %v4403 = vadd.f32 0.0, %v4402
    %v4404 = vpop.f32.mrf.mxu0
    %4405 = vmatprep.mubr.f32.mxu0 0.0
    %4406 = vmatmul.mubr.f32.gmra.mxu0 %v434
    %v4407 = vpop.f32.mrf.mxu0
    %v4408 = vadd.f32 0.0, %v4407
    %v4409 = vpop.f32.mrf.mxu0
    %4410 = vmatprep.mubr.f32.mxu0 0.0
    %4411 = vmatmul.mubr.f32.gmra.mxu0 %v437
    %v4412 = vpop.f32.mrf.mxu0
    %v4413 = vadd.f32 0.0, %v4412
    %v4414 = vpop.f32.mrf.mxu0
    %4415 = vmatprep.mubr.f32.mxu0 0.0
    %4416 = vmatmul.mubr.f32.gmra.mxu0 %v440
    %v4417 = vpop.f32.mrf.mxu0
    %v4418 = vadd.f32 0.0, %v4417
    %v4419 = vpop.f32.mrf.mxu0
    %4420 = vdwg.mxu0
    %v4421 = vmul.f32 %v4383, %v86
    %v4422 = vmul.f32 %v4388, %v87
    %v4423 = vmul.f32 %v4393, %v88
    %v4424 = vmul.f32 %v4398, %v89
    %v4425 = vmul.f32 %v4403, %v90
    %v4426 = vmul.f32 %v4408, %v91
    %v4427 = vmul.f32 %v4413, %v92
    %v4428 = vmul.f32 %v4418, %v93
    %v4429 = vsel %vm327, %v4181, 0
    %v4431 = vsel %vm327, %v4186, 0
    %v4434 = vsel %vm327, %v4302, 0
    %v4437 = vsel %vm327, %v4303, 0
    %v4440 = vsel %vm327, %v4304, 0
    %v4443 = vsel %vm327, %v4305, 0
    %v4446 = vsel %vm327, %v4306, 0
    %v4449 = vsel %vm327, %v4307, 0
    %v4452 = vsel %vm327, %v4308, 0
    %v4455 = vsel %vm327, %v4309, 0
    %4457 = vmatprep.subr.mxu0 0.0
    %4458 = vmatpush1.xpose.msra.mxu0 0.0
    %4459 = vmatprep.subr.mxu0 0.0
    %4460 = vmatpush1.xpose.msra.mxu0 0.0
    %4461 = vmatprep.subr.mxu0 0.0
    %4462 = vmatpush1.xpose.msra.mxu0 0.0
    %4463 = vmatprep.subr.mxu0 0.0
    %4464 = vmatpush1.xpose.msra.mxu0 0.0
    %4465 = vmatprep.subr.mxu0 0.0
    %4466 = vmatpush1.xpose.msra.mxu0 0.0
    %4467 = vmatprep.subr.mxu0 0.0
    %4468 = vmatpush1.xpose.msra.mxu0 0.0
    %4469 = vmatprep.subr.mxu0 0.0
    %4470 = vmatpush1.xpose.msra.mxu0 0.0
    %4471 = vmatprep.subr.mxu0 0.0
    %4472 = vmatpush1.xpose.msra.mxu0 0.0
    %4473 = vmatprep.subr.mxu0 0.0
    %4474 = vmatpush1.xpose.msra.mxu0 %v4455
    %4475 = vmatprep.subr.mxu0 0.0
    %4476 = vmatpush1.xpose.msra.mxu0 %v4452
    %4477 = vmatprep.subr.mxu0 0.0
    %4478 = vmatpush1.xpose.msra.mxu0 %v4449
    %4479 = vmatprep.subr.mxu0 0.0
    %4480 = vmatpush1.xpose.msra.mxu0 %v4446
    %4481 = vmatprep.subr.mxu0 0.0
    %4482 = vmatpush1.xpose.msra.mxu0 %v4443
    %4483 = vmatprep.subr.mxu0 0.0
    %4484 = vmatpush1.xpose.msra.mxu0 %v4440
    %4485 = vmatprep.subr.mxu0 0.0
    %4486 = vmatpush1.xpose.msra.mxu0 %v4437
    %4487 = vmatprep.subr.mxu0 0.0
    %4488 = vmatpush1.xpose.msra.mxu0 %v4434
    %4489 = vmatprep.subr.mxu0 0.0
    %4490 = vmatpush2.xpose.msra.mxu0 0.0
    %4491 = vmatprep.subr.mxu0 0.0
    %4492 = vmatpush2.xpose.msra.mxu0 0.0
    %4493 = vmatprep.subr.mxu0 0.0
    %4494 = vmatpush2.xpose.msra.mxu0 0.0
    %4495 = vmatprep.subr.mxu0 0.0
    %4496 = vmatpush2.xpose.msra.mxu0 0.0
    %4497 = vmatprep.subr.mxu0 0.0
    %4498 = vmatpush2.xpose.msra.mxu0 0.0
    %4499 = vmatprep.subr.mxu0 0.0
    %4500 = vmatpush2.xpose.msra.mxu0 0.0
    %4501 = vmatprep.subr.mxu0 0.0
    %4502 = vmatpush2.xpose.msra.mxu0 0.0
    %4503 = vmatprep.subr.mxu0 0.0
    %4504 = vmatpush2.xpose.msra.mxu0 0.0
    %4505 = vmatprep.subr.mxu0 0.0
    %4506 = vmatpush2.xpose.msra.mxu0 0.0
    %4507 = vmatprep.subr.mxu0 0.0
    %4508 = vmatpush2.xpose.msra.mxu0 0.0
    %4509 = vmatprep.subr.mxu0 0.0
    %4510 = vmatpush2.xpose.msra.mxu0 0.0
    %4511 = vmatprep.subr.mxu0 0.0
    %4512 = vmatpush2.xpose.msra.mxu0 0.0
    %4513 = vmatprep.subr.mxu0 0.0
    %4514 = vmatpush2.xpose.msra.mxu0 0.0
    %4515 = vmatprep.subr.mxu0 0.0
    %4516 = vmatpush2.xpose.msra.mxu0 0.0
    %4517 = vmatprep.subr.mxu0 0.0
    %4518 = vmatpush2.xpose.msra.mxu0 0.0
    %4519 = vmatprep.subr.mxu0 0.0
    %4520 = vmatpush2.xpose.msra.mxu0 0.0
    %4521 = vmatprep.mubr.f32.mxu0 0.0
    %4522 = vmatmul.mubr.f32.gmra.mxu0 %v4429
    %v4523 = vpop.f32.mrf.mxu0
    %v4524 = vadd.f32 %v102, %v4523
    %v4525 = vpop.f32.mrf.mxu0
    %4526 = vmatprep.mubr.f32.mxu0 0.0
    %4527 = vmatmul.mubr.f32.gmra.mxu0 %v4431
    %v4528 = vpop.f32.mrf.mxu0
    %v4529 = vadd.f32 %v103, %v4528
    %v4530 = vpop.f32.mrf.mxu0
    %4531 = vdwg.mxu0
    %v4532 = vsel %vm777, %v4524, -inf
    %4533 = vmax.xlane.f32.xlu0 %v4532
    %v4534 = vpop.xlane.xlu0 %4533
    %v4535 = vsel %vm777, %v4529, -inf
    %4536 = vmax.xlane.f32.xlu0 %v4535
    %v4537 = vpop.xlane.xlu0 %4536
    %v4538 = vsub.f32 %v4524, %v4534
    %v4539 = vsub.f32 %v4529, %v4537
    %v4540 = vmul.f32 %v4538, 1.442695
    %v4541 = vpow.pop %v4540
    %v4542 = vmul.f32 %v4539, 1.442695
    %v4543 = vpow.pop %v4542
    %v4545 = vsel %vm777, %v4541, 0
    %v4548 = vsel %vm777, %v4543, 0
    %4550 = vmatprep.subr.mxu0 0.0
    %4551 = vmatpush1.msra.mxu0 0.0
    %4552 = vmatprep.subr.mxu0 0.0
    %4553 = vmatpush1.msra.mxu0 0.0
    %4554 = vmatprep.subr.mxu0 0.0
    %4555 = vmatpush1.msra.mxu0 0.0
    %4556 = vmatprep.subr.mxu0 0.0
    %4557 = vmatpush1.msra.mxu0 0.0
    %4558 = vmatprep.subr.mxu0 0.0
    %4559 = vmatpush1.msra.mxu0 0.0
    %4560 = vmatprep.subr.mxu0 0.0
    %4561 = vmatpush1.msra.mxu0 0.0
    %4562 = vmatprep.subr.mxu0 0.0
    %4563 = vmatpush1.msra.mxu0 0.0
    %4564 = vmatprep.subr.mxu0 0.0
    %4565 = vmatpush1.msra.mxu0 0.0
    %4566 = vmatprep.subr.mxu0 0.0
    %4567 = vmatpush1.msra.mxu0 %v101
    %4568 = vmatprep.subr.mxu0 0.0
    %4569 = vmatpush1.msra.mxu0 %v100
    %4570 = vmatprep.subr.mxu0 0.0
    %4571 = vmatpush1.msra.mxu0 %v99
    %4572 = vmatprep.subr.mxu0 0.0
    %4573 = vmatpush1.msra.mxu0 %v98
    %4574 = vmatprep.subr.mxu0 0.0
    %4575 = vmatpush1.msra.mxu0 %v97
    %4576 = vmatprep.subr.mxu0 0.0
    %4577 = vmatpush1.msra.mxu0 %v96
    %4578 = vmatprep.subr.mxu0 0.0
    %4579 = vmatpush1.msra.mxu0 %v95
    %4580 = vmatprep.subr.mxu0 0.0
    %4581 = vmatpush1.msra.mxu0 %v94
    %4582 = vmatprep.subr.mxu0 0.0
    %4583 = vmatpush2.msra.mxu0 0.0
    %4584 = vmatprep.subr.mxu0 0.0
    %4585 = vmatpush2.msra.mxu0 0.0
    %4586 = vmatprep.subr.mxu0 0.0
    %4587 = vmatpush2.msra.mxu0 0.0
    %4588 = vmatprep.subr.mxu0 0.0
    %4589 = vmatpush2.msra.mxu0 0.0
    %4590 = vmatprep.subr.mxu0 0.0
    %4591 = vmatpush2.msra.mxu0 0.0
    %4592 = vmatprep.subr.mxu0 0.0
    %4593 = vmatpush2.msra.mxu0 0.0
    %4594 = vmatprep.subr.mxu0 0.0
    %4595 = vmatpush2.msra.mxu0 0.0
    %4596 = vmatprep.subr.mxu0 0.0
    %4597 = vmatpush2.msra.mxu0 0.0
    %4598 = vmatprep.subr.mxu0 0.0
    %4599 = vmatpush2.msra.mxu0 0.0
    %4600 = vmatprep.subr.mxu0 0.0
    %4601 = vmatpush2.msra.mxu0 0.0
    %4602 = vmatprep.subr.mxu0 0.0
    %4603 = vmatpush2.msra.mxu0 0.0
    %4604 = vmatprep.subr.mxu0 0.0
    %4605 = vmatpush2.msra.mxu0 0.0
    %4606 = vmatprep.subr.mxu0 0.0
    %4607 = vmatpush2.msra.mxu0 0.0
    %4608 = vmatprep.subr.mxu0 0.0
    %4609 = vmatpush2.msra.mxu0 0.0
    %4610 = vmatprep.subr.mxu0 0.0
    %4611 = vmatpush2.msra.mxu0 0.0
    %4612 = vmatprep.subr.mxu0 0.0
    %4613 = vmatpush2.msra.mxu0 0.0
    %4614 = vmatprep.mubr.f32.mxu0 0.0
    %4615 = vmatmul.mubr.f32.gmra.mxu0 %v4545
    %v4616 = vpop.f32.mrf.mxu0
    %v4617 = vadd.f32 %v104, %v4616
    %v4618 = vpop.f32.mrf.mxu0
    %4619 = vmatprep.mubr.f32.mxu0 0.0
    %4620 = vmatmul.mubr.f32.gmra.mxu0 %v4548
    %v4621 = vpop.f32.mrf.mxu0
    %v4622 = vadd.f32 %v105, %v4621
    %v4623 = vpop.f32.mrf.mxu0
    %4624 = vdwg.mxu0
    %v4625 = vrcp.pop %v4617
    %v4626 = vmul.f32 %v4541, %v4625
    %v4627 = vrcp.pop %v4622
    %v4628 = vmul.f32 %v4543, %v4627
    %v4630 = vsel %vm777, %v4626, 0
    %v4633 = vsel %vm777, %v4628, 0
    %4635 = vmatprep.subr.mxu0 0.0
    %4636 = vmatpush1.msra.mxu0 0.0
    %4637 = vmatprep.subr.mxu0 0.0
    %4638 = vmatpush1.msra.mxu0 0.0
    %4639 = vmatprep.subr.mxu0 0.0
    %4640 = vmatpush1.msra.mxu0 0.0
    %4641 = vmatprep.subr.mxu0 0.0
    %4642 = vmatpush1.msra.mxu0 0.0
    %4643 = vmatprep.subr.mxu0 0.0
    %4644 = vmatpush1.msra.mxu0 0.0
    %4645 = vmatprep.subr.mxu0 0.0
    %4646 = vmatpush1.msra.mxu0 0.0
    %4647 = vmatprep.subr.mxu0 0.0
    %4648 = vmatpush1.msra.mxu0 0.0
    %4649 = vmatprep.subr.mxu0 0.0
    %4650 = vmatpush1.msra.mxu0 0.0
    %4651 = vmatprep.subr.mxu0 0.0
    %4652 = vmatpush1.msra.mxu0 %v4428
    %4653 = vmatprep.subr.mxu0 0.0
    %4654 = vmatpush1.msra.mxu0 %v4427
    %4655 = vmatprep.subr.mxu0 0.0
    %4656 = vmatpush1.msra.mxu0 %v4426
    %4657 = vmatprep.subr.mxu0 0.0
    %4658 = vmatpush1.msra.mxu0 %v4425
    %4659 = vmatprep.subr.mxu0 0.0
    %4660 = vmatpush1.msra.mxu0 %v4424
    %4661 = vmatprep.subr.mxu0 0.0
    %4662 = vmatpush1.msra.mxu0 %v4423
    %4663 = vmatprep.subr.mxu0 0.0
    %4664 = vmatpush1.msra.mxu0 %v4422
    %4665 = vmatprep.subr.mxu0 0.0
    %4666 = vmatpush1.msra.mxu0 %v4421
    %4667 = vmatprep.subr.mxu0 0.0
    %4668 = vmatpush2.msra.mxu0 0.0
    %4669 = vmatprep.subr.mxu0 0.0
    %4670 = vmatpush2.msra.mxu0 0.0
    %4671 = vmatprep.subr.mxu0 0.0
    %4672 = vmatpush2.msra.mxu0 0.0
    %4673 = vmatprep.subr.mxu0 0.0
    %4674 = vmatpush2.msra.mxu0 0.0
    %4675 = vmatprep.subr.mxu0 0.0
    %4676 = vmatpush2.msra.mxu0 0.0
    %4677 = vmatprep.subr.mxu0 0.0
    %4678 = vmatpush2.msra.mxu0 0.0
    %4679 = vmatprep.subr.mxu0 0.0
    %4680 = vmatpush2.msra.mxu0 0.0
    %4681 = vmatprep.subr.mxu0 0.0
    %4682 = vmatpush2.msra.mxu0 0.0
    %4683 = vmatprep.subr.mxu0 0.0
    %4684 = vmatpush2.msra.mxu0 0.0
    %4685 = vmatprep.subr.mxu0 0.0
    %4686 = vmatpush2.msra.mxu0 0.0
    %4687 = vmatprep.subr.mxu0 0.0
    %4688 = vmatpush2.msra.mxu0 0.0
    %4689 = vmatprep.subr.mxu0 0.0
    %4690 = vmatpush2.msra.mxu0 0.0
    %4691 = vmatprep.subr.mxu0 0.0
    %4692 = vmatpush2.msra.mxu0 0.0
    %4693 = vmatprep.subr.mxu0 0.0
    %4694 = vmatpush2.msra.mxu0 0.0
    %4695 = vmatprep.subr.mxu0 0.0
    %4696 = vmatpush2.msra.mxu0 0.0
    %4697 = vmatprep.subr.mxu0 0.0
    %4698 = vmatpush2.msra.mxu0 0.0
    %4699 = vmatprep.mubr.f32.mxu0 0.0
    %4700 = vmatmul.mubr.f32.gmra.mxu0 %v4630
    %v4701 = vpop.f32.mrf.mxu0
    %v4702 = vadd.f32 0.0, %v4701
    %v4703 = vpop.f32.mrf.mxu0
    %4704 = vmatprep.mubr.f32.mxu0 0.0
    %4705 = vmatmul.mubr.f32.gmra.mxu0 %v4633
    %v4706 = vpop.f32.mrf.mxu0
    %v4707 = vadd.f32 0.0, %v4706
    %v4708 = vpop.f32.mrf.mxu0
    %4709 = vdwg.mxu0
    %s4710 = scalar_lea.vmem %s15, 32
    %v4711 = vld [vmem:[%s4710] sm:$0xff]
    %v4712 = vld [vmem:[%s4710 + $0x8] sm:$0xff]
    %v4713 = vld [vmem:[%s4710 + $0x10] sm:$0xff]
    %v4714 = vld [vmem:[%s4710 + $0x18] sm:$0xff]
    %v4715 = vlaneseq
    %v4716 = vshrl.u32 %v4715, 7
    %v4717 = vsub.s32 1, %v4716
    %v4718 = vrot.slane %v4097, %v4717
    %v4720 = vsel %vm327, %v4702, 0
    %v4723 = vsel %vm327, %v4707, 0
    %4725 = vmatprep.subr.mxu0 0.0
    %4726 = vmatpush1.msra.mxu0 0.0
    %4727 = vmatprep.subr.mxu0 0.0
    %4728 = vmatpush1.msra.mxu0 0.0
    %4729 = vmatprep.subr.mxu0 0.0
    %4730 = vmatpush1.msra.mxu0 0.0
    %4731 = vmatprep.subr.mxu0 0.0
    %4732 = vmatpush1.msra.mxu0 0.0
    %4733 = vmatprep.subr.mxu0 0.0
    %4734 = vmatpush1.msra.mxu0 0.0
    %4735 = vmatprep.subr.mxu0 0.0
    %4736 = vmatpush1.msra.mxu0 0.0
    %4737 = vmatprep.subr.mxu0 0.0
    %4738 = vmatpush1.msra.mxu0 0.0
    %4739 = vmatprep.subr.mxu0 0.0
    %4740 = vmatpush1.msra.mxu0 0.0
    %4741 = vmatprep.subr.mxu0 0.0
    %4742 = vmatpush1.msra.mxu0 0.0
    %4743 = vmatprep.subr.mxu0 0.0
    %4744 = vmatpush1.msra.mxu0 0.0
    %4745 = vmatprep.subr.mxu0 0.0
    %4746 = vmatpush1.msra.mxu0 0.0
    %4747 = vmatprep.subr.mxu0 0.0
    %4748 = vmatpush1.msra.mxu0 0.0
    %4749 = vmatprep.subr.mxu0 0.0
    %4750 = vmatpush1.msra.mxu0 %v4714
    %4751 = vmatprep.subr.mxu0 0.0
    %4752 = vmatpush1.msra.mxu0 %v4713
    %4753 = vmatprep.subr.mxu0 0.0
    %4754 = vmatpush1.msra.mxu0 %v4712
    %4755 = vmatprep.subr.mxu0 0.0
    %4756 = vmatpush1.msra.mxu0 %v4711
    %4757 = vmatprep.subr.mxu0 0.0
    %4758 = vmatpush2.msra.mxu0 0.0
    %4759 = vmatprep.subr.mxu0 0.0
    %4760 = vmatpush2.msra.mxu0 0.0
    %4761 = vmatprep.subr.mxu0 0.0
    %4762 = vmatpush2.msra.mxu0 0.0
    %4763 = vmatprep.subr.mxu0 0.0
    %4764 = vmatpush2.msra.mxu0 0.0
    %4765 = vmatprep.subr.mxu0 0.0
    %4766 = vmatpush2.msra.mxu0 0.0
    %4767 = vmatprep.subr.mxu0 0.0
    %4768 = vmatpush2.msra.mxu0 0.0
    %4769 = vmatprep.subr.mxu0 0.0
    %4770 = vmatpush2.msra.mxu0 0.0
    %4771 = vmatprep.subr.mxu0 0.0
    %4772 = vmatpush2.msra.mxu0 0.0
    %4773 = vmatprep.subr.mxu0 0.0
    %4774 = vmatpush2.msra.mxu0 0.0
    %4775 = vmatprep.subr.mxu0 0.0
    %4776 = vmatpush2.msra.mxu0 0.0
    %4777 = vmatprep.subr.mxu0 0.0
    %4778 = vmatpush2.msra.mxu0 0.0
    %4779 = vmatprep.subr.mxu0 0.0
    %4780 = vmatpush2.msra.mxu0 0.0
    %4781 = vmatprep.subr.mxu0 0.0
    %4782 = vmatpush2.msra.mxu0 0.0
    %4783 = vmatprep.subr.mxu0 0.0
    %4784 = vmatpush2.msra.mxu0 0.0
    %4785 = vmatprep.subr.mxu0 0.0
    %4786 = vmatpush2.msra.mxu0 0.0
    %4787 = vmatprep.subr.mxu0 0.0
    %4788 = vmatpush2.msra.mxu0 0.0
    %4789 = vmatprep.mubr.f32.mxu0 0.0
    %4790 = vmatmul.mubr.f32.gmra.mxu0 %v4720
    %v4791 = vpop.f32.mrf.mxu0
    %v4792 = vadd.f32 %v4718, %v4791
    %v4793 = vpop.f32.mrf.mxu0
    %4794 = vmatprep.mubr.f32.mxu0 0.0
    %4795 = vmatmul.mubr.f32.gmra.mxu0 %v4723
    %v4796 = vpop.f32.mrf.mxu0
    %v4797 = vadd.f32 %v4718, %v4796
    %v4798 = vpop.f32.mrf.mxu0
    %4799 = vdwg.mxu0
    %v4800 = vadd.f32 %v4094, %v4792
    %v4801 = vadd.f32 %v4095, %v4797
    %v4802 = vsel %vm327, %v4800, 0.0
    %4803 = vadd.xlane.f32.xlu0 %v4802
    %v4804 = vpop.xlane.xlu0 %4803
    %v4805 = vsel %vm327, %v4801, 0.0
    %4806 = vadd.xlane.f32.xlu0 %v4805
    %v4807 = vpop.xlane.xlu0 %4806
    %v4808 = vmul.f32 %v4804, %v1053
    %v4809 = vmul.f32 %v4807, %v1053
    %v4810 = vmul.f32 %v4800, %v4800
    %v4811 = vmul.f32 %v4801, %v4801
    %v4812 = vsel %vm327, %v4810, 0.0
    %4813 = vadd.xlane.f32.xlu0 %v4812
    %v4814 = vpop.xlane.xlu0 %4813
    %v4815 = vsel %vm327, %v4811, 0.0
    %4816 = vadd.xlane.f32.xlu0 %v4815
    %v4817 = vpop.xlane.xlu0 %4816
    %v4818 = vmul.f32 %v4814, %v1053
    %v4819 = vmul.f32 %v4817, %v1053
    %v4820 = vsub.f32 %v4800, %v4808
    %v4821 = vsub.f32 %v4801, %v4809
    %v4822 = vmul.f32 %v4808, %v4808
    %v4823 = vmul.f32 %v4809, %v4809
    %v4824 = vsub.f32 %v4818, %v4822
    %v4825 = vsub.f32 %v4819, %v4823
    %v4826 = vadd.f32 %v4824, 1e-05
    %v4827 = vadd.f32 %v4825, 1e-05
    %v4828 = vrsqrt.pop %v4826
    %v4829 = vrsqrt.pop %v4827
    %v4830 = vmul.f32 %v4820, %v4828
    %v4831 = vmul.f32 %v4821, %v4829
    %v4832 = vlaneseq
    %v4833 = vshrl.u32 %v4832, 7
    %v4834 = vsub.s32 2, %v4833
    %v4835 = vrot.slane %v4097, %v4834
    %v4836 = vmul.f32 %v4830, %v4835
    %v4837 = vmul.f32 %v4831, %v4835
    %v4838 = vlaneseq
    %v4839 = vshrl.u32 %v4838, 7
    %v4840 = vsub.s32 3, %v4839
    %v4841 = vrot.slane %v4097, %v4840
    %v4842 = vadd.f32 %v4836, %v4841
    %v4843 = vadd.f32 %v4837, %v4841
    %s4844 = scalar_lea.vmem %s16, 32
    %v4845 = vld [vmem:[%s4844] sm:$0xff]
    %v4846 = vld [vmem:[%s4844 + $0x8] sm:$0xff]
    %v4847 = vld [vmem:[%s4844 + $0x10] sm:$0xff]
    %v4848 = vld [vmem:[%s4844 + $0x18] sm:$0xff]
    %v4849 = vlaneseq
    %v4850 = vshrl.u32 %v4849, 7
    %v4851 = vsub.s32 4, %v4850
    %v4852 = vrot.slane %v4097, %v4851
    %v4854 = vsel %vm327, %v4842, 0
    %v4857 = vsel %vm327, %v4843, 0
    %4859 = vmatprep.subr.mxu0 0.0
    %4860 = vmatpush1.msra.mxu0 0.0
    %4861 = vmatprep.subr.mxu0 0.0
    %4862 = vmatpush1.msra.mxu0 0.0
    %4863 = vmatprep.subr.mxu0 0.0
    %4864 = vmatpush1.msra.mxu0 0.0
    %4865 = vmatprep.subr.mxu0 0.0
    %4866 = vmatpush1.msra.mxu0 0.0
    %4867 = vmatprep.subr.mxu0 0.0
    %4868 = vmatpush1.msra.mxu0 0.0
    %4869 = vmatprep.subr.mxu0 0.0
    %4870 = vmatpush1.msra.mxu0 0.0
    %4871 = vmatprep.subr.mxu0 0.0
    %4872 = vmatpush1.msra.mxu0 0.0
    %4873 = vmatprep.subr.mxu0 0.0
    %4874 = vmatpush1.msra.mxu0 0.0
    %4875 = vmatprep.subr.mxu0 0.0
    %4876 = vmatpush1.msra.mxu0 0.0
    %4877 = vmatprep.subr.mxu0 0.0
    %4878 = vmatpush1.msra.mxu0 0.0
    %4879 = vmatprep.subr.mxu0 0.0
    %4880 = vmatpush1.msra.mxu0 0.0
    %4881 = vmatprep.subr.mxu0 0.0
    %4882 = vmatpush1.msra.mxu0 0.0
    %4883 = vmatprep.subr.mxu0 0.0
    %4884 = vmatpush1.msra.mxu0 %v4848
    %4885 = vmatprep.subr.mxu0 0.0
    %4886 = vmatpush1.msra.mxu0 %v4847
    %4887 = vmatprep.subr.mxu0 0.0
    %4888 = vmatpush1.msra.mxu0 %v4846
    %4889 = vmatprep.subr.mxu0 0.0
    %4890 = vmatpush1.msra.mxu0 %v4845
    %4891 = vmatprep.subr.mxu0 0.0
    %4892 = vmatpush2.msra.mxu0 0.0
    %4893 = vmatprep.subr.mxu0 0.0
    %4894 = vmatpush2.msra.mxu0 0.0
    %4895 = vmatprep.subr.mxu0 0.0
    %4896 = vmatpush2.msra.mxu0 0.0
    %4897 = vmatprep.subr.mxu0 0.0
    %4898 = vmatpush2.msra.mxu0 0.0
    %4899 = vmatprep.subr.mxu0 0.0
    %4900 = vmatpush2.msra.mxu0 0.0
    %4901 = vmatprep.subr.mxu0 0.0
    %4902 = vmatpush2.msra.mxu0 0.0
    %4903 = vmatprep.subr.mxu0 0.0
    %4904 = vmatpush2.msra.mxu0 0.0
    %4905 = vmatprep.subr.mxu0 0.0
    %4906 = vmatpush2.msra.mxu0 0.0
    %4907 = vmatprep.subr.mxu0 0.0
    %4908 = vmatpush2.msra.mxu0 0.0
    %4909 = vmatprep.subr.mxu0 0.0
    %4910 = vmatpush2.msra.mxu0 0.0
    %4911 = vmatprep.subr.mxu0 0.0
    %4912 = vmatpush2.msra.mxu0 0.0
    %4913 = vmatprep.subr.mxu0 0.0
    %4914 = vmatpush2.msra.mxu0 0.0
    %4915 = vmatprep.subr.mxu0 0.0
    %4916 = vmatpush2.msra.mxu0 0.0
    %4917 = vmatprep.subr.mxu0 0.0
    %4918 = vmatpush2.msra.mxu0 0.0
    %4919 = vmatprep.subr.mxu0 0.0
    %4920 = vmatpush2.msra.mxu0 0.0
    %4921 = vmatprep.subr.mxu0 0.0
    %4922 = vmatpush2.msra.mxu0 0.0
    %4923 = vmatprep.mubr.f32.mxu0 0.0
    %4924 = vmatmul.mubr.f32.gmra.mxu0 %v4854
    %v4925 = vpop.f32.mrf.mxu0
    %v4926 = vadd.f32 %v4852, %v4925
    %v4927 = vpop.f32.mrf.mxu0
    %4928 = vmatprep.mubr.f32.mxu0 0.0
    %4929 = vmatmul.mubr.f32.gmra.mxu0 %v4857
    %v4930 = vpop.f32.mrf.mxu0
    %v4931 = vadd.f32 %v4852, %v4930
    %v4932 = vpop.f32.mrf.mxu0
    %4933 = vdwg.mxu0
    %s4934 = scalar_lea.vmem %s17, 32
    %v4935 = vld [vmem:[%s4934] sm:$0xff]
    %v4936 = vld [vmem:[%s4934 + $0x8] sm:$0xff]
    %v4937 = vld [vmem:[%s4934 + $0x10] sm:$0xff]
    %v4938 = vld [vmem:[%s4934 + $0x18] sm:$0xff]
    %v4939 = vlaneseq
    %v4940 = vshrl.u32 %v4939, 7
    %v4941 = vsub.s32 5, %v4940
    %v4942 = vrot.slane %v4097, %v4941
    %4943 = vmatprep.subr.mxu0 0.0
    %4944 = vmatpush1.msra.mxu0 0.0
    %4945 = vmatprep.subr.mxu0 0.0
    %4946 = vmatpush1.msra.mxu0 0.0
    %4947 = vmatprep.subr.mxu0 0.0
    %4948 = vmatpush1.msra.mxu0 0.0
    %4949 = vmatprep.subr.mxu0 0.0
    %4950 = vmatpush1.msra.mxu0 0.0
    %4951 = vmatprep.subr.mxu0 0.0
    %4952 = vmatpush1.msra.mxu0 0.0
    %4953 = vmatprep.subr.mxu0 0.0
    %4954 = vmatpush1.msra.mxu0 0.0
    %4955 = vmatprep.subr.mxu0 0.0
    %4956 = vmatpush1.msra.mxu0 0.0
    %4957 = vmatprep.subr.mxu0 0.0
    %4958 = vmatpush1.msra.mxu0 0.0
    %4959 = vmatprep.subr.mxu0 0.0
    %4960 = vmatpush1.msra.mxu0 0.0
    %4961 = vmatprep.subr.mxu0 0.0
    %4962 = vmatpush1.msra.mxu0 0.0
    %4963 = vmatprep.subr.mxu0 0.0
    %4964 = vmatpush1.msra.mxu0 0.0
    %4965 = vmatprep.subr.mxu0 0.0
    %4966 = vmatpush1.msra.mxu0 0.0
    %4967 = vmatprep.subr.mxu0 0.0
    %4968 = vmatpush1.msra.mxu0 %v4938
    %4969 = vmatprep.subr.mxu0 0.0
    %4970 = vmatpush1.msra.mxu0 %v4937
    %4971 = vmatprep.subr.mxu0 0.0
    %4972 = vmatpush1.msra.mxu0 %v4936
    %4973 = vmatprep.subr.mxu0 0.0
    %4974 = vmatpush1.msra.mxu0 %v4935
    %4975 = vmatprep.subr.mxu0 0.0
    %4976 = vmatpush2.msra.mxu0 0.0
    %4977 = vmatprep.subr.mxu0 0.0
    %4978 = vmatpush2.msra.mxu0 0.0
    %4979 = vmatprep.subr.mxu0 0.0
    %4980 = vmatpush2.msra.mxu0 0.0
    %4981 = vmatprep.subr.mxu0 0.0
    %4982 = vmatpush2.msra.mxu0 0.0
    %4983 = vmatprep.subr.mxu0 0.0
    %4984 = vmatpush2.msra.mxu0 0.0
    %4985 = vmatprep.subr.mxu0 0.0
    %4986 = vmatpush2.msra.mxu0 0.0
    %4987 = vmatprep.subr.mxu0 0.0
    %4988 = vmatpush2.msra.mxu0 0.0
    %4989 = vmatprep.subr.mxu0 0.0
    %4990 = vmatpush2.msra.mxu0 0.0
    %4991 = vmatprep.subr.mxu0 0.0
    %4992 = vmatpush2.msra.mxu0 0.0
    %4993 = vmatprep.subr.mxu0 0.0
    %4994 = vmatpush2.msra.mxu0 0.0
    %4995 = vmatprep.subr.mxu0 0.0
    %4996 = vmatpush2.msra.mxu0 0.0
    %4997 = vmatprep.subr.mxu0 0.0
    %4998 = vmatpush2.msra.mxu0 0.0
    %4999 = vmatprep.subr.mxu0 0.0
    %5000 = vmatpush2.msra.mxu0 0.0
    %5001 = vmatprep.subr.mxu0 0.0
    %5002 = vmatpush2.msra.mxu0 0.0
    %5003 = vmatprep.subr.mxu0 0.0
    %5004 = vmatpush2.msra.mxu0 0.0
    %5005 = vmatprep.subr.mxu0 0.0
    %5006 = vmatpush2.msra.mxu0 0.0
    %5007 = vmatprep.mubr.f32.mxu0 0.0
    %5008 = vmatmul.mubr.f32.gmra.mxu0 %v3138
    %v5009 = vpop.f32.mrf.mxu0
    %v5010 = vadd.f32 %v4942, %v5009
    %v5011 = vpop.f32.mrf.mxu0
    %5012 = vmatprep.mubr.f32.mxu0 0.0
    %5013 = vmatmul.mubr.f32.gmra.mxu0 %v3141
    %v5014 = vpop.f32.mrf.mxu0
    %v5015 = vadd.f32 %v4942, %v5014
    %v5016 = vpop.f32.mrf.mxu0
    %5017 = vdwg.mxu0
    %5018 = vmatprep.subr.mxu0 0.0
    %5019 = vmatpush1.msra.mxu0 0.0
    %5020 = vmatprep.subr.mxu0 0.0
    %5021 = vmatpush1.msra.mxu0 0.0
    %5022 = vmatprep.subr.mxu0 0.0
    %5023 = vmatpush1.msra.mxu0 0.0
    %5024 = vmatprep.subr.mxu0 0.0
    %5025 = vmatpush1.msra.mxu0 0.0
    %5026 = vmatprep.subr.mxu0 0.0
    %5027 = vmatpush1.msra.mxu0 0.0
    %5028 = vmatprep.subr.mxu0 0.0
    %5029 = vmatpush1.msra.mxu0 0.0
    %5030 = vmatprep.subr.mxu0 0.0
    %5031 = vmatpush1.msra.mxu0 0.0
    %5032 = vmatprep.subr.mxu0 0.0
    %5033 = vmatpush1.msra.mxu0 0.0
    %5034 = vmatprep.subr.mxu0 0.0
    %5035 = vmatpush1.msra.mxu0 0.0
    %5036 = vmatprep.subr.mxu0 0.0
    %5037 = vmatpush1.msra.mxu0 0.0
    %5038 = vmatprep.subr.mxu0 0.0
    %5039 = vmatpush1.msra.mxu0 0.0
    %5040 = vmatprep.subr.mxu0 0.0
    %5041 = vmatpush1.msra.mxu0 0.0
    %5042 = vmatprep.subr.mxu0 0.0
    %5043 = vmatpush1.msra.mxu0 0.0
    %5044 = vmatprep.subr.mxu0 0.0
    %5045 = vmatpush1.msra.mxu0 0.0
    %5046 = vmatprep.subr.mxu0 0.0
    %5047 = vmatpush1.msra.mxu0 %v5015
    %5048 = vmatprep.subr.mxu0 0.0
    %5049 = vmatpush1.msra.mxu0 %v5010
    %5050 = vmatprep.subr.mxu0 0.0
    %5051 = vmatpush2.msra.mxu0 0.0
    %5052 = vmatprep.subr.mxu0 0.0
    %5053 = vmatpush2.msra.mxu0 0.0
    %5054 = vmatprep.subr.mxu0 0.0
    %5055 = vmatpush2.msra.mxu0 0.0
    %5056 = vmatprep.subr.mxu0 0.0
    %5057 = vmatpush2.msra.mxu0 0.0
    %5058 = vmatprep.subr.mxu0 0.0
    %5059 = vmatpush2.msra.mxu0 0.0
    %5060 = vmatprep.subr.mxu0 0.0
    %5061 = vmatpush2.msra.mxu0 0.0
    %5062 = vmatprep.subr.mxu0 0.0
    %5063 = vmatpush2.msra.mxu0 0.0
    %5064 = vmatprep.subr.mxu0 0.0
    %5065 = vmatpush2.msra.mxu0 0.0
    %5066 = vmatprep.subr.mxu0 0.0
    %5067 = vmatpush2.msra.mxu0 0.0
    %5068 = vmatprep.subr.mxu0 0.0
    %5069 = vmatpush2.msra.mxu0 0.0
    %5070 = vmatprep.subr.mxu0 0.0
    %5071 = vmatpush2.msra.mxu0 0.0
    %5072 = vmatprep.subr.mxu0 0.0
    %5073 = vmatpush2.msra.mxu0 0.0
    %5074 = vmatprep.subr.mxu0 0.0
    %5075 = vmatpush2.msra.mxu0 0.0
    %5076 = vmatprep.subr.mxu0 0.0
    %5077 = vmatpush2.msra.mxu0 0.0
    %5078 = vmatprep.subr.mxu0 0.0
    %5079 = vmatpush2.msra.mxu0 0.0
    %5080 = vmatprep.subr.mxu0 0.0
    %5081 = vmatpush2.msra.mxu0 0.0
    %5082 = vmatprep.mubr.f32.mxu0 0.0
    %5083 = vmatmul.mubr.f32.gmra.mxu0 %v419
    %v5084 = vpop.f32.mrf.mxu0
    %v5085 = vadd.f32 0.0, %v5084
    %v5086 = vpop.f32.mrf.mxu0
    %5087 = vmatprep.mubr.f32.mxu0 0.0
    %5088 = vmatmul.mubr.f32.gmra.mxu0 %v422
    %v5089 = vpop.f32.mrf.mxu0
    %v5090 = vadd.f32 0.0, %v5089
    %v5091 = vpop.f32.mrf.mxu0
    %5092 = vmatprep.mubr.f32.mxu0 0.0
    %5093 = vmatmul.mubr.f32.gmra.mxu0 %v425
    %v5094 = vpop.f32.mrf.mxu0
    %v5095 = vadd.f32 0.0, %v5094
    %v5096 = vpop.f32.mrf.mxu0
    %5097 = vmatprep.mubr.f32.mxu0 0.0
    %5098 = vmatmul.mubr.f32.gmra.mxu0 %v428
    %v5099 = vpop.f32.mrf.mxu0
    %v5100 = vadd.f32 0.0, %v5099
    %v5101 = vpop.f32.mrf.mxu0
    %5102 = vmatprep.mubr.f32.mxu0 0.0
    %5103 = vmatmul.mubr.f32.gmra.mxu0 %v431
    %v5104 = vpop.f32.mrf.mxu0
    %v5105 = vadd.f32 0.0, %v5104
    %v5106 = vpop.f32.mrf.mxu0
    %5107 = vmatprep.mubr.f32.mxu0 0.0
    %5108 = vmatmul.mubr.f32.gmra.mxu0 %v434
    %v5109 = vpop.f32.mrf.mxu0
    %v5110 = vadd.f32 0.0, %v5109
    %v5111 = vpop.f32.mrf.mxu0
    %5112 = vmatprep.mubr.f32.mxu0 0.0
    %5113 = vmatmul.mubr.f32.gmra.mxu0 %v437
    %v5114 = vpop.f32.mrf.mxu0
    %v5115 = vadd.f32 0.0, %v5114
    %v5116 = vpop.f32.mrf.mxu0
    %5117 = vmatprep.mubr.f32.mxu0 0.0
    %5118 = vmatmul.mubr.f32.gmra.mxu0 %v440
    %v5119 = vpop.f32.mrf.mxu0
    %v5120 = vadd.f32 0.0, %v5119
    %v5121 = vpop.f32.mrf.mxu0
    %5122 = vdwg.mxu0
    %v5123 = vmul.f32 %v5085, %v86
    %v5124 = vmul.f32 %v5090, %v87
    %v5125 = vmul.f32 %v5095, %v88
    %v5126 = vmul.f32 %v5100, %v89
    %v5127 = vmul.f32 %v5105, %v90
    %v5128 = vmul.f32 %v5110, %v91
    %v5129 = vmul.f32 %v5115, %v92
    %v5130 = vmul.f32 %v5120, %v93
    %5133 = vrot.lane.b32.xlu0 %v5010, 96
    %v5134 = vpop.permute.xlu0 %5133
    %5135 = vrot.lane.b32.xlu0 %v5015, 96
    %v5136 = vpop.permute.xlu0 %5135
    %5139 = vmatprep.subr.mxu0 0.0
    %5140 = vmatpush1.msra.mxu0 0.0
    %5141 = vmatprep.subr.mxu0 0.0
    %5142 = vmatpush1.msra.mxu0 0.0
    %5143 = vmatprep.subr.mxu0 0.0
    %5144 = vmatpush1.msra.mxu0 0.0
    %5145 = vmatprep.subr.mxu0 0.0
    %5146 = vmatpush1.msra.mxu0 0.0
    %5147 = vmatprep.subr.mxu0 0.0
    %5148 = vmatpush1.msra.mxu0 0.0
    %5149 = vmatprep.subr.mxu0 0.0
    %5150 = vmatpush1.msra.mxu0 0.0
    %5151 = vmatprep.subr.mxu0 0.0
    %5152 = vmatpush1.msra.mxu0 0.0
    %5153 = vmatprep.subr.mxu0 0.0
    %5154 = vmatpush1.msra.mxu0 0.0
    %5155 = vmatprep.subr.mxu0 0.0
    %5156 = vmatpush1.msra.mxu0 0.0
    %5157 = vmatprep.subr.mxu0 0.0
    %5158 = vmatpush1.msra.mxu0 0.0
    %5159 = vmatprep.subr.mxu0 0.0
    %5160 = vmatpush1.msra.mxu0 0.0
    %5161 = vmatprep.subr.mxu0 0.0
    %5162 = vmatpush1.msra.mxu0 0.0
    %5163 = vmatprep.subr.mxu0 0.0
    %5164 = vmatpush1.msra.mxu0 0.0
    %5165 = vmatprep.subr.mxu0 0.0
    %5166 = vmatpush1.msra.mxu0 0.0
    %5167 = vmatprep.subr.mxu0 0.0
    %5168 = vmatpush1.msra.mxu0 %v5136
    %5169 = vmatprep.subr.mxu0 0.0
    %5170 = vmatpush1.msra.mxu0 %v5134
    %5171 = vmatprep.subr.mxu0 0.0
    %5172 = vmatpush2.msra.mxu0 0.0
    %5173 = vmatprep.subr.mxu0 0.0
    %5174 = vmatpush2.msra.mxu0 0.0
    %5175 = vmatprep.subr.mxu0 0.0
    %5176 = vmatpush2.msra.mxu0 0.0
    %5177 = vmatprep.subr.mxu0 0.0
    %5178 = vmatpush2.msra.mxu0 0.0
    %5179 = vmatprep.subr.mxu0 0.0
    %5180 = vmatpush2.msra.mxu0 0.0
    %5181 = vmatprep.subr.mxu0 0.0
    %5182 = vmatpush2.msra.mxu0 0.0
    %5183 = vmatprep.subr.mxu0 0.0
    %5184 = vmatpush2.msra.mxu0 0.0
    %5185 = vmatprep.subr.mxu0 0.0
    %5186 = vmatpush2.msra.mxu0 0.0
    %5187 = vmatprep.subr.mxu0 0.0
    %5188 = vmatpush2.msra.mxu0 0.0
    %5189 = vmatprep.subr.mxu0 0.0
    %5190 = vmatpush2.msra.mxu0 0.0
    %5191 = vmatprep.subr.mxu0 0.0
    %5192 = vmatpush2.msra.mxu0 0.0
    %5193 = vmatprep.subr.mxu0 0.0
    %5194 = vmatpush2.msra.mxu0 0.0
    %5195 = vmatprep.subr.mxu0 0.0
    %5196 = vmatpush2.msra.mxu0 0.0
    %5197 = vmatprep.subr.mxu0 0.0
    %5198 = vmatpush2.msra.mxu0 0.0
    %5199 = vmatprep.subr.mxu0 0.0
    %5200 = vmatpush2.msra.mxu0 0.0
    %5201 = vmatprep.subr.mxu0 0.0
    %5202 = vmatpush2.msra.mxu0 0.0
    %5203 = vmatprep.mubr.f32.mxu0 0.0
    %5204 = vmatmul.mubr.f32.gmra.mxu0 %v419
    %v5205 = vpop.f32.mrf.mxu0
    %v5206 = vadd.f32 0.0, %v5205
    %v5207 = vpop.f32.mrf.mxu0
    %5208 = vmatprep.mubr.f32.mxu0 0.0
    %5209 = vmatmul.mubr.f32.gmra.mxu0 %v422
    %v5210 = vpop.f32.mrf.mxu0
    %v5211 = vadd.f32 0.0, %v5210
    %v5212 = vpop.f32.mrf.mxu0
    %5213 = vmatprep.mubr.f32.mxu0 0.0
    %5214 = vmatmul.mubr.f32.gmra.mxu0 %v425
    %v5215 = vpop.f32.mrf.mxu0
    %v5216 = vadd.f32 0.0, %v5215
    %v5217 = vpop.f32.mrf.mxu0
    %5218 = vmatprep.mubr.f32.mxu0 0.0
    %5219 = vmatmul.mubr.f32.gmra.mxu0 %v428
    %v5220 = vpop.f32.mrf.mxu0
    %v5221 = vadd.f32 0.0, %v5220
    %v5222 = vpop.f32.mrf.mxu0
    %5223 = vmatprep.mubr.f32.mxu0 0.0
    %5224 = vmatmul.mubr.f32.gmra.mxu0 %v431
    %v5225 = vpop.f32.mrf.mxu0
    %v5226 = vadd.f32 0.0, %v5225
    %v5227 = vpop.f32.mrf.mxu0
    %5228 = vmatprep.mubr.f32.mxu0 0.0
    %5229 = vmatmul.mubr.f32.gmra.mxu0 %v434
    %v5230 = vpop.f32.mrf.mxu0
    %v5231 = vadd.f32 0.0, %v5230
    %v5232 = vpop.f32.mrf.mxu0
    %5233 = vmatprep.mubr.f32.mxu0 0.0
    %5234 = vmatmul.mubr.f32.gmra.mxu0 %v437
    %v5235 = vpop.f32.mrf.mxu0
    %v5236 = vadd.f32 0.0, %v5235
    %v5237 = vpop.f32.mrf.mxu0
    %5238 = vmatprep.mubr.f32.mxu0 0.0
    %5239 = vmatmul.mubr.f32.gmra.mxu0 %v440
    %v5240 = vpop.f32.mrf.mxu0
    %v5241 = vadd.f32 0.0, %v5240
    %v5242 = vpop.f32.mrf.mxu0
    %5243 = vdwg.mxu0
    %v5244 = vmul.f32 %v5206, %v86
    %v5245 = vmul.f32 %v5211, %v87
    %v5246 = vmul.f32 %v5216, %v88
    %v5247 = vmul.f32 %v5221, %v89
    %v5248 = vmul.f32 %v5226, %v90
    %v5249 = vmul.f32 %v5231, %v91
    %v5250 = vmul.f32 %v5236, %v92
    %v5251 = vmul.f32 %v5241, %v93
    %v5253 = vsel %vm327, %v4926, 0
    %v5256 = vsel %vm327, %v4931, 0
    %v5259 = vsel %vm327, %v5123, 0
    %v5262 = vsel %vm327, %v5124, 0
    %v5265 = vsel %vm327, %v5125, 0
    %v5268 = vsel %vm327, %v5126, 0
    %v5271 = vsel %vm327, %v5127, 0
    %v5274 = vsel %vm327, %v5128, 0
    %v5277 = vsel %vm327, %v5129, 0
    %v5280 = vsel %vm327, %v5130, 0
    %5282 = vmatprep.subr.mxu0 0.0
    %5283 = vmatpush1.xpose.msra.mxu0 0.0
    %5284 = vmatprep.subr.mxu0 0.0
    %5285 = vmatpush1.xpose.msra.mxu0 0.0
    %5286 = vmatprep.subr.mxu0 0.0
    %5287 = vmatpush1.xpose.msra.mxu0 0.0
    %5288 = vmatprep.subr.mxu0 0.0
    %5289 = vmatpush1.xpose.msra.mxu0 0.0
    %5290 = vmatprep.subr.mxu0 0.0
    %5291 = vmatpush1.xpose.msra.mxu0 0.0
    %5292 = vmatprep.subr.mxu0 0.0
    %5293 = vmatpush1.xpose.msra.mxu0 0.0
    %5294 = vmatprep.subr.mxu0 0.0
    %5295 = vmatpush1.xpose.msra.mxu0 0.0
    %5296 = vmatprep.subr.mxu0 0.0
    %5297 = vmatpush1.xpose.msra.mxu0 0.0
    %5298 = vmatprep.subr.mxu0 0.0
    %5299 = vmatpush1.xpose.msra.mxu0 %v5280
    %5300 = vmatprep.subr.mxu0 0.0
    %5301 = vmatpush1.xpose.msra.mxu0 %v5277
    %5302 = vmatprep.subr.mxu0 0.0
    %5303 = vmatpush1.xpose.msra.mxu0 %v5274
    %5304 = vmatprep.subr.mxu0 0.0
    %5305 = vmatpush1.xpose.msra.mxu0 %v5271
    %5306 = vmatprep.subr.mxu0 0.0
    %5307 = vmatpush1.xpose.msra.mxu0 %v5268
    %5308 = vmatprep.subr.mxu0 0.0
    %5309 = vmatpush1.xpose.msra.mxu0 %v5265
    %5310 = vmatprep.subr.mxu0 0.0
    %5311 = vmatpush1.xpose.msra.mxu0 %v5262
    %5312 = vmatprep.subr.mxu0 0.0
    %5313 = vmatpush1.xpose.msra.mxu0 %v5259
    %5314 = vmatprep.subr.mxu0 0.0
    %5315 = vmatpush2.xpose.msra.mxu0 0.0
    %5316 = vmatprep.subr.mxu0 0.0
    %5317 = vmatpush2.xpose.msra.mxu0 0.0
    %5318 = vmatprep.subr.mxu0 0.0
    %5319 = vmatpush2.xpose.msra.mxu0 0.0
    %5320 = vmatprep.subr.mxu0 0.0
    %5321 = vmatpush2.xpose.msra.mxu0 0.0
    %5322 = vmatprep.subr.mxu0 0.0
    %5323 = vmatpush2.xpose.msra.mxu0 0.0
    %5324 = vmatprep.subr.mxu0 0.0
    %5325 = vmatpush2.xpose.msra.mxu0 0.0
    %5326 = vmatprep.subr.mxu0 0.0
    %5327 = vmatpush2.xpose.msra.mxu0 0.0
    %5328 = vmatprep.subr.mxu0 0.0
    %5329 = vmatpush2.xpose.msra.mxu0 0.0
    %5330 = vmatprep.subr.mxu0 0.0
    %5331 = vmatpush2.xpose.msra.mxu0 0.0
    %5332 = vmatprep.subr.mxu0 0.0
    %5333 = vmatpush2.xpose.msra.mxu0 0.0
    %5334 = vmatprep.subr.mxu0 0.0
    %5335 = vmatpush2.xpose.msra.mxu0 0.0
    %5336 = vmatprep.subr.mxu0 0.0
    %5337 = vmatpush2.xpose.msra.mxu0 0.0
    %5338 = vmatprep.subr.mxu0 0.0
    %5339 = vmatpush2.xpose.msra.mxu0 0.0
    %5340 = vmatprep.subr.mxu0 0.0
    %5341 = vmatpush2.xpose.msra.mxu0 0.0
    %5342 = vmatprep.subr.mxu0 0.0
    %5343 = vmatpush2.xpose.msra.mxu0 0.0
    %5344 = vmatprep.subr.mxu0 0.0
    %5345 = vmatpush2.xpose.msra.mxu0 0.0
    %5346 = vmatprep.mubr.f32.mxu0 0.0
    %5347 = vmatmul.mubr.f32.gmra.mxu0 %v5253
    %v5348 = vpop.f32.mrf.mxu0
    %v5349 = vadd.f32 %v102, %v5348
    %v5350 = vpop.f32.mrf.mxu0
    %5351 = vmatprep.mubr.f32.mxu0 0.0
    %5352 = vmatmul.mubr.f32.gmra.mxu0 %v5256
    %v5353 = vpop.f32.mrf.mxu0
    %v5354 = vadd.f32 %v103, %v5353
    %v5355 = vpop.f32.mrf.mxu0
    %5356 = vdwg.mxu0
    %v5357 = vsel %vm777, %v5349, -inf
    %5358 = vmax.xlane.f32.xlu0 %v5357
    %v5359 = vpop.xlane.xlu0 %5358
    %v5360 = vsel %vm777, %v5354, -inf
    %5361 = vmax.xlane.f32.xlu0 %v5360
    %v5362 = vpop.xlane.xlu0 %5361
    %v5363 = vsub.f32 %v5349, %v5359
    %v5364 = vsub.f32 %v5354, %v5362
    %v5365 = vmul.f32 %v5363, 1.442695
    %v5366 = vpow.pop %v5365
    %v5367 = vmul.f32 %v5364, 1.442695
    %v5368 = vpow.pop %v5367
    %v5370 = vsel %vm777, %v5366, 0
    %v5373 = vsel %vm777, %v5368, 0
    %5375 = vmatprep.subr.mxu0 0.0
    %5376 = vmatpush1.msra.mxu0 0.0
    %5377 = vmatprep.subr.mxu0 0.0
    %5378 = vmatpush1.msra.mxu0 0.0
    %5379 = vmatprep.subr.mxu0 0.0
    %5380 = vmatpush1.msra.mxu0 0.0
    %5381 = vmatprep.subr.mxu0 0.0
    %5382 = vmatpush1.msra.mxu0 0.0
    %5383 = vmatprep.subr.mxu0 0.0
    %5384 = vmatpush1.msra.mxu0 0.0
    %5385 = vmatprep.subr.mxu0 0.0
    %5386 = vmatpush1.msra.mxu0 0.0
    %5387 = vmatprep.subr.mxu0 0.0
    %5388 = vmatpush1.msra.mxu0 0.0
    %5389 = vmatprep.subr.mxu0 0.0
    %5390 = vmatpush1.msra.mxu0 0.0
    %5391 = vmatprep.subr.mxu0 0.0
    %5392 = vmatpush1.msra.mxu0 %v101
    %5393 = vmatprep.subr.mxu0 0.0
    %5394 = vmatpush1.msra.mxu0 %v100
    %5395 = vmatprep.subr.mxu0 0.0
    %5396 = vmatpush1.msra.mxu0 %v99
    %5397 = vmatprep.subr.mxu0 0.0
    %5398 = vmatpush1.msra.mxu0 %v98
    %5399 = vmatprep.subr.mxu0 0.0
    %5400 = vmatpush1.msra.mxu0 %v97
    %5401 = vmatprep.subr.mxu0 0.0
    %5402 = vmatpush1.msra.mxu0 %v96
    %5403 = vmatprep.subr.mxu0 0.0
    %5404 = vmatpush1.msra.mxu0 %v95
    %5405 = vmatprep.subr.mxu0 0.0
    %5406 = vmatpush1.msra.mxu0 %v94
    %5407 = vmatprep.subr.mxu0 0.0
    %5408 = vmatpush2.msra.mxu0 0.0
    %5409 = vmatprep.subr.mxu0 0.0
    %5410 = vmatpush2.msra.mxu0 0.0
    %5411 = vmatprep.subr.mxu0 0.0
    %5412 = vmatpush2.msra.mxu0 0.0
    %5413 = vmatprep.subr.mxu0 0.0
    %5414 = vmatpush2.msra.mxu0 0.0
    %5415 = vmatprep.subr.mxu0 0.0
    %5416 = vmatpush2.msra.mxu0 0.0
    %5417 = vmatprep.subr.mxu0 0.0
    %5418 = vmatpush2.msra.mxu0 0.0
    %5419 = vmatprep.subr.mxu0 0.0
    %5420 = vmatpush2.msra.mxu0 0.0
    %5421 = vmatprep.subr.mxu0 0.0
    %5422 = vmatpush2.msra.mxu0 0.0
    %5423 = vmatprep.subr.mxu0 0.0
    %5424 = vmatpush2.msra.mxu0 0.0
    %5425 = vmatprep.subr.mxu0 0.0
    %5426 = vmatpush2.msra.mxu0 0.0
    %5427 = vmatprep.subr.mxu0 0.0
    %5428 = vmatpush2.msra.mxu0 0.0
    %5429 = vmatprep.subr.mxu0 0.0
    %5430 = vmatpush2.msra.mxu0 0.0
    %5431 = vmatprep.subr.mxu0 0.0
    %5432 = vmatpush2.msra.mxu0 0.0
    %5433 = vmatprep.subr.mxu0 0.0
    %5434 = vmatpush2.msra.mxu0 0.0
    %5435 = vmatprep.subr.mxu0 0.0
    %5436 = vmatpush2.msra.mxu0 0.0
    %5437 = vmatprep.subr.mxu0 0.0
    %5438 = vmatpush2.msra.mxu0 0.0
    %5439 = vmatprep.mubr.f32.mxu0 0.0
    %5440 = vmatmul.mubr.f32.gmra.mxu0 %v5370
    %v5441 = vpop.f32.mrf.mxu0
    %v5442 = vadd.f32 %v104, %v5441
    %v5443 = vpop.f32.mrf.mxu0
    %5444 = vmatprep.mubr.f32.mxu0 0.0
    %5445 = vmatmul.mubr.f32.gmra.mxu0 %v5373
    %v5446 = vpop.f32.mrf.mxu0
    %v5447 = vadd.f32 %v105, %v5446
    %v5448 = vpop.f32.mrf.mxu0
    %5449 = vdwg.mxu0
    %v5450 = vrcp.pop %v5442
    %v5451 = vmul.f32 %v5366, %v5450
    %v5452 = vrcp.pop %v5447
    %v5453 = vmul.f32 %v5368, %v5452
    %v5455 = vsel %vm777, %v5451, 0
    %v5458 = vsel %vm777, %v5453, 0
    %5460 = vmatprep.subr.mxu0 0.0
    %5461 = vmatpush1.msra.mxu0 0.0
    %5462 = vmatprep.subr.mxu0 0.0
    %5463 = vmatpush1.msra.mxu0 0.0
    %5464 = vmatprep.subr.mxu0 0.0
    %5465 = vmatpush1.msra.mxu0 0.0
    %5466 = vmatprep.subr.mxu0 0.0
    %5467 = vmatpush1.msra.mxu0 0.0
    %5468 = vmatprep.subr.mxu0 0.0
    %5469 = vmatpush1.msra.mxu0 0.0
    %5470 = vmatprep.subr.mxu0 0.0
    %5471 = vmatpush1.msra.mxu0 0.0
    %5472 = vmatprep.subr.mxu0 0.0
    %5473 = vmatpush1.msra.mxu0 0.0
    %5474 = vmatprep.subr.mxu0 0.0
    %5475 = vmatpush1.msra.mxu0 0.0
    %5476 = vmatprep.subr.mxu0 0.0
    %5477 = vmatpush1.msra.mxu0 %v5251
    %5478 = vmatprep.subr.mxu0 0.0
    %5479 = vmatpush1.msra.mxu0 %v5250
    %5480 = vmatprep.subr.mxu0 0.0
    %5481 = vmatpush1.msra.mxu0 %v5249
    %5482 = vmatprep.subr.mxu0 0.0
    %5483 = vmatpush1.msra.mxu0 %v5248
    %5484 = vmatprep.subr.mxu0 0.0
    %5485 = vmatpush1.msra.mxu0 %v5247
    %5486 = vmatprep.subr.mxu0 0.0
    %5487 = vmatpush1.msra.mxu0 %v5246
    %5488 = vmatprep.subr.mxu0 0.0
    %5489 = vmatpush1.msra.mxu0 %v5245
    %5490 = vmatprep.subr.mxu0 0.0
    %5491 = vmatpush1.msra.mxu0 %v5244
    %5492 = vmatprep.subr.mxu0 0.0
    %5493 = vmatpush2.msra.mxu0 0.0
    %5494 = vmatprep.subr.mxu0 0.0
    %5495 = vmatpush2.msra.mxu0 0.0
    %5496 = vmatprep.subr.mxu0 0.0
    %5497 = vmatpush2.msra.mxu0 0.0
    %5498 = vmatprep.subr.mxu0 0.0
    %5499 = vmatpush2.msra.mxu0 0.0
    %5500 = vmatprep.subr.mxu0 0.0
    %5501 = vmatpush2.msra.mxu0 0.0
    %5502 = vmatprep.subr.mxu0 0.0
    %5503 = vmatpush2.msra.mxu0 0.0
    %5504 = vmatprep.subr.mxu0 0.0
    %5505 = vmatpush2.msra.mxu0 0.0
    %5506 = vmatprep.subr.mxu0 0.0
    %5507 = vmatpush2.msra.mxu0 0.0
    %5508 = vmatprep.subr.mxu0 0.0
    %5509 = vmatpush2.msra.mxu0 0.0
    %5510 = vmatprep.subr.mxu0 0.0
    %5511 = vmatpush2.msra.mxu0 0.0
    %5512 = vmatprep.subr.mxu0 0.0
    %5513 = vmatpush2.msra.mxu0 0.0
    %5514 = vmatprep.subr.mxu0 0.0
    %5515 = vmatpush2.msra.mxu0 0.0
    %5516 = vmatprep.subr.mxu0 0.0
    %5517 = vmatpush2.msra.mxu0 0.0
    %5518 = vmatprep.subr.mxu0 0.0
    %5519 = vmatpush2.msra.mxu0 0.0
    %5520 = vmatprep.subr.mxu0 0.0
    %5521 = vmatpush2.msra.mxu0 0.0
    %5522 = vmatprep.subr.mxu0 0.0
    %5523 = vmatpush2.msra.mxu0 0.0
    %5524 = vmatprep.mubr.f32.mxu0 0.0
    %5525 = vmatmul.mubr.f32.gmra.mxu0 %v5455
    %v5526 = vpop.f32.mrf.mxu0
    %v5527 = vadd.f32 0.0, %v5526
    %v5528 = vpop.f32.mrf.mxu0
    %5529 = vmatprep.mubr.f32.mxu0 0.0
    %5530 = vmatmul.mubr.f32.gmra.mxu0 %v5458
    %v5531 = vpop.f32.mrf.mxu0
    %v5532 = vadd.f32 0.0, %v5531
    %v5533 = vpop.f32.mrf.mxu0
    %5534 = vdwg.mxu0
    %s5535 = scalar_lea.vmem %s18, 32
    %v5536 = vld [vmem:[%s5535] sm:$0xff]
    %v5537 = vld [vmem:[%s5535 + $0x8] sm:$0xff]
    %v5538 = vld [vmem:[%s5535 + $0x10] sm:$0xff]
    %v5539 = vld [vmem:[%s5535 + $0x18] sm:$0xff]
    %v5540 = vlaneseq
    %v5541 = vshrl.u32 %v5540, 7
    %v5542 = vsub.s32 6, %v5541
    %v5543 = vrot.slane %v4097, %v5542
    %v5545 = vsel %vm327, %v5527, 0
    %v5548 = vsel %vm327, %v5532, 0
    %5550 = vmatprep.subr.mxu0 0.0
    %5551 = vmatpush1.msra.mxu0 0.0
    %5552 = vmatprep.subr.mxu0 0.0
    %5553 = vmatpush1.msra.mxu0 0.0
    %5554 = vmatprep.subr.mxu0 0.0
    %5555 = vmatpush1.msra.mxu0 0.0
    %5556 = vmatprep.subr.mxu0 0.0
    %5557 = vmatpush1.msra.mxu0 0.0
    %5558 = vmatprep.subr.mxu0 0.0
    %5559 = vmatpush1.msra.mxu0 0.0
    %5560 = vmatprep.subr.mxu0 0.0
    %5561 = vmatpush1.msra.mxu0 0.0
    %5562 = vmatprep.subr.mxu0 0.0
    %5563 = vmatpush1.msra.mxu0 0.0
    %5564 = vmatprep.subr.mxu0 0.0
    %5565 = vmatpush1.msra.mxu0 0.0
    %5566 = vmatprep.subr.mxu0 0.0
    %5567 = vmatpush1.msra.mxu0 0.0
    %5568 = vmatprep.subr.mxu0 0.0
    %5569 = vmatpush1.msra.mxu0 0.0
    %5570 = vmatprep.subr.mxu0 0.0
    %5571 = vmatpush1.msra.mxu0 0.0
    %5572 = vmatprep.subr.mxu0 0.0
    %5573 = vmatpush1.msra.mxu0 0.0
    %5574 = vmatprep.subr.mxu0 0.0
    %5575 = vmatpush1.msra.mxu0 %v5539
    %5576 = vmatprep.subr.mxu0 0.0
    %5577 = vmatpush1.msra.mxu0 %v5538
    %5578 = vmatprep.subr.mxu0 0.0
    %5579 = vmatpush1.msra.mxu0 %v5537
    %5580 = vmatprep.subr.mxu0 0.0
    %5581 = vmatpush1.msra.mxu0 %v5536
    %5582 = vmatprep.subr.mxu0 0.0
    %5583 = vmatpush2.msra.mxu0 0.0
    %5584 = vmatprep.subr.mxu0 0.0
    %5585 = vmatpush2.msra.mxu0 0.0
    %5586 = vmatprep.subr.mxu0 0.0
    %5587 = vmatpush2.msra.mxu0 0.0
    %5588 = vmatprep.subr.mxu0 0.0
    %5589 = vmatpush2.msra.mxu0 0.0
    %5590 = vmatprep.subr.mxu0 0.0
    %5591 = vmatpush2.msra.mxu0 0.0
    %5592 = vmatprep.subr.mxu0 0.0
    %5593 = vmatpush2.msra.mxu0 0.0
    %5594 = vmatprep.subr.mxu0 0.0
    %5595 = vmatpush2.msra.mxu0 0.0
    %5596 = vmatprep.subr.mxu0 0.0
    %5597 = vmatpush2.msra.mxu0 0.0
    %5598 = vmatprep.subr.mxu0 0.0
    %5599 = vmatpush2.msra.mxu0 0.0
    %5600 = vmatprep.subr.mxu0 0.0
    %5601 = vmatpush2.msra.mxu0 0.0
    %5602 = vmatprep.subr.mxu0 0.0
    %5603 = vmatpush2.msra.mxu0 0.0
    %5604 = vmatprep.subr.mxu0 0.0
    %5605 = vmatpush2.msra.mxu0 0.0
    %5606 = vmatprep.subr.mxu0 0.0
    %5607 = vmatpush2.msra.mxu0 0.0
    %5608 = vmatprep.subr.mxu0 0.0
    %5609 = vmatpush2.msra.mxu0 0.0
    %5610 = vmatprep.subr.mxu0 0.0
    %5611 = vmatpush2.msra.mxu0 0.0
    %5612 = vmatprep.subr.mxu0 0.0
    %5613 = vmatpush2.msra.mxu0 0.0
    %5614 = vmatprep.mubr.f32.mxu0 0.0
    %5615 = vmatmul.mubr.f32.gmra.mxu0 %v5545
    %v5616 = vpop.f32.mrf.mxu0
    %v5617 = vadd.f32 %v5543, %v5616
    %v5618 = vpop.f32.mrf.mxu0
    %5619 = vmatprep.mubr.f32.mxu0 0.0
    %5620 = vmatmul.mubr.f32.gmra.mxu0 %v5548
    %v5621 = vpop.f32.mrf.mxu0
    %v5622 = vadd.f32 %v5543, %v5621
    %v5623 = vpop.f32.mrf.mxu0
    %5624 = vdwg.mxu0
    %v5625 = vadd.f32 %v4842, %v5617
    %v5626 = vadd.f32 %v4843, %v5622
    %v5627 = vsel %vm327, %v5625, 0.0
    %5628 = vadd.xlane.f32.xlu0 %v5627
    %v5629 = vpop.xlane.xlu0 %5628
    %v5630 = vsel %vm327, %v5626, 0.0
    %5631 = vadd.xlane.f32.xlu0 %v5630
    %v5632 = vpop.xlane.xlu0 %5631
    %v5633 = vmul.f32 %v5629, %v1053
    %v5634 = vmul.f32 %v5632, %v1053
    %v5635 = vmul.f32 %v5625, %v5625
    %v5636 = vmul.f32 %v5626, %v5626
    %v5637 = vsel %vm327, %v5635, 0.0
    %5638 = vadd.xlane.f32.xlu0 %v5637
    %v5639 = vpop.xlane.xlu0 %5638
    %v5640 = vsel %vm327, %v5636, 0.0
    %5641 = vadd.xlane.f32.xlu0 %v5640
    %v5642 = vpop.xlane.xlu0 %5641
    %v5643 = vmul.f32 %v5639, %v1053
    %v5644 = vmul.f32 %v5642, %v1053
    %v5645 = vsub.f32 %v5625, %v5633
    %v5646 = vsub.f32 %v5626, %v5634
    %v5647 = vmul.f32 %v5633, %v5633
    %v5648 = vmul.f32 %v5634, %v5634
    %v5649 = vsub.f32 %v5643, %v5647
    %v5650 = vsub.f32 %v5644, %v5648
    %v5651 = vadd.f32 %v5649, 1e-05
    %v5652 = vadd.f32 %v5650, 1e-05
    %v5653 = vrsqrt.pop %v5651
    %v5654 = vrsqrt.pop %v5652
    %v5655 = vmul.f32 %v5645, %v5653
    %v5656 = vmul.f32 %v5646, %v5654
    %v5657 = vlaneseq
    %v5658 = vshrl.u32 %v5657, 7
    %v5659 = vsub.s32 7, %v5658
    %v5660 = vrot.slane %v4097, %v5659
    %v5661 = vmul.f32 %v5655, %v5660
    %v5662 = vmul.f32 %v5656, %v5660
    %v5663 = vlaneseq
    %v5664 = vshrl.u32 %v5663, 7
    %v5665 = vsub.s32 0, %v5664
    %v5666 = vrot.slane %v4098, %v5665
    %v5667 = vadd.f32 %v5661, %v5666
    %v5668 = vadd.f32 %v5662, %v5666
    %s5669 = scalar_lea.vmem %s19, 32
    %v5670 = vld [vmem:[%s5669] sm:$0xff]
    %v5671 = vld [vmem:[%s5669 + $0x8] sm:$0xff]
    %v5672 = vld [vmem:[%s5669 + $0x10] sm:$0xff]
    %v5673 = vld [vmem:[%s5669 + $0x18] sm:$0xff]
    %v5674 = vlaneseq
    %v5675 = vshrl.u32 %v5674, 7
    %v5676 = vsub.s32 1, %v5675
    %v5677 = vrot.slane %v4098, %v5676
    %v5679 = vsel %vm327, %v5667, 0
    %v5682 = vsel %vm327, %v5668, 0
    %5684 = vmatprep.subr.mxu0 0.0
    %5685 = vmatpush1.msra.mxu0 0.0
    %5686 = vmatprep.subr.mxu0 0.0
    %5687 = vmatpush1.msra.mxu0 0.0
    %5688 = vmatprep.subr.mxu0 0.0
    %5689 = vmatpush1.msra.mxu0 0.0
    %5690 = vmatprep.subr.mxu0 0.0
    %5691 = vmatpush1.msra.mxu0 0.0
    %5692 = vmatprep.subr.mxu0 0.0
    %5693 = vmatpush1.msra.mxu0 0.0
    %5694 = vmatprep.subr.mxu0 0.0
    %5695 = vmatpush1.msra.mxu0 0.0
    %5696 = vmatprep.subr.mxu0 0.0
    %5697 = vmatpush1.msra.mxu0 0.0
    %5698 = vmatprep.subr.mxu0 0.0
    %5699 = vmatpush1.msra.mxu0 0.0
    %5700 = vmatprep.subr.mxu0 0.0
    %5701 = vmatpush1.msra.mxu0 0.0
    %5702 = vmatprep.subr.mxu0 0.0
    %5703 = vmatpush1.msra.mxu0 0.0
    %5704 = vmatprep.subr.mxu0 0.0
    %5705 = vmatpush1.msra.mxu0 0.0
    %5706 = vmatprep.subr.mxu0 0.0
    %5707 = vmatpush1.msra.mxu0 0.0
    %5708 = vmatprep.subr.mxu0 0.0
    %5709 = vmatpush1.msra.mxu0 %v5673
    %5710 = vmatprep.subr.mxu0 0.0
    %5711 = vmatpush1.msra.mxu0 %v5672
    %5712 = vmatprep.subr.mxu0 0.0
    %5713 = vmatpush1.msra.mxu0 %v5671
    %5714 = vmatprep.subr.mxu0 0.0
    %5715 = vmatpush1.msra.mxu0 %v5670
    %5716 = vmatprep.subr.mxu0 0.0
    %5717 = vmatpush2.msra.mxu0 0.0
    %5718 = vmatprep.subr.mxu0 0.0
    %5719 = vmatpush2.msra.mxu0 0.0
    %5720 = vmatprep.subr.mxu0 0.0
    %5721 = vmatpush2.msra.mxu0 0.0
    %5722 = vmatprep.subr.mxu0 0.0
    %5723 = vmatpush2.msra.mxu0 0.0
    %5724 = vmatprep.subr.mxu0 0.0
    %5725 = vmatpush2.msra.mxu0 0.0
    %5726 = vmatprep.subr.mxu0 0.0
    %5727 = vmatpush2.msra.mxu0 0.0
    %5728 = vmatprep.subr.mxu0 0.0
    %5729 = vmatpush2.msra.mxu0 0.0
    %5730 = vmatprep.subr.mxu0 0.0
    %5731 = vmatpush2.msra.mxu0 0.0
    %5732 = vmatprep.subr.mxu0 0.0
    %5733 = vmatpush2.msra.mxu0 0.0
    %5734 = vmatprep.subr.mxu0 0.0
    %5735 = vmatpush2.msra.mxu0 0.0
    %5736 = vmatprep.subr.mxu0 0.0
    %5737 = vmatpush2.msra.mxu0 0.0
    %5738 = vmatprep.subr.mxu0 0.0
    %5739 = vmatpush2.msra.mxu0 0.0
    %5740 = vmatprep.subr.mxu0 0.0
    %5741 = vmatpush2.msra.mxu0 0.0
    %5742 = vmatprep.subr.mxu0 0.0
    %5743 = vmatpush2.msra.mxu0 0.0
    %5744 = vmatprep.subr.mxu0 0.0
    %5745 = vmatpush2.msra.mxu0 0.0
    %5746 = vmatprep.subr.mxu0 0.0
    %5747 = vmatpush2.msra.mxu0 0.0
    %5748 = vmatprep.mubr.f32.mxu0 0.0
    %5749 = vmatmul.mubr.f32.gmra.mxu0 %v5679
    %v5750 = vpop.f32.mrf.mxu0
    %v5751 = vadd.f32 %v5677, %v5750
    %v5752 = vpop.f32.mrf.mxu0
    %5753 = vmatprep.mubr.f32.mxu0 0.0
    %5754 = vmatmul.mubr.f32.gmra.mxu0 %v5682
    %v5755 = vpop.f32.mrf.mxu0
    %v5756 = vadd.f32 %v5677, %v5755
    %v5757 = vpop.f32.mrf.mxu0
    %5758 = vdwg.mxu0
    %v5759 = vmax.f32 %v5751, 0.0
    %v5760 = vmax.f32 %v5756, 0.0
    %s5761 = scalar_lea.vmem %s20, 64
    %v5762 = vld [vmem:[%s5761] sm:$0xff]
    %v5763 = vld [vmem:[%s5761 + $0x8] sm:$0xff]
    %v5764 = vld [vmem:[%s5761 + $0x10] sm:$0xff]
    %v5765 = vld [vmem:[%s5761 + $0x18] sm:$0xff]
    %v5766 = vld [vmem:[%s5761 + $0x20] sm:$0xff]
    %v5767 = vld [vmem:[%s5761 + $0x28] sm:$0xff]
    %v5768 = vld [vmem:[%s5761 + $0x30] sm:$0xff]
    %v5769 = vld [vmem:[%s5761 + $0x38] sm:$0xff]
    %v5770 = vlaneseq
    %v5771 = vshrl.u32 %v5770, 7
    %v5772 = vsub.s32 2, %v5771
    %v5773 = vrot.slane %v4098, %v5772
    %v5775 = vsel %vm777, %v5759, 0
    %v5778 = vsel %vm777, %v5760, 0
    %5780 = vmatprep.subr.mxu0 0.0
    %5781 = vmatpush1.msra.mxu0 0.0
    %5782 = vmatprep.subr.mxu0 0.0
    %5783 = vmatpush1.msra.mxu0 0.0
    %5784 = vmatprep.subr.mxu0 0.0
    %5785 = vmatpush1.msra.mxu0 0.0
    %5786 = vmatprep.subr.mxu0 0.0
    %5787 = vmatpush1.msra.mxu0 0.0
    %5788 = vmatprep.subr.mxu0 0.0
    %5789 = vmatpush1.msra.mxu0 0.0
    %5790 = vmatprep.subr.mxu0 0.0
    %5791 = vmatpush1.msra.mxu0 0.0
    %5792 = vmatprep.subr.mxu0 0.0
    %5793 = vmatpush1.msra.mxu0 0.0
    %5794 = vmatprep.subr.mxu0 0.0
    %5795 = vmatpush1.msra.mxu0 0.0
    %5796 = vmatprep.subr.mxu0 0.0
    %5797 = vmatpush1.msra.mxu0 %v5769
    %5798 = vmatprep.subr.mxu0 0.0
    %5799 = vmatpush1.msra.mxu0 %v5768
    %5800 = vmatprep.subr.mxu0 0.0
    %5801 = vmatpush1.msra.mxu0 %v5767
    %5802 = vmatprep.subr.mxu0 0.0
    %5803 = vmatpush1.msra.mxu0 %v5766
    %5804 = vmatprep.subr.mxu0 0.0
    %5805 = vmatpush1.msra.mxu0 %v5765
    %5806 = vmatprep.subr.mxu0 0.0
    %5807 = vmatpush1.msra.mxu0 %v5764
    %5808 = vmatprep.subr.mxu0 0.0
    %5809 = vmatpush1.msra.mxu0 %v5763
    %5810 = vmatprep.subr.mxu0 0.0
    %5811 = vmatpush1.msra.mxu0 %v5762
    %5812 = vmatprep.subr.mxu0 0.0
    %5813 = vmatpush2.msra.mxu0 0.0
    %5814 = vmatprep.subr.mxu0 0.0
    %5815 = vmatpush2.msra.mxu0 0.0
    %5816 = vmatprep.subr.mxu0 0.0
    %5817 = vmatpush2.msra.mxu0 0.0
    %5818 = vmatprep.subr.mxu0 0.0
    %5819 = vmatpush2.msra.mxu0 0.0
    %5820 = vmatprep.subr.mxu0 0.0
    %5821 = vmatpush2.msra.mxu0 0.0
    %5822 = vmatprep.subr.mxu0 0.0
    %5823 = vmatpush2.msra.mxu0 0.0
    %5824 = vmatprep.subr.mxu0 0.0
    %5825 = vmatpush2.msra.mxu0 0.0
    %5826 = vmatprep.subr.mxu0 0.0
    %5827 = vmatpush2.msra.mxu0 0.0
    %5828 = vmatprep.subr.mxu0 0.0
    %5829 = vmatpush2.msra.mxu0 0.0
    %5830 = vmatprep.subr.mxu0 0.0
    %5831 = vmatpush2.msra.mxu0 0.0
    %5832 = vmatprep.subr.mxu0 0.0
    %5833 = vmatpush2.msra.mxu0 0.0
    %5834 = vmatprep.subr.mxu0 0.0
    %5835 = vmatpush2.msra.mxu0 0.0
    %5836 = vmatprep.subr.mxu0 0.0
    %5837 = vmatpush2.msra.mxu0 0.0
    %5838 = vmatprep.subr.mxu0 0.0
    %5839 = vmatpush2.msra.mxu0 0.0
    %5840 = vmatprep.subr.mxu0 0.0
    %5841 = vmatpush2.msra.mxu0 0.0
    %5842 = vmatprep.subr.mxu0 0.0
    %5843 = vmatpush2.msra.mxu0 0.0
    %5844 = vmatprep.mubr.f32.mxu0 0.0
    %5845 = vmatmul.mubr.f32.gmra.mxu0 %v5775
    %v5846 = vpop.f32.mrf.mxu0
    %v5847 = vadd.f32 %v5773, %v5846
    %v5848 = vpop.f32.mrf.mxu0
    %5849 = vmatprep.mubr.f32.mxu0 0.0
    %5850 = vmatmul.mubr.f32.gmra.mxu0 %v5778
    %v5851 = vpop.f32.mrf.mxu0
    %v5852 = vadd.f32 %v5773, %v5851
    %v5853 = vpop.f32.mrf.mxu0
    %5854 = vdwg.mxu0
    %v5855 = vadd.f32 %v5667, %v5847
    %v5856 = vadd.f32 %v5668, %v5852
    %v5857 = vsel %vm327, %v5855, 0.0
    %5858 = vadd.xlane.f32.xlu0 %v5857
    %v5859 = vpop.xlane.xlu0 %5858
    %v5860 = vsel %vm327, %v5856, 0.0
    %5861 = vadd.xlane.f32.xlu0 %v5860
    %v5862 = vpop.xlane.xlu0 %5861
    %v5863 = vmul.f32 %v5859, %v1053
    %v5864 = vmul.f32 %v5862, %v1053
    %v5865 = vmul.f32 %v5855, %v5855
    %v5866 = vmul.f32 %v5856, %v5856
    %v5867 = vsel %vm327, %v5865, 0.0
    %5868 = vadd.xlane.f32.xlu0 %v5867
    %v5869 = vpop.xlane.xlu0 %5868
    %v5870 = vsel %vm327, %v5866, 0.0
    %5871 = vadd.xlane.f32.xlu0 %v5870
    %v5872 = vpop.xlane.xlu0 %5871
    %v5873 = vmul.f32 %v5869, %v1053
    %v5874 = vmul.f32 %v5872, %v1053
    %v5875 = vsub.f32 %v5855, %v5863
    %v5876 = vsub.f32 %v5856, %v5864
    %v5877 = vmul.f32 %v5863, %v5863
    %v5878 = vmul.f32 %v5864, %v5864
    %v5879 = vsub.f32 %v5873, %v5877
    %v5880 = vsub.f32 %v5874, %v5878
    %v5881 = vadd.f32 %v5879, 1e-05
    %v5882 = vadd.f32 %v5880, 1e-05
    %v5883 = vrsqrt.pop %v5881
    %v5884 = vrsqrt.pop %v5882
    %v5885 = vmul.f32 %v5875, %v5883
    %v5886 = vmul.f32 %v5876, %v5884
    %v5887 = vlaneseq
    %v5888 = vshrl.u32 %v5887, 7
    %v5889 = vsub.s32 3, %v5888
    %v5890 = vrot.slane %v4098, %v5889
    %v5891 = vmul.f32 %v5885, %v5890
    %v5892 = vmul.f32 %v5886, %v5890
    %v5893 = vlaneseq
    %v5894 = vshrl.u32 %v5893, 7
    %v5895 = vsub.s32 4, %v5894
    %v5896 = vrot.slane %v4098, %v5895
    %v5897 = vadd.f32 %v5891, %v5896
    %v5898 = vadd.f32 %v5892, %v5896
    %v5899 = vld [vmem:[%s22] sm:$0xff]
    %v5900 = vld [vmem:[%s22 + $0x8] sm:$0xff]
    %v5901 = vld [vmem:[%s22 + $0x10] sm:$0xff]
    %v5902 = vld [vmem:[%s22 + $0x18] sm:$0xff]
    %v5903 = vld [vmem:[%s23] sm:$0x1]
    %v5905 = vlaneseq
    %v5906 = vshrl.u32 %v5905, 7
    %v5907 = vsub.s32 0, %v5906
    %v5908 = vrot.slane %v5903, %v5907
    %v5911 = vsel %vm327, %v5897, 0
    %v5914 = vsel %vm327, %v5898, 0
    %5916 = vmatprep.subr.mxu0 0.0
    %5917 = vmatpush1.msra.mxu0 0.0
    %5918 = vmatprep.subr.mxu0 0.0
    %5919 = vmatpush1.msra.mxu0 0.0
    %5920 = vmatprep.subr.mxu0 0.0
    %5921 = vmatpush1.msra.mxu0 0.0
    %5922 = vmatprep.subr.mxu0 0.0
    %5923 = vmatpush1.msra.mxu0 0.0
    %5924 = vmatprep.subr.mxu0 0.0
    %5925 = vmatpush1.msra.mxu0 0.0
    %5926 = vmatprep.subr.mxu0 0.0
    %5927 = vmatpush1.msra.mxu0 0.0
    %5928 = vmatprep.subr.mxu0 0.0
    %5929 = vmatpush1.msra.mxu0 0.0
    %5930 = vmatprep.subr.mxu0 0.0
    %5931 = vmatpush1.msra.mxu0 0.0
    %5932 = vmatprep.subr.mxu0 0.0
    %5933 = vmatpush1.msra.mxu0 0.0
    %5934 = vmatprep.subr.mxu0 0.0
    %5935 = vmatpush1.msra.mxu0 0.0
    %5936 = vmatprep.subr.mxu0 0.0
    %5937 = vmatpush1.msra.mxu0 0.0
    %5938 = vmatprep.subr.mxu0 0.0
    %5939 = vmatpush1.msra.mxu0 0.0
    %5940 = vmatprep.subr.mxu0 0.0
    %5941 = vmatpush1.msra.mxu0 %v5902
    %5942 = vmatprep.subr.mxu0 0.0
    %5943 = vmatpush1.msra.mxu0 %v5901
    %5944 = vmatprep.subr.mxu0 0.0
    %5945 = vmatpush1.msra.mxu0 %v5900
    %5946 = vmatprep.subr.mxu0 0.0
    %5947 = vmatpush1.msra.mxu0 %v5899
    %5948 = vmatprep.subr.mxu0 0.0
    %5949 = vmatpush2.msra.mxu0 0.0
    %5950 = vmatprep.subr.mxu0 0.0
    %5951 = vmatpush2.msra.mxu0 0.0
    %5952 = vmatprep.subr.mxu0 0.0
    %5953 = vmatpush2.msra.mxu0 0.0
    %5954 = vmatprep.subr.mxu0 0.0
    %5955 = vmatpush2.msra.mxu0 0.0
    %5956 = vmatprep.subr.mxu0 0.0
    %5957 = vmatpush2.msra.mxu0 0.0
    %5958 = vmatprep.subr.mxu0 0.0
    %5959 = vmatpush2.msra.mxu0 0.0
    %5960 = vmatprep.subr.mxu0 0.0
    %5961 = vmatpush2.msra.mxu0 0.0
    %5962 = vmatprep.subr.mxu0 0.0
    %5963 = vmatpush2.msra.mxu0 0.0
    %5964 = vmatprep.subr.mxu0 0.0
    %5965 = vmatpush2.msra.mxu0 0.0
    %5966 = vmatprep.subr.mxu0 0.0
    %5967 = vmatpush2.msra.mxu0 0.0
    %5968 = vmatprep.subr.mxu0 0.0
    %5969 = vmatpush2.msra.mxu0 0.0
    %5970 = vmatprep.subr.mxu0 0.0
    %5971 = vmatpush2.msra.mxu0 0.0
    %5972 = vmatprep.subr.mxu0 0.0
    %5973 = vmatpush2.msra.mxu0 0.0
    %5974 = vmatprep.subr.mxu0 0.0
    %5975 = vmatpush2.msra.mxu0 0.0
    %5976 = vmatprep.subr.mxu0 0.0
    %5977 = vmatpush2.msra.mxu0 0.0
    %5978 = vmatprep.subr.mxu0 0.0
    %5979 = vmatpush2.msra.mxu0 0.0
    %5980 = vmatprep.mubr.f32.mxu0 0.0
    %5981 = vmatmul.mubr.f32.gmra.mxu0 %v5911
    %v5982 = vpop.f32.mrf.mxu0
    %v5983 = vadd.f32 %v5908, %v5982
    %v5984 = vpop.f32.mrf.mxu0
    %5985 = vmatprep.mubr.f32.mxu0 0.0
    %5986 = vmatmul.mubr.f32.gmra.mxu0 %v5914
    %v5987 = vpop.f32.mrf.mxu0
    %v5988 = vadd.f32 %v5908, %v5987
    %v5989 = vpop.f32.mrf.mxu0
    %5990 = vdwg.mxu0
    %5991 = vst [vmem:[#allocation2] sm:$0xff] %v5983
    %5992 = vst [vmem:[#allocation2 + $0x8] sm:$0xff] %v5988
    // Predicated region
    $region98: #{transformer_forward.1} parent=1 // pred_check
      _
    $region99: #{transformer_forward.1} parent=1 // pred_check_branch
      %5994 = sbr.rel (0) target = $region101
    $region100: #{transformer_forward.1} parent=1 // pred_region
      %s5996 = ssub.s32 256, 256
      %5997 = vsyncadd [#allocation3], %s5996
      %s5998 = sshll.u32 [#allocation2], 4
      %s5999 = int_to_ptr.vmem [resolvable:$true] %s5998
      %6004 = dma.vmem_to_hbm [thread:$0]  %s5999, 256, %s24, [#allocation3], 128, 128, 8
    $region101: #{transformer_forward.1} parent=1 // pred_fallthru
      _
    // Predicated region
    $region102: #{transformer_forward.1} parent=1 // pred_check
      _
    $region103: #{transformer_forward.1} parent=1 // pred_check_branch
      %6006 = sbr.rel (0) target = $region105
    $region104: #{transformer_forward.1} parent=1 // pred_region
      %6007 = dma.done [#allocation3], 256
    $region105: #{transformer_forward.1} parent=1 // pred_fallthru
      _
    %6008 = vsyncpa [#allocation3], 1

</llo_original>
